<compile_context>
chip_gen: v6e
topology: v6e:2x2x1
jax: 0.10.0
libtpu: 0.0.40
codegen_flags: <defaults>
</compile_context>

<pallas_src>
import math
import numpy as np
import jax
import jax.numpy as jnp
from jax.experimental import pallas as pl
from jax.experimental.pallas import tpu as pltpu


def _leaky(v):
    # F.leaky_relu default negative_slope = 0.01
    return jnp.where(v > 0, v, 0.01 * v)


# ---------------------------------------------------------------------------
# Shared in-kernel bidirectional LSTM recurrence (whole sequence in VMEM).
# ---------------------------------------------------------------------------
def _bilstm_scan(mask_ref, x_ref, wih_ref, whh_ref, out_ref):
    """Runs one bidirectional LSTM layer over the VMEM-resident sequence.

    mask_ref : (T, B, 1) f32   1.0 where t < lens[b] else 0.0 (precomputed once)
    x_ref    : (S, T, B, F)    layer input; S feature groups (S=1 raw embeddings,
                               S=2 fwd/bwd halves of the previous layer's 2H)
    wih_ref  : (S, F, 8H)      input-projection weights, cols [0:4H]=fwd gates,
                               [4H:8H]=bwd gates (PyTorch i,f,g,o order)
    whh_ref  : (2H, 8H)        block-diag [Whh_f^T, 0; 0, Whh_b^T]
    out_ref  : (2, T, B, H) or None   per-timestep [fwd; bwd] hidden states
                               (0.0 where t >= lens[b], i.e. padding_value=0.0)
    Returns (max_fwd, max_bwd): running max-over-time of each direction, (B,H).

    LSTM biases are exactly zero (init.zeros_ in lstmNet.init_params) -> omitted.
    """
    S, T, B, F = x_ref.shape
    H = whh_ref.shape[0] // 2
    G = 4 * H

    # Hoist weights out of the recurrence (loaded once).
    wih = wih_ref[...]                               # (S, F, 8H)
    wih_f = [wih[si, :, :G] for si in range(S)]      # fwd-gate input projections
    wih_b = [wih[si, :, G:] for si in range(S)]      # bwd-gate input projections
    whh = whh_ref[...]                               # (2H, 8H) block-diagonal

    def gate_act(g):                                 # PyTorch gate order i,f,g,o
        i_g = jax.nn.sigmoid(g[:, 0 * H:1 * H])
        f_g = jax.nn.sigmoid(g[:, 1 * H:2 * H])
        g_g = jnp.tanh(g[:, 2 * H:3 * H])
        o_g = jax.nn.sigmoid(g[:, 3 * H:4 * H])
        return i_g, f_g, g_g, o_g

    def step(s, carry):
        hf, cf, hb, cb, mxf, mxb = carry
        tb = T - 1 - s        # backward direction walks time in reverse; with the
        #                      same t<len mask its state stays 0 until t=len-1,
        #                      reproducing the packed-sequence per-row reversal.

        # ---- fused input projections (off the recurrence critical path) ----
        gf = jnp.dot(x_ref[0, s], wih_f[0], preferred_element_type=jnp.float32)
        gb = jnp.dot(x_ref[0, tb], wih_b[0], preferred_element_type=jnp.float32)
        for si in range(1, S):
            gf = gf + jnp.dot(x_ref[si, s], wih_f[si],
                              preferred_element_type=jnp.float32)
            gb = gb + jnp.dot(x_ref[si, tb], wih_b[si],
                              preferred_element_type=jnp.float32)

        # ---- ONE block-diagonal recurrent matmul for both directions ----
        rec = jnp.dot(jnp.concatenate([hf, hb], axis=-1), whh,
                      preferred_element_type=jnp.float32,
                      precision=jax.lax.Precision.HIGHEST)
        gf = gf + rec[:, :G]
        gb = gb + rec[:, G:]

        # Masks: one broadcast per direction per step, reused by every blend.
        mf = jnp.broadcast_to(mask_ref[s], (B, H))
        mb = jnp.broadcast_to(mask_ref[tb], (B, H))
        nmf = 1.0 - mf
        nmb = 1.0 - mb

        # ---- forward cell ----
        i_g, f_g, g_g, o_g = gate_act(gf)
        c_cand = f_g * cf + i_g * g_g
        h_cand = o_g * jnp.tanh(c_cand)
        yf = mf * h_cand                     # 0 past seq end (padding_value=0.0)
        hf = yf + nmf * hf                   # freeze state past seq end
        cf = mf * c_cand + nmf * cf
        mxf = jnp.maximum(mxf, yf)

        # ---- backward cell ----
        i_g, f_g, g_g, o_g = gate_act(gb)
        c_cand = f_g * cb + i_g * g_g
        h_cand = o_g * jnp.tanh(c_cand)
        yb = mb * h_cand
        hb = yb + nmb * hb
        cb = mb * c_cand + nmb * cb
        mxb = jnp.maximum(mxb, yb)

        if out_ref is not None:              # last layer skips the sequence write
            out_ref[0, s] = yf
            out_ref[1, tb] = yb
        return hf, cf, hb, cb, mxf, mxb

    zeros = jnp.zeros((B, H), jnp.float32)
    neg = jnp.full((B, H), -jnp.inf, jnp.float32)
    carry = (zeros, zeros, zeros, zeros, neg, neg)
    # unroll=True is fine for these tiny T; for production T use a T-chunked grid
    # with a modest (4-8) inner unroll instead (see TODO at top).
    carry = jax.lax.fori_loop(0, T, step, carry, unroll=True)
    return carry[4], carry[5]


# ---------------------------------------------------------------------------
# Pallas kernels
# ---------------------------------------------------------------------------
def _bilstm_mid_layer_kernel(mask_ref, x_ref, wih_ref, whh_ref, out_ref):
    _bilstm_scan(mask_ref, x_ref, wih_ref, whh_ref, out_ref)


def _bilstm_last_layer_head_kernel(mask_ref, x_ref, wih_ref, whh_ref,
                                   emax_ref, feas_ref,
                                   wemb_ref, bemb_ref, wfea_ref, bfea_ref,
                                   w1e_ref, w1lf_ref, w1lb_ref, w1fe_ref, b1_ref,
                                   w2_ref, b2_ref, w3_ref, b3_ref,
                                   y_ref):
    """Last LSTM layer (only its max-over-time is needed) + Net head, fused."""
    mxf, mxb = _bilstm_scan(mask_ref, x_ref, wih_ref, whh_ref, None)

    e = _leaky(jnp.dot(emax_ref[...], wemb_ref[...],
                       preferred_element_type=jnp.float32) + bemb_ref[...])
    f = _leaky(jnp.dot(feas_ref[...], wfea_ref[...],
                       preferred_element_type=jnp.float32) + bfea_ref[...])
    # concat([e, lstm_fwd, lstm_bwd, feas]) @ w1 realized as a sum of four dots
    # against row blocks of w1 (no cross-lane concat).
    h = (jnp.dot(e, w1e_ref[...], preferred_element_type=jnp.float32)
         + jnp.dot(mxf, w1lf_ref[...], preferred_element_type=jnp.float32)
         + jnp.dot(mxb, w1lb_ref[...], preferred_element_type=jnp.float32)
         + jnp.dot(f, w1fe_ref[...], preferred_element_type=jnp.float32)
         + b1_ref[...])
    h = _leaky(h)
    h = _leaky(jnp.dot(h, w2_ref[...], preferred_element_type=jnp.float32)
               + b2_ref[...])
    y_ref[...] = jnp.dot(h, w3_ref[...],
                         preferred_element_type=jnp.float32) + b3_ref[...]


# ---------------------------------------------------------------------------
# pallas_call wrappers
# ---------------------------------------------------------------------------
def _whole_spec(a):
    nd = a.ndim
    return pl.BlockSpec(a.shape, lambda i, _n=nd: (0,) * _n)


def bilstm_mid_layer(mask, x, wih, whh_bd):
    S, T, B, F = x.shape
    H = whh_bd.shape[0] // 2
    return pl.pallas_call(
        _bilstm_mid_layer_kernel,
        out_shape=jax.ShapeDtypeStruct((2, T, B, H), jnp.float32),
        grid_spec=pltpu.PrefetchScalarGridSpec(
            num_scalar_prefetch=0,
            grid=(1,),
            in_specs=[_whole_spec(a) for a in (mask, x, wih, whh_bd)],
            out_specs=pl.BlockSpec((2, T, B, H), lambda i: (0, 0, 0, 0)),
        ),
        compiler_params=pltpu.CompilerParams(
            dimension_semantics=("arbitrary",)),     # sequential recurrence
    )(mask, x, wih, whh_bd)


def bilstm_last_layer_with_head(mask, x, wih, whh_bd, emb_max, feas, params):
    B = emb_max.shape[0]
    H = whh_bd.shape[0] // 2
    num_labels = params["w3"].shape[1]
    w1 = params["w1"]                                # (4H, 2H), split once per trace
    args = (mask, x, wih, whh_bd, emb_max, feas,
            params["w_emb"], params["b_emb"], params["w_fea"], params["b_fea"],
            w1[:H], w1[H:2 * H], w1[2 * H:3 * H], w1[3 * H:], params["b1"],
            params["w2"], params["b2"], params["w3"], params["b3"])
    return pl.pallas_call(
        _bilstm_last_layer_head_kernel,
        out_shape=jax.ShapeDtypeStruct((B, num_labels), jnp.float32),
        grid_spec=pltpu.PrefetchScalarGridSpec(
            num_scalar_prefetch=0,
            grid=(1,),
            in_specs=[_whole_spec(a) for a in args],
            out_specs=pl.BlockSpec((B, num_labels), lambda i: (0, 0)),
        ),
        compiler_params=pltpu.CompilerParams(
            dimension_semantics=("arbitrary",)),
    )(*args)


def net_forward(params, embeddings, feas, lens):
    """Forward pass of Net (eval mode).  lens are host ints, sorted descending
    (pack_padded_sequence(enforce_sorted=True) requirement)."""
    lens_np = np.asarray(lens, dtype=np.int32)
    t_max = int(lens_np.max())            # pad_packed_sequence truncates to max(lens)
    emb = jnp.asarray(embeddings, jnp.float32)

    # Length mask computed ONCE, shared by every layer: (T, B, 1) float {0,1}.
    lens_j = jnp.asarray(lens_np)
    mask = (lens_j[None, :, None] >
            jnp.arange(t_max, dtype=jnp.int32)[:, None, None]).astype(jnp.float32)

    # Layer-0 input, time-major, with a leading feature-group axis: (1, T, B, E).
    x = jnp.transpose(emb[:, :t_max, :], (1, 0, 2))[None]

    for lp in params["lstm"][:-1]:
        x = bilstm_mid_layer(mask, x, lp["wih"], lp["whh_bd"])
        # TODO(synk): inter-layer LSTM dropout omitted (eval-mode semantics).

    emb_max = jnp.max(emb, axis=1)        # F.max_pool1d over raw embeddings (full T)
    lp = params["lstm"][-1]
    return bilstm_last_layer_with_head(mask, x, lp["wih"], lp["whh_bd"],
                                       emb_max, jnp.asarray(feas, jnp.float32),
                                       params)


# ---------------------------------------------------------------------------
# Deterministic parameter init (orthogonal LSTM weights / zero LSTM+fc biases as
# in the module's init_params; weights stored pre-transposed / pre-packed).
# ---------------------------------------------------------------------------
def _orthogonal(key, shape):
    rows, cols = shape
    flip = rows < cols
    a = jax.random.normal(key, (cols, rows) if flip else (rows, cols), jnp.float32)
    q, r = jnp.linalg.qr(a)
    q = q * jnp.sign(jnp.diagonal(r))[None, :]
    return q.T if flip else q


def _xavier_normal(key, fan_in, fan_out):
    std = math.sqrt(2.0 / (fan_in + fan_out))
    return std * jax.random.normal(key, (fan_in, fan_out), jnp.float32)


def init_net_params(key, embed_size, fea_size, hidden_size, num_layers, num_labels):
    H = hidden_size
    layers = []
    for layer in range(num_layers):
        d_in = embed_size if layer == 0 else 2 * H
        key, k0, k1, k2, k3 = jax.random.split(key, 5)
        wih_f = _orthogonal(k0, (4 * H, d_in)).T     # (d_in, 4H) pre-transposed
        whh_f = _orthogonal(k1, (4 * H, H)).T        # (H, 4H)
        wih_b = _orthogonal(k2, (4 * H, d_in)).T
        whh_b = _orthogonal(k3, (4 * H, H)).T
        # Packed input projection for the kernel: (S, F, 8H); cols 0:4H fwd gates,
        # 4H:8H bwd gates. For layers>0 the 2H input features are split into their
        # fwd-half / bwd-half groups so no inter-layer concat is ever needed.
        wih_cat = jnp.concatenate([wih_f, wih_b], axis=1)          # (d_in, 8H)
        if layer == 0:
            wih_pack = wih_cat[None]                               # (1, E, 8H)
        else:
            wih_pack = jnp.stack([wih_cat[:H], wih_cat[H:]], 0)    # (2, H, 8H)
        # Block-diagonal recurrent weight: one MXU pass computes both directions.
        z = jnp.zeros((H, 4 * H), jnp.float32)
        whh_bd = jnp.concatenate(
            [jnp.concatenate([whh_f, z], axis=1),
             jnp.concatenate([z, whh_b], axis=1)], axis=0)         # (2H, 8H)
        layers.append(dict(wih_f=wih_f, whh_f=whh_f, wih_b=wih_b, whh_b=whh_b,
                           wih=wih_pack, whh_bd=whh_bd))

    key, ke, kf, k1, k2, k3, kb1, kb2, kb3 = jax.random.split(key, 9)
    return dict(
        lstm=layers,
        # Net.fc_embed / fc_feas: xavier_normal weights, zero biases (init_params).
        w_emb=_xavier_normal(ke, embed_size, H),
        b_emb=jnp.zeros((1, H), jnp.float32),
        w_fea=_xavier_normal(kf, fea_size, H),
        b_fea=jnp.zeros((1, H), jnp.float32),
        # classfiyNet 4H -> 2H -> H -> num_labels (eval path); default torch Linear
        # init is not reproduced exactly — any deterministic values exercise the
        # same forward math.
        w1=_xavier_normal(k1, 4 * H, 2 * H),
        b1=0.1 * jax.random.normal(kb1, (1, 2 * H), jnp.float32),
        w2=_xavier_normal(k2, 2 * H, H),
        b2=0.1 * jax.random.normal(kb2, (1, H), jnp.float32),
        w3=_xavier_normal(k3, H, num_labels),
        b3=0.1 * jax.random.normal(kb3, (1, num_labels), jnp.float32),
    )


# ---------------------------------------------------------------------------
# Pure-JAX reference (same math, no Pallas) for a correctness sanity check
# ---------------------------------------------------------------------------
def _ref_dir(x_btd, lens2d, wih, whh, reverse):
    B, T, _ = x_btd.shape
    H = whh.shape[0]
    h = jnp.zeros((B, H), jnp.float32)
    c = jnp.zeros((B, H), jnp.float32)
    outs = [None] * T
    order = range(T - 1, -1, -1) if reverse else range(T)
    for t in order:
        g = (jnp.dot(x_btd[:, t, :], wih)
             + jnp.dot(h, whh, precision=jax.lax.Precision.HIGHEST))
        i_g = jax.nn.sigmoid(g[:, 0 * H:1 * H])
        f_g = jax.nn.sigmoid(g[:, 1 * H:2 * H])
        g_g = jnp.tanh(g[:, 2 * H:3 * H])
        o_g = jax.nn.sigmoid(g[:, 3 * H:4 * H])
        c_new = f_g * c + i_g * g_g
        h_new = o_g * jnp.tanh(c_new)
        m = lens2d > t
        h = jnp.where(m, h_new, h)
        c = jnp.where(m, c_new, c)
        outs[t] = jnp.where(m, h_new, 0.0)
    return jnp.stack(outs, axis=1)       # (B, T, H)


def _ref_net_forward(params, embeddings, feas, lens):
    lens_np = np.asarray(lens, np.int32)
    t_max = int(lens_np.max())
    emb = jnp.asarray(embeddings, jnp.float32)
    B = emb.shape[0]
    lens2d = jnp.asarray(lens_np).reshape(B, 1)
    x = emb[:, :t_max, :]
    for lp in params["lstm"]:
        of = _ref_dir(x, lens2d, lp["wih_f"], lp["whh_f"], reverse=False)
        ob = _ref_dir(x, lens2d, lp["wih_b"], lp["whh_b"], reverse=True)
        x = jnp.concatenate([of, ob], axis=-1)
    lstm_out = jnp.max(x, axis=1)
    e = _leaky(jnp.dot(jnp.max(emb, axis=1), params["w_emb"]) + params["b_emb"])
    f = _leaky(jnp.dot(jnp.asarray(feas, jnp.float32), params["w_fea"]) + params["b_fea"])
    h = jnp.concatenate([e, lstm_out, f], axis=1)
    h = _leaky(jnp.dot(h, params["w1"]) + params["b1"])
    h = _leaky(jnp.dot(h, params["w2"]) + params["b2"])
    return jnp.dot(h, params["w3"]) + params["b3"]


# ---------------------------------------------------------------------------
if __name__ == "__main__":
    B, T = 2, 8
    embed_size, fea_size, hidden_size, num_layers = 16, 16, 32, 2
    num_labels = 20        # classfiyNet output size hard-coded in Net

    key = jax.random.PRNGKey(0)
    k_emb, k_fea, k_par = jax.random.split(key, 3)
    embeddings = jax.random.normal(k_emb, (B, T, embed_size), jnp.float32)
    feas = jax.random.normal(k_fea, (B, fea_size), jnp.float32)
    lens = [8, 5]          # sorted descending, as pack_padded_sequence requires

    params = init_net_params(k_par, embed_size, fea_size, hidden_size,
                             num_layers, num_labels)

    out = jax.block_until_ready(net_forward(params, embeddings, feas, lens))
    ref = jax.block_until_ready(_ref_net_forward(params, embeddings, feas, lens))

    assert out.shape == (B, num_labels), out.shape
    err = float(np.max(np.abs(np.asarray(out) - np.asarray(ref))))
    # Tolerance accommodates MXU default-precision rounding differences between
    # the in-kernel input-projection dots (Mosaic) and the XLA reference;
    # structural bugs (gate order / masking / reversal) would be far larger.
    assert np.allclose(np.asarray(out), np.asarray(ref), atol=1e-2, rtol=1e-2), err

    print("KERNEL_OK")
</pallas_src>

<mosaic_0001>
module attributes {stable_mosaic.version = 11 : i64} {
  func.func @_bilstm_mid_layer_kernel(%arg0: i32, %arg1: memref<8x2x1xf32, #tpu.memory_space<vmem>>, %arg2: memref<1x8x2x16xf32, #tpu.memory_space<vmem>>, %arg3: memref<1x16x256xf32, #tpu.memory_space<vmem>>, %arg4: memref<64x256xf32, #tpu.memory_space<vmem>>, %arg5: memref<2x8x2x32xf32, #tpu.memory_space<vmem>>) attributes {dimension_semantics = [#tpu.dimension_semantics<arbitrary>], iteration_bounds = array<i64: 1>, scalar_prefetch = 0 : i64, scratch_operands = 0 : i64, tpu.core_type = #tpu.core_type<tc>, window_params = [{pipeline_mode = #tpu.pipeline_mode<synchronous>, transform_indices = @transform_0, window_bounds = array<i64: 8, 2, 1>}, {pipeline_mode = #tpu.pipeline_mode<synchronous>, transform_indices = @transform_1, window_bounds = array<i64: 1, 8, 2, 16>}, {pipeline_mode = #tpu.pipeline_mode<synchronous>, transform_indices = @transform_2, window_bounds = array<i64: 1, 16, 256>}, {pipeline_mode = #tpu.pipeline_mode<synchronous>, transform_indices = @transform_3, window_bounds = array<i64: 64, 256>}, {pipeline_mode = #tpu.pipeline_mode<synchronous>, transform_indices = @transform_4, window_bounds = array<i64: 2, 8, 2, 32>}]} {
    %c0 = arith.constant 0 : index
    %c0_0 = arith.constant 0 : index
    %c0_1 = arith.constant 0 : index
    %0 = vector.load %arg3[%c0, %c0_0, %c0_1] : memref<1x16x256xf32, #tpu.memory_space<vmem>>, vector<1x16x256xf32>
    %1 = vector.extract_strided_slice %0 {offsets = [0, 0, 0], sizes = [1, 16, 128], strides = [1, 1, 1]} : vector<1x16x256xf32> to vector<1x16x128xf32>
    %2 = vector.shape_cast %1 : vector<1x16x128xf32> to vector<16x128xf32>
    %3 = vector.extract_strided_slice %0 {offsets = [0, 0, 128], sizes = [1, 16, 128], strides = [1, 1, 1]} : vector<1x16x256xf32> to vector<1x16x128xf32>
    %4 = vector.shape_cast %3 : vector<1x16x128xf32> to vector<16x128xf32>
    %c0_2 = arith.constant 0 : index
    %c0_3 = arith.constant 0 : index
    %5 = vector.load %arg4[%c0_2, %c0_3] : memref<64x256xf32, #tpu.memory_space<vmem>>, vector<64x256xf32>
    %cst = arith.constant 0.000000e+00 : f32
    %6 = vector.broadcast %cst : f32 to vector<2x32xf32>
    %c0_i32 = arith.constant 0 : i32
    %c7_i32 = arith.constant 7 : i32
    %7 = arith.subi %c7_i32, %c0_i32 : i32
    %c0_4 = arith.constant 0 : index
    %8 = arith.index_cast %c0_i32 : i32 to index
    %c0_5 = arith.constant 0 : index
    %c0_6 = arith.constant 0 : index
    %9 = vector.load %arg2[%c0_4, %8, %c0_5, %c0_6] : memref<1x8x2x16xf32, #tpu.memory_space<vmem>>, vector<1x1x2x16xf32>
    %10 = vector.shape_cast %9 : vector<1x1x2x16xf32> to vector<2x16xf32>
    %cst_7 = arith.constant dense<0.000000e+00> : vector<2x128xf32>
    %11 = tpu.matmul %10, %2, %cst_7 {dimension_numbers = #tpu.dot_dimension_numbers<[1], [0], [0], [1], [0, 0, 1, 1], [], []>} : vector<2x16xf32>, vector<16x128xf32>, vector<2x128xf32> -> vector<2x128xf32>
    %c0_8 = arith.constant 0 : index
    %12 = arith.index_cast %7 : i32 to index
    %c0_9 = arith.constant 0 : index
    %c0_10 = arith.constant 0 : index
    %13 = vector.load %arg2[%c0_8, %12, %c0_9, %c0_10] : memref<1x8x2x16xf32, #tpu.memory_space<vmem>>, vector<1x1x2x16xf32>
    %14 = vector.shape_cast %13 : vector<1x1x2x16xf32> to vector<2x16xf32>
    %cst_11 = arith.constant dense<0.000000e+00> : vector<2x128xf32>
    %15 = tpu.matmul %14, %4, %cst_11 {dimension_numbers = #tpu.dot_dimension_numbers<[1], [0], [0], [1], [0, 0, 1, 1], [], []>} : vector<2x16xf32>, vector<16x128xf32>, vector<2x128xf32> -> vector<2x128xf32>
    %16 = tpu.concatenate %6, %6 in 1 : vector<2x32xf32>, vector<2x32xf32> -> vector<2x64xf32>
    %cst_12 = arith.constant dense<0.000000e+00> : vector<2x256xf32>
    %17 = tpu.matmul %16, %5, %cst_12 {dimension_numbers = #tpu.dot_dimension_numbers<[1], [0], [0], [1], [0, 0, 1, 1], [], []>, precision = #tpu.contract_precision<fp32>} : vector<2x64xf32>, vector<64x256xf32>, vector<2x256xf32> -> vector<2x256xf32>
    %18 = vector.extract_strided_slice %17 {offsets = [0, 0], sizes = [2, 128], strides = [1, 1]} : vector<2x256xf32> to vector<2x128xf32>
    %19 = arith.addf %11, %18 : vector<2x128xf32>
    %20 = vector.extract_strided_slice %17 {offsets = [0, 128], sizes = [2, 128], strides = [1, 1]} : vector<2x256xf32> to vector<2x128xf32>
    %21 = arith.addf %15, %20 : vector<2x128xf32>
    %22 = arith.index_cast %c0_i32 : i32 to index
    %c0_13 = arith.constant 0 : index
    %c0_14 = arith.constant 0 : index
    %23 = vector.load %arg1[%22, %c0_13, %c0_14] : memref<8x2x1xf32, #tpu.memory_space<vmem>>, vector<1x2x1xf32>
    %24 = vector.shape_cast %23 : vector<1x2x1xf32> to vector<2x1xf32>
    %25 = vector.shape_cast %24 : vector<2x1xf32> to vector<2x1xf32>
    %26 = vector.broadcast %25 : vector<2x1xf32> to vector<2x32xf32>
    %27 = arith.index_cast %7 : i32 to index
    %c0_15 = arith.constant 0 : index
    %c0_16 = arith.constant 0 : index
    %28 = vector.load %arg1[%27, %c0_15, %c0_16] : memref<8x2x1xf32, #tpu.memory_space<vmem>>, vector<1x2x1xf32>
    %29 = vector.shape_cast %28 : vector<1x2x1xf32> to vector<2x1xf32>
    %30 = vector.shape_cast %29 : vector<2x1xf32> to vector<2x1xf32>
    %31 = vector.broadcast %30 : vector<2x1xf32> to vector<2x32xf32>
    %cst_17 = arith.constant 1.000000e+00 : f32
    %32 = vector.broadcast %cst_17 : f32 to vector<2x32xf32>
    %33 = arith.subf %32, %26 : vector<2x32xf32>
    %cst_18 = arith.constant 1.000000e+00 : f32
    %34 = vector.broadcast %cst_18 : f32 to vector<2x32xf32>
    %35 = arith.subf %34, %31 : vector<2x32xf32>
    %36 = vector.extract_strided_slice %19 {offsets = [0, 0], sizes = [2, 32], strides = [1, 1]} : vector<2x128xf32> to vector<2x32xf32>
    %37 = arith.negf %36 : vector<2x32xf32>
    %38 = math.exp %37 : vector<2x32xf32>
    %cst_19 = arith.constant 1.000000e+00 : f32
    %39 = vector.broadcast %cst_19 : f32 to vector<2x32xf32>
    %40 = arith.addf %39, %38 : vector<2x32xf32>
    %41 = arith.divf %39, %40 : vector<2x32xf32>
    %42 = vector.extract_strided_slice %19 {offsets = [0, 32], sizes = [2, 32], strides = [1, 1]} : vector<2x128xf32> to vector<2x32xf32>
    %43 = arith.negf %42 : vector<2x32xf32>
    %44 = math.exp %43 : vector<2x32xf32>
    %cst_20 = arith.constant 1.000000e+00 : f32
    %45 = vector.broadcast %cst_20 : f32 to vector<2x32xf32>
    %46 = arith.addf %45, %44 : vector<2x32xf32>
    %47 = arith.divf %45, %46 : vector<2x32xf32>
    %48 = vector.extract_strided_slice %19 {offsets = [0, 64], sizes = [2, 32], strides = [1, 1]} : vector<2x128xf32> to vector<2x32xf32>
    %49 = math.tanh %48 : vector<2x32xf32>
    %50 = vector.extract_strided_slice %19 {offsets = [0, 96], sizes = [2, 32], strides = [1, 1]} : vector<2x128xf32> to vector<2x32xf32>
    %51 = arith.negf %50 : vector<2x32xf32>
    %52 = math.exp %51 : vector<2x32xf32>
    %cst_21 = arith.constant 1.000000e+00 : f32
    %53 = vector.broadcast %cst_21 : f32 to vector<2x32xf32>
    %54 = arith.addf %53, %52 : vector<2x32xf32>
    %55 = arith.divf %53, %54 : vector<2x32xf32>
    %56 = arith.mulf %47, %6 : vector<2x32xf32>
    %57 = arith.mulf %41, %49 : vector<2x32xf32>
    %58 = arith.addf %56, %57 : vector<2x32xf32>
    %59 = math.tanh %58 : vector<2x32xf32>
    %60 = arith.mulf %55, %59 : vector<2x32xf32>
    %61 = arith.mulf %26, %60 : vector<2x32xf32>
    %62 = arith.mulf %33, %6 : vector<2x32xf32>
    %63 = arith.addf %61, %62 : vector<2x32xf32>
    %64 = arith.mulf %26, %58 : vector<2x32xf32>
    %65 = arith.mulf %33, %6 : vector<2x32xf32>
    %66 = arith.addf %64, %65 : vector<2x32xf32>
    %67 = vector.extract_strided_slice %21 {offsets = [0, 0], sizes = [2, 32], strides = [1, 1]} : vector<2x128xf32> to vector<2x32xf32>
    %68 = arith.negf %67 : vector<2x32xf32>
    %69 = math.exp %68 : vector<2x32xf32>
    %cst_22 = arith.constant 1.000000e+00 : f32
    %70 = vector.broadcast %cst_22 : f32 to vector<2x32xf32>
    %71 = arith.addf %70, %69 : vector<2x32xf32>
    %72 = arith.divf %70, %71 : vector<2x32xf32>
    %73 = vector.extract_strided_slice %21 {offsets = [0, 32], sizes = [2, 32], strides = [1, 1]} : vector<2x128xf32> to vector<2x32xf32>
    %74 = arith.negf %73 : vector<2x32xf32>
    %75 = math.exp %74 : vector<2x32xf32>
    %cst_23 = arith.constant 1.000000e+00 : f32
    %76 = vector.broadcast %cst_23 : f32 to vector<2x32xf32>
    %77 = arith.addf %76, %75 : vector<2x32xf32>
    %78 = arith.divf %76, %77 : vector<2x32xf32>
    %79 = vector.extract_strided_slice %21 {offsets = [0, 64], sizes = [2, 32], strides = [1, 1]} : vector<2x128xf32> to vector<2x32xf32>
    %80 = math.tanh %79 : vector<2x32xf32>
    %81 = vector.extract_strided_slice %21 {offsets = [0, 96], sizes = [2, 32], strides = [1, 1]} : vector<2x128xf32> to vector<2x32xf32>
    %82 = arith.negf %81 : vector<2x32xf32>
    %83 = math.exp %82 : vector<2x32xf32>
    %cst_24 = arith.constant 1.000000e+00 : f32
    %84 = vector.broadcast %cst_24 : f32 to vector<2x32xf32>
    %85 = arith.addf %84, %83 : vector<2x32xf32>
    %86 = arith.divf %84, %85 : vector<2x32xf32>
    %87 = arith.mulf %78, %6 : vector<2x32xf32>
    %88 = arith.mulf %72, %80 : vector<2x32xf32>
    %89 = arith.addf %87, %88 : vector<2x32xf32>
    %90 = math.tanh %89 : vector<2x32xf32>
    %91 = arith.mulf %86, %90 : vector<2x32xf32>
    %92 = arith.mulf %31, %91 : vector<2x32xf32>
    %93 = arith.mulf %35, %6 : vector<2x32xf32>
    %94 = arith.addf %92, %93 : vector<2x32xf32>
    %95 = arith.mulf %31, %89 : vector<2x32xf32>
    %96 = arith.mulf %35, %6 : vector<2x32xf32>
    %97 = arith.addf %95, %96 : vector<2x32xf32>
    %c0_25 = arith.constant 0 : index
    %98 = arith.index_cast %c0_i32 : i32 to index
    %c0_26 = arith.constant 0 : index
    %c0_27 = arith.constant 0 : index
    %99 = vector.load %arg5[%c0_25, %98, %c0_26, %c0_27] : memref<2x8x2x32xf32, #tpu.memory_space<vmem>>, vector<1x1x2x32xf32>
    %100 = vector.shape_cast %99 : vector<1x1x2x32xf32> to vector<2x32xf32>
    %101 = vector.shape_cast %61 : vector<2x32xf32> to vector<1x1x2x32xf32>
    tpu.vector_store %arg5[%c0_25, %98, %c0_26, %c0_27], %101 {strides = array<i32>} : memref<2x8x2x32xf32, #tpu.memory_space<vmem>>, vector<1x1x2x32xf32>,
    %c1 = arith.constant 1 : index
    %102 = arith.index_cast %7 : i32 to index
    %c0_28 = arith.constant 0 : index
    %c0_29 = arith.constant 0 : index
    %103 = vector.load %arg5[%c1, %102, %c0_28, %c0_29] : memref<2x8x2x32xf32, #tpu.memory_space<vmem>>, vector<1x1x2x32xf32>
    %104 = vector.shape_cast %103 : vector<1x1x2x32xf32> to vector<2x32xf32>
    %105 = vector.shape_cast %92 : vector<2x32xf32> to vector<1x1x2x32xf32>
    tpu.vector_store %arg5[%c1, %102, %c0_28, %c0_29], %105 {strides = array<i32>} : memref<2x8x2x32xf32, #tpu.memory_space<vmem>>, vector<1x1x2x32xf32>,
    %c1_i32 = arith.constant 1 : i32
    %c7_i32_30 = arith.constant 7 : i32
    %106 = arith.subi %c7_i32_30, %c1_i32 : i32
    %c0_31 = arith.constant 0 : index
    %107 = arith.index_cast %c1_i32 : i32 to index
    %c0_32 = arith.constant 0 : index
    %c0_33 = arith.constant 0 : index
    %108 = vector.load %arg2[%c0_31, %107, %c0_32, %c0_33] : memref<1x8x2x16xf32, #tpu.memory_space<vmem>>, vector<1x1x2x16xf32>
    %109 = vector.shape_cast %108 : vector<1x1x2x16xf32> to vector<2x16xf32>
    %cst_34 = arith.constant dense<0.000000e+00> : vector<2x128xf32>
    %110 = tpu.matmul %109, %2, %cst_34 {dimension_numbers = #tpu.dot_dimension_numbers<[1], [0], [0], [1], [0, 0, 1, 1], [], []>} : vector<2x16xf32>, vector<16x128xf32>, vector<2x128xf32> -> vector<2x128xf32>
    %c0_35 = arith.constant 0 : index
    %111 = arith.index_cast %106 : i32 to index
    %c0_36 = arith.constant 0 : index
    %c0_37 = arith.constant 0 : index
    %112 = vector.load %arg2[%c0_35, %111, %c0_36, %c0_37] : memref<1x8x2x16xf32, #tpu.memory_space<vmem>>, vector<1x1x2x16xf32>
    %113 = vector.shape_cast %112 : vector<1x1x2x16xf32> to vector<2x16xf32>
    %cst_38 = arith.constant dense<0.000000e+00> : vector<2x128xf32>
    %114 = tpu.matmul %113, %4, %cst_38 {dimension_numbers = #tpu.dot_dimension_numbers<[1], [0], [0], [1], [0, 0, 1, 1], [], []>} : vector<2x16xf32>, vector<16x128xf32>, vector<2x128xf32> -> vector<2x128xf32>
    %115 = tpu.concatenate %63, %94 in 1 : vector<2x32xf32>, vector<2x32xf32> -> vector<2x64xf32>
    %cst_39 = arith.constant dense<0.000000e+00> : vector<2x256xf32>
    %116 = tpu.matmul %115, %5, %cst_39 {dimension_numbers = #tpu.dot_dimension_numbers<[1], [0], [0], [1], [0, 0, 1, 1], [], []>, precision = #tpu.contract_precision<fp32>} : vector<2x64xf32>, vector<64x256xf32>, vector<2x256xf32> -> vector<2x256xf32>
    %117 = vector.extract_strided_slice %116 {offsets = [0, 0], sizes = [2, 128], strides = [1, 1]} : vector<2x256xf32> to vector<2x128xf32>
    %118 = arith.addf %110, %117 : vector<2x128xf32>
    %119 = vector.extract_strided_slice %116 {offsets = [0, 128], sizes = [2, 128], strides = [1, 1]} : vector<2x256xf32> to vector<2x128xf32>
    %120 = arith.addf %114, %119 : vector<2x128xf32>
    %121 = arith.index_cast %c1_i32 : i32 to index
    %c0_40 = arith.constant 0 : index
    %c0_41 = arith.constant 0 : index
    %122 = vector.load %arg1[%121, %c0_40, %c0_41] : memref<8x2x1xf32, #tpu.memory_space<vmem>>, vector<1x2x1xf32>
    %123 = vector.shape_cast %122 : vector<1x2x1xf32> to vector<2x1xf32>
    %124 = vector.shape_cast %123 : vector<2x1xf32> to vector<2x1xf32>
    %125 = vector.broadcast %124 : vector<2x1xf32> to vector<2x32xf32>
    %126 = arith.index_cast %106 : i32 to index
    %c0_42 = arith.constant 0 : index
    %c0_43 = arith.constant 0 : index
    %127 = vector.load %arg1[%126, %c0_42, %c0_43] : memref<8x2x1xf32, #tpu.memory_space<vmem>>, vector<1x2x1xf32>
    %128 = vector.shape_cast %127 : vector<1x2x1xf32> to vector<2x1xf32>
    %129 = vector.shape_cast %128 : vector<2x1xf32> to vector<2x1xf32>
    %130 = vector.broadcast %129 : vector<2x1xf32> to vector<2x32xf32>
    %cst_44 = arith.constant 1.000000e+00 : f32
    %131 = vector.broadcast %cst_44 : f32 to vector<2x32xf32>
    %132 = arith.subf %131, %125 : vector<2x32xf32>
    %cst_45 = arith.constant 1.000000e+00 : f32
    %133 = vector.broadcast %cst_45 : f32 to vector<2x32xf32>
    %134 = arith.subf %133, %130 : vector<2x32xf32>
    %135 = vector.extract_strided_slice %118 {offsets = [0, 0], sizes = [2, 32], strides = [1, 1]} : vector<2x128xf32> to vector<2x32xf32>
    %136 = arith.negf %135 : vector<2x32xf32>
    %137 = math.exp %136 : vector<2x32xf32>
    %cst_46 = arith.constant 1.000000e+00 : f32
    %138 = vector.broadcast %cst_46 : f32 to vector<2x32xf32>
    %139 = arith.addf %138, %137 : vector<2x32xf32>
    %140 = arith.divf %138, %139 : vector<2x32xf32>
    %141 = vector.extract_strided_slice %118 {offsets = [0, 32], sizes = [2, 32], strides = [1, 1]} : vector<2x128xf32> to vector<2x32xf32>
    %142 = arith.negf %141 : vector<2x32xf32>
    %143 = math.exp %142 : vector<2x32xf32>
    %cst_47 = arith.constant 1.000000e+00 : f32
    %144 = vector.broadcast %cst_47 : f32 to vector<2x32xf32>
    %145 = arith.addf %144, %143 : vector<2x32xf32>
    %146 = arith.divf %144, %145 : vector<2x32xf32>
    %147 = vector.extract_strided_slice %118 {offsets = [0, 64], sizes = [2, 32], strides = [1, 1]} : vector<2x128xf32> to vector<2x32xf32>
    %148 = math.tanh %147 : vector<2x32xf32>
    %149 = vector.extract_strided_slice %118 {offsets = [0, 96], sizes = [2, 32], strides = [1, 1]} : vector<2x128xf32> to vector<2x32xf32>
    %150 = arith.negf %149 : vector<2x32xf32>
    %151 = math.exp %150 : vector<2x32xf32>
    %cst_48 = arith.constant 1.000000e+00 : f32
    %152 = vector.broadcast %cst_48 : f32 to vector<2x32xf32>
    %153 = arith.addf %152, %151 : vector<2x32xf32>
    %154 = arith.divf %152, %153 : vector<2x32xf32>
    %155 = arith.mulf %146, %66 : vector<2x32xf32>
    %156 = arith.mulf %140, %148 : vector<2x32xf32>
    %157 = arith.addf %155, %156 : vector<2x32xf32>
    %158 = math.tanh %157 : vector<2x32xf32>
    %159 = arith.mulf %154, %158 : vector<2x32xf32>
    %160 = arith.mulf %125, %159 : vector<2x32xf32>
    %161 = arith.mulf %132, %63 : vector<2x32xf32>
    %162 = arith.addf %160, %161 : vector<2x32xf32>
    %163 = arith.mulf %125, %157 : vector<2x32xf32>
    %164 = arith.mulf %132, %66 : vector<2x32xf32>
    %165 = arith.addf %163, %164 : vector<2x32xf32>
    %166 = vector.extract_strided_slice %120 {offsets = [0, 0], sizes = [2, 32], strides = [1, 1]} : vector<2x128xf32> to vector<2x32xf32>
    %167 = arith.negf %166 : vector<2x32xf32>
    %168 = math.exp %167 : vector<2x32xf32>
    %cst_49 = arith.constant 1.000000e+00 : f32
    %169 = vector.broadcast %cst_49 : f32 to vector<2x32xf32>
    %170 = arith.addf %169, %168 : vector<2x32xf32>
    %171 = arith.divf %169, %170 : vector<2x32xf32>
    %172 = vector.extract_strided_slice %120 {offsets = [0, 32], sizes = [2, 32], strides = [1, 1]} : vector<2x128xf32> to vector<2x32xf32>
    %173 = arith.negf %172 : vector<2x32xf32>
    %174 = math.exp %173 : vector<2x32xf32>
    %cst_50 = arith.constant 1.000000e+00 : f32
    %175 = vector.broadcast %cst_50 : f32 to vector<2x32xf32>
    %176 = arith.addf %175, %174 : vector<2x32xf32>
    %177 = arith.divf %175, %176 : vector<2x32xf32>
    %178 = vector.extract_strided_slice %120 {offsets = [0, 64], sizes = [2, 32], strides = [1, 1]} : vector<2x128xf32> to vector<2x32xf32>
    %179 = math.tanh %178 : vector<2x32xf32>
    %180 = vector.extract_strided_slice %120 {offsets = [0, 96], sizes = [2, 32], strides = [1, 1]} : vector<2x128xf32> to vector<2x32xf32>
    %181 = arith.negf %180 : vector<2x32xf32>
    %182 = math.exp %181 : vector<2x32xf32>
    %cst_51 = arith.constant 1.000000e+00 : f32
    %183 = vector.broadcast %cst_51 : f32 to vector<2x32xf32>
    %184 = arith.addf %183, %182 : vector<2x32xf32>
    %185 = arith.divf %183, %184 : vector<2x32xf32>
    %186 = arith.mulf %177, %97 : vector<2x32xf32>
    %187 = arith.mulf %171, %179 : vector<2x32xf32>
    %188 = arith.addf %186, %187 : vector<2x32xf32>
    %189 = math.tanh %188 : vector<2x32xf32>
    %190 = arith.mulf %185, %189 : vector<2x32xf32>
    %191 = arith.mulf %130, %190 : vector<2x32xf32>
    %192 = arith.mulf %134, %94 : vector<2x32xf32>
    %193 = arith.addf %191, %192 : vector<2x32xf32>
    %194 = arith.mulf %130, %188 : vector<2x32xf32>
    %195 = arith.mulf %134, %97 : vector<2x32xf32>
    %196 = arith.addf %194, %195 : vector<2x32xf32>
    %c0_52 = arith.constant 0 : index
    %197 = arith.index_cast %c1_i32 : i32 to index
    %c0_53 = arith.constant 0 : index
    %c0_54 = arith.constant 0 : index
    %198 = vector.load %arg5[%c0_52, %197, %c0_53, %c0_54] : memref<2x8x2x32xf32, #tpu.memory_space<vmem>>, vector<1x1x2x32xf32>
    %199 = vector.shape_cast %198 : vector<1x1x2x32xf32> to vector<2x32xf32>
    %200 = vector.shape_cast %160 : vector<2x32xf32> to vector<1x1x2x32xf32>
    tpu.vector_store %arg5[%c0_52, %197, %c0_53, %c0_54], %200 {strides = array<i32>} : memref<2x8x2x32xf32, #tpu.memory_space<vmem>>, vector<1x1x2x32xf32>,
    %c1_55 = arith.constant 1 : index
    %201 = arith.index_cast %106 : i32 to index
    %c0_56 = arith.constant 0 : index
    %c0_57 = arith.constant 0 : index
    %202 = vector.load %arg5[%c1_55, %201, %c0_56, %c0_57] : memref<2x8x2x32xf32, #tpu.memory_space<vmem>>, vector<1x1x2x32xf32>
    %203 = vector.shape_cast %202 : vector<1x1x2x32xf32> to vector<2x32xf32>
    %204 = vector.shape_cast %191 : vector<2x32xf32> to vector<1x1x2x32xf32>
    tpu.vector_store %arg5[%c1_55, %201, %c0_56, %c0_57], %204 {strides = array<i32>} : memref<2x8x2x32xf32, #tpu.memory_space<vmem>>, vector<1x1x2x32xf32>,
    %c2_i32 = arith.constant 2 : i32
    %c7_i32_58 = arith.constant 7 : i32
    %205 = arith.subi %c7_i32_58, %c2_i32 : i32
    %c0_59 = arith.constant 0 : index
    %206 = arith.index_cast %c2_i32 : i32 to index
    %c0_60 = arith.constant 0 : index
    %c0_61 = arith.constant 0 : index
    %207 = vector.load %arg2[%c0_59, %206, %c0_60, %c0_61] : memref<1x8x2x16xf32, #tpu.memory_space<vmem>>, vector<1x1x2x16xf32>
    %208 = vector.shape_cast %207 : vector<1x1x2x16xf32> to vector<2x16xf32>
    %cst_62 = arith.constant dense<0.000000e+00> : vector<2x128xf32>
    %209 = tpu.matmul %208, %2, %cst_62 {dimension_numbers = #tpu.dot_dimension_numbers<[1], [0], [0], [1], [0, 0, 1, 1], [], []>} : vector<2x16xf32>, vector<16x128xf32>, vector<2x128xf32> -> vector<2x128xf32>
    %c0_63 = arith.constant 0 : index
    %210 = arith.index_cast %205 : i32 to index
    %c0_64 = arith.constant 0 : index
    %c0_65 = arith.constant 0 : index
    %211 = vector.load %arg2[%c0_63, %210, %c0_64, %c0_65] : memref<1x8x2x16xf32, #tpu.memory_space<vmem>>, vector<1x1x2x16xf32>
    %212 = vector.shape_cast %211 : vector<1x1x2x16xf32> to vector<2x16xf32>
    %cst_66 = arith.constant dense<0.000000e+00> : vector<2x128xf32>
    %213 = tpu.matmul %212, %4, %cst_66 {dimension_numbers = #tpu.dot_dimension_numbers<[1], [0], [0], [1], [0, 0, 1, 1], [], []>} : vector<2x16xf32>, vector<16x128xf32>, vector<2x128xf32> -> vector<2x128xf32>
    %214 = tpu.concatenate %162, %193 in 1 : vector<2x32xf32>, vector<2x32xf32> -> vector<2x64xf32>
    %cst_67 = arith.constant dense<0.000000e+00> : vector<2x256xf32>
    %215 = tpu.matmul %214, %5, %cst_67 {dimension_numbers = #tpu.dot_dimension_numbers<[1], [0], [0], [1], [0, 0, 1, 1], [], []>, precision = #tpu.contract_precision<fp32>} : vector<2x64xf32>, vector<64x256xf32>, vector<2x256xf32> -> vector<2x256xf32>
    %216 = vector.extract_strided_slice %215 {offsets = [0, 0], sizes = [2, 128], strides = [1, 1]} : vector<2x256xf32> to vector<2x128xf32>
    %217 = arith.addf %209, %216 : vector<2x128xf32>
    %218 = vector.extract_strided_slice %215 {offsets = [0, 128], sizes = [2, 128], strides = [1, 1]} : vector<2x256xf32> to vector<2x128xf32>
    %219 = arith.addf %213, %218 : vector<2x128xf32>
    %220 = arith.index_cast %c2_i32 : i32 to index
    %c0_68 = arith.constant 0 : index
    %c0_69 = arith.constant 0 : index
    %221 = vector.load %arg1[%220, %c0_68, %c0_69] : memref<8x2x1xf32, #tpu.memory_space<vmem>>, vector<1x2x1xf32>
    %222 = vector.shape_cast %221 : vector<1x2x1xf32> to vector<2x1xf32>
    %223 = vector.shape_cast %222 : vector<2x1xf32> to vector<2x1xf32>
    %224 = vector.broadcast %223 : vector<2x1xf32> to vector<2x32xf32>
    %225 = arith.index_cast %205 : i32 to index
    %c0_70 = arith.constant 0 : index
    %c0_71 = arith.constant 0 : index
    %226 = vector.load %arg1[%225, %c0_70, %c0_71] : memref<8x2x1xf32, #tpu.memory_space<vmem>>, vector<1x2x1xf32>
    %227 = vector.shape_cast %226 : vector<1x2x1xf32> to vector<2x1xf32>
    %228 = vector.shape_cast %227 : vector<2x1xf32> to vector<2x1xf32>
    %229 = vector.broadcast %228 : vector<2x1xf32> to vector<2x32xf32>
    %cst_72 = arith.constant 1.000000e+00 : f32
    %230 = vector.broadcast %cst_72 : f32 to vector<2x32xf32>
    %231 = arith.subf %230, %224 : vector<2x32xf32>
    %cst_73 = arith.constant 1.000000e+00 : f32
    %232 = vector.broadcast %cst_73 : f32 to vector<2x32xf32>
    %233 = arith.subf %232, %229 : vector<2x32xf32>
    %234 = vector.extract_strided_slice %217 {offsets = [0, 0], sizes = [2, 32], strides = [1, 1]} : vector<2x128xf32> to vector<2x32xf32>
    %235 = arith.negf %234 : vector<2x32xf32>
    %236 = math.exp %235 : vector<2x32xf32>
    %cst_74 = arith.constant 1.000000e+00 : f32
    %237 = vector.broadcast %cst_74 : f32 to vector<2x32xf32>
    %238 = arith.addf %237, %236 : vector<2x32xf32>
    %239 = arith.divf %237, %238 : vector<2x32xf32>
    %240 = vector.extract_strided_slice %217 {offsets = [0, 32], sizes = [2, 32], strides = [1, 1]} : vector<2x128xf32> to vector<2x32xf32>
    %241 = arith.negf %240 : vector<2x32xf32>
    %242 = math.exp %241 : vector<2x32xf32>
    %cst_75 = arith.constant 1.000000e+00 : f32
    %243 = vector.broadcast %cst_75 : f32 to vector<2x32xf32>
    %244 = arith.addf %243, %242 : vector<2x32xf32>
    %245 = arith.divf %243, %244 : vector<2x32xf32>
    %246 = vector.extract_strided_slice %217 {offsets = [0, 64], sizes = [2, 32], strides = [1, 1]} : vector<2x128xf32> to vector<2x32xf32>
    %247 = math.tanh %246 : vector<2x32xf32>
    %248 = vector.extract_strided_slice %217 {offsets = [0, 96], sizes = [2, 32], strides = [1, 1]} : vector<2x128xf32> to vector<2x32xf32>
    %249 = arith.negf %248 : vector<2x32xf32>
    %250 = math.exp %249 : vector<2x32xf32>
    %cst_76 = arith.constant 1.000000e+00 : f32
    %251 = vector.broadcast %cst_76 : f32 to vector<2x32xf32>
    %252 = arith.addf %251, %250 : vector<2x32xf32>
    %253 = arith.divf %251, %252 : vector<2x32xf32>
    %254 = arith.mulf %245, %165 : vector<2x32xf32>
    %255 = arith.mulf %239, %247 : vector<2x32xf32>
    %256 = arith.addf %254, %255 : vector<2x32xf32>
    %257 = math.tanh %256 : vector<2x32xf32>
    %258 = arith.mulf %253, %257 : vector<2x32xf32>
    %259 = arith.mulf %224, %258 : vector<2x32xf32>
    %260 = arith.mulf %231, %162 : vector<2x32xf32>
    %261 = arith.addf %259, %260 : vector<2x32xf32>
    %262 = arith.mulf %224, %256 : vector<2x32xf32>
    %263 = arith.mulf %231, %165 : vector<2x32xf32>
    %264 = arith.addf %262, %263 : vector<2x32xf32>
    %265 = vector.extract_strided_slice %219 {offsets = [0, 0], sizes = [2, 32], strides = [1, 1]} : vector<2x128xf32> to vector<2x32xf32>
    %266 = arith.negf %265 : vector<2x32xf32>
    %267 = math.exp %266 : vector<2x32xf32>
    %cst_77 = arith.constant 1.000000e+00 : f32
    %268 = vector.broadcast %cst_77 : f32 to vector<2x32xf32>
    %269 = arith.addf %268, %267 : vector<2x32xf32>
    %270 = arith.divf %268, %269 : vector<2x32xf32>
    %271 = vector.extract_strided_slice %219 {offsets = [0, 32], sizes = [2, 32], strides = [1, 1]} : vector<2x128xf32> to vector<2x32xf32>
    %272 = arith.negf %271 : vector<2x32xf32>
    %273 = math.exp %272 : vector<2x32xf32>
    %cst_78 = arith.constant 1.000000e+00 : f32
    %274 = vector.broadcast %cst_78 : f32 to vector<2x32xf32>
    %275 = arith.addf %274, %273 : vector<2x32xf32>
    %276 = arith.divf %274, %275 : vector<2x32xf32>
    %277 = vector.extract_strided_slice %219 {offsets = [0, 64], sizes = [2, 32], strides = [1, 1]} : vector<2x128xf32> to vector<2x32xf32>
    %278 = math.tanh %277 : vector<2x32xf32>
    %279 = vector.extract_strided_slice %219 {offsets = [0, 96], sizes = [2, 32], strides = [1, 1]} : vector<2x128xf32> to vector<2x32xf32>
    %280 = arith.negf %279 : vector<2x32xf32>
    %281 = math.exp %280 : vector<2x32xf32>
    %cst_79 = arith.constant 1.000000e+00 : f32
    %282 = vector.broadcast %cst_79 : f32 to vector<2x32xf32>
    %283 = arith.addf %282, %281 : vector<2x32xf32>
    %284 = arith.divf %282, %283 : vector<2x32xf32>
    %285 = arith.mulf %276, %196 : vector<2x32xf32>
    %286 = arith.mulf %270, %278 : vector<2x32xf32>
    %287 = arith.addf %285, %286 : vector<2x32xf32>
    %288 = math.tanh %287 : vector<2x32xf32>
    %289 = arith.mulf %284, %288 : vector<2x32xf32>
    %290 = arith.mulf %229, %289 : vector<2x32xf32>
    %291 = arith.mulf %233, %193 : vector<2x32xf32>
    %292 = arith.addf %290, %291 : vector<2x32xf32>
    %293 = arith.mulf %229, %287 : vector<2x32xf32>
    %294 = arith.mulf %233, %196 : vector<2x32xf32>
    %295 = arith.addf %293, %294 : vector<2x32xf32>
    %c0_80 = arith.constant 0 : index
    %296 = arith.index_cast %c2_i32 : i32 to index
    %c0_81 = arith.constant 0 : index
    %c0_82 = arith.constant 0 : index
    %297 = vector.load %arg5[%c0_80, %296, %c0_81, %c0_82] : memref<2x8x2x32xf32, #tpu.memory_space<vmem>>, vector<1x1x2x32xf32>
    %298 = vector.shape_cast %297 : vector<1x1x2x32xf32> to vector<2x32xf32>
    %299 = vector.shape_cast %259 : vector<2x32xf32> to vector<1x1x2x32xf32>
    tpu.vector_store %arg5[%c0_80, %296, %c0_81, %c0_82], %299 {strides = array<i32>} : memref<2x8x2x32xf32, #tpu.memory_space<vmem>>, vector<1x1x2x32xf32>,
    %c1_83 = arith.constant 1 : index
    %300 = arith.index_cast %205 : i32 to index
    %c0_84 = arith.constant 0 : index
    %c0_85 = arith.constant 0 : index
    %301 = vector.load %arg5[%c1_83, %300, %c0_84, %c0_85] : memref<2x8x2x32xf32, #tpu.memory_space<vmem>>, vector<1x1x2x32xf32>
    %302 = vector.shape_cast %301 : vector<1x1x2x32xf32> to vector<2x32xf32>
    %303 = vector.shape_cast %290 : vector<2x32xf32> to vector<1x1x2x32xf32>
    tpu.vector_store %arg5[%c1_83, %300, %c0_84, %c0_85], %303 {strides = array<i32>} : memref<2x8x2x32xf32, #tpu.memory_space<vmem>>, vector<1x1x2x32xf32>,
    %c3_i32 = arith.constant 3 : i32
    %c7_i32_86 = arith.constant 7 : i32
    %304 = arith.subi %c7_i32_86, %c3_i32 : i32
    %c0_87 = arith.constant 0 : index
    %305 = arith.index_cast %c3_i32 : i32 to index
    %c0_88 = arith.constant 0 : index
    %c0_89 = arith.constant 0 : index
    %306 = vector.load %arg2[%c0_87, %305, %c0_88, %c0_89] : memref<1x8x2x16xf32, #tpu.memory_space<vmem>>, vector<1x1x2x16xf32>
    %307 = vector.shape_cast %306 : vector<1x1x2x16xf32> to vector<2x16xf32>
    %cst_90 = arith.constant dense<0.000000e+00> : vector<2x128xf32>
    %308 = tpu.matmul %307, %2, %cst_90 {dimension_numbers = #tpu.dot_dimension_numbers<[1], [0], [0], [1], [0, 0, 1, 1], [], []>} : vector<2x16xf32>, vector<16x128xf32>, vector<2x128xf32> -> vector<2x128xf32>
    %c0_91 = arith.constant 0 : index
    %309 = arith.index_cast %304 : i32 to index
    %c0_92 = arith.constant 0 : index
    %c0_93 = arith.constant 0 : index
    %310 = vector.load %arg2[%c0_91, %309, %c0_92, %c0_93] : memref<1x8x2x16xf32, #tpu.memory_space<vmem>>, vector<1x1x2x16xf32>
    %311 = vector.shape_cast %310 : vector<1x1x2x16xf32> to vector<2x16xf32>
    %cst_94 = arith.constant dense<0.000000e+00> : vector<2x128xf32>
    %312 = tpu.matmul %311, %4, %cst_94 {dimension_numbers = #tpu.dot_dimension_numbers<[1], [0], [0], [1], [0, 0, 1, 1], [], []>} : vector<2x16xf32>, vector<16x128xf32>, vector<2x128xf32> -> vector<2x128xf32>
    %313 = tpu.concatenate %261, %292 in 1 : vector<2x32xf32>, vector<2x32xf32> -> vector<2x64xf32>
    %cst_95 = arith.constant dense<0.000000e+00> : vector<2x256xf32>
    %314 = tpu.matmul %313, %5, %cst_95 {dimension_numbers = #tpu.dot_dimension_numbers<[1], [0], [0], [1], [0, 0, 1, 1], [], []>, precision = #tpu.contract_precision<fp32>} : vector<2x64xf32>, vector<64x256xf32>, vector<2x256xf32> -> vector<2x256xf32>
    %315 = vector.extract_strided_slice %314 {offsets = [0, 0], sizes = [2, 128], strides = [1, 1]} : vector<2x256xf32> to vector<2x128xf32>
    %316 = arith.addf %308, %315 : vector<2x128xf32>
    %317 = vector.extract_strided_slice %314 {offsets = [0, 128], sizes = [2, 128], strides = [1, 1]} : vector<2x256xf32> to vector<2x128xf32>
    %318 = arith.addf %312, %317 : vector<2x128xf32>
    %319 = arith.index_cast %c3_i32 : i32 to index
    %c0_96 = arith.constant 0 : index
    %c0_97 = arith.constant 0 : index
    %320 = vector.load %arg1[%319, %c0_96, %c0_97] : memref<8x2x1xf32, #tpu.memory_space<vmem>>, vector<1x2x1xf32>
    %321 = vector.shape_cast %320 : vector<1x2x1xf32> to vector<2x1xf32>
    %322 = vector.shape_cast %321 : vector<2x1xf32> to vector<2x1xf32>
    %323 = vector.broadcast %322 : vector<2x1xf32> to vector<2x32xf32>
    %324 = arith.index_cast %304 : i32 to index
    %c0_98 = arith.constant 0 : index
    %c0_99 = arith.constant 0 : index
    %325 = vector.load %arg1[%324, %c0_98, %c0_99] : memref<8x2x1xf32, #tpu.memory_space<vmem>>, vector<1x2x1xf32>
    %326 = vector.shape_cast %325 : vector<1x2x1xf32> to vector<2x1xf32>
    %327 = vector.shape_cast %326 : vector<2x1xf32> to vector<2x1xf32>
    %328 = vector.broadcast %327 : vector<2x1xf32> to vector<2x32xf32>
    %cst_100 = arith.constant 1.000000e+00 : f32
    %329 = vector.broadcast %cst_100 : f32 to vector<2x32xf32>
    %330 = arith.subf %329, %323 : vector<2x32xf32>
    %cst_101 = arith.constant 1.000000e+00 : f32
    %331 = vector.broadcast %cst_101 : f32 to vector<2x32xf32>
    %332 = arith.subf %331, %328 : vector<2x32xf32>
    %333 = vector.extract_strided_slice %316 {offsets = [0, 0], sizes = [2, 32], strides = [1, 1]} : vector<2x128xf32> to vector<2x32xf32>
    %334 = arith.negf %333 : vector<2x32xf32>
    %335 = math.exp %334 : vector<2x32xf32>
    %cst_102 = arith.constant 1.000000e+00 : f32
    %336 = vector.broadcast %cst_102 : f32 to vector<2x32xf32>
    %337 = arith.addf %336, %335 : vector<2x32xf32>
    %338 = arith.divf %336, %337 : vector<2x32xf32>
    %339 = vector.extract_strided_slice %316 {offsets = [0, 32], sizes = [2, 32], strides = [1, 1]} : vector<2x128xf32> to vector<2x32xf32>
    %340 = arith.negf %339 : vector<2x32xf32>
    %341 = math.exp %340 : vector<2x32xf32>
    %cst_103 = arith.constant 1.000000e+00 : f32
    %342 = vector.broadcast %cst_103 : f32 to vector<2x32xf32>
    %343 = arith.addf %342, %341 : vector<2x32xf32>
    %344 = arith.divf %342, %343 : vector<2x32xf32>
    %345 = vector.extract_strided_slice %316 {offsets = [0, 64], sizes = [2, 32], strides = [1, 1]} : vector<2x128xf32> to vector<2x32xf32>
    %346 = math.tanh %345 : vector<2x32xf32>
    %347 = vector.extract_strided_slice %316 {offsets = [0, 96], sizes = [2, 32], strides = [1, 1]} : vector<2x128xf32> to vector<2x32xf32>
    %348 = arith.negf %347 : vector<2x32xf32>
    %349 = math.exp %348 : vector<2x32xf32>
    %cst_104 = arith.constant 1.000000e+00 : f32
    %350 = vector.broadcast %cst_104 : f32 to vector<2x32xf32>
    %351 = arith.addf %350, %349 : vector<2x32xf32>
    %352 = arith.divf %350, %351 : vector<2x32xf32>
    %353 = arith.mulf %344, %264 : vector<2x32xf32>
    %354 = arith.mulf %338, %346 : vector<2x32xf32>
    %355 = arith.addf %353, %354 : vector<2x32xf32>
    %356 = math.tanh %355 : vector<2x32xf32>
    %357 = arith.mulf %352, %356 : vector<2x32xf32>
    %358 = arith.mulf %323, %357 : vector<2x32xf32>
    %359 = arith.mulf %330, %261 : vector<2x32xf32>
    %360 = arith.addf %358, %359 : vector<2x32xf32>
    %361 = arith.mulf %323, %355 : vector<2x32xf32>
    %362 = arith.mulf %330, %264 : vector<2x32xf32>
    %363 = arith.addf %361, %362 : vector<2x32xf32>
    %364 = vector.extract_strided_slice %318 {offsets = [0, 0], sizes = [2, 32], strides = [1, 1]} : vector<2x128xf32> to vector<2x32xf32>
    %365 = arith.negf %364 : vector<2x32xf32>
    %366 = math.exp %365 : vector<2x32xf32>
    %cst_105 = arith.constant 1.000000e+00 : f32
    %367 = vector.broadcast %cst_105 : f32 to vector<2x32xf32>
    %368 = arith.addf %367, %366 : vector<2x32xf32>
    %369 = arith.divf %367, %368 : vector<2x32xf32>
    %370 = vector.extract_strided_slice %318 {offsets = [0, 32], sizes = [2, 32], strides = [1, 1]} : vector<2x128xf32> to vector<2x32xf32>
    %371 = arith.negf %370 : vector<2x32xf32>
    %372 = math.exp %371 : vector<2x32xf32>
    %cst_106 = arith.constant 1.000000e+00 : f32
    %373 = vector.broadcast %cst_106 : f32 to vector<2x32xf32>
    %374 = arith.addf %373, %372 : vector<2x32xf32>
    %375 = arith.divf %373, %374 : vector<2x32xf32>
    %376 = vector.extract_strided_slice %318 {offsets = [0, 64], sizes = [2, 32], strides = [1, 1]} : vector<2x128xf32> to vector<2x32xf32>
    %377 = math.tanh %376 : vector<2x32xf32>
    %378 = vector.extract_strided_slice %318 {offsets = [0, 96], sizes = [2, 32], strides = [1, 1]} : vector<2x128xf32> to vector<2x32xf32>
    %379 = arith.negf %378 : vector<2x32xf32>
    %380 = math.exp %379 : vector<2x32xf32>
    %cst_107 = arith.constant 1.000000e+00 : f32
    %381 = vector.broadcast %cst_107 : f32 to vector<2x32xf32>
    %382 = arith.addf %381, %380 : vector<2x32xf32>
    %383 = arith.divf %381, %382 : vector<2x32xf32>
    %384 = arith.mulf %375, %295 : vector<2x32xf32>
    %385 = arith.mulf %369, %377 : vector<2x32xf32>
    %386 = arith.addf %384, %385 : vector<2x32xf32>
    %387 = math.tanh %386 : vector<2x32xf32>
    %388 = arith.mulf %383, %387 : vector<2x32xf32>
    %389 = arith.mulf %328, %388 : vector<2x32xf32>
    %390 = arith.mulf %332, %292 : vector<2x32xf32>
    %391 = arith.addf %389, %390 : vector<2x32xf32>
    %392 = arith.mulf %328, %386 : vector<2x32xf32>
    %393 = arith.mulf %332, %295 : vector<2x32xf32>
    %394 = arith.addf %392, %393 : vector<2x32xf32>
    %c0_108 = arith.constant 0 : index
    %395 = arith.index_cast %c3_i32 : i32 to index
    %c0_109 = arith.constant 0 : index
    %c0_110 = arith.constant 0 : index
    %396 = vector.load %arg5[%c0_108, %395, %c0_109, %c0_110] : memref<2x8x2x32xf32, #tpu.memory_space<vmem>>, vector<1x1x2x32xf32>
    %397 = vector.shape_cast %396 : vector<1x1x2x32xf32> to vector<2x32xf32>
    %398 = vector.shape_cast %358 : vector<2x32xf32> to vector<1x1x2x32xf32>
    tpu.vector_store %arg5[%c0_108, %395, %c0_109, %c0_110], %398 {strides = array<i32>} : memref<2x8x2x32xf32, #tpu.memory_space<vmem>>, vector<1x1x2x32xf32>,
    %c1_111 = arith.constant 1 : index
    %399 = arith.index_cast %304 : i32 to index
    %c0_112 = arith.constant 0 : index
    %c0_113 = arith.constant 0 : index
    %400 = vector.load %arg5[%c1_111, %399, %c0_112, %c0_113] : memref<2x8x2x32xf32, #tpu.memory_space<vmem>>, vector<1x1x2x32xf32>
    %401 = vector.shape_cast %400 : vector<1x1x2x32xf32> to vector<2x32xf32>
    %402 = vector.shape_cast %389 : vector<2x32xf32> to vector<1x1x2x32xf32>
    tpu.vector_store %arg5[%c1_111, %399, %c0_112, %c0_113], %402 {strides = array<i32>} : memref<2x8x2x32xf32, #tpu.memory_space<vmem>>, vector<1x1x2x32xf32>,
    %c4_i32 = arith.constant 4 : i32
    %c7_i32_114 = arith.constant 7 : i32
    %403 = arith.subi %c7_i32_114, %c4_i32 : i32
    %c0_115 = arith.constant 0 : index
    %404 = arith.index_cast %c4_i32 : i32 to index
    %c0_116 = arith.constant 0 : index
    %c0_117 = arith.constant 0 : index
    %405 = vector.load %arg2[%c0_115, %404, %c0_116, %c0_117] : memref<1x8x2x16xf32, #tpu.memory_space<vmem>>, vector<1x1x2x16xf32>
    %406 = vector.shape_cast %405 : vector<1x1x2x16xf32> to vector<2x16xf32>
    %cst_118 = arith.constant dense<0.000000e+00> : vector<2x128xf32>
    %407 = tpu.matmul %406, %2, %cst_118 {dimension_numbers = #tpu.dot_dimension_numbers<[1], [0], [0], [1], [0, 0, 1, 1], [], []>} : vector<2x16xf32>, vector<16x128xf32>, vector<2x128xf32> -> vector<2x128xf32>
    %c0_119 = arith.constant 0 : index
    %408 = arith.index_cast %403 : i32 to index
    %c0_120 = arith.constant 0 : index
    %c0_121 = arith.constant 0 : index
    %409 = vector.load %arg2[%c0_119, %408, %c0_120, %c0_121] : memref<1x8x2x16xf32, #tpu.memory_space<vmem>>, vector<1x1x2x16xf32>
    %410 = vector.shape_cast %409 : vector<1x1x2x16xf32> to vector<2x16xf32>
    %cst_122 = arith.constant dense<0.000000e+00> : vector<2x128xf32>
    %411 = tpu.matmul %410, %4, %cst_122 {dimension_numbers = #tpu.dot_dimension_numbers<[1], [0], [0], [1], [0, 0, 1, 1], [], []>} : vector<2x16xf32>, vector<16x128xf32>, vector<2x128xf32> -> vector<2x128xf32>
    %412 = tpu.concatenate %360, %391 in 1 : vector<2x32xf32>, vector<2x32xf32> -> vector<2x64xf32>
    %cst_123 = arith.constant dense<0.000000e+00> : vector<2x256xf32>
    %413 = tpu.matmul %412, %5, %cst_123 {dimension_numbers = #tpu.dot_dimension_numbers<[1], [0], [0], [1], [0, 0, 1, 1], [], []>, precision = #tpu.contract_precision<fp32>} : vector<2x64xf32>, vector<64x256xf32>, vector<2x256xf32> -> vector<2x256xf32>
    %414 = vector.extract_strided_slice %413 {offsets = [0, 0], sizes = [2, 128], strides = [1, 1]} : vector<2x256xf32> to vector<2x128xf32>
    %415 = arith.addf %407, %414 : vector<2x128xf32>
    %416 = vector.extract_strided_slice %413 {offsets = [0, 128], sizes = [2, 128], strides = [1, 1]} : vector<2x256xf32> to vector<2x128xf32>
    %417 = arith.addf %411, %416 : vector<2x128xf32>
    %418 = arith.index_cast %c4_i32 : i32 to index
    %c0_124 = arith.constant 0 : index
    %c0_125 = arith.constant 0 : index
    %419 = vector.load %arg1[%418, %c0_124, %c0_125] : memref<8x2x1xf32, #tpu.memory_space<vmem>>, vector<1x2x1xf32>
    %420 = vector.shape_cast %419 : vector<1x2x1xf32> to vector<2x1xf32>
    %421 = vector.shape_cast %420 : vector<2x1xf32> to vector<2x1xf32>
    %422 = vector.broadcast %421 : vector<2x1xf32> to vector<2x32xf32>
    %423 = arith.index_cast %403 : i32 to index
    %c0_126 = arith.constant 0 : index
    %c0_127 = arith.constant 0 : index
    %424 = vector.load %arg1[%423, %c0_126, %c0_127] : memref<8x2x1xf32, #tpu.memory_space<vmem>>, vector<1x2x1xf32>
    %425 = vector.shape_cast %424 : vector<1x2x1xf32> to vector<2x1xf32>
    %426 = vector.shape_cast %425 : vector<2x1xf32> to vector<2x1xf32>
    %427 = vector.broadcast %426 : vector<2x1xf32> to vector<2x32xf32>
    %cst_128 = arith.constant 1.000000e+00 : f32
    %428 = vector.broadcast %cst_128 : f32 to vector<2x32xf32>
    %429 = arith.subf %428, %422 : vector<2x32xf32>
    %cst_129 = arith.constant 1.000000e+00 : f32
    %430 = vector.broadcast %cst_129 : f32 to vector<2x32xf32>
    %431 = arith.subf %430, %427 : vector<2x32xf32>
    %432 = vector.extract_strided_slice %415 {offsets = [0, 0], sizes = [2, 32], strides = [1, 1]} : vector<2x128xf32> to vector<2x32xf32>
    %433 = arith.negf %432 : vector<2x32xf32>
    %434 = math.exp %433 : vector<2x32xf32>
    %cst_130 = arith.constant 1.000000e+00 : f32
    %435 = vector.broadcast %cst_130 : f32 to vector<2x32xf32>
    %436 = arith.addf %435, %434 : vector<2x32xf32>
    %437 = arith.divf %435, %436 : vector<2x32xf32>
    %438 = vector.extract_strided_slice %415 {offsets = [0, 32], sizes = [2, 32], strides = [1, 1]} : vector<2x128xf32> to vector<2x32xf32>
    %439 = arith.negf %438 : vector<2x32xf32>
    %440 = math.exp %439 : vector<2x32xf32>
    %cst_131 = arith.constant 1.000000e+00 : f32
    %441 = vector.broadcast %cst_131 : f32 to vector<2x32xf32>
    %442 = arith.addf %441, %440 : vector<2x32xf32>
    %443 = arith.divf %441, %442 : vector<2x32xf32>
    %444 = vector.extract_strided_slice %415 {offsets = [0, 64], sizes = [2, 32], strides = [1, 1]} : vector<2x128xf32> to vector<2x32xf32>
    %445 = math.tanh %444 : vector<2x32xf32>
    %446 = vector.extract_strided_slice %415 {offsets = [0, 96], sizes = [2, 32], strides = [1, 1]} : vector<2x128xf32> to vector<2x32xf32>
    %447 = arith.negf %446 : vector<2x32xf32>
    %448 = math.exp %447 : vector<2x32xf32>
    %cst_132 = arith.constant 1.000000e+00 : f32
    %449 = vector.broadcast %cst_132 : f32 to vector<2x32xf32>
    %450 = arith.addf %449, %448 : vector<2x32xf32>
    %451 = arith.divf %449, %450 : vector<2x32xf32>
    %452 = arith.mulf %443, %363 : vector<2x32xf32>
    %453 = arith.mulf %437, %445 : vector<2x32xf32>
    %454 = arith.addf %452, %453 : vector<2x32xf32>
    %455 = math.tanh %454 : vector<2x32xf32>
    %456 = arith.mulf %451, %455 : vector<2x32xf32>
    %457 = arith.mulf %422, %456 : vector<2x32xf32>
    %458 = arith.mulf %429, %360 : vector<2x32xf32>
    %459 = arith.addf %457, %458 : vector<2x32xf32>
    %460 = arith.mulf %422, %454 : vector<2x32xf32>
    %461 = arith.mulf %429, %363 : vector<2x32xf32>
    %462 = arith.addf %460, %461 : vector<2x32xf32>
    %463 = vector.extract_strided_slice %417 {offsets = [0, 0], sizes = [2, 32], strides = [1, 1]} : vector<2x128xf32> to vector<2x32xf32>
    %464 = arith.negf %463 : vector<2x32xf32>
    %465 = math.exp %464 : vector<2x32xf32>
    %cst_133 = arith.constant 1.000000e+00 : f32
    %466 = vector.broadcast %cst_133 : f32 to vector<2x32xf32>
    %467 = arith.addf %466, %465 : vector<2x32xf32>
    %468 = arith.divf %466, %467 : vector<2x32xf32>
    %469 = vector.extract_strided_slice %417 {offsets = [0, 32], sizes = [2, 32], strides = [1, 1]} : vector<2x128xf32> to vector<2x32xf32>
    %470 = arith.negf %469 : vector<2x32xf32>
    %471 = math.exp %470 : vector<2x32xf32>
    %cst_134 = arith.constant 1.000000e+00 : f32
    %472 = vector.broadcast %cst_134 : f32 to vector<2x32xf32>
    %473 = arith.addf %472, %471 : vector<2x32xf32>
    %474 = arith.divf %472, %473 : vector<2x32xf32>
    %475 = vector.extract_strided_slice %417 {offsets = [0, 64], sizes = [2, 32], strides = [1, 1]} : vector<2x128xf32> to vector<2x32xf32>
    %476 = math.tanh %475 : vector<2x32xf32>
    %477 = vector.extract_strided_slice %417 {offsets = [0, 96], sizes = [2, 32], strides = [1, 1]} : vector<2x128xf32> to vector<2x32xf32>
    %478 = arith.negf %477 : vector<2x32xf32>
    %479 = math.exp %478 : vector<2x32xf32>
    %cst_135 = arith.constant 1.000000e+00 : f32
    %480 = vector.broadcast %cst_135 : f32 to vector<2x32xf32>
    %481 = arith.addf %480, %479 : vector<2x32xf32>
    %482 = arith.divf %480, %481 : vector<2x32xf32>
    %483 = arith.mulf %474, %394 : vector<2x32xf32>
    %484 = arith.mulf %468, %476 : vector<2x32xf32>
    %485 = arith.addf %483, %484 : vector<2x32xf32>
    %486 = math.tanh %485 : vector<2x32xf32>
    %487 = arith.mulf %482, %486 : vector<2x32xf32>
    %488 = arith.mulf %427, %487 : vector<2x32xf32>
    %489 = arith.mulf %431, %391 : vector<2x32xf32>
    %490 = arith.addf %488, %489 : vector<2x32xf32>
    %491 = arith.mulf %427, %485 : vector<2x32xf32>
    %492 = arith.mulf %431, %394 : vector<2x32xf32>
    %493 = arith.addf %491, %492 : vector<2x32xf32>
    %c0_136 = arith.constant 0 : index
    %494 = arith.index_cast %c4_i32 : i32 to index
    %c0_137 = arith.constant 0 : index
    %c0_138 = arith.constant 0 : index
    %495 = vector.load %arg5[%c0_136, %494, %c0_137, %c0_138] : memref<2x8x2x32xf32, #tpu.memory_space<vmem>>, vector<1x1x2x32xf32>
    %496 = vector.shape_cast %495 : vector<1x1x2x32xf32> to vector<2x32xf32>
    %497 = vector.shape_cast %457 : vector<2x32xf32> to vector<1x1x2x32xf32>
    tpu.vector_store %arg5[%c0_136, %494, %c0_137, %c0_138], %497 {strides = array<i32>} : memref<2x8x2x32xf32, #tpu.memory_space<vmem>>, vector<1x1x2x32xf32>,
    %c1_139 = arith.constant 1 : index
    %498 = arith.index_cast %403 : i32 to index
    %c0_140 = arith.constant 0 : index
    %c0_141 = arith.constant 0 : index
    %499 = vector.load %arg5[%c1_139, %498, %c0_140, %c0_141] : memref<2x8x2x32xf32, #tpu.memory_space<vmem>>, vector<1x1x2x32xf32>
    %500 = vector.shape_cast %499 : vector<1x1x2x32xf32> to vector<2x32xf32>
    %501 = vector.shape_cast %488 : vector<2x32xf32> to vector<1x1x2x32xf32>
    tpu.vector_store %arg5[%c1_139, %498, %c0_140, %c0_141], %501 {strides = array<i32>} : memref<2x8x2x32xf32, #tpu.memory_space<vmem>>, vector<1x1x2x32xf32>,
    %c5_i32 = arith.constant 5 : i32
    %c7_i32_142 = arith.constant 7 : i32
    %502 = arith.subi %c7_i32_142, %c5_i32 : i32
    %c0_143 = arith.constant 0 : index
    %503 = arith.index_cast %c5_i32 : i32 to index
    %c0_144 = arith.constant 0 : index
    %c0_145 = arith.constant 0 : index
    %504 = vector.load %arg2[%c0_143, %503, %c0_144, %c0_145] : memref<1x8x2x16xf32, #tpu.memory_space<vmem>>, vector<1x1x2x16xf32>
    %505 = vector.shape_cast %504 : vector<1x1x2x16xf32> to vector<2x16xf32>
    %cst_146 = arith.constant dense<0.000000e+00> : vector<2x128xf32>
    %506 = tpu.matmul %505, %2, %cst_146 {dimension_numbers = #tpu.dot_dimension_numbers<[1], [0], [0], [1], [0, 0, 1, 1], [], []>} : vector<2x16xf32>, vector<16x128xf32>, vector<2x128xf32> -> vector<2x128xf32>
    %c0_147 = arith.constant 0 : index
    %507 = arith.index_cast %502 : i32 to index
    %c0_148 = arith.constant 0 : index
    %c0_149 = arith.constant 0 : index
    %508 = vector.load %arg2[%c0_147, %507, %c0_148, %c0_149] : memref<1x8x2x16xf32, #tpu.memory_space<vmem>>, vector<1x1x2x16xf32>
    %509 = vector.shape_cast %508 : vector<1x1x2x16xf32> to vector<2x16xf32>
    %cst_150 = arith.constant dense<0.000000e+00> : vector<2x128xf32>
    %510 = tpu.matmul %509, %4, %cst_150 {dimension_numbers = #tpu.dot_dimension_numbers<[1], [0], [0], [1], [0, 0, 1, 1], [], []>} : vector<2x16xf32>, vector<16x128xf32>, vector<2x128xf32> -> vector<2x128xf32>
    %511 = tpu.concatenate %459, %490 in 1 : vector<2x32xf32>, vector<2x32xf32> -> vector<2x64xf32>
    %cst_151 = arith.constant dense<0.000000e+00> : vector<2x256xf32>
    %512 = tpu.matmul %511, %5, %cst_151 {dimension_numbers = #tpu.dot_dimension_numbers<[1], [0], [0], [1], [0, 0, 1, 1], [], []>, precision = #tpu.contract_precision<fp32>} : vector<2x64xf32>, vector<64x256xf32>, vector<2x256xf32> -> vector<2x256xf32>
    %513 = vector.extract_strided_slice %512 {offsets = [0, 0], sizes = [2, 128], strides = [1, 1]} : vector<2x256xf32> to vector<2x128xf32>
    %514 = arith.addf %506, %513 : vector<2x128xf32>
    %515 = vector.extract_strided_slice %512 {offsets = [0, 128], sizes = [2, 128], strides = [1, 1]} : vector<2x256xf32> to vector<2x128xf32>
    %516 = arith.addf %510, %515 : vector<2x128xf32>
    %517 = arith.index_cast %c5_i32 : i32 to index
    %c0_152 = arith.constant 0 : index
    %c0_153 = arith.constant 0 : index
    %518 = vector.load %arg1[%517, %c0_152, %c0_153] : memref<8x2x1xf32, #tpu.memory_space<vmem>>, vector<1x2x1xf32>
    %519 = vector.shape_cast %518 : vector<1x2x1xf32> to vector<2x1xf32>
    %520 = vector.shape_cast %519 : vector<2x1xf32> to vector<2x1xf32>
    %521 = vector.broadcast %520 : vector<2x1xf32> to vector<2x32xf32>
    %522 = arith.index_cast %502 : i32 to index
    %c0_154 = arith.constant 0 : index
    %c0_155 = arith.constant 0 : index
    %523 = vector.load %arg1[%522, %c0_154, %c0_155] : memref<8x2x1xf32, #tpu.memory_space<vmem>>, vector<1x2x1xf32>
    %524 = vector.shape_cast %523 : vector<1x2x1xf32> to vector<2x1xf32>
    %525 = vector.shape_cast %524 : vector<2x1xf32> to vector<2x1xf32>
    %526 = vector.broadcast %525 : vector<2x1xf32> to vector<2x32xf32>
    %cst_156 = arith.constant 1.000000e+00 : f32
    %527 = vector.broadcast %cst_156 : f32 to vector<2x32xf32>
    %528 = arith.subf %527, %521 : vector<2x32xf32>
    %cst_157 = arith.constant 1.000000e+00 : f32
    %529 = vector.broadcast %cst_157 : f32 to vector<2x32xf32>
    %530 = arith.subf %529, %526 : vector<2x32xf32>
    %531 = vector.extract_strided_slice %514 {offsets = [0, 0], sizes = [2, 32], strides = [1, 1]} : vector<2x128xf32> to vector<2x32xf32>
    %532 = arith.negf %531 : vector<2x32xf32>
    %533 = math.exp %532 : vector<2x32xf32>
    %cst_158 = arith.constant 1.000000e+00 : f32
    %534 = vector.broadcast %cst_158 : f32 to vector<2x32xf32>
    %535 = arith.addf %534, %533 : vector<2x32xf32>
    %536 = arith.divf %534, %535 : vector<2x32xf32>
    %537 = vector.extract_strided_slice %514 {offsets = [0, 32], sizes = [2, 32], strides = [1, 1]} : vector<2x128xf32> to vector<2x32xf32>
    %538 = arith.negf %537 : vector<2x32xf32>
    %539 = math.exp %538 : vector<2x32xf32>
    %cst_159 = arith.constant 1.000000e+00 : f32
    %540 = vector.broadcast %cst_159 : f32 to vector<2x32xf32>
    %541 = arith.addf %540, %539 : vector<2x32xf32>
    %542 = arith.divf %540, %541 : vector<2x32xf32>
    %543 = vector.extract_strided_slice %514 {offsets = [0, 64], sizes = [2, 32], strides = [1, 1]} : vector<2x128xf32> to vector<2x32xf32>
    %544 = math.tanh %543 : vector<2x32xf32>
    %545 = vector.extract_strided_slice %514 {offsets = [0, 96], sizes = [2, 32], strides = [1, 1]} : vector<2x128xf32> to vector<2x32xf32>
    %546 = arith.negf %545 : vector<2x32xf32>
    %547 = math.exp %546 : vector<2x32xf32>
    %cst_160 = arith.constant 1.000000e+00 : f32
    %548 = vector.broadcast %cst_160 : f32 to vector<2x32xf32>
    %549 = arith.addf %548, %547 : vector<2x32xf32>
    %550 = arith.divf %548, %549 : vector<2x32xf32>
    %551 = arith.mulf %542, %462 : vector<2x32xf32>
    %552 = arith.mulf %536, %544 : vector<2x32xf32>
    %553 = arith.addf %551, %552 : vector<2x32xf32>
    %554 = math.tanh %553 : vector<2x32xf32>
    %555 = arith.mulf %550, %554 : vector<2x32xf32>
    %556 = arith.mulf %521, %555 : vector<2x32xf32>
    %557 = arith.mulf %528, %459 : vector<2x32xf32>
    %558 = arith.addf %556, %557 : vector<2x32xf32>
    %559 = arith.mulf %521, %553 : vector<2x32xf32>
    %560 = arith.mulf %528, %462 : vector<2x32xf32>
    %561 = arith.addf %559, %560 : vector<2x32xf32>
    %562 = vector.extract_strided_slice %516 {offsets = [0, 0], sizes = [2, 32], strides = [1, 1]} : vector<2x128xf32> to vector<2x32xf32>
    %563 = arith.negf %562 : vector<2x32xf32>
    %564 = math.exp %563 : vector<2x32xf32>
    %cst_161 = arith.constant 1.000000e+00 : f32
    %565 = vector.broadcast %cst_161 : f32 to vector<2x32xf32>
    %566 = arith.addf %565, %564 : vector<2x32xf32>
    %567 = arith.divf %565, %566 : vector<2x32xf32>
    %568 = vector.extract_strided_slice %516 {offsets = [0, 32], sizes = [2, 32], strides = [1, 1]} : vector<2x128xf32> to vector<2x32xf32>
    %569 = arith.negf %568 : vector<2x32xf32>
    %570 = math.exp %569 : vector<2x32xf32>
    %cst_162 = arith.constant 1.000000e+00 : f32
    %571 = vector.broadcast %cst_162 : f32 to vector<2x32xf32>
    %572 = arith.addf %571, %570 : vector<2x32xf32>
    %573 = arith.divf %571, %572 : vector<2x32xf32>
    %574 = vector.extract_strided_slice %516 {offsets = [0, 64], sizes = [2, 32], strides = [1, 1]} : vector<2x128xf32> to vector<2x32xf32>
    %575 = math.tanh %574 : vector<2x32xf32>
    %576 = vector.extract_strided_slice %516 {offsets = [0, 96], sizes = [2, 32], strides = [1, 1]} : vector<2x128xf32> to vector<2x32xf32>
    %577 = arith.negf %576 : vector<2x32xf32>
    %578 = math.exp %577 : vector<2x32xf32>
    %cst_163 = arith.constant 1.000000e+00 : f32
    %579 = vector.broadcast %cst_163 : f32 to vector<2x32xf32>
    %580 = arith.addf %579, %578 : vector<2x32xf32>
    %581 = arith.divf %579, %580 : vector<2x32xf32>
    %582 = arith.mulf %573, %493 : vector<2x32xf32>
    %583 = arith.mulf %567, %575 : vector<2x32xf32>
    %584 = arith.addf %582, %583 : vector<2x32xf32>
    %585 = math.tanh %584 : vector<2x32xf32>
    %586 = arith.mulf %581, %585 : vector<2x32xf32>
    %587 = arith.mulf %526, %586 : vector<2x32xf32>
    %588 = arith.mulf %530, %490 : vector<2x32xf32>
    %589 = arith.addf %587, %588 : vector<2x32xf32>
    %590 = arith.mulf %526, %584 : vector<2x32xf32>
    %591 = arith.mulf %530, %493 : vector<2x32xf32>
    %592 = arith.addf %590, %591 : vector<2x32xf32>
    %c0_164 = arith.constant 0 : index
    %593 = arith.index_cast %c5_i32 : i32 to index
    %c0_165 = arith.constant 0 : index
    %c0_166 = arith.constant 0 : index
    %594 = vector.load %arg5[%c0_164, %593, %c0_165, %c0_166] : memref<2x8x2x32xf32, #tpu.memory_space<vmem>>, vector<1x1x2x32xf32>
    %595 = vector.shape_cast %594 : vector<1x1x2x32xf32> to vector<2x32xf32>
    %596 = vector.shape_cast %556 : vector<2x32xf32> to vector<1x1x2x32xf32>
    tpu.vector_store %arg5[%c0_164, %593, %c0_165, %c0_166], %596 {strides = array<i32>} : memref<2x8x2x32xf32, #tpu.memory_space<vmem>>, vector<1x1x2x32xf32>,
    %c1_167 = arith.constant 1 : index
    %597 = arith.index_cast %502 : i32 to index
    %c0_168 = arith.constant 0 : index
    %c0_169 = arith.constant 0 : index
    %598 = vector.load %arg5[%c1_167, %597, %c0_168, %c0_169] : memref<2x8x2x32xf32, #tpu.memory_space<vmem>>, vector<1x1x2x32xf32>
    %599 = vector.shape_cast %598 : vector<1x1x2x32xf32> to vector<2x32xf32>
    %600 = vector.shape_cast %587 : vector<2x32xf32> to vector<1x1x2x32xf32>
    tpu.vector_store %arg5[%c1_167, %597, %c0_168, %c0_169], %600 {strides = array<i32>} : memref<2x8x2x32xf32, #tpu.memory_space<vmem>>, vector<1x1x2x32xf32>,
    %c6_i32 = arith.constant 6 : i32
    %c7_i32_170 = arith.constant 7 : i32
    %601 = arith.subi %c7_i32_170, %c6_i32 : i32
    %c0_171 = arith.constant 0 : index
    %602 = arith.index_cast %c6_i32 : i32 to index
    %c0_172 = arith.constant 0 : index
    %c0_173 = arith.constant 0 : index
    %603 = vector.load %arg2[%c0_171, %602, %c0_172, %c0_173] : memref<1x8x2x16xf32, #tpu.memory_space<vmem>>, vector<1x1x2x16xf32>
    %604 = vector.shape_cast %603 : vector<1x1x2x16xf32> to vector<2x16xf32>
    %cst_174 = arith.constant dense<0.000000e+00> : vector<2x128xf32>
    %605 = tpu.matmul %604, %2, %cst_174 {dimension_numbers = #tpu.dot_dimension_numbers<[1], [0], [0], [1], [0, 0, 1, 1], [], []>} : vector<2x16xf32>, vector<16x128xf32>, vector<2x128xf32> -> vector<2x128xf32>
    %c0_175 = arith.constant 0 : index
    %606 = arith.index_cast %601 : i32 to index
    %c0_176 = arith.constant 0 : index
    %c0_177 = arith.constant 0 : index
    %607 = vector.load %arg2[%c0_175, %606, %c0_176, %c0_177] : memref<1x8x2x16xf32, #tpu.memory_space<vmem>>, vector<1x1x2x16xf32>
    %608 = vector.shape_cast %607 : vector<1x1x2x16xf32> to vector<2x16xf32>
    %cst_178 = arith.constant dense<0.000000e+00> : vector<2x128xf32>
    %609 = tpu.matmul %608, %4, %cst_178 {dimension_numbers = #tpu.dot_dimension_numbers<[1], [0], [0], [1], [0, 0, 1, 1], [], []>} : vector<2x16xf32>, vector<16x128xf32>, vector<2x128xf32> -> vector<2x128xf32>
    %610 = tpu.concatenate %558, %589 in 1 : vector<2x32xf32>, vector<2x32xf32> -> vector<2x64xf32>
    %cst_179 = arith.constant dense<0.000000e+00> : vector<2x256xf32>
    %611 = tpu.matmul %610, %5, %cst_179 {dimension_numbers = #tpu.dot_dimension_numbers<[1], [0], [0], [1], [0, 0, 1, 1], [], []>, precision = #tpu.contract_precision<fp32>} : vector<2x64xf32>, vector<64x256xf32>, vector<2x256xf32> -> vector<2x256xf32>
    %612 = vector.extract_strided_slice %611 {offsets = [0, 0], sizes = [2, 128], strides = [1, 1]} : vector<2x256xf32> to vector<2x128xf32>
    %613 = arith.addf %605, %612 : vector<2x128xf32>
    %614 = vector.extract_strided_slice %611 {offsets = [0, 128], sizes = [2, 128], strides = [1, 1]} : vector<2x256xf32> to vector<2x128xf32>
    %615 = arith.addf %609, %614 : vector<2x128xf32>
    %616 = arith.index_cast %c6_i32 : i32 to index
    %c0_180 = arith.constant 0 : index
    %c0_181 = arith.constant 0 : index
    %617 = vector.load %arg1[%616, %c0_180, %c0_181] : memref<8x2x1xf32, #tpu.memory_space<vmem>>, vector<1x2x1xf32>
    %618 = vector.shape_cast %617 : vector<1x2x1xf32> to vector<2x1xf32>
    %619 = vector.shape_cast %618 : vector<2x1xf32> to vector<2x1xf32>
    %620 = vector.broadcast %619 : vector<2x1xf32> to vector<2x32xf32>
    %621 = arith.index_cast %601 : i32 to index
    %c0_182 = arith.constant 0 : index
    %c0_183 = arith.constant 0 : index
    %622 = vector.load %arg1[%621, %c0_182, %c0_183] : memref<8x2x1xf32, #tpu.memory_space<vmem>>, vector<1x2x1xf32>
    %623 = vector.shape_cast %622 : vector<1x2x1xf32> to vector<2x1xf32>
    %624 = vector.shape_cast %623 : vector<2x1xf32> to vector<2x1xf32>
    %625 = vector.broadcast %624 : vector<2x1xf32> to vector<2x32xf32>
    %cst_184 = arith.constant 1.000000e+00 : f32
    %626 = vector.broadcast %cst_184 : f32 to vector<2x32xf32>
    %627 = arith.subf %626, %620 : vector<2x32xf32>
    %cst_185 = arith.constant 1.000000e+00 : f32
    %628 = vector.broadcast %cst_185 : f32 to vector<2x32xf32>
    %629 = arith.subf %628, %625 : vector<2x32xf32>
    %630 = vector.extract_strided_slice %613 {offsets = [0, 0], sizes = [2, 32], strides = [1, 1]} : vector<2x128xf32> to vector<2x32xf32>
    %631 = arith.negf %630 : vector<2x32xf32>
    %632 = math.exp %631 : vector<2x32xf32>
    %cst_186 = arith.constant 1.000000e+00 : f32
    %633 = vector.broadcast %cst_186 : f32 to vector<2x32xf32>
    %634 = arith.addf %633, %632 : vector<2x32xf32>
    %635 = arith.divf %633, %634 : vector<2x32xf32>
    %636 = vector.extract_strided_slice %613 {offsets = [0, 32], sizes = [2, 32], strides = [1, 1]} : vector<2x128xf32> to vector<2x32xf32>
    %637 = arith.negf %636 : vector<2x32xf32>
    %638 = math.exp %637 : vector<2x32xf32>
    %cst_187 = arith.constant 1.000000e+00 : f32
    %639 = vector.broadcast %cst_187 : f32 to vector<2x32xf32>
    %640 = arith.addf %639, %638 : vector<2x32xf32>
    %641 = arith.divf %639, %640 : vector<2x32xf32>
    %642 = vector.extract_strided_slice %613 {offsets = [0, 64], sizes = [2, 32], strides = [1, 1]} : vector<2x128xf32> to vector<2x32xf32>
    %643 = math.tanh %642 : vector<2x32xf32>
    %644 = vector.extract_strided_slice %613 {offsets = [0, 96], sizes = [2, 32], strides = [1, 1]} : vector<2x128xf32> to vector<2x32xf32>
    %645 = arith.negf %644 : vector<2x32xf32>
    %646 = math.exp %645 : vector<2x32xf32>
    %cst_188 = arith.constant 1.000000e+00 : f32
    %647 = vector.broadcast %cst_188 : f32 to vector<2x32xf32>
    %648 = arith.addf %647, %646 : vector<2x32xf32>
    %649 = arith.divf %647, %648 : vector<2x32xf32>
    %650 = arith.mulf %641, %561 : vector<2x32xf32>
    %651 = arith.mulf %635, %643 : vector<2x32xf32>
    %652 = arith.addf %650, %651 : vector<2x32xf32>
    %653 = math.tanh %652 : vector<2x32xf32>
    %654 = arith.mulf %649, %653 : vector<2x32xf32>
    %655 = arith.mulf %620, %654 : vector<2x32xf32>
    %656 = arith.mulf %627, %558 : vector<2x32xf32>
    %657 = arith.addf %655, %656 : vector<2x32xf32>
    %658 = arith.mulf %620, %652 : vector<2x32xf32>
    %659 = arith.mulf %627, %561 : vector<2x32xf32>
    %660 = arith.addf %658, %659 : vector<2x32xf32>
    %661 = vector.extract_strided_slice %615 {offsets = [0, 0], sizes = [2, 32], strides = [1, 1]} : vector<2x128xf32> to vector<2x32xf32>
    %662 = arith.negf %661 : vector<2x32xf32>
    %663 = math.exp %662 : vector<2x32xf32>
    %cst_189 = arith.constant 1.000000e+00 : f32
    %664 = vector.broadcast %cst_189 : f32 to vector<2x32xf32>
    %665 = arith.addf %664, %663 : vector<2x32xf32>
    %666 = arith.divf %664, %665 : vector<2x32xf32>
    %667 = vector.extract_strided_slice %615 {offsets = [0, 32], sizes = [2, 32], strides = [1, 1]} : vector<2x128xf32> to vector<2x32xf32>
    %668 = arith.negf %667 : vector<2x32xf32>
    %669 = math.exp %668 : vector<2x32xf32>
    %cst_190 = arith.constant 1.000000e+00 : f32
    %670 = vector.broadcast %cst_190 : f32 to vector<2x32xf32>
    %671 = arith.addf %670, %669 : vector<2x32xf32>
    %672 = arith.divf %670, %671 : vector<2x32xf32>
    %673 = vector.extract_strided_slice %615 {offsets = [0, 64], sizes = [2, 32], strides = [1, 1]} : vector<2x128xf32> to vector<2x32xf32>
    %674 = math.tanh %673 : vector<2x32xf32>
    %675 = vector.extract_strided_slice %615 {offsets = [0, 96], sizes = [2, 32], strides = [1, 1]} : vector<2x128xf32> to vector<2x32xf32>
    %676 = arith.negf %675 : vector<2x32xf32>
    %677 = math.exp %676 : vector<2x32xf32>
    %cst_191 = arith.constant 1.000000e+00 : f32
    %678 = vector.broadcast %cst_191 : f32 to vector<2x32xf32>
    %679 = arith.addf %678, %677 : vector<2x32xf32>
    %680 = arith.divf %678, %679 : vector<2x32xf32>
    %681 = arith.mulf %672, %592 : vector<2x32xf32>
    %682 = arith.mulf %666, %674 : vector<2x32xf32>
    %683 = arith.addf %681, %682 : vector<2x32xf32>
    %684 = math.tanh %683 : vector<2x32xf32>
    %685 = arith.mulf %680, %684 : vector<2x32xf32>
    %686 = arith.mulf %625, %685 : vector<2x32xf32>
    %687 = arith.mulf %629, %589 : vector<2x32xf32>
    %688 = arith.addf %686, %687 : vector<2x32xf32>
    %689 = arith.mulf %625, %683 : vector<2x32xf32>
    %690 = arith.mulf %629, %592 : vector<2x32xf32>
    %691 = arith.addf %689, %690 : vector<2x32xf32>
    %c0_192 = arith.constant 0 : index
    %692 = arith.index_cast %c6_i32 : i32 to index
    %c0_193 = arith.constant 0 : index
    %c0_194 = arith.constant 0 : index
    %693 = vector.load %arg5[%c0_192, %692, %c0_193, %c0_194] : memref<2x8x2x32xf32, #tpu.memory_space<vmem>>, vector<1x1x2x32xf32>
    %694 = vector.shape_cast %693 : vector<1x1x2x32xf32> to vector<2x32xf32>
    %695 = vector.shape_cast %655 : vector<2x32xf32> to vector<1x1x2x32xf32>
    tpu.vector_store %arg5[%c0_192, %692, %c0_193, %c0_194], %695 {strides = array<i32>} : memref<2x8x2x32xf32, #tpu.memory_space<vmem>>, vector<1x1x2x32xf32>,
    %c1_195 = arith.constant 1 : index
    %696 = arith.index_cast %601 : i32 to index
    %c0_196 = arith.constant 0 : index
    %c0_197 = arith.constant 0 : index
    %697 = vector.load %arg5[%c1_195, %696, %c0_196, %c0_197] : memref<2x8x2x32xf32, #tpu.memory_space<vmem>>, vector<1x1x2x32xf32>
    %698 = vector.shape_cast %697 : vector<1x1x2x32xf32> to vector<2x32xf32>
    %699 = vector.shape_cast %686 : vector<2x32xf32> to vector<1x1x2x32xf32>
    tpu.vector_store %arg5[%c1_195, %696, %c0_196, %c0_197], %699 {strides = array<i32>} : memref<2x8x2x32xf32, #tpu.memory_space<vmem>>, vector<1x1x2x32xf32>,
    %c7_i32_198 = arith.constant 7 : i32
    %c7_i32_199 = arith.constant 7 : i32
    %700 = arith.subi %c7_i32_199, %c7_i32_198 : i32
    %c0_200 = arith.constant 0 : index
    %701 = arith.index_cast %c7_i32_198 : i32 to index
    %c0_201 = arith.constant 0 : index
    %c0_202 = arith.constant 0 : index
    %702 = vector.load %arg2[%c0_200, %701, %c0_201, %c0_202] : memref<1x8x2x16xf32, #tpu.memory_space<vmem>>, vector<1x1x2x16xf32>
    %703 = vector.shape_cast %702 : vector<1x1x2x16xf32> to vector<2x16xf32>
    %cst_203 = arith.constant dense<0.000000e+00> : vector<2x128xf32>
    %704 = tpu.matmul %703, %2, %cst_203 {dimension_numbers = #tpu.dot_dimension_numbers<[1], [0], [0], [1], [0, 0, 1, 1], [], []>} : vector<2x16xf32>, vector<16x128xf32>, vector<2x128xf32> -> vector<2x128xf32>
    %c0_204 = arith.constant 0 : index
    %705 = arith.index_cast %700 : i32 to index
    %c0_205 = arith.constant 0 : index
    %c0_206 = arith.constant 0 : index
    %706 = vector.load %arg2[%c0_204, %705, %c0_205, %c0_206] : memref<1x8x2x16xf32, #tpu.memory_space<vmem>>, vector<1x1x2x16xf32>
    %707 = vector.shape_cast %706 : vector<1x1x2x16xf32> to vector<2x16xf32>
    %cst_207 = arith.constant dense<0.000000e+00> : vector<2x128xf32>
    %708 = tpu.matmul %707, %4, %cst_207 {dimension_numbers = #tpu.dot_dimension_numbers<[1], [0], [0], [1], [0, 0, 1, 1], [], []>} : vector<2x16xf32>, vector<16x128xf32>, vector<2x128xf32> -> vector<2x128xf32>
    %709 = tpu.concatenate %657, %688 in 1 : vector<2x32xf32>, vector<2x32xf32> -> vector<2x64xf32>
    %cst_208 = arith.constant dense<0.000000e+00> : vector<2x256xf32>
    %710 = tpu.matmul %709, %5, %cst_208 {dimension_numbers = #tpu.dot_dimension_numbers<[1], [0], [0], [1], [0, 0, 1, 1], [], []>, precision = #tpu.contract_precision<fp32>} : vector<2x64xf32>, vector<64x256xf32>, vector<2x256xf32> -> vector<2x256xf32>
    %711 = vector.extract_strided_slice %710 {offsets = [0, 0], sizes = [2, 128], strides = [1, 1]} : vector<2x256xf32> to vector<2x128xf32>
    %712 = arith.addf %704, %711 : vector<2x128xf32>
    %713 = vector.extract_strided_slice %710 {offsets = [0, 128], sizes = [2, 128], strides = [1, 1]} : vector<2x256xf32> to vector<2x128xf32>
    %714 = arith.addf %708, %713 : vector<2x128xf32>
    %715 = arith.index_cast %c7_i32_198 : i32 to index
    %c0_209 = arith.constant 0 : index
    %c0_210 = arith.constant 0 : index
    %716 = vector.load %arg1[%715, %c0_209, %c0_210] : memref<8x2x1xf32, #tpu.memory_space<vmem>>, vector<1x2x1xf32>
    %717 = vector.shape_cast %716 : vector<1x2x1xf32> to vector<2x1xf32>
    %718 = vector.shape_cast %717 : vector<2x1xf32> to vector<2x1xf32>
    %719 = vector.broadcast %718 : vector<2x1xf32> to vector<2x32xf32>
    %720 = arith.index_cast %700 : i32 to index
    %c0_211 = arith.constant 0 : index
    %c0_212 = arith.constant 0 : index
    %721 = vector.load %arg1[%720, %c0_211, %c0_212] : memref<8x2x1xf32, #tpu.memory_space<vmem>>, vector<1x2x1xf32>
    %722 = vector.shape_cast %721 : vector<1x2x1xf32> to vector<2x1xf32>
    %723 = vector.shape_cast %722 : vector<2x1xf32> to vector<2x1xf32>
    %724 = vector.broadcast %723 : vector<2x1xf32> to vector<2x32xf32>
    %cst_213 = arith.constant 1.000000e+00 : f32
    %725 = vector.broadcast %cst_213 : f32 to vector<2x32xf32>
    %726 = arith.subf %725, %719 : vector<2x32xf32>
    %cst_214 = arith.constant 1.000000e+00 : f32
    %727 = vector.broadcast %cst_214 : f32 to vector<2x32xf32>
    %728 = arith.subf %727, %724 : vector<2x32xf32>
    %729 = vector.extract_strided_slice %712 {offsets = [0, 0], sizes = [2, 32], strides = [1, 1]} : vector<2x128xf32> to vector<2x32xf32>
    %730 = arith.negf %729 : vector<2x32xf32>
    %731 = math.exp %730 : vector<2x32xf32>
    %cst_215 = arith.constant 1.000000e+00 : f32
    %732 = vector.broadcast %cst_215 : f32 to vector<2x32xf32>
    %733 = arith.addf %732, %731 : vector<2x32xf32>
    %734 = arith.divf %732, %733 : vector<2x32xf32>
    %735 = vector.extract_strided_slice %712 {offsets = [0, 32], sizes = [2, 32], strides = [1, 1]} : vector<2x128xf32> to vector<2x32xf32>
    %736 = arith.negf %735 : vector<2x32xf32>
    %737 = math.exp %736 : vector<2x32xf32>
    %cst_216 = arith.constant 1.000000e+00 : f32
    %738 = vector.broadcast %cst_216 : f32 to vector<2x32xf32>
    %739 = arith.addf %738, %737 : vector<2x32xf32>
    %740 = arith.divf %738, %739 : vector<2x32xf32>
    %741 = vector.extract_strided_slice %712 {offsets = [0, 64], sizes = [2, 32], strides = [1, 1]} : vector<2x128xf32> to vector<2x32xf32>
    %742 = math.tanh %741 : vector<2x32xf32>
    %743 = vector.extract_strided_slice %712 {offsets = [0, 96], sizes = [2, 32], strides = [1, 1]} : vector<2x128xf32> to vector<2x32xf32>
    %744 = arith.negf %743 : vector<2x32xf32>
    %745 = math.exp %744 : vector<2x32xf32>
    %cst_217 = arith.constant 1.000000e+00 : f32
    %746 = vector.broadcast %cst_217 : f32 to vector<2x32xf32>
    %747 = arith.addf %746, %745 : vector<2x32xf32>
    %748 = arith.divf %746, %747 : vector<2x32xf32>
    %749 = arith.mulf %740, %660 : vector<2x32xf32>
    %750 = arith.mulf %734, %742 : vector<2x32xf32>
    %751 = arith.addf %749, %750 : vector<2x32xf32>
    %752 = math.tanh %751 : vector<2x32xf32>
    %753 = arith.mulf %748, %752 : vector<2x32xf32>
    %754 = arith.mulf %719, %753 : vector<2x32xf32>
    %755 = arith.mulf %726, %657 : vector<2x32xf32>
    %756 = arith.addf %754, %755 : vector<2x32xf32>
    %757 = arith.mulf %719, %751 : vector<2x32xf32>
    %758 = arith.mulf %726, %660 : vector<2x32xf32>
    %759 = arith.addf %757, %758 : vector<2x32xf32>
    %760 = vector.extract_strided_slice %714 {offsets = [0, 0], sizes = [2, 32], strides = [1, 1]} : vector<2x128xf32> to vector<2x32xf32>
    %761 = arith.negf %760 : vector<2x32xf32>
    %762 = math.exp %761 : vector<2x32xf32>
    %cst_218 = arith.constant 1.000000e+00 : f32
    %763 = vector.broadcast %cst_218 : f32 to vector<2x32xf32>
    %764 = arith.addf %763, %762 : vector<2x32xf32>
    %765 = arith.divf %763, %764 : vector<2x32xf32>
    %766 = vector.extract_strided_slice %714 {offsets = [0, 32], sizes = [2, 32], strides = [1, 1]} : vector<2x128xf32> to vector<2x32xf32>
    %767 = arith.negf %766 : vector<2x32xf32>
    %768 = math.exp %767 : vector<2x32xf32>
    %cst_219 = arith.constant 1.000000e+00 : f32
    %769 = vector.broadcast %cst_219 : f32 to vector<2x32xf32>
    %770 = arith.addf %769, %768 : vector<2x32xf32>
    %771 = arith.divf %769, %770 : vector<2x32xf32>
    %772 = vector.extract_strided_slice %714 {offsets = [0, 64], sizes = [2, 32], strides = [1, 1]} : vector<2x128xf32> to vector<2x32xf32>
    %773 = math.tanh %772 : vector<2x32xf32>
    %774 = vector.extract_strided_slice %714 {offsets = [0, 96], sizes = [2, 32], strides = [1, 1]} : vector<2x128xf32> to vector<2x32xf32>
    %775 = arith.negf %774 : vector<2x32xf32>
    %776 = math.exp %775 : vector<2x32xf32>
    %cst_220 = arith.constant 1.000000e+00 : f32
    %777 = vector.broadcast %cst_220 : f32 to vector<2x32xf32>
    %778 = arith.addf %777, %776 : vector<2x32xf32>
    %779 = arith.divf %777, %778 : vector<2x32xf32>
    %780 = arith.mulf %771, %691 : vector<2x32xf32>
    %781 = arith.mulf %765, %773 : vector<2x32xf32>
    %782 = arith.addf %780, %781 : vector<2x32xf32>
    %783 = math.tanh %782 : vector<2x32xf32>
    %784 = arith.mulf %779, %783 : vector<2x32xf32>
    %785 = arith.mulf %724, %784 : vector<2x32xf32>
    %786 = arith.mulf %728, %688 : vector<2x32xf32>
    %787 = arith.addf %785, %786 : vector<2x32xf32>
    %788 = arith.mulf %724, %782 : vector<2x32xf32>
    %789 = arith.mulf %728, %691 : vector<2x32xf32>
    %790 = arith.addf %788, %789 : vector<2x32xf32>
    %c0_221 = arith.constant 0 : index
    %791 = arith.index_cast %c7_i32_198 : i32 to index
    %c0_222 = arith.constant 0 : index
    %c0_223 = arith.constant 0 : index
    %792 = vector.load %arg5[%c0_221, %791, %c0_222, %c0_223] : memref<2x8x2x32xf32, #tpu.memory_space<vmem>>, vector<1x1x2x32xf32>
    %793 = vector.shape_cast %792 : vector<1x1x2x32xf32> to vector<2x32xf32>
    %794 = vector.shape_cast %754 : vector<2x32xf32> to vector<1x1x2x32xf32>
    tpu.vector_store %arg5[%c0_221, %791, %c0_222, %c0_223], %794 {strides = array<i32>} : memref<2x8x2x32xf32, #tpu.memory_space<vmem>>, vector<1x1x2x32xf32>,
    %c1_224 = arith.constant 1 : index
    %795 = arith.index_cast %700 : i32 to index
    %c0_225 = arith.constant 0 : index
    %c0_226 = arith.constant 0 : index
    %796 = vector.load %arg5[%c1_224, %795, %c0_225, %c0_226] : memref<2x8x2x32xf32, #tpu.memory_space<vmem>>, vector<1x1x2x32xf32>
    %797 = vector.shape_cast %796 : vector<1x1x2x32xf32> to vector<2x32xf32>
    %798 = vector.shape_cast %785 : vector<2x32xf32> to vector<1x1x2x32xf32>
    tpu.vector_store %arg5[%c1_224, %795, %c0_225, %c0_226], %798 {strides = array<i32>} : memref<2x8x2x32xf32, #tpu.memory_space<vmem>>, vector<1x1x2x32xf32>,
    %c8_i32 = arith.constant 8 : i32
    return
  }
  func.func @transform_0(%arg0: i32) -> (i32, i32, i32) {
    %c0_i32 = arith.constant 0 : i32
    %c0_i32_0 = arith.constant 0 : i32
    %c0_i32_1 = arith.constant 0 : i32
    %c0_i32_2 = arith.constant 0 : i32
    return %c0_i32, %c0_i32_0, %c0_i32_1 : i32, i32, i32
  }
  func.func @transform_1(%arg0: i32) -> (i32, i32, i32, i32) {
    %c0_i32 = arith.constant 0 : i32
    %c0_i32_0 = arith.constant 0 : i32
    %c0_i32_1 = arith.constant 0 : i32
    %c0_i32_2 = arith.constant 0 : i32
    %c0_i32_3 = arith.constant 0 : i32
    return %c0_i32, %c0_i32_0, %c0_i32_1, %c0_i32_2 : i32, i32, i32, i32
  }
  func.func @transform_2(%arg0: i32) -> (i32, i32, i32) {
    %c0_i32 = arith.constant 0 : i32
    %c0_i32_0 = arith.constant 0 : i32
    %c0_i32_1 = arith.constant 0 : i32
    %c0_i32_2 = arith.constant 0 : i32
    return %c0_i32, %c0_i32_0, %c0_i32_1 : i32, i32, i32
  }
  func.func @transform_3(%arg0: i32) -> (i32, i32) {
    %c0_i32 = arith.constant 0 : i32
    %c0_i32_0 = arith.constant 0 : i32
    %c0_i32_1 = arith.constant 0 : i32
    return %c0_i32, %c0_i32_0 : i32, i32
  }
  func.func @transform_4(%arg0: i32) -> (i32, i32, i32, i32) {
    %c0_i32 = arith.constant 0 : i32
    %c0_i32_0 = arith.constant 0 : i32
    %c0_i32_1 = arith.constant 0 : i32
    %c0_i32_2 = arith.constant 0 : i32
    %c0_i32_3 = arith.constant 0 : i32
    return %c0_i32, %c0_i32_0, %c0_i32_1, %c0_i32_2 : i32, i32, i32, i32
  }
}

</mosaic_0001>

<llo_original>
// kernel: tpu_custom_call.1
$region0: #{tpu_custom_call.1}
  #allocation0 [shape = 'u32[]', space=smem, size = 0x4, offset = 0x4, fixed_abs, tag = 'smem constant byte address 0x4 - core index']
  #allocation1 [shape = 'u32[144,128]{1,0:T(1,128)}', space=vmem, size = 0x12000, scoped, tag = 'internal scratch']
  %s0 = inlined_call_operand.vmem [shape: f32[8,2,1], index: 0, kind: input, shape index: {}]
  %s1 = inlined_call_operand.vmem [shape: f32[1,8,2,16], index: 1, kind: input, shape index: {}]
  %s2 = inlined_call_operand.hbm [shape: f32[1,16,256], index: 2, kind: input, shape index: {}]
  %s3 = inlined_call_operand.hbm [shape: f32[64,256], index: 3, kind: input, shape index: {}]
  %s4 = inlined_call_operand.hbm [shape: f32[2,8,2,32], index: 4, kind: output, shape index: {}]
  %s5 = sld [smem:[#allocation0]]
  $region34: #{tpu_custom_call.1} parent=0
    _
  %s7 = ssub.s32 1, %s5
  %s8 = scalar_select 0, %s7, %s5
  $region1: #{tpu_custom_call.1} parent=0
    #allocation2 [shape = 'u8[16384]{0}', space=vmem, size = 0x4000, scoped, tag = 'input window, operand 2, single buffered']
    #allocation3 [shape = 's32[1]{0}', space=sflag, size = 0x4, scoped, tag = 'scoped memory for tpu_custom_call.1']
    #allocation4 [shape = 's32[1]{0}', space=sflag, size = 0x4, scoped, tag = 'scoped memory for tpu_custom_call.1']
    #allocation5 [shape = 'u8[65536]{0}', space=vmem, size = 0x10000, scoped, tag = 'input window, operand 3, single buffered']
    #allocation6 [shape = 's32[1]{0}', space=sflag, size = 0x4, scoped, tag = 'scoped memory for tpu_custom_call.1']
    #allocation7 [shape = 'u8[16384]{0}', space=vmem, size = 0x4000, scoped, tag = 'output window, operand 0, single buffered']
    %9 = vsyncpa [#allocation3], 0
    %10 = vsyncpa [#allocation6], 0
    %11 = vsyncpa [#allocation4], 0
    // Predicated region
    $region2: #{tpu_custom_call.1} parent=1 // pred_check
      _
    $region3: #{tpu_custom_call.1} parent=1 // pred_check_branch
      %13 = sbr.rel (0) target = $region5
    $region4: #{tpu_custom_call.1} parent=1 // pred_region
      _
    $region5: #{tpu_custom_call.1} parent=1 // pred_fallthru
      _
    // Predicated region
    $region6: #{tpu_custom_call.1} parent=1 // pred_check
      _
    $region7: #{tpu_custom_call.1} parent=1 // pred_check_branch
      %15 = sbr.rel (0) target = $region9
    $region8: #{tpu_custom_call.1} parent=1 // pred_region
      _
    $region9: #{tpu_custom_call.1} parent=1 // pred_fallthru
      _
    // Predicated region
    $region10: #{tpu_custom_call.1} parent=1 // pred_check
      _
    $region11: #{tpu_custom_call.1} parent=1 // pred_check_branch
      %17 = sbr.rel (0) target = $region13
    $region12: #{tpu_custom_call.1} parent=1 // pred_region
      %s19 = ssub.s32 512, 512
      %20 = vsyncadd [#allocation3], %s19
      %s21 = sshll.u32 [#allocation2], 4
      %s22 = int_to_ptr.vmem [resolvable:$true] %s21
      %27 = dma.hbm_to_vmem [thread:$0]  %s2, 512, %s22, [#allocation3], 256, 256, 16
    $region13: #{tpu_custom_call.1} parent=1 // pred_fallthru
      _
    // Predicated region
    $region14: #{tpu_custom_call.1} parent=1 // pred_check
      _
    $region15: #{tpu_custom_call.1} parent=1 // pred_check_branch
      %29 = sbr.rel (0) target = $region17
    $region16: #{tpu_custom_call.1} parent=1 // pred_region
      %s31 = ssub.s32 2048, 2048
      %32 = vsyncadd [#allocation6], %s31
      %s33 = sshll.u32 [#allocation5], 4
      %s34 = int_to_ptr.vmem [resolvable:$true] %s33
      %39 = dma.hbm_to_vmem [thread:$0]  %s3, 2048, %s34, [#allocation6], 256, 256, 16
    $region17: #{tpu_custom_call.1} parent=1 // pred_fallthru
      _
    // Predicated region
    $region18: #{tpu_custom_call.1} parent=1 // pred_check
      _
    $region19: #{tpu_custom_call.1} parent=1 // pred_check_branch
      %41 = sbr.rel (0) target = $region21
    $region20: #{tpu_custom_call.1} parent=1 // pred_region
      %42 = dma.done [#allocation3], 512
    $region21: #{tpu_custom_call.1} parent=1 // pred_fallthru
      _
    // Predicated region
    $region22: #{tpu_custom_call.1} parent=1 // pred_check
      _
    $region23: #{tpu_custom_call.1} parent=1 // pred_check_branch
      %44 = sbr.rel (0) target = $region25
    $region24: #{tpu_custom_call.1} parent=1 // pred_region
      %45 = dma.done [#allocation6], 2048
    $region25: #{tpu_custom_call.1} parent=1 // pred_fallthru
      _
    %v46 = vld [vmem:[#allocation2] sm:$0xff]
    %v47 = vld [vmem:[#allocation2 + $0x8] sm:$0xff]
    %v48 = vld [vmem:[#allocation2 + $0x10] sm:$0xff]
    %v49 = vld [vmem:[#allocation2 + $0x18] sm:$0xff]
    %v50 = vld [vmem:[#allocation5] sm:$0xff]
    %v51 = vld [vmem:[#allocation5 + $0x8] sm:$0xff]
    %v52 = vld [vmem:[#allocation5 + $0x10] sm:$0xff]
    %v53 = vld [vmem:[#allocation5 + $0x18] sm:$0xff]
    %v54 = vld [vmem:[#allocation5 + $0x20] sm:$0xff]
    %v55 = vld [vmem:[#allocation5 + $0x28] sm:$0xff]
    %v56 = vld [vmem:[#allocation5 + $0x30] sm:$0xff]
    %v57 = vld [vmem:[#allocation5 + $0x38] sm:$0xff]
    %v58 = vld [vmem:[#allocation5 + $0x40] sm:$0xff]
    %v59 = vld [vmem:[#allocation5 + $0x48] sm:$0xff]
    %v60 = vld [vmem:[#allocation5 + $0x50] sm:$0xff]
    %v61 = vld [vmem:[#allocation5 + $0x58] sm:$0xff]
    %v62 = vld [vmem:[#allocation5 + $0x60] sm:$0xff]
    %v63 = vld [vmem:[#allocation5 + $0x68] sm:$0xff]
    %v64 = vld [vmem:[#allocation5 + $0x70] sm:$0xff]
    %v65 = vld [vmem:[#allocation5 + $0x78] sm:$0xff]
    %v66 = vld [vmem:[%s1] sm:$0x3]
    %s67 = scalar_lea.vmem %s1, 14
    %v68 = vld [vmem:[%s67] sm:$0x3]
    %vm69 = vcmask 523264
    %v71 = vsel %vm69, 0.0, 0
    %73 = vmatprep.subr.mxu0 0.0
    %74 = vmatpush1.msra.mxu0 0.0
    %75 = vmatprep.subr.mxu0 0.0
    %76 = vmatpush1.msra.mxu0 0.0
    %77 = vmatprep.subr.mxu0 0.0
    %78 = vmatpush1.msra.mxu0 0.0
    %79 = vmatprep.subr.mxu0 0.0
    %80 = vmatpush1.msra.mxu0 0.0
    %81 = vmatprep.subr.mxu0 0.0
    %82 = vmatpush1.msra.mxu0 0.0
    %83 = vmatprep.subr.mxu0 0.0
    %84 = vmatpush1.msra.mxu0 0.0
    %85 = vmatprep.subr.mxu0 0.0
    %86 = vmatpush1.msra.mxu0 0.0
    %87 = vmatprep.subr.mxu0 0.0
    %88 = vmatpush1.msra.mxu0 0.0
    %v89 = vand.u32 %v65, 4294901760
    %90 = vmatprep.subr.mxu0 %v89
    %v91 = vand.u32 %v64, 4294901760
    %92 = vmatpush1.msra.mxu0 %v91
    %v93 = vand.u32 %v63, 4294901760
    %94 = vmatprep.subr.mxu0 %v93
    %v95 = vand.u32 %v62, 4294901760
    %96 = vmatpush1.msra.mxu0 %v95
    %v97 = vand.u32 %v61, 4294901760
    %98 = vmatprep.subr.mxu0 %v97
    %v99 = vand.u32 %v60, 4294901760
    %100 = vmatpush1.msra.mxu0 %v99
    %v101 = vand.u32 %v59, 4294901760
    %102 = vmatprep.subr.mxu0 %v101
    %v103 = vand.u32 %v58, 4294901760
    %104 = vmatpush1.msra.mxu0 %v103
    %v105 = vand.u32 %v57, 4294901760
    %106 = vmatprep.subr.mxu0 %v105
    %v107 = vand.u32 %v56, 4294901760
    %108 = vmatpush1.msra.mxu0 %v107
    %v109 = vand.u32 %v55, 4294901760
    %110 = vmatprep.subr.mxu0 %v109
    %v111 = vand.u32 %v54, 4294901760
    %112 = vmatpush1.msra.mxu0 %v111
    %v113 = vand.u32 %v53, 4294901760
    %114 = vmatprep.subr.mxu0 %v113
    %v115 = vand.u32 %v52, 4294901760
    %116 = vmatpush1.msra.mxu0 %v115
    %v117 = vand.u32 %v51, 4294901760
    %118 = vmatprep.subr.mxu0 %v117
    %v119 = vand.u32 %v50, 4294901760
    %120 = vmatpush1.msra.mxu0 %v119
    %121 = vmatprep.subr.mxu0 0.0
    %122 = vmatpush2.msra.mxu0 0.0
    %123 = vmatprep.subr.mxu0 0.0
    %124 = vmatpush2.msra.mxu0 0.0
    %125 = vmatprep.subr.mxu0 0.0
    %126 = vmatpush2.msra.mxu0 0.0
    %127 = vmatprep.subr.mxu0 0.0
    %128 = vmatpush2.msra.mxu0 0.0
    %129 = vmatprep.subr.mxu0 0.0
    %130 = vmatpush2.msra.mxu0 0.0
    %131 = vmatprep.subr.mxu0 0.0
    %132 = vmatpush2.msra.mxu0 0.0
    %133 = vmatprep.subr.mxu0 0.0
    %134 = vmatpush2.msra.mxu0 0.0
    %135 = vmatprep.subr.mxu0 0.0
    %136 = vmatpush2.msra.mxu0 0.0
    %137 = vmatprep.subr.mxu0 0.0
    %138 = vmatpush2.msra.mxu0 0.0
    %139 = vmatprep.subr.mxu0 0.0
    %140 = vmatpush2.msra.mxu0 0.0
    %141 = vmatprep.subr.mxu0 0.0
    %142 = vmatpush2.msra.mxu0 0.0
    %143 = vmatprep.subr.mxu0 0.0
    %144 = vmatpush2.msra.mxu0 0.0
    %145 = vmatprep.subr.mxu0 0.0
    %146 = vmatpush2.msra.mxu0 0.0
    %147 = vmatprep.subr.mxu0 0.0
    %148 = vmatpush2.msra.mxu0 0.0
    %149 = vmatprep.subr.mxu0 0.0
    %150 = vmatpush2.msra.mxu0 0.0
    %151 = vmatprep.subr.mxu0 0.0
    %152 = vmatpush2.msra.mxu0 0.0
    %153 = vmatprep.mubr.f32.mxu0 0.0
    %v154 = vand.u32 %v71, 4294901760
    %v155 = vsub.f32 %v71, %v154
    %v156 = vand.u32 %v155, 4294901760
    %v157 = vsub.f32 %v155, %v156
    %v158 = vand.u32 %v157, 4294901760
    %159 = vmatmul.mubr.f32.gmra.mxu0 %v158
    %v160 = vpop.f32.mrf.mxu0
    %v161 = vadd.f32 0.0, %v160
    %v162 = vpop.f32.mrf.mxu0
    %v163 = vadd.f32 0.0, %v162
    %164 = vdwg.mxu0
    %165 = vmatprep.subr.mxu0 0.0
    %166 = vmatpush1.msra.mxu0 0.0
    %167 = vmatprep.subr.mxu0 0.0
    %168 = vmatpush1.msra.mxu0 0.0
    %169 = vmatprep.subr.mxu0 0.0
    %170 = vmatpush1.msra.mxu0 0.0
    %171 = vmatprep.subr.mxu0 0.0
    %172 = vmatpush1.msra.mxu0 0.0
    %173 = vmatprep.subr.mxu0 0.0
    %174 = vmatpush1.msra.mxu0 0.0
    %175 = vmatprep.subr.mxu0 0.0
    %176 = vmatpush1.msra.mxu0 0.0
    %177 = vmatprep.subr.mxu0 0.0
    %178 = vmatpush1.msra.mxu0 0.0
    %179 = vmatprep.subr.mxu0 0.0
    %180 = vmatpush1.msra.mxu0 0.0
    %v181 = vand.u32 %v65, 4294901760
    %v182 = vsub.f32 %v65, %v181
    %v183 = vand.u32 %v182, 4294901760
    %v184 = vsub.f32 %v182, %v183
    %v185 = vand.u32 %v184, 4294901760
    %186 = vmatprep.subr.mxu0 %v185
    %v187 = vand.u32 %v64, 4294901760
    %v188 = vsub.f32 %v64, %v187
    %v189 = vand.u32 %v188, 4294901760
    %v190 = vsub.f32 %v188, %v189
    %v191 = vand.u32 %v190, 4294901760
    %192 = vmatpush1.msra.mxu0 %v191
    %v193 = vand.u32 %v63, 4294901760
    %v194 = vsub.f32 %v63, %v193
    %v195 = vand.u32 %v194, 4294901760
    %v196 = vsub.f32 %v194, %v195
    %v197 = vand.u32 %v196, 4294901760
    %198 = vmatprep.subr.mxu0 %v197
    %v199 = vand.u32 %v62, 4294901760
    %v200 = vsub.f32 %v62, %v199
    %v201 = vand.u32 %v200, 4294901760
    %v202 = vsub.f32 %v200, %v201
    %v203 = vand.u32 %v202, 4294901760
    %204 = vmatpush1.msra.mxu0 %v203
    %v205 = vand.u32 %v61, 4294901760
    %v206 = vsub.f32 %v61, %v205
    %v207 = vand.u32 %v206, 4294901760
    %v208 = vsub.f32 %v206, %v207
    %v209 = vand.u32 %v208, 4294901760
    %210 = vmatprep.subr.mxu0 %v209
    %v211 = vand.u32 %v60, 4294901760
    %v212 = vsub.f32 %v60, %v211
    %v213 = vand.u32 %v212, 4294901760
    %v214 = vsub.f32 %v212, %v213
    %v215 = vand.u32 %v214, 4294901760
    %216 = vmatpush1.msra.mxu0 %v215
    %v217 = vand.u32 %v59, 4294901760
    %v218 = vsub.f32 %v59, %v217
    %v219 = vand.u32 %v218, 4294901760
    %v220 = vsub.f32 %v218, %v219
    %v221 = vand.u32 %v220, 4294901760
    %222 = vmatprep.subr.mxu0 %v221
    %v223 = vand.u32 %v58, 4294901760
    %v224 = vsub.f32 %v58, %v223
    %v225 = vand.u32 %v224, 4294901760
    %v226 = vsub.f32 %v224, %v225
    %v227 = vand.u32 %v226, 4294901760
    %228 = vmatpush1.msra.mxu0 %v227
    %v229 = vand.u32 %v57, 4294901760
    %v230 = vsub.f32 %v57, %v229
    %v231 = vand.u32 %v230, 4294901760
    %v232 = vsub.f32 %v230, %v231
    %v233 = vand.u32 %v232, 4294901760
    %234 = vmatprep.subr.mxu0 %v233
    %v235 = vand.u32 %v56, 4294901760
    %v236 = vsub.f32 %v56, %v235
    %v237 = vand.u32 %v236, 4294901760
    %v238 = vsub.f32 %v236, %v237
    %v239 = vand.u32 %v238, 4294901760
    %240 = vmatpush1.msra.mxu0 %v239
    %v241 = vand.u32 %v55, 4294901760
    %v242 = vsub.f32 %v55, %v241
    %v243 = vand.u32 %v242, 4294901760
    %v244 = vsub.f32 %v242, %v243
    %v245 = vand.u32 %v244, 4294901760
    %246 = vmatprep.subr.mxu0 %v245
    %v247 = vand.u32 %v54, 4294901760
    %v248 = vsub.f32 %v54, %v247
    %v249 = vand.u32 %v248, 4294901760
    %v250 = vsub.f32 %v248, %v249
    %v251 = vand.u32 %v250, 4294901760
    %252 = vmatpush1.msra.mxu0 %v251
    %v253 = vand.u32 %v53, 4294901760
    %v254 = vsub.f32 %v53, %v253
    %v255 = vand.u32 %v254, 4294901760
    %v256 = vsub.f32 %v254, %v255
    %v257 = vand.u32 %v256, 4294901760
    %258 = vmatprep.subr.mxu0 %v257
    %v259 = vand.u32 %v52, 4294901760
    %v260 = vsub.f32 %v52, %v259
    %v261 = vand.u32 %v260, 4294901760
    %v262 = vsub.f32 %v260, %v261
    %v263 = vand.u32 %v262, 4294901760
    %264 = vmatpush1.msra.mxu0 %v263
    %v265 = vand.u32 %v51, 4294901760
    %v266 = vsub.f32 %v51, %v265
    %v267 = vand.u32 %v266, 4294901760
    %v268 = vsub.f32 %v266, %v267
    %v269 = vand.u32 %v268, 4294901760
    %270 = vmatprep.subr.mxu0 %v269
    %v271 = vand.u32 %v50, 4294901760
    %v272 = vsub.f32 %v50, %v271
    %v273 = vand.u32 %v272, 4294901760
    %v274 = vsub.f32 %v272, %v273
    %v275 = vand.u32 %v274, 4294901760
    %276 = vmatpush1.msra.mxu0 %v275
    %277 = vmatprep.subr.mxu0 0.0
    %278 = vmatpush2.msra.mxu0 0.0
    %279 = vmatprep.subr.mxu0 0.0
    %280 = vmatpush2.msra.mxu0 0.0
    %281 = vmatprep.subr.mxu0 0.0
    %282 = vmatpush2.msra.mxu0 0.0
    %283 = vmatprep.subr.mxu0 0.0
    %284 = vmatpush2.msra.mxu0 0.0
    %285 = vmatprep.subr.mxu0 0.0
    %286 = vmatpush2.msra.mxu0 0.0
    %287 = vmatprep.subr.mxu0 0.0
    %288 = vmatpush2.msra.mxu0 0.0
    %289 = vmatprep.subr.mxu0 0.0
    %290 = vmatpush2.msra.mxu0 0.0
    %291 = vmatprep.subr.mxu0 0.0
    %292 = vmatpush2.msra.mxu0 0.0
    %293 = vmatprep.subr.mxu0 0.0
    %294 = vmatpush2.msra.mxu0 0.0
    %295 = vmatprep.subr.mxu0 0.0
    %296 = vmatpush2.msra.mxu0 0.0
    %297 = vmatprep.subr.mxu0 0.0
    %298 = vmatpush2.msra.mxu0 0.0
    %299 = vmatprep.subr.mxu0 0.0
    %300 = vmatpush2.msra.mxu0 0.0
    %301 = vmatprep.subr.mxu0 0.0
    %302 = vmatpush2.msra.mxu0 0.0
    %303 = vmatprep.subr.mxu0 0.0
    %304 = vmatpush2.msra.mxu0 0.0
    %305 = vmatprep.subr.mxu0 0.0
    %306 = vmatpush2.msra.mxu0 0.0
    %307 = vmatprep.subr.mxu0 0.0
    %308 = vmatpush2.msra.mxu0 0.0
    %309 = vmatprep.mubr.f32.mxu0 0.0
    %v310 = vand.u32 %v71, 4294901760
    %311 = vmatmul.mubr.f32.gmra.mxu0 %v310
    %v312 = vpop.f32.mrf.mxu0
    %v313 = vadd.f32 %v161, %v312
    %v314 = vpop.f32.mrf.mxu0
    %v315 = vadd.f32 %v163, %v314
    %316 = vdwg.mxu0
    %317 = vmatprep.subr.mxu0 0.0
    %318 = vmatpush1.msra.mxu0 0.0
    %319 = vmatprep.subr.mxu0 0.0
    %320 = vmatpush1.msra.mxu0 0.0
    %321 = vmatprep.subr.mxu0 0.0
    %322 = vmatpush1.msra.mxu0 0.0
    %323 = vmatprep.subr.mxu0 0.0
    %324 = vmatpush1.msra.mxu0 0.0
    %325 = vmatprep.subr.mxu0 0.0
    %326 = vmatpush1.msra.mxu0 0.0
    %327 = vmatprep.subr.mxu0 0.0
    %328 = vmatpush1.msra.mxu0 0.0
    %329 = vmatprep.subr.mxu0 0.0
    %330 = vmatpush1.msra.mxu0 0.0
    %331 = vmatprep.subr.mxu0 0.0
    %332 = vmatpush1.msra.mxu0 0.0
    %v333 = vand.u32 %v65, 4294901760
    %v334 = vsub.f32 %v65, %v333
    %335 = vmatprep.subr.mxu0 %v334
    %v336 = vand.u32 %v64, 4294901760
    %v337 = vsub.f32 %v64, %v336
    %338 = vmatpush1.msra.mxu0 %v337
    %v339 = vand.u32 %v63, 4294901760
    %v340 = vsub.f32 %v63, %v339
    %341 = vmatprep.subr.mxu0 %v340
    %v342 = vand.u32 %v62, 4294901760
    %v343 = vsub.f32 %v62, %v342
    %344 = vmatpush1.msra.mxu0 %v343
    %v345 = vand.u32 %v61, 4294901760
    %v346 = vsub.f32 %v61, %v345
    %347 = vmatprep.subr.mxu0 %v346
    %v348 = vand.u32 %v60, 4294901760
    %v349 = vsub.f32 %v60, %v348
    %350 = vmatpush1.msra.mxu0 %v349
    %v351 = vand.u32 %v59, 4294901760
    %v352 = vsub.f32 %v59, %v351
    %353 = vmatprep.subr.mxu0 %v352
    %v354 = vand.u32 %v58, 4294901760
    %v355 = vsub.f32 %v58, %v354
    %356 = vmatpush1.msra.mxu0 %v355
    %v357 = vand.u32 %v57, 4294901760
    %v358 = vsub.f32 %v57, %v357
    %359 = vmatprep.subr.mxu0 %v358
    %v360 = vand.u32 %v56, 4294901760
    %v361 = vsub.f32 %v56, %v360
    %362 = vmatpush1.msra.mxu0 %v361
    %v363 = vand.u32 %v55, 4294901760
    %v364 = vsub.f32 %v55, %v363
    %365 = vmatprep.subr.mxu0 %v364
    %v366 = vand.u32 %v54, 4294901760
    %v367 = vsub.f32 %v54, %v366
    %368 = vmatpush1.msra.mxu0 %v367
    %v369 = vand.u32 %v53, 4294901760
    %v370 = vsub.f32 %v53, %v369
    %371 = vmatprep.subr.mxu0 %v370
    %v372 = vand.u32 %v52, 4294901760
    %v373 = vsub.f32 %v52, %v372
    %374 = vmatpush1.msra.mxu0 %v373
    %v375 = vand.u32 %v51, 4294901760
    %v376 = vsub.f32 %v51, %v375
    %377 = vmatprep.subr.mxu0 %v376
    %v378 = vand.u32 %v50, 4294901760
    %v379 = vsub.f32 %v50, %v378
    %380 = vmatpush1.msra.mxu0 %v379
    %381 = vmatprep.subr.mxu0 0.0
    %382 = vmatpush2.msra.mxu0 0.0
    %383 = vmatprep.subr.mxu0 0.0
    %384 = vmatpush2.msra.mxu0 0.0
    %385 = vmatprep.subr.mxu0 0.0
    %386 = vmatpush2.msra.mxu0 0.0
    %387 = vmatprep.subr.mxu0 0.0
    %388 = vmatpush2.msra.mxu0 0.0
    %389 = vmatprep.subr.mxu0 0.0
    %390 = vmatpush2.msra.mxu0 0.0
    %391 = vmatprep.subr.mxu0 0.0
    %392 = vmatpush2.msra.mxu0 0.0
    %393 = vmatprep.subr.mxu0 0.0
    %394 = vmatpush2.msra.mxu0 0.0
    %395 = vmatprep.subr.mxu0 0.0
    %396 = vmatpush2.msra.mxu0 0.0
    %397 = vmatprep.subr.mxu0 0.0
    %398 = vmatpush2.msra.mxu0 0.0
    %399 = vmatprep.subr.mxu0 0.0
    %400 = vmatpush2.msra.mxu0 0.0
    %401 = vmatprep.subr.mxu0 0.0
    %402 = vmatpush2.msra.mxu0 0.0
    %403 = vmatprep.subr.mxu0 0.0
    %404 = vmatpush2.msra.mxu0 0.0
    %405 = vmatprep.subr.mxu0 0.0
    %406 = vmatpush2.msra.mxu0 0.0
    %407 = vmatprep.subr.mxu0 0.0
    %408 = vmatpush2.msra.mxu0 0.0
    %409 = vmatprep.subr.mxu0 0.0
    %410 = vmatpush2.msra.mxu0 0.0
    %411 = vmatprep.subr.mxu0 0.0
    %412 = vmatpush2.msra.mxu0 0.0
    %413 = vmatprep.mubr.f32.mxu0 0.0
    %v414 = vand.u32 %v71, 4294901760
    %v415 = vsub.f32 %v71, %v414
    %416 = vmatmul.mubr.f32.gmra.mxu0 %v415
    %v417 = vpop.f32.mrf.mxu0
    %v418 = vadd.f32 %v313, %v417
    %v419 = vpop.f32.mrf.mxu0
    %v420 = vadd.f32 %v315, %v419
    %421 = vdwg.mxu0
    %422 = vmatprep.subr.mxu0 0.0
    %423 = vmatpush1.msra.mxu0 0.0
    %424 = vmatprep.subr.mxu0 0.0
    %425 = vmatpush1.msra.mxu0 0.0
    %426 = vmatprep.subr.mxu0 0.0
    %427 = vmatpush1.msra.mxu0 0.0
    %428 = vmatprep.subr.mxu0 0.0
    %429 = vmatpush1.msra.mxu0 0.0
    %430 = vmatprep.subr.mxu0 0.0
    %431 = vmatpush1.msra.mxu0 0.0
    %432 = vmatprep.subr.mxu0 0.0
    %433 = vmatpush1.msra.mxu0 0.0
    %434 = vmatprep.subr.mxu0 0.0
    %435 = vmatpush1.msra.mxu0 0.0
    %436 = vmatprep.subr.mxu0 0.0
    %437 = vmatpush1.msra.mxu0 0.0
    %v438 = vand.u32 %v65, 4294901760
    %439 = vmatprep.subr.mxu0 %v438
    %v440 = vand.u32 %v64, 4294901760
    %441 = vmatpush1.msra.mxu0 %v440
    %v442 = vand.u32 %v63, 4294901760
    %443 = vmatprep.subr.mxu0 %v442
    %v444 = vand.u32 %v62, 4294901760
    %445 = vmatpush1.msra.mxu0 %v444
    %v446 = vand.u32 %v61, 4294901760
    %447 = vmatprep.subr.mxu0 %v446
    %v448 = vand.u32 %v60, 4294901760
    %449 = vmatpush1.msra.mxu0 %v448
    %v450 = vand.u32 %v59, 4294901760
    %451 = vmatprep.subr.mxu0 %v450
    %v452 = vand.u32 %v58, 4294901760
    %453 = vmatpush1.msra.mxu0 %v452
    %v454 = vand.u32 %v57, 4294901760
    %455 = vmatprep.subr.mxu0 %v454
    %v456 = vand.u32 %v56, 4294901760
    %457 = vmatpush1.msra.mxu0 %v456
    %v458 = vand.u32 %v55, 4294901760
    %459 = vmatprep.subr.mxu0 %v458
    %v460 = vand.u32 %v54, 4294901760
    %461 = vmatpush1.msra.mxu0 %v460
    %v462 = vand.u32 %v53, 4294901760
    %463 = vmatprep.subr.mxu0 %v462
    %v464 = vand.u32 %v52, 4294901760
    %465 = vmatpush1.msra.mxu0 %v464
    %v466 = vand.u32 %v51, 4294901760
    %467 = vmatprep.subr.mxu0 %v466
    %v468 = vand.u32 %v50, 4294901760
    %469 = vmatpush1.msra.mxu0 %v468
    %470 = vmatprep.subr.mxu0 0.0
    %471 = vmatpush2.msra.mxu0 0.0
    %472 = vmatprep.subr.mxu0 0.0
    %473 = vmatpush2.msra.mxu0 0.0
    %474 = vmatprep.subr.mxu0 0.0
    %475 = vmatpush2.msra.mxu0 0.0
    %476 = vmatprep.subr.mxu0 0.0
    %477 = vmatpush2.msra.mxu0 0.0
    %478 = vmatprep.subr.mxu0 0.0
    %479 = vmatpush2.msra.mxu0 0.0
    %480 = vmatprep.subr.mxu0 0.0
    %481 = vmatpush2.msra.mxu0 0.0
    %482 = vmatprep.subr.mxu0 0.0
    %483 = vmatpush2.msra.mxu0 0.0
    %484 = vmatprep.subr.mxu0 0.0
    %485 = vmatpush2.msra.mxu0 0.0
    %486 = vmatprep.subr.mxu0 0.0
    %487 = vmatpush2.msra.mxu0 0.0
    %488 = vmatprep.subr.mxu0 0.0
    %489 = vmatpush2.msra.mxu0 0.0
    %490 = vmatprep.subr.mxu0 0.0
    %491 = vmatpush2.msra.mxu0 0.0
    %492 = vmatprep.subr.mxu0 0.0
    %493 = vmatpush2.msra.mxu0 0.0
    %494 = vmatprep.subr.mxu0 0.0
    %495 = vmatpush2.msra.mxu0 0.0
    %496 = vmatprep.subr.mxu0 0.0
    %497 = vmatpush2.msra.mxu0 0.0
    %498 = vmatprep.subr.mxu0 0.0
    %499 = vmatpush2.msra.mxu0 0.0
    %500 = vmatprep.subr.mxu0 0.0
    %501 = vmatpush2.msra.mxu0 0.0
    %502 = vmatprep.mubr.f32.mxu0 0.0
    %v503 = vand.u32 %v71, 4294901760
    %v504 = vsub.f32 %v71, %v503
    %v505 = vand.u32 %v504, 4294901760
    %506 = vmatmul.mubr.f32.gmra.mxu0 %v505
    %v507 = vpop.f32.mrf.mxu0
    %v508 = vadd.f32 %v418, %v507
    %v509 = vpop.f32.mrf.mxu0
    %v510 = vadd.f32 %v420, %v509
    %511 = vdwg.mxu0
    %512 = vmatprep.subr.mxu0 0.0
    %513 = vmatpush1.msra.mxu0 0.0
    %514 = vmatprep.subr.mxu0 0.0
    %515 = vmatpush1.msra.mxu0 0.0
    %516 = vmatprep.subr.mxu0 0.0
    %517 = vmatpush1.msra.mxu0 0.0
    %518 = vmatprep.subr.mxu0 0.0
    %519 = vmatpush1.msra.mxu0 0.0
    %520 = vmatprep.subr.mxu0 0.0
    %521 = vmatpush1.msra.mxu0 0.0
    %522 = vmatprep.subr.mxu0 0.0
    %523 = vmatpush1.msra.mxu0 0.0
    %524 = vmatprep.subr.mxu0 0.0
    %525 = vmatpush1.msra.mxu0 0.0
    %526 = vmatprep.subr.mxu0 0.0
    %527 = vmatpush1.msra.mxu0 0.0
    %v528 = vand.u32 %v65, 4294901760
    %v529 = vsub.f32 %v65, %v528
    %v530 = vand.u32 %v529, 4294901760
    %531 = vmatprep.subr.mxu0 %v530
    %v532 = vand.u32 %v64, 4294901760
    %v533 = vsub.f32 %v64, %v532
    %v534 = vand.u32 %v533, 4294901760
    %535 = vmatpush1.msra.mxu0 %v534
    %v536 = vand.u32 %v63, 4294901760
    %v537 = vsub.f32 %v63, %v536
    %v538 = vand.u32 %v537, 4294901760
    %539 = vmatprep.subr.mxu0 %v538
    %v540 = vand.u32 %v62, 4294901760
    %v541 = vsub.f32 %v62, %v540
    %v542 = vand.u32 %v541, 4294901760
    %543 = vmatpush1.msra.mxu0 %v542
    %v544 = vand.u32 %v61, 4294901760
    %v545 = vsub.f32 %v61, %v544
    %v546 = vand.u32 %v545, 4294901760
    %547 = vmatprep.subr.mxu0 %v546
    %v548 = vand.u32 %v60, 4294901760
    %v549 = vsub.f32 %v60, %v548
    %v550 = vand.u32 %v549, 4294901760
    %551 = vmatpush1.msra.mxu0 %v550
    %v552 = vand.u32 %v59, 4294901760
    %v553 = vsub.f32 %v59, %v552
    %v554 = vand.u32 %v553, 4294901760
    %555 = vmatprep.subr.mxu0 %v554
    %v556 = vand.u32 %v58, 4294901760
    %v557 = vsub.f32 %v58, %v556
    %v558 = vand.u32 %v557, 4294901760
    %559 = vmatpush1.msra.mxu0 %v558
    %v560 = vand.u32 %v57, 4294901760
    %v561 = vsub.f32 %v57, %v560
    %v562 = vand.u32 %v561, 4294901760
    %563 = vmatprep.subr.mxu0 %v562
    %v564 = vand.u32 %v56, 4294901760
    %v565 = vsub.f32 %v56, %v564
    %v566 = vand.u32 %v565, 4294901760
    %567 = vmatpush1.msra.mxu0 %v566
    %v568 = vand.u32 %v55, 4294901760
    %v569 = vsub.f32 %v55, %v568
    %v570 = vand.u32 %v569, 4294901760
    %571 = vmatprep.subr.mxu0 %v570
    %v572 = vand.u32 %v54, 4294901760
    %v573 = vsub.f32 %v54, %v572
    %v574 = vand.u32 %v573, 4294901760
    %575 = vmatpush1.msra.mxu0 %v574
    %v576 = vand.u32 %v53, 4294901760
    %v577 = vsub.f32 %v53, %v576
    %v578 = vand.u32 %v577, 4294901760
    %579 = vmatprep.subr.mxu0 %v578
    %v580 = vand.u32 %v52, 4294901760
    %v581 = vsub.f32 %v52, %v580
    %v582 = vand.u32 %v581, 4294901760
    %583 = vmatpush1.msra.mxu0 %v582
    %v584 = vand.u32 %v51, 4294901760
    %v585 = vsub.f32 %v51, %v584
    %v586 = vand.u32 %v585, 4294901760
    %587 = vmatprep.subr.mxu0 %v586
    %v588 = vand.u32 %v50, 4294901760
    %v589 = vsub.f32 %v50, %v588
    %v590 = vand.u32 %v589, 4294901760
    %591 = vmatpush1.msra.mxu0 %v590
    %592 = vmatprep.subr.mxu0 0.0
    %593 = vmatpush2.msra.mxu0 0.0
    %594 = vmatprep.subr.mxu0 0.0
    %595 = vmatpush2.msra.mxu0 0.0
    %596 = vmatprep.subr.mxu0 0.0
    %597 = vmatpush2.msra.mxu0 0.0
    %598 = vmatprep.subr.mxu0 0.0
    %599 = vmatpush2.msra.mxu0 0.0
    %600 = vmatprep.subr.mxu0 0.0
    %601 = vmatpush2.msra.mxu0 0.0
    %602 = vmatprep.subr.mxu0 0.0
    %603 = vmatpush2.msra.mxu0 0.0
    %604 = vmatprep.subr.mxu0 0.0
    %605 = vmatpush2.msra.mxu0 0.0
    %606 = vmatprep.subr.mxu0 0.0
    %607 = vmatpush2.msra.mxu0 0.0
    %608 = vmatprep.subr.mxu0 0.0
    %609 = vmatpush2.msra.mxu0 0.0
    %610 = vmatprep.subr.mxu0 0.0
    %611 = vmatpush2.msra.mxu0 0.0
    %612 = vmatprep.subr.mxu0 0.0
    %613 = vmatpush2.msra.mxu0 0.0
    %614 = vmatprep.subr.mxu0 0.0
    %615 = vmatpush2.msra.mxu0 0.0
    %616 = vmatprep.subr.mxu0 0.0
    %617 = vmatpush2.msra.mxu0 0.0
    %618 = vmatprep.subr.mxu0 0.0
    %619 = vmatpush2.msra.mxu0 0.0
    %620 = vmatprep.subr.mxu0 0.0
    %621 = vmatpush2.msra.mxu0 0.0
    %622 = vmatprep.subr.mxu0 0.0
    %623 = vmatpush2.msra.mxu0 0.0
    %624 = vmatprep.mubr.f32.mxu0 0.0
    %v625 = vand.u32 %v71, 4294901760
    %626 = vmatmul.mubr.f32.gmra.mxu0 %v625
    %v627 = vpop.f32.mrf.mxu0
    %v628 = vadd.f32 %v508, %v627
    %v629 = vpop.f32.mrf.mxu0
    %v630 = vadd.f32 %v510, %v629
    %631 = vdwg.mxu0
    %632 = vmatprep.subr.mxu0 0.0
    %633 = vmatpush1.msra.mxu0 0.0
    %634 = vmatprep.subr.mxu0 0.0
    %635 = vmatpush1.msra.mxu0 0.0
    %636 = vmatprep.subr.mxu0 0.0
    %637 = vmatpush1.msra.mxu0 0.0
    %638 = vmatprep.subr.mxu0 0.0
    %639 = vmatpush1.msra.mxu0 0.0
    %640 = vmatprep.subr.mxu0 0.0
    %641 = vmatpush1.msra.mxu0 0.0
    %642 = vmatprep.subr.mxu0 0.0
    %643 = vmatpush1.msra.mxu0 0.0
    %644 = vmatprep.subr.mxu0 0.0
    %645 = vmatpush1.msra.mxu0 0.0
    %646 = vmatprep.subr.mxu0 0.0
    %647 = vmatpush1.msra.mxu0 0.0
    %v648 = vand.u32 %v65, 4294901760
    %649 = vmatprep.subr.mxu0 %v648
    %v650 = vand.u32 %v64, 4294901760
    %651 = vmatpush1.msra.mxu0 %v650
    %v652 = vand.u32 %v63, 4294901760
    %653 = vmatprep.subr.mxu0 %v652
    %v654 = vand.u32 %v62, 4294901760
    %655 = vmatpush1.msra.mxu0 %v654
    %v656 = vand.u32 %v61, 4294901760
    %657 = vmatprep.subr.mxu0 %v656
    %v658 = vand.u32 %v60, 4294901760
    %659 = vmatpush1.msra.mxu0 %v658
    %v660 = vand.u32 %v59, 4294901760
    %661 = vmatprep.subr.mxu0 %v660
    %v662 = vand.u32 %v58, 4294901760
    %663 = vmatpush1.msra.mxu0 %v662
    %v664 = vand.u32 %v57, 4294901760
    %665 = vmatprep.subr.mxu0 %v664
    %v666 = vand.u32 %v56, 4294901760
    %667 = vmatpush1.msra.mxu0 %v666
    %v668 = vand.u32 %v55, 4294901760
    %669 = vmatprep.subr.mxu0 %v668
    %v670 = vand.u32 %v54, 4294901760
    %671 = vmatpush1.msra.mxu0 %v670
    %v672 = vand.u32 %v53, 4294901760
    %673 = vmatprep.subr.mxu0 %v672
    %v674 = vand.u32 %v52, 4294901760
    %675 = vmatpush1.msra.mxu0 %v674
    %v676 = vand.u32 %v51, 4294901760
    %677 = vmatprep.subr.mxu0 %v676
    %v678 = vand.u32 %v50, 4294901760
    %679 = vmatpush1.msra.mxu0 %v678
    %680 = vmatprep.subr.mxu0 0.0
    %681 = vmatpush2.msra.mxu0 0.0
    %682 = vmatprep.subr.mxu0 0.0
    %683 = vmatpush2.msra.mxu0 0.0
    %684 = vmatprep.subr.mxu0 0.0
    %685 = vmatpush2.msra.mxu0 0.0
    %686 = vmatprep.subr.mxu0 0.0
    %687 = vmatpush2.msra.mxu0 0.0
    %688 = vmatprep.subr.mxu0 0.0
    %689 = vmatpush2.msra.mxu0 0.0
    %690 = vmatprep.subr.mxu0 0.0
    %691 = vmatpush2.msra.mxu0 0.0
    %692 = vmatprep.subr.mxu0 0.0
    %693 = vmatpush2.msra.mxu0 0.0
    %694 = vmatprep.subr.mxu0 0.0
    %695 = vmatpush2.msra.mxu0 0.0
    %696 = vmatprep.subr.mxu0 0.0
    %697 = vmatpush2.msra.mxu0 0.0
    %698 = vmatprep.subr.mxu0 0.0
    %699 = vmatpush2.msra.mxu0 0.0
    %700 = vmatprep.subr.mxu0 0.0
    %701 = vmatpush2.msra.mxu0 0.0
    %702 = vmatprep.subr.mxu0 0.0
    %703 = vmatpush2.msra.mxu0 0.0
    %704 = vmatprep.subr.mxu0 0.0
    %705 = vmatpush2.msra.mxu0 0.0
    %706 = vmatprep.subr.mxu0 0.0
    %707 = vmatpush2.msra.mxu0 0.0
    %708 = vmatprep.subr.mxu0 0.0
    %709 = vmatpush2.msra.mxu0 0.0
    %710 = vmatprep.subr.mxu0 0.0
    %711 = vmatpush2.msra.mxu0 0.0
    %712 = vmatprep.mubr.f32.mxu0 0.0
    %v713 = vand.u32 %v71, 4294901760
    %714 = vmatmul.mubr.f32.gmra.mxu0 %v713
    %v715 = vpop.f32.mrf.mxu0
    %v716 = vadd.f32 %v628, %v715
    %v717 = vpop.f32.mrf.mxu0
    %v718 = vadd.f32 %v630, %v717
    %719 = vdwg.mxu0
    %vm720 = vcmask 130048
    %v722 = vsel %vm720, %v66, 0
    %724 = vmatprep.subr.mxu0 0.0
    %725 = vmatpush1.msra.mxu0 0.0
    %726 = vmatprep.subr.mxu0 0.0
    %727 = vmatpush1.msra.mxu0 0.0
    %728 = vmatprep.subr.mxu0 0.0
    %729 = vmatpush1.msra.mxu0 0.0
    %730 = vmatprep.subr.mxu0 0.0
    %731 = vmatpush1.msra.mxu0 0.0
    %732 = vmatprep.subr.mxu0 0.0
    %733 = vmatpush1.msra.mxu0 0.0
    %734 = vmatprep.subr.mxu0 0.0
    %735 = vmatpush1.msra.mxu0 0.0
    %736 = vmatprep.subr.mxu0 0.0
    %737 = vmatpush1.msra.mxu0 0.0
    %738 = vmatprep.subr.mxu0 0.0
    %739 = vmatpush1.msra.mxu0 0.0
    %740 = vmatprep.subr.mxu0 0.0
    %741 = vmatpush1.msra.mxu0 0.0
    %742 = vmatprep.subr.mxu0 0.0
    %743 = vmatpush1.msra.mxu0 0.0
    %744 = vmatprep.subr.mxu0 0.0
    %745 = vmatpush1.msra.mxu0 0.0
    %746 = vmatprep.subr.mxu0 0.0
    %747 = vmatpush1.msra.mxu0 0.0
    %748 = vmatprep.subr.mxu0 0.0
    %749 = vmatpush1.msra.mxu0 0.0
    %750 = vmatprep.subr.mxu0 0.0
    %751 = vmatpush1.msra.mxu0 0.0
    %752 = vmatprep.subr.mxu0 0.0
    %753 = vmatpush1.msra.mxu0 %v48
    %754 = vmatprep.subr.mxu0 0.0
    %755 = vmatpush1.msra.mxu0 %v46
    %756 = vmatprep.subr.mxu0 0.0
    %757 = vmatpush2.msra.mxu0 0.0
    %758 = vmatprep.subr.mxu0 0.0
    %759 = vmatpush2.msra.mxu0 0.0
    %760 = vmatprep.subr.mxu0 0.0
    %761 = vmatpush2.msra.mxu0 0.0
    %762 = vmatprep.subr.mxu0 0.0
    %763 = vmatpush2.msra.mxu0 0.0
    %764 = vmatprep.subr.mxu0 0.0
    %765 = vmatpush2.msra.mxu0 0.0
    %766 = vmatprep.subr.mxu0 0.0
    %767 = vmatpush2.msra.mxu0 0.0
    %768 = vmatprep.subr.mxu0 0.0
    %769 = vmatpush2.msra.mxu0 0.0
    %770 = vmatprep.subr.mxu0 0.0
    %771 = vmatpush2.msra.mxu0 0.0
    %772 = vmatprep.subr.mxu0 0.0
    %773 = vmatpush2.msra.mxu0 0.0
    %774 = vmatprep.subr.mxu0 0.0
    %775 = vmatpush2.msra.mxu0 0.0
    %776 = vmatprep.subr.mxu0 0.0
    %777 = vmatpush2.msra.mxu0 0.0
    %778 = vmatprep.subr.mxu0 0.0
    %779 = vmatpush2.msra.mxu0 0.0
    %780 = vmatprep.subr.mxu0 0.0
    %781 = vmatpush2.msra.mxu0 0.0
    %782 = vmatprep.subr.mxu0 0.0
    %783 = vmatpush2.msra.mxu0 0.0
    %784 = vmatprep.subr.mxu0 0.0
    %785 = vmatpush2.msra.mxu0 0.0
    %786 = vmatprep.subr.mxu0 0.0
    %787 = vmatpush2.msra.mxu0 0.0
    %788 = vmatprep.mubr.f32.mxu0 0.0
    %789 = vmatmul.mubr.f32.gmra.mxu0 %v722
    %v790 = vpop.f32.mrf.mxu0
    %v791 = vadd.f32 %v716, %v790
    %v792 = vpop.f32.mrf.mxu0
    %793 = vdwg.mxu0
    %v795 = vsel %vm720, %v68, 0
    %797 = vmatprep.subr.mxu0 0.0
    %798 = vmatpush1.msra.mxu0 0.0
    %799 = vmatprep.subr.mxu0 0.0
    %800 = vmatpush1.msra.mxu0 0.0
    %801 = vmatprep.subr.mxu0 0.0
    %802 = vmatpush1.msra.mxu0 0.0
    %803 = vmatprep.subr.mxu0 0.0
    %804 = vmatpush1.msra.mxu0 0.0
    %805 = vmatprep.subr.mxu0 0.0
    %806 = vmatpush1.msra.mxu0 0.0
    %807 = vmatprep.subr.mxu0 0.0
    %808 = vmatpush1.msra.mxu0 0.0
    %809 = vmatprep.subr.mxu0 0.0
    %810 = vmatpush1.msra.mxu0 0.0
    %811 = vmatprep.subr.mxu0 0.0
    %812 = vmatpush1.msra.mxu0 0.0
    %813 = vmatprep.subr.mxu0 0.0
    %814 = vmatpush1.msra.mxu0 0.0
    %815 = vmatprep.subr.mxu0 0.0
    %816 = vmatpush1.msra.mxu0 0.0
    %817 = vmatprep.subr.mxu0 0.0
    %818 = vmatpush1.msra.mxu0 0.0
    %819 = vmatprep.subr.mxu0 0.0
    %820 = vmatpush1.msra.mxu0 0.0
    %821 = vmatprep.subr.mxu0 0.0
    %822 = vmatpush1.msra.mxu0 0.0
    %823 = vmatprep.subr.mxu0 0.0
    %824 = vmatpush1.msra.mxu0 0.0
    %825 = vmatprep.subr.mxu0 0.0
    %826 = vmatpush1.msra.mxu0 %v49
    %827 = vmatprep.subr.mxu0 0.0
    %828 = vmatpush1.msra.mxu0 %v47
    %829 = vmatprep.subr.mxu0 0.0
    %830 = vmatpush2.msra.mxu0 0.0
    %831 = vmatprep.subr.mxu0 0.0
    %832 = vmatpush2.msra.mxu0 0.0
    %833 = vmatprep.subr.mxu0 0.0
    %834 = vmatpush2.msra.mxu0 0.0
    %835 = vmatprep.subr.mxu0 0.0
    %836 = vmatpush2.msra.mxu0 0.0
    %837 = vmatprep.subr.mxu0 0.0
    %838 = vmatpush2.msra.mxu0 0.0
    %839 = vmatprep.subr.mxu0 0.0
    %840 = vmatpush2.msra.mxu0 0.0
    %841 = vmatprep.subr.mxu0 0.0
    %842 = vmatpush2.msra.mxu0 0.0
    %843 = vmatprep.subr.mxu0 0.0
    %844 = vmatpush2.msra.mxu0 0.0
    %845 = vmatprep.subr.mxu0 0.0
    %846 = vmatpush2.msra.mxu0 0.0
    %847 = vmatprep.subr.mxu0 0.0
    %848 = vmatpush2.msra.mxu0 0.0
    %849 = vmatprep.subr.mxu0 0.0
    %850 = vmatpush2.msra.mxu0 0.0
    %851 = vmatprep.subr.mxu0 0.0
    %852 = vmatpush2.msra.mxu0 0.0
    %853 = vmatprep.subr.mxu0 0.0
    %854 = vmatpush2.msra.mxu0 0.0
    %855 = vmatprep.subr.mxu0 0.0
    %856 = vmatpush2.msra.mxu0 0.0
    %857 = vmatprep.subr.mxu0 0.0
    %858 = vmatpush2.msra.mxu0 0.0
    %859 = vmatprep.subr.mxu0 0.0
    %860 = vmatpush2.msra.mxu0 0.0
    %861 = vmatprep.mubr.f32.mxu0 0.0
    %862 = vmatmul.mubr.f32.gmra.mxu0 %v795
    %v863 = vpop.f32.mrf.mxu0
    %v864 = vadd.f32 %v718, %v863
    %v865 = vpop.f32.mrf.mxu0
    %866 = vdwg.mxu0
    %v867 = vld [vmem:[%s0] sm:$0x3]
    %869 = vset.pattern.permute.xlu0 0
    %870 = vperm.xlu0 %869, %v867
    %v871 = vpop.permute.xlu0 %870
    %s873 = scalar_lea.vmem %s0, 14
    %v874 = vld [vmem:[%s873] sm:$0x3]
    %876 = vset.pattern.permute.xlu0 0
    %877 = vperm.xlu0 %876, %v874
    %v878 = vpop.permute.xlu0 %877
    %v880 = vsub.f32 1.0, %v871
    %v881 = vsub.f32 1.0, %v878
    %v882 = vxor.u32 %v791, 2147483648
    %v883 = vmul.f32 %v882, 1.442695
    %v884 = vpow.pop %v883
    %v885 = vadd.f32 %v884, 1.0
    %v886 = vrcp.pop %v885
    %v887 = vmul.f32 1.0, %v886
    %v888 = vtanh.pop %v791
    %v889 = vmul.f32 %v887, 0.0
    %891 = vrot.lane.b32.xlu0 %v888, 64
    %v892 = vpop.permute.xlu0 %891
    %v894 = vmul.f32 %v887, %v892
    %896 = vrot.lane.b32.xlu0 %v894, 32
    %v897 = vpop.permute.xlu0 %896
    %v899 = vadd.f32 %v889, %v897
    %v900 = vtanh.pop %v899
    %902 = vrot.lane.b32.xlu0 %v900, 64
    %v903 = vpop.permute.xlu0 %902
    %v905 = vmul.f32 %v887, %v903
    %v906 = vmul.f32 %v871, %v905
    %v907 = vmul.f32 %v880, 0.0
    %v908 = vadd.f32 %v906, %v907
    %v909 = vmul.f32 %v871, %v899
    %v910 = vadd.f32 %v909, %v907
    %v911 = vxor.u32 %v864, 2147483648
    %v912 = vmul.f32 %v911, 1.442695
    %v913 = vpow.pop %v912
    %v914 = vadd.f32 %v913, 1.0
    %v915 = vrcp.pop %v914
    %v916 = vmul.f32 1.0, %v915
    %v917 = vtanh.pop %v864
    %v918 = vmul.f32 %v916, 0.0
    %920 = vrot.lane.b32.xlu0 %v917, 64
    %v921 = vpop.permute.xlu0 %920
    %v923 = vmul.f32 %v916, %v921
    %925 = vrot.lane.b32.xlu0 %v923, 32
    %v926 = vpop.permute.xlu0 %925
    %v928 = vadd.f32 %v918, %v926
    %v929 = vtanh.pop %v928
    %931 = vrot.lane.b32.xlu0 %v929, 64
    %v932 = vpop.permute.xlu0 %931
    %v934 = vmul.f32 %v916, %v932
    %v935 = vmul.f32 %v878, %v934
    %v936 = vmul.f32 %v881, 0.0
    %v937 = vadd.f32 %v935, %v936
    %v938 = vmul.f32 %v878, %v928
    %v939 = vadd.f32 %v938, %v936
    %941 = vrot.lane.b32.xlu0 %v906, 32
    %v942 = vpop.permute.xlu0 %941
    %vm944 = vcmask 254976
    %945 = vst.msk [vmem:[#allocation7] sm:$0x3] %vm944, %v942
    %947 = vrot.lane.b32.xlu0 %v935, 32
    %v948 = vpop.permute.xlu0 %947
    %s950 = scalar_lea.vmem [#allocation7], 30
    %951 = vst.msk [vmem:[%s950] sm:$0x3] %vm944, %v948
    %s952 = scalar_lea.vmem %s1, 2
    %v953 = vld [vmem:[%s952] sm:$0x3]
    %s954 = scalar_lea.vmem %s1, 12
    %v955 = vld [vmem:[%s954] sm:$0x3]
    %957 = vrot.lane.b32.xlu0 %v908, 32
    %v958 = vpop.permute.xlu0 %957
    %961 = vrot.lane.b32.xlu0 %v937, 64
    %v962 = vpop.permute.xlu0 %961
    %vm964 = vcmask 261120
    %v965 = vsel %vm964, %v958, %v962
    %v967 = vsel %vm69, %v965, 0
    %969 = vmatprep.subr.mxu0 0.0
    %970 = vmatpush1.msra.mxu0 0.0
    %971 = vmatprep.subr.mxu0 0.0
    %972 = vmatpush1.msra.mxu0 0.0
    %973 = vmatprep.subr.mxu0 0.0
    %974 = vmatpush1.msra.mxu0 0.0
    %975 = vmatprep.subr.mxu0 0.0
    %976 = vmatpush1.msra.mxu0 0.0
    %977 = vmatprep.subr.mxu0 0.0
    %978 = vmatpush1.msra.mxu0 0.0
    %979 = vmatprep.subr.mxu0 0.0
    %980 = vmatpush1.msra.mxu0 0.0
    %981 = vmatprep.subr.mxu0 0.0
    %982 = vmatpush1.msra.mxu0 0.0
    %983 = vmatprep.subr.mxu0 0.0
    %984 = vmatpush1.msra.mxu0 0.0
    %v985 = vand.u32 %v65, 4294901760
    %986 = vmatprep.subr.mxu0 %v985
    %v987 = vand.u32 %v64, 4294901760
    %988 = vmatpush1.msra.mxu0 %v987
    %v989 = vand.u32 %v63, 4294901760
    %990 = vmatprep.subr.mxu0 %v989
    %v991 = vand.u32 %v62, 4294901760
    %992 = vmatpush1.msra.mxu0 %v991
    %v993 = vand.u32 %v61, 4294901760
    %994 = vmatprep.subr.mxu0 %v993
    %v995 = vand.u32 %v60, 4294901760
    %996 = vmatpush1.msra.mxu0 %v995
    %v997 = vand.u32 %v59, 4294901760
    %998 = vmatprep.subr.mxu0 %v997
    %v999 = vand.u32 %v58, 4294901760
    %1000 = vmatpush1.msra.mxu0 %v999
    %v1001 = vand.u32 %v57, 4294901760
    %1002 = vmatprep.subr.mxu0 %v1001
    %v1003 = vand.u32 %v56, 4294901760
    %1004 = vmatpush1.msra.mxu0 %v1003
    %v1005 = vand.u32 %v55, 4294901760
    %1006 = vmatprep.subr.mxu0 %v1005
    %v1007 = vand.u32 %v54, 4294901760
    %1008 = vmatpush1.msra.mxu0 %v1007
    %v1009 = vand.u32 %v53, 4294901760
    %1010 = vmatprep.subr.mxu0 %v1009
    %v1011 = vand.u32 %v52, 4294901760
    %1012 = vmatpush1.msra.mxu0 %v1011
    %v1013 = vand.u32 %v51, 4294901760
    %1014 = vmatprep.subr.mxu0 %v1013
    %v1015 = vand.u32 %v50, 4294901760
    %1016 = vmatpush1.msra.mxu0 %v1015
    %1017 = vmatprep.subr.mxu0 0.0
    %1018 = vmatpush2.msra.mxu0 0.0
    %1019 = vmatprep.subr.mxu0 0.0
    %1020 = vmatpush2.msra.mxu0 0.0
    %1021 = vmatprep.subr.mxu0 0.0
    %1022 = vmatpush2.msra.mxu0 0.0
    %1023 = vmatprep.subr.mxu0 0.0
    %1024 = vmatpush2.msra.mxu0 0.0
    %1025 = vmatprep.subr.mxu0 0.0
    %1026 = vmatpush2.msra.mxu0 0.0
    %1027 = vmatprep.subr.mxu0 0.0
    %1028 = vmatpush2.msra.mxu0 0.0
    %1029 = vmatprep.subr.mxu0 0.0
    %1030 = vmatpush2.msra.mxu0 0.0
    %1031 = vmatprep.subr.mxu0 0.0
    %1032 = vmatpush2.msra.mxu0 0.0
    %1033 = vmatprep.subr.mxu0 0.0
    %1034 = vmatpush2.msra.mxu0 0.0
    %1035 = vmatprep.subr.mxu0 0.0
    %1036 = vmatpush2.msra.mxu0 0.0
    %1037 = vmatprep.subr.mxu0 0.0
    %1038 = vmatpush2.msra.mxu0 0.0
    %1039 = vmatprep.subr.mxu0 0.0
    %1040 = vmatpush2.msra.mxu0 0.0
    %1041 = vmatprep.subr.mxu0 0.0
    %1042 = vmatpush2.msra.mxu0 0.0
    %1043 = vmatprep.subr.mxu0 0.0
    %1044 = vmatpush2.msra.mxu0 0.0
    %1045 = vmatprep.subr.mxu0 0.0
    %1046 = vmatpush2.msra.mxu0 0.0
    %1047 = vmatprep.subr.mxu0 0.0
    %1048 = vmatpush2.msra.mxu0 0.0
    %1049 = vmatprep.mubr.f32.mxu0 0.0
    %v1050 = vand.u32 %v967, 4294901760
    %v1051 = vsub.f32 %v967, %v1050
    %v1052 = vand.u32 %v1051, 4294901760
    %v1053 = vsub.f32 %v1051, %v1052
    %v1054 = vand.u32 %v1053, 4294901760
    %1055 = vmatmul.mubr.f32.gmra.mxu0 %v1054
    %v1056 = vpop.f32.mrf.mxu0
    %v1057 = vadd.f32 0.0, %v1056
    %v1058 = vpop.f32.mrf.mxu0
    %v1059 = vadd.f32 0.0, %v1058
    %1060 = vdwg.mxu0
    %1061 = vmatprep.subr.mxu0 0.0
    %1062 = vmatpush1.msra.mxu0 0.0
    %1063 = vmatprep.subr.mxu0 0.0
    %1064 = vmatpush1.msra.mxu0 0.0
    %1065 = vmatprep.subr.mxu0 0.0
    %1066 = vmatpush1.msra.mxu0 0.0
    %1067 = vmatprep.subr.mxu0 0.0
    %1068 = vmatpush1.msra.mxu0 0.0
    %1069 = vmatprep.subr.mxu0 0.0
    %1070 = vmatpush1.msra.mxu0 0.0
    %1071 = vmatprep.subr.mxu0 0.0
    %1072 = vmatpush1.msra.mxu0 0.0
    %1073 = vmatprep.subr.mxu0 0.0
    %1074 = vmatpush1.msra.mxu0 0.0
    %1075 = vmatprep.subr.mxu0 0.0
    %1076 = vmatpush1.msra.mxu0 0.0
    %v1077 = vand.u32 %v65, 4294901760
    %v1078 = vsub.f32 %v65, %v1077
    %v1079 = vand.u32 %v1078, 4294901760
    %v1080 = vsub.f32 %v1078, %v1079
    %v1081 = vand.u32 %v1080, 4294901760
    %1082 = vmatprep.subr.mxu0 %v1081
    %v1083 = vand.u32 %v64, 4294901760
    %v1084 = vsub.f32 %v64, %v1083
    %v1085 = vand.u32 %v1084, 4294901760
    %v1086 = vsub.f32 %v1084, %v1085
    %v1087 = vand.u32 %v1086, 4294901760
    %1088 = vmatpush1.msra.mxu0 %v1087
    %v1089 = vand.u32 %v63, 4294901760
    %v1090 = vsub.f32 %v63, %v1089
    %v1091 = vand.u32 %v1090, 4294901760
    %v1092 = vsub.f32 %v1090, %v1091
    %v1093 = vand.u32 %v1092, 4294901760
    %1094 = vmatprep.subr.mxu0 %v1093
    %v1095 = vand.u32 %v62, 4294901760
    %v1096 = vsub.f32 %v62, %v1095
    %v1097 = vand.u32 %v1096, 4294901760
    %v1098 = vsub.f32 %v1096, %v1097
    %v1099 = vand.u32 %v1098, 4294901760
    %1100 = vmatpush1.msra.mxu0 %v1099
    %v1101 = vand.u32 %v61, 4294901760
    %v1102 = vsub.f32 %v61, %v1101
    %v1103 = vand.u32 %v1102, 4294901760
    %v1104 = vsub.f32 %v1102, %v1103
    %v1105 = vand.u32 %v1104, 4294901760
    %1106 = vmatprep.subr.mxu0 %v1105
    %v1107 = vand.u32 %v60, 4294901760
    %v1108 = vsub.f32 %v60, %v1107
    %v1109 = vand.u32 %v1108, 4294901760
    %v1110 = vsub.f32 %v1108, %v1109
    %v1111 = vand.u32 %v1110, 4294901760
    %1112 = vmatpush1.msra.mxu0 %v1111
    %v1113 = vand.u32 %v59, 4294901760
    %v1114 = vsub.f32 %v59, %v1113
    %v1115 = vand.u32 %v1114, 4294901760
    %v1116 = vsub.f32 %v1114, %v1115
    %v1117 = vand.u32 %v1116, 4294901760
    %1118 = vmatprep.subr.mxu0 %v1117
    %v1119 = vand.u32 %v58, 4294901760
    %v1120 = vsub.f32 %v58, %v1119
    %v1121 = vand.u32 %v1120, 4294901760
    %v1122 = vsub.f32 %v1120, %v1121
    %v1123 = vand.u32 %v1122, 4294901760
    %1124 = vmatpush1.msra.mxu0 %v1123
    %v1125 = vand.u32 %v57, 4294901760
    %v1126 = vsub.f32 %v57, %v1125
    %v1127 = vand.u32 %v1126, 4294901760
    %v1128 = vsub.f32 %v1126, %v1127
    %v1129 = vand.u32 %v1128, 4294901760
    %1130 = vmatprep.subr.mxu0 %v1129
    %v1131 = vand.u32 %v56, 4294901760
    %v1132 = vsub.f32 %v56, %v1131
    %v1133 = vand.u32 %v1132, 4294901760
    %v1134 = vsub.f32 %v1132, %v1133
    %v1135 = vand.u32 %v1134, 4294901760
    %1136 = vmatpush1.msra.mxu0 %v1135
    %v1137 = vand.u32 %v55, 4294901760
    %v1138 = vsub.f32 %v55, %v1137
    %v1139 = vand.u32 %v1138, 4294901760
    %v1140 = vsub.f32 %v1138, %v1139
    %v1141 = vand.u32 %v1140, 4294901760
    %1142 = vmatprep.subr.mxu0 %v1141
    %v1143 = vand.u32 %v54, 4294901760
    %v1144 = vsub.f32 %v54, %v1143
    %v1145 = vand.u32 %v1144, 4294901760
    %v1146 = vsub.f32 %v1144, %v1145
    %v1147 = vand.u32 %v1146, 4294901760
    %1148 = vmatpush1.msra.mxu0 %v1147
    %v1149 = vand.u32 %v53, 4294901760
    %v1150 = vsub.f32 %v53, %v1149
    %v1151 = vand.u32 %v1150, 4294901760
    %v1152 = vsub.f32 %v1150, %v1151
    %v1153 = vand.u32 %v1152, 4294901760
    %1154 = vmatprep.subr.mxu0 %v1153
    %v1155 = vand.u32 %v52, 4294901760
    %v1156 = vsub.f32 %v52, %v1155
    %v1157 = vand.u32 %v1156, 4294901760
    %v1158 = vsub.f32 %v1156, %v1157
    %v1159 = vand.u32 %v1158, 4294901760
    %1160 = vmatpush1.msra.mxu0 %v1159
    %v1161 = vand.u32 %v51, 4294901760
    %v1162 = vsub.f32 %v51, %v1161
    %v1163 = vand.u32 %v1162, 4294901760
    %v1164 = vsub.f32 %v1162, %v1163
    %v1165 = vand.u32 %v1164, 4294901760
    %1166 = vmatprep.subr.mxu0 %v1165
    %v1167 = vand.u32 %v50, 4294901760
    %v1168 = vsub.f32 %v50, %v1167
    %v1169 = vand.u32 %v1168, 4294901760
    %v1170 = vsub.f32 %v1168, %v1169
    %v1171 = vand.u32 %v1170, 4294901760
    %1172 = vmatpush1.msra.mxu0 %v1171
    %1173 = vmatprep.subr.mxu0 0.0
    %1174 = vmatpush2.msra.mxu0 0.0
    %1175 = vmatprep.subr.mxu0 0.0
    %1176 = vmatpush2.msra.mxu0 0.0
    %1177 = vmatprep.subr.mxu0 0.0
    %1178 = vmatpush2.msra.mxu0 0.0
    %1179 = vmatprep.subr.mxu0 0.0
    %1180 = vmatpush2.msra.mxu0 0.0
    %1181 = vmatprep.subr.mxu0 0.0
    %1182 = vmatpush2.msra.mxu0 0.0
    %1183 = vmatprep.subr.mxu0 0.0
    %1184 = vmatpush2.msra.mxu0 0.0
    %1185 = vmatprep.subr.mxu0 0.0
    %1186 = vmatpush2.msra.mxu0 0.0
    %1187 = vmatprep.subr.mxu0 0.0
    %1188 = vmatpush2.msra.mxu0 0.0
    %1189 = vmatprep.subr.mxu0 0.0
    %1190 = vmatpush2.msra.mxu0 0.0
    %1191 = vmatprep.subr.mxu0 0.0
    %1192 = vmatpush2.msra.mxu0 0.0
    %1193 = vmatprep.subr.mxu0 0.0
    %1194 = vmatpush2.msra.mxu0 0.0
    %1195 = vmatprep.subr.mxu0 0.0
    %1196 = vmatpush2.msra.mxu0 0.0
    %1197 = vmatprep.subr.mxu0 0.0
    %1198 = vmatpush2.msra.mxu0 0.0
    %1199 = vmatprep.subr.mxu0 0.0
    %1200 = vmatpush2.msra.mxu0 0.0
    %1201 = vmatprep.subr.mxu0 0.0
    %1202 = vmatpush2.msra.mxu0 0.0
    %1203 = vmatprep.subr.mxu0 0.0
    %1204 = vmatpush2.msra.mxu0 0.0
    %1205 = vmatprep.mubr.f32.mxu0 0.0
    %v1206 = vand.u32 %v967, 4294901760
    %1207 = vmatmul.mubr.f32.gmra.mxu0 %v1206
    %v1208 = vpop.f32.mrf.mxu0
    %v1209 = vadd.f32 %v1057, %v1208
    %v1210 = vpop.f32.mrf.mxu0
    %v1211 = vadd.f32 %v1059, %v1210
    %1212 = vdwg.mxu0
    %1213 = vmatprep.subr.mxu0 0.0
    %1214 = vmatpush1.msra.mxu0 0.0
    %1215 = vmatprep.subr.mxu0 0.0
    %1216 = vmatpush1.msra.mxu0 0.0
    %1217 = vmatprep.subr.mxu0 0.0
    %1218 = vmatpush1.msra.mxu0 0.0
    %1219 = vmatprep.subr.mxu0 0.0
    %1220 = vmatpush1.msra.mxu0 0.0
    %1221 = vmatprep.subr.mxu0 0.0
    %1222 = vmatpush1.msra.mxu0 0.0
    %1223 = vmatprep.subr.mxu0 0.0
    %1224 = vmatpush1.msra.mxu0 0.0
    %1225 = vmatprep.subr.mxu0 0.0
    %1226 = vmatpush1.msra.mxu0 0.0
    %1227 = vmatprep.subr.mxu0 0.0
    %1228 = vmatpush1.msra.mxu0 0.0
    %v1229 = vand.u32 %v65, 4294901760
    %v1230 = vsub.f32 %v65, %v1229
    %1231 = vmatprep.subr.mxu0 %v1230
    %v1232 = vand.u32 %v64, 4294901760
    %v1233 = vsub.f32 %v64, %v1232
    %1234 = vmatpush1.msra.mxu0 %v1233
    %v1235 = vand.u32 %v63, 4294901760
    %v1236 = vsub.f32 %v63, %v1235
    %1237 = vmatprep.subr.mxu0 %v1236
    %v1238 = vand.u32 %v62, 4294901760
    %v1239 = vsub.f32 %v62, %v1238
    %1240 = vmatpush1.msra.mxu0 %v1239
    %v1241 = vand.u32 %v61, 4294901760
    %v1242 = vsub.f32 %v61, %v1241
    %1243 = vmatprep.subr.mxu0 %v1242
    %v1244 = vand.u32 %v60, 4294901760
    %v1245 = vsub.f32 %v60, %v1244
    %1246 = vmatpush1.msra.mxu0 %v1245
    %v1247 = vand.u32 %v59, 4294901760
    %v1248 = vsub.f32 %v59, %v1247
    %1249 = vmatprep.subr.mxu0 %v1248
    %v1250 = vand.u32 %v58, 4294901760
    %v1251 = vsub.f32 %v58, %v1250
    %1252 = vmatpush1.msra.mxu0 %v1251
    %v1253 = vand.u32 %v57, 4294901760
    %v1254 = vsub.f32 %v57, %v1253
    %1255 = vmatprep.subr.mxu0 %v1254
    %v1256 = vand.u32 %v56, 4294901760
    %v1257 = vsub.f32 %v56, %v1256
    %1258 = vmatpush1.msra.mxu0 %v1257
    %v1259 = vand.u32 %v55, 4294901760
    %v1260 = vsub.f32 %v55, %v1259
    %1261 = vmatprep.subr.mxu0 %v1260
    %v1262 = vand.u32 %v54, 4294901760
    %v1263 = vsub.f32 %v54, %v1262
    %1264 = vmatpush1.msra.mxu0 %v1263
    %v1265 = vand.u32 %v53, 4294901760
    %v1266 = vsub.f32 %v53, %v1265
    %1267 = vmatprep.subr.mxu0 %v1266
    %v1268 = vand.u32 %v52, 4294901760
    %v1269 = vsub.f32 %v52, %v1268
    %1270 = vmatpush1.msra.mxu0 %v1269
    %v1271 = vand.u32 %v51, 4294901760
    %v1272 = vsub.f32 %v51, %v1271
    %1273 = vmatprep.subr.mxu0 %v1272
    %v1274 = vand.u32 %v50, 4294901760
    %v1275 = vsub.f32 %v50, %v1274
    %1276 = vmatpush1.msra.mxu0 %v1275
    %1277 = vmatprep.subr.mxu0 0.0
    %1278 = vmatpush2.msra.mxu0 0.0
    %1279 = vmatprep.subr.mxu0 0.0
    %1280 = vmatpush2.msra.mxu0 0.0
    %1281 = vmatprep.subr.mxu0 0.0
    %1282 = vmatpush2.msra.mxu0 0.0
    %1283 = vmatprep.subr.mxu0 0.0
    %1284 = vmatpush2.msra.mxu0 0.0
    %1285 = vmatprep.subr.mxu0 0.0
    %1286 = vmatpush2.msra.mxu0 0.0
    %1287 = vmatprep.subr.mxu0 0.0
    %1288 = vmatpush2.msra.mxu0 0.0
    %1289 = vmatprep.subr.mxu0 0.0
    %1290 = vmatpush2.msra.mxu0 0.0
    %1291 = vmatprep.subr.mxu0 0.0
    %1292 = vmatpush2.msra.mxu0 0.0
    %1293 = vmatprep.subr.mxu0 0.0
    %1294 = vmatpush2.msra.mxu0 0.0
    %1295 = vmatprep.subr.mxu0 0.0
    %1296 = vmatpush2.msra.mxu0 0.0
    %1297 = vmatprep.subr.mxu0 0.0
    %1298 = vmatpush2.msra.mxu0 0.0
    %1299 = vmatprep.subr.mxu0 0.0
    %1300 = vmatpush2.msra.mxu0 0.0
    %1301 = vmatprep.subr.mxu0 0.0
    %1302 = vmatpush2.msra.mxu0 0.0
    %1303 = vmatprep.subr.mxu0 0.0
    %1304 = vmatpush2.msra.mxu0 0.0
    %1305 = vmatprep.subr.mxu0 0.0
    %1306 = vmatpush2.msra.mxu0 0.0
    %1307 = vmatprep.subr.mxu0 0.0
    %1308 = vmatpush2.msra.mxu0 0.0
    %1309 = vmatprep.mubr.f32.mxu0 0.0
    %v1310 = vand.u32 %v967, 4294901760
    %v1311 = vsub.f32 %v967, %v1310
    %1312 = vmatmul.mubr.f32.gmra.mxu0 %v1311
    %v1313 = vpop.f32.mrf.mxu0
    %v1314 = vadd.f32 %v1209, %v1313
    %v1315 = vpop.f32.mrf.mxu0
    %v1316 = vadd.f32 %v1211, %v1315
    %1317 = vdwg.mxu0
    %1318 = vmatprep.subr.mxu0 0.0
    %1319 = vmatpush1.msra.mxu0 0.0
    %1320 = vmatprep.subr.mxu0 0.0
    %1321 = vmatpush1.msra.mxu0 0.0
    %1322 = vmatprep.subr.mxu0 0.0
    %1323 = vmatpush1.msra.mxu0 0.0
    %1324 = vmatprep.subr.mxu0 0.0
    %1325 = vmatpush1.msra.mxu0 0.0
    %1326 = vmatprep.subr.mxu0 0.0
    %1327 = vmatpush1.msra.mxu0 0.0
    %1328 = vmatprep.subr.mxu0 0.0
    %1329 = vmatpush1.msra.mxu0 0.0
    %1330 = vmatprep.subr.mxu0 0.0
    %1331 = vmatpush1.msra.mxu0 0.0
    %1332 = vmatprep.subr.mxu0 0.0
    %1333 = vmatpush1.msra.mxu0 0.0
    %v1334 = vand.u32 %v65, 4294901760
    %1335 = vmatprep.subr.mxu0 %v1334
    %v1336 = vand.u32 %v64, 4294901760
    %1337 = vmatpush1.msra.mxu0 %v1336
    %v1338 = vand.u32 %v63, 4294901760
    %1339 = vmatprep.subr.mxu0 %v1338
    %v1340 = vand.u32 %v62, 4294901760
    %1341 = vmatpush1.msra.mxu0 %v1340
    %v1342 = vand.u32 %v61, 4294901760
    %1343 = vmatprep.subr.mxu0 %v1342
    %v1344 = vand.u32 %v60, 4294901760
    %1345 = vmatpush1.msra.mxu0 %v1344
    %v1346 = vand.u32 %v59, 4294901760
    %1347 = vmatprep.subr.mxu0 %v1346
    %v1348 = vand.u32 %v58, 4294901760
    %1349 = vmatpush1.msra.mxu0 %v1348
    %v1350 = vand.u32 %v57, 4294901760
    %1351 = vmatprep.subr.mxu0 %v1350
    %v1352 = vand.u32 %v56, 4294901760
    %1353 = vmatpush1.msra.mxu0 %v1352
    %v1354 = vand.u32 %v55, 4294901760
    %1355 = vmatprep.subr.mxu0 %v1354
    %v1356 = vand.u32 %v54, 4294901760
    %1357 = vmatpush1.msra.mxu0 %v1356
    %v1358 = vand.u32 %v53, 4294901760
    %1359 = vmatprep.subr.mxu0 %v1358
    %v1360 = vand.u32 %v52, 4294901760
    %1361 = vmatpush1.msra.mxu0 %v1360
    %v1362 = vand.u32 %v51, 4294901760
    %1363 = vmatprep.subr.mxu0 %v1362
    %v1364 = vand.u32 %v50, 4294901760
    %1365 = vmatpush1.msra.mxu0 %v1364
    %1366 = vmatprep.subr.mxu0 0.0
    %1367 = vmatpush2.msra.mxu0 0.0
    %1368 = vmatprep.subr.mxu0 0.0
    %1369 = vmatpush2.msra.mxu0 0.0
    %1370 = vmatprep.subr.mxu0 0.0
    %1371 = vmatpush2.msra.mxu0 0.0
    %1372 = vmatprep.subr.mxu0 0.0
    %1373 = vmatpush2.msra.mxu0 0.0
    %1374 = vmatprep.subr.mxu0 0.0
    %1375 = vmatpush2.msra.mxu0 0.0
    %1376 = vmatprep.subr.mxu0 0.0
    %1377 = vmatpush2.msra.mxu0 0.0
    %1378 = vmatprep.subr.mxu0 0.0
    %1379 = vmatpush2.msra.mxu0 0.0
    %1380 = vmatprep.subr.mxu0 0.0
    %1381 = vmatpush2.msra.mxu0 0.0
    %1382 = vmatprep.subr.mxu0 0.0
    %1383 = vmatpush2.msra.mxu0 0.0
    %1384 = vmatprep.subr.mxu0 0.0
    %1385 = vmatpush2.msra.mxu0 0.0
    %1386 = vmatprep.subr.mxu0 0.0
    %1387 = vmatpush2.msra.mxu0 0.0
    %1388 = vmatprep.subr.mxu0 0.0
    %1389 = vmatpush2.msra.mxu0 0.0
    %1390 = vmatprep.subr.mxu0 0.0
    %1391 = vmatpush2.msra.mxu0 0.0
    %1392 = vmatprep.subr.mxu0 0.0
    %1393 = vmatpush2.msra.mxu0 0.0
    %1394 = vmatprep.subr.mxu0 0.0
    %1395 = vmatpush2.msra.mxu0 0.0
    %1396 = vmatprep.subr.mxu0 0.0
    %1397 = vmatpush2.msra.mxu0 0.0
    %1398 = vmatprep.mubr.f32.mxu0 0.0
    %v1399 = vand.u32 %v967, 4294901760
    %v1400 = vsub.f32 %v967, %v1399
    %v1401 = vand.u32 %v1400, 4294901760
    %1402 = vmatmul.mubr.f32.gmra.mxu0 %v1401
    %v1403 = vpop.f32.mrf.mxu0
    %v1404 = vadd.f32 %v1314, %v1403
    %v1405 = vpop.f32.mrf.mxu0
    %v1406 = vadd.f32 %v1316, %v1405
    %1407 = vdwg.mxu0
    %1408 = vmatprep.subr.mxu0 0.0
    %1409 = vmatpush1.msra.mxu0 0.0
    %1410 = vmatprep.subr.mxu0 0.0
    %1411 = vmatpush1.msra.mxu0 0.0
    %1412 = vmatprep.subr.mxu0 0.0
    %1413 = vmatpush1.msra.mxu0 0.0
    %1414 = vmatprep.subr.mxu0 0.0
    %1415 = vmatpush1.msra.mxu0 0.0
    %1416 = vmatprep.subr.mxu0 0.0
    %1417 = vmatpush1.msra.mxu0 0.0
    %1418 = vmatprep.subr.mxu0 0.0
    %1419 = vmatpush1.msra.mxu0 0.0
    %1420 = vmatprep.subr.mxu0 0.0
    %1421 = vmatpush1.msra.mxu0 0.0
    %1422 = vmatprep.subr.mxu0 0.0
    %1423 = vmatpush1.msra.mxu0 0.0
    %v1424 = vand.u32 %v65, 4294901760
    %v1425 = vsub.f32 %v65, %v1424
    %v1426 = vand.u32 %v1425, 4294901760
    %1427 = vmatprep.subr.mxu0 %v1426
    %v1428 = vand.u32 %v64, 4294901760
    %v1429 = vsub.f32 %v64, %v1428
    %v1430 = vand.u32 %v1429, 4294901760
    %1431 = vmatpush1.msra.mxu0 %v1430
    %v1432 = vand.u32 %v63, 4294901760
    %v1433 = vsub.f32 %v63, %v1432
    %v1434 = vand.u32 %v1433, 4294901760
    %1435 = vmatprep.subr.mxu0 %v1434
    %v1436 = vand.u32 %v62, 4294901760
    %v1437 = vsub.f32 %v62, %v1436
    %v1438 = vand.u32 %v1437, 4294901760
    %1439 = vmatpush1.msra.mxu0 %v1438
    %v1440 = vand.u32 %v61, 4294901760
    %v1441 = vsub.f32 %v61, %v1440
    %v1442 = vand.u32 %v1441, 4294901760
    %1443 = vmatprep.subr.mxu0 %v1442
    %v1444 = vand.u32 %v60, 4294901760
    %v1445 = vsub.f32 %v60, %v1444
    %v1446 = vand.u32 %v1445, 4294901760
    %1447 = vmatpush1.msra.mxu0 %v1446
    %v1448 = vand.u32 %v59, 4294901760
    %v1449 = vsub.f32 %v59, %v1448
    %v1450 = vand.u32 %v1449, 4294901760
    %1451 = vmatprep.subr.mxu0 %v1450
    %v1452 = vand.u32 %v58, 4294901760
    %v1453 = vsub.f32 %v58, %v1452
    %v1454 = vand.u32 %v1453, 4294901760
    %1455 = vmatpush1.msra.mxu0 %v1454
    %v1456 = vand.u32 %v57, 4294901760
    %v1457 = vsub.f32 %v57, %v1456
    %v1458 = vand.u32 %v1457, 4294901760
    %1459 = vmatprep.subr.mxu0 %v1458
    %v1460 = vand.u32 %v56, 4294901760
    %v1461 = vsub.f32 %v56, %v1460
    %v1462 = vand.u32 %v1461, 4294901760
    %1463 = vmatpush1.msra.mxu0 %v1462
    %v1464 = vand.u32 %v55, 4294901760
    %v1465 = vsub.f32 %v55, %v1464
    %v1466 = vand.u32 %v1465, 4294901760
    %1467 = vmatprep.subr.mxu0 %v1466
    %v1468 = vand.u32 %v54, 4294901760
    %v1469 = vsub.f32 %v54, %v1468
    %v1470 = vand.u32 %v1469, 4294901760
    %1471 = vmatpush1.msra.mxu0 %v1470
    %v1472 = vand.u32 %v53, 4294901760
    %v1473 = vsub.f32 %v53, %v1472
    %v1474 = vand.u32 %v1473, 4294901760
    %1475 = vmatprep.subr.mxu0 %v1474
    %v1476 = vand.u32 %v52, 4294901760
    %v1477 = vsub.f32 %v52, %v1476
    %v1478 = vand.u32 %v1477, 4294901760
    %1479 = vmatpush1.msra.mxu0 %v1478
    %v1480 = vand.u32 %v51, 4294901760
    %v1481 = vsub.f32 %v51, %v1480
    %v1482 = vand.u32 %v1481, 4294901760
    %1483 = vmatprep.subr.mxu0 %v1482
    %v1484 = vand.u32 %v50, 4294901760
    %v1485 = vsub.f32 %v50, %v1484
    %v1486 = vand.u32 %v1485, 4294901760
    %1487 = vmatpush1.msra.mxu0 %v1486
    %1488 = vmatprep.subr.mxu0 0.0
    %1489 = vmatpush2.msra.mxu0 0.0
    %1490 = vmatprep.subr.mxu0 0.0
    %1491 = vmatpush2.msra.mxu0 0.0
    %1492 = vmatprep.subr.mxu0 0.0
    %1493 = vmatpush2.msra.mxu0 0.0
    %1494 = vmatprep.subr.mxu0 0.0
    %1495 = vmatpush2.msra.mxu0 0.0
    %1496 = vmatprep.subr.mxu0 0.0
    %1497 = vmatpush2.msra.mxu0 0.0
    %1498 = vmatprep.subr.mxu0 0.0
    %1499 = vmatpush2.msra.mxu0 0.0
    %1500 = vmatprep.subr.mxu0 0.0
    %1501 = vmatpush2.msra.mxu0 0.0
    %1502 = vmatprep.subr.mxu0 0.0
    %1503 = vmatpush2.msra.mxu0 0.0
    %1504 = vmatprep.subr.mxu0 0.0
    %1505 = vmatpush2.msra.mxu0 0.0
    %1506 = vmatprep.subr.mxu0 0.0
    %1507 = vmatpush2.msra.mxu0 0.0
    %1508 = vmatprep.subr.mxu0 0.0
    %1509 = vmatpush2.msra.mxu0 0.0
    %1510 = vmatprep.subr.mxu0 0.0
    %1511 = vmatpush2.msra.mxu0 0.0
    %1512 = vmatprep.subr.mxu0 0.0
    %1513 = vmatpush2.msra.mxu0 0.0
    %1514 = vmatprep.subr.mxu0 0.0
    %1515 = vmatpush2.msra.mxu0 0.0
    %1516 = vmatprep.subr.mxu0 0.0
    %1517 = vmatpush2.msra.mxu0 0.0
    %1518 = vmatprep.subr.mxu0 0.0
    %1519 = vmatpush2.msra.mxu0 0.0
    %1520 = vmatprep.mubr.f32.mxu0 0.0
    %v1521 = vand.u32 %v967, 4294901760
    %1522 = vmatmul.mubr.f32.gmra.mxu0 %v1521
    %v1523 = vpop.f32.mrf.mxu0
    %v1524 = vadd.f32 %v1404, %v1523
    %v1525 = vpop.f32.mrf.mxu0
    %v1526 = vadd.f32 %v1406, %v1525
    %1527 = vdwg.mxu0
    %1528 = vmatprep.subr.mxu0 0.0
    %1529 = vmatpush1.msra.mxu0 0.0
    %1530 = vmatprep.subr.mxu0 0.0
    %1531 = vmatpush1.msra.mxu0 0.0
    %1532 = vmatprep.subr.mxu0 0.0
    %1533 = vmatpush1.msra.mxu0 0.0
    %1534 = vmatprep.subr.mxu0 0.0
    %1535 = vmatpush1.msra.mxu0 0.0
    %1536 = vmatprep.subr.mxu0 0.0
    %1537 = vmatpush1.msra.mxu0 0.0
    %1538 = vmatprep.subr.mxu0 0.0
    %1539 = vmatpush1.msra.mxu0 0.0
    %1540 = vmatprep.subr.mxu0 0.0
    %1541 = vmatpush1.msra.mxu0 0.0
    %1542 = vmatprep.subr.mxu0 0.0
    %1543 = vmatpush1.msra.mxu0 0.0
    %v1544 = vand.u32 %v65, 4294901760
    %1545 = vmatprep.subr.mxu0 %v1544
    %v1546 = vand.u32 %v64, 4294901760
    %1547 = vmatpush1.msra.mxu0 %v1546
    %v1548 = vand.u32 %v63, 4294901760
    %1549 = vmatprep.subr.mxu0 %v1548
    %v1550 = vand.u32 %v62, 4294901760
    %1551 = vmatpush1.msra.mxu0 %v1550
    %v1552 = vand.u32 %v61, 4294901760
    %1553 = vmatprep.subr.mxu0 %v1552
    %v1554 = vand.u32 %v60, 4294901760
    %1555 = vmatpush1.msra.mxu0 %v1554
    %v1556 = vand.u32 %v59, 4294901760
    %1557 = vmatprep.subr.mxu0 %v1556
    %v1558 = vand.u32 %v58, 4294901760
    %1559 = vmatpush1.msra.mxu0 %v1558
    %v1560 = vand.u32 %v57, 4294901760
    %1561 = vmatprep.subr.mxu0 %v1560
    %v1562 = vand.u32 %v56, 4294901760
    %1563 = vmatpush1.msra.mxu0 %v1562
    %v1564 = vand.u32 %v55, 4294901760
    %1565 = vmatprep.subr.mxu0 %v1564
    %v1566 = vand.u32 %v54, 4294901760
    %1567 = vmatpush1.msra.mxu0 %v1566
    %v1568 = vand.u32 %v53, 4294901760
    %1569 = vmatprep.subr.mxu0 %v1568
    %v1570 = vand.u32 %v52, 4294901760
    %1571 = vmatpush1.msra.mxu0 %v1570
    %v1572 = vand.u32 %v51, 4294901760
    %1573 = vmatprep.subr.mxu0 %v1572
    %v1574 = vand.u32 %v50, 4294901760
    %1575 = vmatpush1.msra.mxu0 %v1574
    %1576 = vmatprep.subr.mxu0 0.0
    %1577 = vmatpush2.msra.mxu0 0.0
    %1578 = vmatprep.subr.mxu0 0.0
    %1579 = vmatpush2.msra.mxu0 0.0
    %1580 = vmatprep.subr.mxu0 0.0
    %1581 = vmatpush2.msra.mxu0 0.0
    %1582 = vmatprep.subr.mxu0 0.0
    %1583 = vmatpush2.msra.mxu0 0.0
    %1584 = vmatprep.subr.mxu0 0.0
    %1585 = vmatpush2.msra.mxu0 0.0
    %1586 = vmatprep.subr.mxu0 0.0
    %1587 = vmatpush2.msra.mxu0 0.0
    %1588 = vmatprep.subr.mxu0 0.0
    %1589 = vmatpush2.msra.mxu0 0.0
    %1590 = vmatprep.subr.mxu0 0.0
    %1591 = vmatpush2.msra.mxu0 0.0
    %1592 = vmatprep.subr.mxu0 0.0
    %1593 = vmatpush2.msra.mxu0 0.0
    %1594 = vmatprep.subr.mxu0 0.0
    %1595 = vmatpush2.msra.mxu0 0.0
    %1596 = vmatprep.subr.mxu0 0.0
    %1597 = vmatpush2.msra.mxu0 0.0
    %1598 = vmatprep.subr.mxu0 0.0
    %1599 = vmatpush2.msra.mxu0 0.0
    %1600 = vmatprep.subr.mxu0 0.0
    %1601 = vmatpush2.msra.mxu0 0.0
    %1602 = vmatprep.subr.mxu0 0.0
    %1603 = vmatpush2.msra.mxu0 0.0
    %1604 = vmatprep.subr.mxu0 0.0
    %1605 = vmatpush2.msra.mxu0 0.0
    %1606 = vmatprep.subr.mxu0 0.0
    %1607 = vmatpush2.msra.mxu0 0.0
    %1608 = vmatprep.mubr.f32.mxu0 0.0
    %v1609 = vand.u32 %v967, 4294901760
    %1610 = vmatmul.mubr.f32.gmra.mxu0 %v1609
    %v1611 = vpop.f32.mrf.mxu0
    %v1612 = vadd.f32 %v1524, %v1611
    %v1613 = vpop.f32.mrf.mxu0
    %v1614 = vadd.f32 %v1526, %v1613
    %1615 = vdwg.mxu0
    %v1617 = vsel %vm720, %v953, 0
    %1619 = vmatprep.subr.mxu0 0.0
    %1620 = vmatpush1.msra.mxu0 0.0
    %1621 = vmatprep.subr.mxu0 0.0
    %1622 = vmatpush1.msra.mxu0 0.0
    %1623 = vmatprep.subr.mxu0 0.0
    %1624 = vmatpush1.msra.mxu0 0.0
    %1625 = vmatprep.subr.mxu0 0.0
    %1626 = vmatpush1.msra.mxu0 0.0
    %1627 = vmatprep.subr.mxu0 0.0
    %1628 = vmatpush1.msra.mxu0 0.0
    %1629 = vmatprep.subr.mxu0 0.0
    %1630 = vmatpush1.msra.mxu0 0.0
    %1631 = vmatprep.subr.mxu0 0.0
    %1632 = vmatpush1.msra.mxu0 0.0
    %1633 = vmatprep.subr.mxu0 0.0
    %1634 = vmatpush1.msra.mxu0 0.0
    %1635 = vmatprep.subr.mxu0 0.0
    %1636 = vmatpush1.msra.mxu0 0.0
    %1637 = vmatprep.subr.mxu0 0.0
    %1638 = vmatpush1.msra.mxu0 0.0
    %1639 = vmatprep.subr.mxu0 0.0
    %1640 = vmatpush1.msra.mxu0 0.0
    %1641 = vmatprep.subr.mxu0 0.0
    %1642 = vmatpush1.msra.mxu0 0.0
    %1643 = vmatprep.subr.mxu0 0.0
    %1644 = vmatpush1.msra.mxu0 0.0
    %1645 = vmatprep.subr.mxu0 0.0
    %1646 = vmatpush1.msra.mxu0 0.0
    %1647 = vmatprep.subr.mxu0 0.0
    %1648 = vmatpush1.msra.mxu0 %v48
    %1649 = vmatprep.subr.mxu0 0.0
    %1650 = vmatpush1.msra.mxu0 %v46
    %1651 = vmatprep.subr.mxu0 0.0
    %1652 = vmatpush2.msra.mxu0 0.0
    %1653 = vmatprep.subr.mxu0 0.0
    %1654 = vmatpush2.msra.mxu0 0.0
    %1655 = vmatprep.subr.mxu0 0.0
    %1656 = vmatpush2.msra.mxu0 0.0
    %1657 = vmatprep.subr.mxu0 0.0
    %1658 = vmatpush2.msra.mxu0 0.0
    %1659 = vmatprep.subr.mxu0 0.0
    %1660 = vmatpush2.msra.mxu0 0.0
    %1661 = vmatprep.subr.mxu0 0.0
    %1662 = vmatpush2.msra.mxu0 0.0
    %1663 = vmatprep.subr.mxu0 0.0
    %1664 = vmatpush2.msra.mxu0 0.0
    %1665 = vmatprep.subr.mxu0 0.0
    %1666 = vmatpush2.msra.mxu0 0.0
    %1667 = vmatprep.subr.mxu0 0.0
    %1668 = vmatpush2.msra.mxu0 0.0
    %1669 = vmatprep.subr.mxu0 0.0
    %1670 = vmatpush2.msra.mxu0 0.0
    %1671 = vmatprep.subr.mxu0 0.0
    %1672 = vmatpush2.msra.mxu0 0.0
    %1673 = vmatprep.subr.mxu0 0.0
    %1674 = vmatpush2.msra.mxu0 0.0
    %1675 = vmatprep.subr.mxu0 0.0
    %1676 = vmatpush2.msra.mxu0 0.0
    %1677 = vmatprep.subr.mxu0 0.0
    %1678 = vmatpush2.msra.mxu0 0.0
    %1679 = vmatprep.subr.mxu0 0.0
    %1680 = vmatpush2.msra.mxu0 0.0
    %1681 = vmatprep.subr.mxu0 0.0
    %1682 = vmatpush2.msra.mxu0 0.0
    %1683 = vmatprep.mubr.f32.mxu0 0.0
    %1684 = vmatmul.mubr.f32.gmra.mxu0 %v1617
    %v1685 = vpop.f32.mrf.mxu0
    %v1686 = vadd.f32 %v1612, %v1685
    %v1687 = vpop.f32.mrf.mxu0
    %1688 = vdwg.mxu0
    %v1690 = vsel %vm720, %v955, 0
    %1692 = vmatprep.subr.mxu0 0.0
    %1693 = vmatpush1.msra.mxu0 0.0
    %1694 = vmatprep.subr.mxu0 0.0
    %1695 = vmatpush1.msra.mxu0 0.0
    %1696 = vmatprep.subr.mxu0 0.0
    %1697 = vmatpush1.msra.mxu0 0.0
    %1698 = vmatprep.subr.mxu0 0.0
    %1699 = vmatpush1.msra.mxu0 0.0
    %1700 = vmatprep.subr.mxu0 0.0
    %1701 = vmatpush1.msra.mxu0 0.0
    %1702 = vmatprep.subr.mxu0 0.0
    %1703 = vmatpush1.msra.mxu0 0.0
    %1704 = vmatprep.subr.mxu0 0.0
    %1705 = vmatpush1.msra.mxu0 0.0
    %1706 = vmatprep.subr.mxu0 0.0
    %1707 = vmatpush1.msra.mxu0 0.0
    %1708 = vmatprep.subr.mxu0 0.0
    %1709 = vmatpush1.msra.mxu0 0.0
    %1710 = vmatprep.subr.mxu0 0.0
    %1711 = vmatpush1.msra.mxu0 0.0
    %1712 = vmatprep.subr.mxu0 0.0
    %1713 = vmatpush1.msra.mxu0 0.0
    %1714 = vmatprep.subr.mxu0 0.0
    %1715 = vmatpush1.msra.mxu0 0.0
    %1716 = vmatprep.subr.mxu0 0.0
    %1717 = vmatpush1.msra.mxu0 0.0
    %1718 = vmatprep.subr.mxu0 0.0
    %1719 = vmatpush1.msra.mxu0 0.0
    %1720 = vmatprep.subr.mxu0 0.0
    %1721 = vmatpush1.msra.mxu0 %v49
    %1722 = vmatprep.subr.mxu0 0.0
    %1723 = vmatpush1.msra.mxu0 %v47
    %1724 = vmatprep.subr.mxu0 0.0
    %1725 = vmatpush2.msra.mxu0 0.0
    %1726 = vmatprep.subr.mxu0 0.0
    %1727 = vmatpush2.msra.mxu0 0.0
    %1728 = vmatprep.subr.mxu0 0.0
    %1729 = vmatpush2.msra.mxu0 0.0
    %1730 = vmatprep.subr.mxu0 0.0
    %1731 = vmatpush2.msra.mxu0 0.0
    %1732 = vmatprep.subr.mxu0 0.0
    %1733 = vmatpush2.msra.mxu0 0.0
    %1734 = vmatprep.subr.mxu0 0.0
    %1735 = vmatpush2.msra.mxu0 0.0
    %1736 = vmatprep.subr.mxu0 0.0
    %1737 = vmatpush2.msra.mxu0 0.0
    %1738 = vmatprep.subr.mxu0 0.0
    %1739 = vmatpush2.msra.mxu0 0.0
    %1740 = vmatprep.subr.mxu0 0.0
    %1741 = vmatpush2.msra.mxu0 0.0
    %1742 = vmatprep.subr.mxu0 0.0
    %1743 = vmatpush2.msra.mxu0 0.0
    %1744 = vmatprep.subr.mxu0 0.0
    %1745 = vmatpush2.msra.mxu0 0.0
    %1746 = vmatprep.subr.mxu0 0.0
    %1747 = vmatpush2.msra.mxu0 0.0
    %1748 = vmatprep.subr.mxu0 0.0
    %1749 = vmatpush2.msra.mxu0 0.0
    %1750 = vmatprep.subr.mxu0 0.0
    %1751 = vmatpush2.msra.mxu0 0.0
    %1752 = vmatprep.subr.mxu0 0.0
    %1753 = vmatpush2.msra.mxu0 0.0
    %1754 = vmatprep.subr.mxu0 0.0
    %1755 = vmatpush2.msra.mxu0 0.0
    %1756 = vmatprep.mubr.f32.mxu0 0.0
    %1757 = vmatmul.mubr.f32.gmra.mxu0 %v1690
    %v1758 = vpop.f32.mrf.mxu0
    %v1759 = vadd.f32 %v1614, %v1758
    %v1760 = vpop.f32.mrf.mxu0
    %1761 = vdwg.mxu0
    %s1762 = scalar_lea.vmem %s0, 2
    %v1763 = vld [vmem:[%s1762] sm:$0x3]
    %1765 = vset.pattern.permute.xlu0 0
    %1766 = vperm.xlu0 %1765, %v1763
    %v1767 = vpop.permute.xlu0 %1766
    %s1769 = scalar_lea.vmem %s0, 12
    %v1770 = vld [vmem:[%s1769] sm:$0x3]
    %1772 = vset.pattern.permute.xlu0 0
    %1773 = vperm.xlu0 %1772, %v1770
    %v1774 = vpop.permute.xlu0 %1773
    %v1776 = vsub.f32 1.0, %v1767
    %v1777 = vsub.f32 1.0, %v1774
    %v1778 = vxor.u32 %v1686, 2147483648
    %v1779 = vmul.f32 %v1778, 1.442695
    %v1780 = vpow.pop %v1779
    %v1781 = vadd.f32 %v1780, 1.0
    %v1782 = vrcp.pop %v1781
    %v1783 = vmul.f32 1.0, %v1782
    %v1784 = vtanh.pop %v1686
    %v1785 = vmul.f32 %v1783, %v910
    %1787 = vrot.lane.b32.xlu0 %v1784, 64
    %v1788 = vpop.permute.xlu0 %1787
    %v1790 = vmul.f32 %v1783, %v1788
    %1792 = vrot.lane.b32.xlu0 %v1790, 32
    %v1793 = vpop.permute.xlu0 %1792
    %v1795 = vadd.f32 %v1785, %v1793
    %v1796 = vtanh.pop %v1795
    %1798 = vrot.lane.b32.xlu0 %v1796, 64
    %v1799 = vpop.permute.xlu0 %1798
    %v1801 = vmul.f32 %v1783, %v1799
    %v1802 = vmul.f32 %v1767, %v1801
    %v1803 = vmul.f32 %v1776, %v908
    %v1804 = vadd.f32 %v1802, %v1803
    %v1805 = vmul.f32 %v1767, %v1795
    %v1806 = vmul.f32 %v1776, %v910
    %v1807 = vadd.f32 %v1805, %v1806
    %v1808 = vxor.u32 %v1759, 2147483648
    %v1809 = vmul.f32 %v1808, 1.442695
    %v1810 = vpow.pop %v1809
    %v1811 = vadd.f32 %v1810, 1.0
    %v1812 = vrcp.pop %v1811
    %v1813 = vmul.f32 1.0, %v1812
    %v1814 = vtanh.pop %v1759
    %v1815 = vmul.f32 %v1813, %v939
    %1817 = vrot.lane.b32.xlu0 %v1814, 64
    %v1818 = vpop.permute.xlu0 %1817
    %v1820 = vmul.f32 %v1813, %v1818
    %1822 = vrot.lane.b32.xlu0 %v1820, 32
    %v1823 = vpop.permute.xlu0 %1822
    %v1825 = vadd.f32 %v1815, %v1823
    %v1826 = vtanh.pop %v1825
    %1828 = vrot.lane.b32.xlu0 %v1826, 64
    %v1829 = vpop.permute.xlu0 %1828
    %v1831 = vmul.f32 %v1813, %v1829
    %v1832 = vmul.f32 %v1774, %v1831
    %v1833 = vmul.f32 %v1777, %v937
    %v1834 = vadd.f32 %v1832, %v1833
    %v1835 = vmul.f32 %v1774, %v1825
    %v1836 = vmul.f32 %v1777, %v939
    %v1837 = vadd.f32 %v1835, %v1836
    %1839 = vrot.lane.b32.xlu0 %v1802, 32
    %v1840 = vpop.permute.xlu0 %1839
    %s1842 = scalar_lea.vmem [#allocation7], 2
    %1843 = vst.msk [vmem:[%s1842] sm:$0x3] %vm944, %v1840
    %1845 = vrot.lane.b32.xlu0 %v1832, 32
    %v1846 = vpop.permute.xlu0 %1845
    %s1848 = scalar_lea.vmem [#allocation7], 28
    %1849 = vst.msk [vmem:[%s1848] sm:$0x3] %vm944, %v1846
    %s1850 = scalar_lea.vmem %s1, 4
    %v1851 = vld [vmem:[%s1850] sm:$0x3]
    %s1852 = scalar_lea.vmem %s1, 10
    %v1853 = vld [vmem:[%s1852] sm:$0x3]
    %1855 = vrot.lane.b32.xlu0 %v1804, 32
    %v1856 = vpop.permute.xlu0 %1855
    %1859 = vrot.lane.b32.xlu0 %v1834, 64
    %v1860 = vpop.permute.xlu0 %1859
    %v1862 = vsel %vm964, %v1856, %v1860
    %v1864 = vsel %vm69, %v1862, 0
    %1866 = vmatprep.subr.mxu0 0.0
    %1867 = vmatpush1.msra.mxu0 0.0
    %1868 = vmatprep.subr.mxu0 0.0
    %1869 = vmatpush1.msra.mxu0 0.0
    %1870 = vmatprep.subr.mxu0 0.0
    %1871 = vmatpush1.msra.mxu0 0.0
    %1872 = vmatprep.subr.mxu0 0.0
    %1873 = vmatpush1.msra.mxu0 0.0
    %1874 = vmatprep.subr.mxu0 0.0
    %1875 = vmatpush1.msra.mxu0 0.0
    %1876 = vmatprep.subr.mxu0 0.0
    %1877 = vmatpush1.msra.mxu0 0.0
    %1878 = vmatprep.subr.mxu0 0.0
    %1879 = vmatpush1.msra.mxu0 0.0
    %1880 = vmatprep.subr.mxu0 0.0
    %1881 = vmatpush1.msra.mxu0 0.0
    %v1882 = vand.u32 %v65, 4294901760
    %1883 = vmatprep.subr.mxu0 %v1882
    %v1884 = vand.u32 %v64, 4294901760
    %1885 = vmatpush1.msra.mxu0 %v1884
    %v1886 = vand.u32 %v63, 4294901760
    %1887 = vmatprep.subr.mxu0 %v1886
    %v1888 = vand.u32 %v62, 4294901760
    %1889 = vmatpush1.msra.mxu0 %v1888
    %v1890 = vand.u32 %v61, 4294901760
    %1891 = vmatprep.subr.mxu0 %v1890
    %v1892 = vand.u32 %v60, 4294901760
    %1893 = vmatpush1.msra.mxu0 %v1892
    %v1894 = vand.u32 %v59, 4294901760
    %1895 = vmatprep.subr.mxu0 %v1894
    %v1896 = vand.u32 %v58, 4294901760
    %1897 = vmatpush1.msra.mxu0 %v1896
    %v1898 = vand.u32 %v57, 4294901760
    %1899 = vmatprep.subr.mxu0 %v1898
    %v1900 = vand.u32 %v56, 4294901760
    %1901 = vmatpush1.msra.mxu0 %v1900
    %v1902 = vand.u32 %v55, 4294901760
    %1903 = vmatprep.subr.mxu0 %v1902
    %v1904 = vand.u32 %v54, 4294901760
    %1905 = vmatpush1.msra.mxu0 %v1904
    %v1906 = vand.u32 %v53, 4294901760
    %1907 = vmatprep.subr.mxu0 %v1906
    %v1908 = vand.u32 %v52, 4294901760
    %1909 = vmatpush1.msra.mxu0 %v1908
    %v1910 = vand.u32 %v51, 4294901760
    %1911 = vmatprep.subr.mxu0 %v1910
    %v1912 = vand.u32 %v50, 4294901760
    %1913 = vmatpush1.msra.mxu0 %v1912
    %1914 = vmatprep.subr.mxu0 0.0
    %1915 = vmatpush2.msra.mxu0 0.0
    %1916 = vmatprep.subr.mxu0 0.0
    %1917 = vmatpush2.msra.mxu0 0.0
    %1918 = vmatprep.subr.mxu0 0.0
    %1919 = vmatpush2.msra.mxu0 0.0
    %1920 = vmatprep.subr.mxu0 0.0
    %1921 = vmatpush2.msra.mxu0 0.0
    %1922 = vmatprep.subr.mxu0 0.0
    %1923 = vmatpush2.msra.mxu0 0.0
    %1924 = vmatprep.subr.mxu0 0.0
    %1925 = vmatpush2.msra.mxu0 0.0
    %1926 = vmatprep.subr.mxu0 0.0
    %1927 = vmatpush2.msra.mxu0 0.0
    %1928 = vmatprep.subr.mxu0 0.0
    %1929 = vmatpush2.msra.mxu0 0.0
    %1930 = vmatprep.subr.mxu0 0.0
    %1931 = vmatpush2.msra.mxu0 0.0
    %1932 = vmatprep.subr.mxu0 0.0
    %1933 = vmatpush2.msra.mxu0 0.0
    %1934 = vmatprep.subr.mxu0 0.0
    %1935 = vmatpush2.msra.mxu0 0.0
    %1936 = vmatprep.subr.mxu0 0.0
    %1937 = vmatpush2.msra.mxu0 0.0
    %1938 = vmatprep.subr.mxu0 0.0
    %1939 = vmatpush2.msra.mxu0 0.0
    %1940 = vmatprep.subr.mxu0 0.0
    %1941 = vmatpush2.msra.mxu0 0.0
    %1942 = vmatprep.subr.mxu0 0.0
    %1943 = vmatpush2.msra.mxu0 0.0
    %1944 = vmatprep.subr.mxu0 0.0
    %1945 = vmatpush2.msra.mxu0 0.0
    %1946 = vmatprep.mubr.f32.mxu0 0.0
    %v1947 = vand.u32 %v1864, 4294901760
    %v1948 = vsub.f32 %v1864, %v1947
    %v1949 = vand.u32 %v1948, 4294901760
    %v1950 = vsub.f32 %v1948, %v1949
    %v1951 = vand.u32 %v1950, 4294901760
    %1952 = vmatmul.mubr.f32.gmra.mxu0 %v1951
    %v1953 = vpop.f32.mrf.mxu0
    %v1954 = vadd.f32 0.0, %v1953
    %v1955 = vpop.f32.mrf.mxu0
    %v1956 = vadd.f32 0.0, %v1955
    %1957 = vdwg.mxu0
    %1958 = vmatprep.subr.mxu0 0.0
    %1959 = vmatpush1.msra.mxu0 0.0
    %1960 = vmatprep.subr.mxu0 0.0
    %1961 = vmatpush1.msra.mxu0 0.0
    %1962 = vmatprep.subr.mxu0 0.0
    %1963 = vmatpush1.msra.mxu0 0.0
    %1964 = vmatprep.subr.mxu0 0.0
    %1965 = vmatpush1.msra.mxu0 0.0
    %1966 = vmatprep.subr.mxu0 0.0
    %1967 = vmatpush1.msra.mxu0 0.0
    %1968 = vmatprep.subr.mxu0 0.0
    %1969 = vmatpush1.msra.mxu0 0.0
    %1970 = vmatprep.subr.mxu0 0.0
    %1971 = vmatpush1.msra.mxu0 0.0
    %1972 = vmatprep.subr.mxu0 0.0
    %1973 = vmatpush1.msra.mxu0 0.0
    %v1974 = vand.u32 %v65, 4294901760
    %v1975 = vsub.f32 %v65, %v1974
    %v1976 = vand.u32 %v1975, 4294901760
    %v1977 = vsub.f32 %v1975, %v1976
    %v1978 = vand.u32 %v1977, 4294901760
    %1979 = vmatprep.subr.mxu0 %v1978
    %v1980 = vand.u32 %v64, 4294901760
    %v1981 = vsub.f32 %v64, %v1980
    %v1982 = vand.u32 %v1981, 4294901760
    %v1983 = vsub.f32 %v1981, %v1982
    %v1984 = vand.u32 %v1983, 4294901760
    %1985 = vmatpush1.msra.mxu0 %v1984
    %v1986 = vand.u32 %v63, 4294901760
    %v1987 = vsub.f32 %v63, %v1986
    %v1988 = vand.u32 %v1987, 4294901760
    %v1989 = vsub.f32 %v1987, %v1988
    %v1990 = vand.u32 %v1989, 4294901760
    %1991 = vmatprep.subr.mxu0 %v1990
    %v1992 = vand.u32 %v62, 4294901760
    %v1993 = vsub.f32 %v62, %v1992
    %v1994 = vand.u32 %v1993, 4294901760
    %v1995 = vsub.f32 %v1993, %v1994
    %v1996 = vand.u32 %v1995, 4294901760
    %1997 = vmatpush1.msra.mxu0 %v1996
    %v1998 = vand.u32 %v61, 4294901760
    %v1999 = vsub.f32 %v61, %v1998
    %v2000 = vand.u32 %v1999, 4294901760
    %v2001 = vsub.f32 %v1999, %v2000
    %v2002 = vand.u32 %v2001, 4294901760
    %2003 = vmatprep.subr.mxu0 %v2002
    %v2004 = vand.u32 %v60, 4294901760
    %v2005 = vsub.f32 %v60, %v2004
    %v2006 = vand.u32 %v2005, 4294901760
    %v2007 = vsub.f32 %v2005, %v2006
    %v2008 = vand.u32 %v2007, 4294901760
    %2009 = vmatpush1.msra.mxu0 %v2008
    %v2010 = vand.u32 %v59, 4294901760
    %v2011 = vsub.f32 %v59, %v2010
    %v2012 = vand.u32 %v2011, 4294901760
    %v2013 = vsub.f32 %v2011, %v2012
    %v2014 = vand.u32 %v2013, 4294901760
    %2015 = vmatprep.subr.mxu0 %v2014
    %v2016 = vand.u32 %v58, 4294901760
    %v2017 = vsub.f32 %v58, %v2016
    %v2018 = vand.u32 %v2017, 4294901760
    %v2019 = vsub.f32 %v2017, %v2018
    %v2020 = vand.u32 %v2019, 4294901760
    %2021 = vmatpush1.msra.mxu0 %v2020
    %v2022 = vand.u32 %v57, 4294901760
    %v2023 = vsub.f32 %v57, %v2022
    %v2024 = vand.u32 %v2023, 4294901760
    %v2025 = vsub.f32 %v2023, %v2024
    %v2026 = vand.u32 %v2025, 4294901760
    %2027 = vmatprep.subr.mxu0 %v2026
    %v2028 = vand.u32 %v56, 4294901760
    %v2029 = vsub.f32 %v56, %v2028
    %v2030 = vand.u32 %v2029, 4294901760
    %v2031 = vsub.f32 %v2029, %v2030
    %v2032 = vand.u32 %v2031, 4294901760
    %2033 = vmatpush1.msra.mxu0 %v2032
    %v2034 = vand.u32 %v55, 4294901760
    %v2035 = vsub.f32 %v55, %v2034
    %v2036 = vand.u32 %v2035, 4294901760
    %v2037 = vsub.f32 %v2035, %v2036
    %v2038 = vand.u32 %v2037, 4294901760
    %2039 = vmatprep.subr.mxu0 %v2038
    %v2040 = vand.u32 %v54, 4294901760
    %v2041 = vsub.f32 %v54, %v2040
    %v2042 = vand.u32 %v2041, 4294901760
    %v2043 = vsub.f32 %v2041, %v2042
    %v2044 = vand.u32 %v2043, 4294901760
    %2045 = vmatpush1.msra.mxu0 %v2044
    %v2046 = vand.u32 %v53, 4294901760
    %v2047 = vsub.f32 %v53, %v2046
    %v2048 = vand.u32 %v2047, 4294901760
    %v2049 = vsub.f32 %v2047, %v2048
    %v2050 = vand.u32 %v2049, 4294901760
    %2051 = vmatprep.subr.mxu0 %v2050
    %v2052 = vand.u32 %v52, 4294901760
    %v2053 = vsub.f32 %v52, %v2052
    %v2054 = vand.u32 %v2053, 4294901760
    %v2055 = vsub.f32 %v2053, %v2054
    %v2056 = vand.u32 %v2055, 4294901760
    %2057 = vmatpush1.msra.mxu0 %v2056
    %v2058 = vand.u32 %v51, 4294901760
    %v2059 = vsub.f32 %v51, %v2058
    %v2060 = vand.u32 %v2059, 4294901760
    %v2061 = vsub.f32 %v2059, %v2060
    %v2062 = vand.u32 %v2061, 4294901760
    %2063 = vmatprep.subr.mxu0 %v2062
    %v2064 = vand.u32 %v50, 4294901760
    %v2065 = vsub.f32 %v50, %v2064
    %v2066 = vand.u32 %v2065, 4294901760
    %v2067 = vsub.f32 %v2065, %v2066
    %v2068 = vand.u32 %v2067, 4294901760
    %2069 = vmatpush1.msra.mxu0 %v2068
    %2070 = vmatprep.subr.mxu0 0.0
    %2071 = vmatpush2.msra.mxu0 0.0
    %2072 = vmatprep.subr.mxu0 0.0
    %2073 = vmatpush2.msra.mxu0 0.0
    %2074 = vmatprep.subr.mxu0 0.0
    %2075 = vmatpush2.msra.mxu0 0.0
    %2076 = vmatprep.subr.mxu0 0.0
    %2077 = vmatpush2.msra.mxu0 0.0
    %2078 = vmatprep.subr.mxu0 0.0
    %2079 = vmatpush2.msra.mxu0 0.0
    %2080 = vmatprep.subr.mxu0 0.0
    %2081 = vmatpush2.msra.mxu0 0.0
    %2082 = vmatprep.subr.mxu0 0.0
    %2083 = vmatpush2.msra.mxu0 0.0
    %2084 = vmatprep.subr.mxu0 0.0
    %2085 = vmatpush2.msra.mxu0 0.0
    %2086 = vmatprep.subr.mxu0 0.0
    %2087 = vmatpush2.msra.mxu0 0.0
    %2088 = vmatprep.subr.mxu0 0.0
    %2089 = vmatpush2.msra.mxu0 0.0
    %2090 = vmatprep.subr.mxu0 0.0
    %2091 = vmatpush2.msra.mxu0 0.0
    %2092 = vmatprep.subr.mxu0 0.0
    %2093 = vmatpush2.msra.mxu0 0.0
    %2094 = vmatprep.subr.mxu0 0.0
    %2095 = vmatpush2.msra.mxu0 0.0
    %2096 = vmatprep.subr.mxu0 0.0
    %2097 = vmatpush2.msra.mxu0 0.0
    %2098 = vmatprep.subr.mxu0 0.0
    %2099 = vmatpush2.msra.mxu0 0.0
    %2100 = vmatprep.subr.mxu0 0.0
    %2101 = vmatpush2.msra.mxu0 0.0
    %2102 = vmatprep.mubr.f32.mxu0 0.0
    %v2103 = vand.u32 %v1864, 4294901760
    %2104 = vmatmul.mubr.f32.gmra.mxu0 %v2103
    %v2105 = vpop.f32.mrf.mxu0
    %v2106 = vadd.f32 %v1954, %v2105
    %v2107 = vpop.f32.mrf.mxu0
    %v2108 = vadd.f32 %v1956, %v2107
    %2109 = vdwg.mxu0
    %2110 = vmatprep.subr.mxu0 0.0
    %2111 = vmatpush1.msra.mxu0 0.0
    %2112 = vmatprep.subr.mxu0 0.0
    %2113 = vmatpush1.msra.mxu0 0.0
    %2114 = vmatprep.subr.mxu0 0.0
    %2115 = vmatpush1.msra.mxu0 0.0
    %2116 = vmatprep.subr.mxu0 0.0
    %2117 = vmatpush1.msra.mxu0 0.0
    %2118 = vmatprep.subr.mxu0 0.0
    %2119 = vmatpush1.msra.mxu0 0.0
    %2120 = vmatprep.subr.mxu0 0.0
    %2121 = vmatpush1.msra.mxu0 0.0
    %2122 = vmatprep.subr.mxu0 0.0
    %2123 = vmatpush1.msra.mxu0 0.0
    %2124 = vmatprep.subr.mxu0 0.0
    %2125 = vmatpush1.msra.mxu0 0.0
    %v2126 = vand.u32 %v65, 4294901760
    %v2127 = vsub.f32 %v65, %v2126
    %2128 = vmatprep.subr.mxu0 %v2127
    %v2129 = vand.u32 %v64, 4294901760
    %v2130 = vsub.f32 %v64, %v2129
    %2131 = vmatpush1.msra.mxu0 %v2130
    %v2132 = vand.u32 %v63, 4294901760
    %v2133 = vsub.f32 %v63, %v2132
    %2134 = vmatprep.subr.mxu0 %v2133
    %v2135 = vand.u32 %v62, 4294901760
    %v2136 = vsub.f32 %v62, %v2135
    %2137 = vmatpush1.msra.mxu0 %v2136
    %v2138 = vand.u32 %v61, 4294901760
    %v2139 = vsub.f32 %v61, %v2138
    %2140 = vmatprep.subr.mxu0 %v2139
    %v2141 = vand.u32 %v60, 4294901760
    %v2142 = vsub.f32 %v60, %v2141
    %2143 = vmatpush1.msra.mxu0 %v2142
    %v2144 = vand.u32 %v59, 4294901760
    %v2145 = vsub.f32 %v59, %v2144
    %2146 = vmatprep.subr.mxu0 %v2145
    %v2147 = vand.u32 %v58, 4294901760
    %v2148 = vsub.f32 %v58, %v2147
    %2149 = vmatpush1.msra.mxu0 %v2148
    %v2150 = vand.u32 %v57, 4294901760
    %v2151 = vsub.f32 %v57, %v2150
    %2152 = vmatprep.subr.mxu0 %v2151
    %v2153 = vand.u32 %v56, 4294901760
    %v2154 = vsub.f32 %v56, %v2153
    %2155 = vmatpush1.msra.mxu0 %v2154
    %v2156 = vand.u32 %v55, 4294901760
    %v2157 = vsub.f32 %v55, %v2156
    %2158 = vmatprep.subr.mxu0 %v2157
    %v2159 = vand.u32 %v54, 4294901760
    %v2160 = vsub.f32 %v54, %v2159
    %2161 = vmatpush1.msra.mxu0 %v2160
    %v2162 = vand.u32 %v53, 4294901760
    %v2163 = vsub.f32 %v53, %v2162
    %2164 = vmatprep.subr.mxu0 %v2163
    %v2165 = vand.u32 %v52, 4294901760
    %v2166 = vsub.f32 %v52, %v2165
    %2167 = vmatpush1.msra.mxu0 %v2166
    %v2168 = vand.u32 %v51, 4294901760
    %v2169 = vsub.f32 %v51, %v2168
    %2170 = vmatprep.subr.mxu0 %v2169
    %v2171 = vand.u32 %v50, 4294901760
    %v2172 = vsub.f32 %v50, %v2171
    %2173 = vmatpush1.msra.mxu0 %v2172
    %2174 = vmatprep.subr.mxu0 0.0
    %2175 = vmatpush2.msra.mxu0 0.0
    %2176 = vmatprep.subr.mxu0 0.0
    %2177 = vmatpush2.msra.mxu0 0.0
    %2178 = vmatprep.subr.mxu0 0.0
    %2179 = vmatpush2.msra.mxu0 0.0
    %2180 = vmatprep.subr.mxu0 0.0
    %2181 = vmatpush2.msra.mxu0 0.0
    %2182 = vmatprep.subr.mxu0 0.0
    %2183 = vmatpush2.msra.mxu0 0.0
    %2184 = vmatprep.subr.mxu0 0.0
    %2185 = vmatpush2.msra.mxu0 0.0
    %2186 = vmatprep.subr.mxu0 0.0
    %2187 = vmatpush2.msra.mxu0 0.0
    %2188 = vmatprep.subr.mxu0 0.0
    %2189 = vmatpush2.msra.mxu0 0.0
    %2190 = vmatprep.subr.mxu0 0.0
    %2191 = vmatpush2.msra.mxu0 0.0
    %2192 = vmatprep.subr.mxu0 0.0
    %2193 = vmatpush2.msra.mxu0 0.0
    %2194 = vmatprep.subr.mxu0 0.0
    %2195 = vmatpush2.msra.mxu0 0.0
    %2196 = vmatprep.subr.mxu0 0.0
    %2197 = vmatpush2.msra.mxu0 0.0
    %2198 = vmatprep.subr.mxu0 0.0
    %2199 = vmatpush2.msra.mxu0 0.0
    %2200 = vmatprep.subr.mxu0 0.0
    %2201 = vmatpush2.msra.mxu0 0.0
    %2202 = vmatprep.subr.mxu0 0.0
    %2203 = vmatpush2.msra.mxu0 0.0
    %2204 = vmatprep.subr.mxu0 0.0
    %2205 = vmatpush2.msra.mxu0 0.0
    %2206 = vmatprep.mubr.f32.mxu0 0.0
    %v2207 = vand.u32 %v1864, 4294901760
    %v2208 = vsub.f32 %v1864, %v2207
    %2209 = vmatmul.mubr.f32.gmra.mxu0 %v2208
    %v2210 = vpop.f32.mrf.mxu0
    %v2211 = vadd.f32 %v2106, %v2210
    %v2212 = vpop.f32.mrf.mxu0
    %v2213 = vadd.f32 %v2108, %v2212
    %2214 = vdwg.mxu0
    %2215 = vmatprep.subr.mxu0 0.0
    %2216 = vmatpush1.msra.mxu0 0.0
    %2217 = vmatprep.subr.mxu0 0.0
    %2218 = vmatpush1.msra.mxu0 0.0
    %2219 = vmatprep.subr.mxu0 0.0
    %2220 = vmatpush1.msra.mxu0 0.0
    %2221 = vmatprep.subr.mxu0 0.0
    %2222 = vmatpush1.msra.mxu0 0.0
    %2223 = vmatprep.subr.mxu0 0.0
    %2224 = vmatpush1.msra.mxu0 0.0
    %2225 = vmatprep.subr.mxu0 0.0
    %2226 = vmatpush1.msra.mxu0 0.0
    %2227 = vmatprep.subr.mxu0 0.0
    %2228 = vmatpush1.msra.mxu0 0.0
    %2229 = vmatprep.subr.mxu0 0.0
    %2230 = vmatpush1.msra.mxu0 0.0
    %v2231 = vand.u32 %v65, 4294901760
    %2232 = vmatprep.subr.mxu0 %v2231
    %v2233 = vand.u32 %v64, 4294901760
    %2234 = vmatpush1.msra.mxu0 %v2233
    %v2235 = vand.u32 %v63, 4294901760
    %2236 = vmatprep.subr.mxu0 %v2235
    %v2237 = vand.u32 %v62, 4294901760
    %2238 = vmatpush1.msra.mxu0 %v2237
    %v2239 = vand.u32 %v61, 4294901760
    %2240 = vmatprep.subr.mxu0 %v2239
    %v2241 = vand.u32 %v60, 4294901760
    %2242 = vmatpush1.msra.mxu0 %v2241
    %v2243 = vand.u32 %v59, 4294901760
    %2244 = vmatprep.subr.mxu0 %v2243
    %v2245 = vand.u32 %v58, 4294901760
    %2246 = vmatpush1.msra.mxu0 %v2245
    %v2247 = vand.u32 %v57, 4294901760
    %2248 = vmatprep.subr.mxu0 %v2247
    %v2249 = vand.u32 %v56, 4294901760
    %2250 = vmatpush1.msra.mxu0 %v2249
    %v2251 = vand.u32 %v55, 4294901760
    %2252 = vmatprep.subr.mxu0 %v2251
    %v2253 = vand.u32 %v54, 4294901760
    %2254 = vmatpush1.msra.mxu0 %v2253
    %v2255 = vand.u32 %v53, 4294901760
    %2256 = vmatprep.subr.mxu0 %v2255
    %v2257 = vand.u32 %v52, 4294901760
    %2258 = vmatpush1.msra.mxu0 %v2257
    %v2259 = vand.u32 %v51, 4294901760
    %2260 = vmatprep.subr.mxu0 %v2259
    %v2261 = vand.u32 %v50, 4294901760
    %2262 = vmatpush1.msra.mxu0 %v2261
    %2263 = vmatprep.subr.mxu0 0.0
    %2264 = vmatpush2.msra.mxu0 0.0
    %2265 = vmatprep.subr.mxu0 0.0
    %2266 = vmatpush2.msra.mxu0 0.0
    %2267 = vmatprep.subr.mxu0 0.0
    %2268 = vmatpush2.msra.mxu0 0.0
    %2269 = vmatprep.subr.mxu0 0.0
    %2270 = vmatpush2.msra.mxu0 0.0
    %2271 = vmatprep.subr.mxu0 0.0
    %2272 = vmatpush2.msra.mxu0 0.0
    %2273 = vmatprep.subr.mxu0 0.0
    %2274 = vmatpush2.msra.mxu0 0.0
    %2275 = vmatprep.subr.mxu0 0.0
    %2276 = vmatpush2.msra.mxu0 0.0
    %2277 = vmatprep.subr.mxu0 0.0
    %2278 = vmatpush2.msra.mxu0 0.0
    %2279 = vmatprep.subr.mxu0 0.0
    %2280 = vmatpush2.msra.mxu0 0.0
    %2281 = vmatprep.subr.mxu0 0.0
    %2282 = vmatpush2.msra.mxu0 0.0
    %2283 = vmatprep.subr.mxu0 0.0
    %2284 = vmatpush2.msra.mxu0 0.0
    %2285 = vmatprep.subr.mxu0 0.0
    %2286 = vmatpush2.msra.mxu0 0.0
    %2287 = vmatprep.subr.mxu0 0.0
    %2288 = vmatpush2.msra.mxu0 0.0
    %2289 = vmatprep.subr.mxu0 0.0
    %2290 = vmatpush2.msra.mxu0 0.0
    %2291 = vmatprep.subr.mxu0 0.0
    %2292 = vmatpush2.msra.mxu0 0.0
    %2293 = vmatprep.subr.mxu0 0.0
    %2294 = vmatpush2.msra.mxu0 0.0
    %2295 = vmatprep.mubr.f32.mxu0 0.0
    %v2296 = vand.u32 %v1864, 4294901760
    %v2297 = vsub.f32 %v1864, %v2296
    %v2298 = vand.u32 %v2297, 4294901760
    %2299 = vmatmul.mubr.f32.gmra.mxu0 %v2298
    %v2300 = vpop.f32.mrf.mxu0
    %v2301 = vadd.f32 %v2211, %v2300
    %v2302 = vpop.f32.mrf.mxu0
    %v2303 = vadd.f32 %v2213, %v2302
    %2304 = vdwg.mxu0
    %2305 = vmatprep.subr.mxu0 0.0
    %2306 = vmatpush1.msra.mxu0 0.0
    %2307 = vmatprep.subr.mxu0 0.0
    %2308 = vmatpush1.msra.mxu0 0.0
    %2309 = vmatprep.subr.mxu0 0.0
    %2310 = vmatpush1.msra.mxu0 0.0
    %2311 = vmatprep.subr.mxu0 0.0
    %2312 = vmatpush1.msra.mxu0 0.0
    %2313 = vmatprep.subr.mxu0 0.0
    %2314 = vmatpush1.msra.mxu0 0.0
    %2315 = vmatprep.subr.mxu0 0.0
    %2316 = vmatpush1.msra.mxu0 0.0
    %2317 = vmatprep.subr.mxu0 0.0
    %2318 = vmatpush1.msra.mxu0 0.0
    %2319 = vmatprep.subr.mxu0 0.0
    %2320 = vmatpush1.msra.mxu0 0.0
    %v2321 = vand.u32 %v65, 4294901760
    %v2322 = vsub.f32 %v65, %v2321
    %v2323 = vand.u32 %v2322, 4294901760
    %2324 = vmatprep.subr.mxu0 %v2323
    %v2325 = vand.u32 %v64, 4294901760
    %v2326 = vsub.f32 %v64, %v2325
    %v2327 = vand.u32 %v2326, 4294901760
    %2328 = vmatpush1.msra.mxu0 %v2327
    %v2329 = vand.u32 %v63, 4294901760
    %v2330 = vsub.f32 %v63, %v2329
    %v2331 = vand.u32 %v2330, 4294901760
    %2332 = vmatprep.subr.mxu0 %v2331
    %v2333 = vand.u32 %v62, 4294901760
    %v2334 = vsub.f32 %v62, %v2333
    %v2335 = vand.u32 %v2334, 4294901760
    %2336 = vmatpush1.msra.mxu0 %v2335
    %v2337 = vand.u32 %v61, 4294901760
    %v2338 = vsub.f32 %v61, %v2337
    %v2339 = vand.u32 %v2338, 4294901760
    %2340 = vmatprep.subr.mxu0 %v2339
    %v2341 = vand.u32 %v60, 4294901760
    %v2342 = vsub.f32 %v60, %v2341
    %v2343 = vand.u32 %v2342, 4294901760
    %2344 = vmatpush1.msra.mxu0 %v2343
    %v2345 = vand.u32 %v59, 4294901760
    %v2346 = vsub.f32 %v59, %v2345
    %v2347 = vand.u32 %v2346, 4294901760
    %2348 = vmatprep.subr.mxu0 %v2347
    %v2349 = vand.u32 %v58, 4294901760
    %v2350 = vsub.f32 %v58, %v2349
    %v2351 = vand.u32 %v2350, 4294901760
    %2352 = vmatpush1.msra.mxu0 %v2351
    %v2353 = vand.u32 %v57, 4294901760
    %v2354 = vsub.f32 %v57, %v2353
    %v2355 = vand.u32 %v2354, 4294901760
    %2356 = vmatprep.subr.mxu0 %v2355
    %v2357 = vand.u32 %v56, 4294901760
    %v2358 = vsub.f32 %v56, %v2357
    %v2359 = vand.u32 %v2358, 4294901760
    %2360 = vmatpush1.msra.mxu0 %v2359
    %v2361 = vand.u32 %v55, 4294901760
    %v2362 = vsub.f32 %v55, %v2361
    %v2363 = vand.u32 %v2362, 4294901760
    %2364 = vmatprep.subr.mxu0 %v2363
    %v2365 = vand.u32 %v54, 4294901760
    %v2366 = vsub.f32 %v54, %v2365
    %v2367 = vand.u32 %v2366, 4294901760
    %2368 = vmatpush1.msra.mxu0 %v2367
    %v2369 = vand.u32 %v53, 4294901760
    %v2370 = vsub.f32 %v53, %v2369
    %v2371 = vand.u32 %v2370, 4294901760
    %2372 = vmatprep.subr.mxu0 %v2371
    %v2373 = vand.u32 %v52, 4294901760
    %v2374 = vsub.f32 %v52, %v2373
    %v2375 = vand.u32 %v2374, 4294901760
    %2376 = vmatpush1.msra.mxu0 %v2375
    %v2377 = vand.u32 %v51, 4294901760
    %v2378 = vsub.f32 %v51, %v2377
    %v2379 = vand.u32 %v2378, 4294901760
    %2380 = vmatprep.subr.mxu0 %v2379
    %v2381 = vand.u32 %v50, 4294901760
    %v2382 = vsub.f32 %v50, %v2381
    %v2383 = vand.u32 %v2382, 4294901760
    %2384 = vmatpush1.msra.mxu0 %v2383
    %2385 = vmatprep.subr.mxu0 0.0
    %2386 = vmatpush2.msra.mxu0 0.0
    %2387 = vmatprep.subr.mxu0 0.0
    %2388 = vmatpush2.msra.mxu0 0.0
    %2389 = vmatprep.subr.mxu0 0.0
    %2390 = vmatpush2.msra.mxu0 0.0
    %2391 = vmatprep.subr.mxu0 0.0
    %2392 = vmatpush2.msra.mxu0 0.0
    %2393 = vmatprep.subr.mxu0 0.0
    %2394 = vmatpush2.msra.mxu0 0.0
    %2395 = vmatprep.subr.mxu0 0.0
    %2396 = vmatpush2.msra.mxu0 0.0
    %2397 = vmatprep.subr.mxu0 0.0
    %2398 = vmatpush2.msra.mxu0 0.0
    %2399 = vmatprep.subr.mxu0 0.0
    %2400 = vmatpush2.msra.mxu0 0.0
    %2401 = vmatprep.subr.mxu0 0.0
    %2402 = vmatpush2.msra.mxu0 0.0
    %2403 = vmatprep.subr.mxu0 0.0
    %2404 = vmatpush2.msra.mxu0 0.0
    %2405 = vmatprep.subr.mxu0 0.0
    %2406 = vmatpush2.msra.mxu0 0.0
    %2407 = vmatprep.subr.mxu0 0.0
    %2408 = vmatpush2.msra.mxu0 0.0
    %2409 = vmatprep.subr.mxu0 0.0
    %2410 = vmatpush2.msra.mxu0 0.0
    %2411 = vmatprep.subr.mxu0 0.0
    %2412 = vmatpush2.msra.mxu0 0.0
    %2413 = vmatprep.subr.mxu0 0.0
    %2414 = vmatpush2.msra.mxu0 0.0
    %2415 = vmatprep.subr.mxu0 0.0
    %2416 = vmatpush2.msra.mxu0 0.0
    %2417 = vmatprep.mubr.f32.mxu0 0.0
    %v2418 = vand.u32 %v1864, 4294901760
    %2419 = vmatmul.mubr.f32.gmra.mxu0 %v2418
    %v2420 = vpop.f32.mrf.mxu0
    %v2421 = vadd.f32 %v2301, %v2420
    %v2422 = vpop.f32.mrf.mxu0
    %v2423 = vadd.f32 %v2303, %v2422
    %2424 = vdwg.mxu0
    %2425 = vmatprep.subr.mxu0 0.0
    %2426 = vmatpush1.msra.mxu0 0.0
    %2427 = vmatprep.subr.mxu0 0.0
    %2428 = vmatpush1.msra.mxu0 0.0
    %2429 = vmatprep.subr.mxu0 0.0
    %2430 = vmatpush1.msra.mxu0 0.0
    %2431 = vmatprep.subr.mxu0 0.0
    %2432 = vmatpush1.msra.mxu0 0.0
    %2433 = vmatprep.subr.mxu0 0.0
    %2434 = vmatpush1.msra.mxu0 0.0
    %2435 = vmatprep.subr.mxu0 0.0
    %2436 = vmatpush1.msra.mxu0 0.0
    %2437 = vmatprep.subr.mxu0 0.0
    %2438 = vmatpush1.msra.mxu0 0.0
    %2439 = vmatprep.subr.mxu0 0.0
    %2440 = vmatpush1.msra.mxu0 0.0
    %v2441 = vand.u32 %v65, 4294901760
    %2442 = vmatprep.subr.mxu0 %v2441
    %v2443 = vand.u32 %v64, 4294901760
    %2444 = vmatpush1.msra.mxu0 %v2443
    %v2445 = vand.u32 %v63, 4294901760
    %2446 = vmatprep.subr.mxu0 %v2445
    %v2447 = vand.u32 %v62, 4294901760
    %2448 = vmatpush1.msra.mxu0 %v2447
    %v2449 = vand.u32 %v61, 4294901760
    %2450 = vmatprep.subr.mxu0 %v2449
    %v2451 = vand.u32 %v60, 4294901760
    %2452 = vmatpush1.msra.mxu0 %v2451
    %v2453 = vand.u32 %v59, 4294901760
    %2454 = vmatprep.subr.mxu0 %v2453
    %v2455 = vand.u32 %v58, 4294901760
    %2456 = vmatpush1.msra.mxu0 %v2455
    %v2457 = vand.u32 %v57, 4294901760
    %2458 = vmatprep.subr.mxu0 %v2457
    %v2459 = vand.u32 %v56, 4294901760
    %2460 = vmatpush1.msra.mxu0 %v2459
    %v2461 = vand.u32 %v55, 4294901760
    %2462 = vmatprep.subr.mxu0 %v2461
    %v2463 = vand.u32 %v54, 4294901760
    %2464 = vmatpush1.msra.mxu0 %v2463
    %v2465 = vand.u32 %v53, 4294901760
    %2466 = vmatprep.subr.mxu0 %v2465
    %v2467 = vand.u32 %v52, 4294901760
    %2468 = vmatpush1.msra.mxu0 %v2467
    %v2469 = vand.u32 %v51, 4294901760
    %2470 = vmatprep.subr.mxu0 %v2469
    %v2471 = vand.u32 %v50, 4294901760
    %2472 = vmatpush1.msra.mxu0 %v2471
    %2473 = vmatprep.subr.mxu0 0.0
    %2474 = vmatpush2.msra.mxu0 0.0
    %2475 = vmatprep.subr.mxu0 0.0
    %2476 = vmatpush2.msra.mxu0 0.0
    %2477 = vmatprep.subr.mxu0 0.0
    %2478 = vmatpush2.msra.mxu0 0.0
    %2479 = vmatprep.subr.mxu0 0.0
    %2480 = vmatpush2.msra.mxu0 0.0
    %2481 = vmatprep.subr.mxu0 0.0
    %2482 = vmatpush2.msra.mxu0 0.0
    %2483 = vmatprep.subr.mxu0 0.0
    %2484 = vmatpush2.msra.mxu0 0.0
    %2485 = vmatprep.subr.mxu0 0.0
    %2486 = vmatpush2.msra.mxu0 0.0
    %2487 = vmatprep.subr.mxu0 0.0
    %2488 = vmatpush2.msra.mxu0 0.0
    %2489 = vmatprep.subr.mxu0 0.0
    %2490 = vmatpush2.msra.mxu0 0.0
    %2491 = vmatprep.subr.mxu0 0.0
    %2492 = vmatpush2.msra.mxu0 0.0
    %2493 = vmatprep.subr.mxu0 0.0
    %2494 = vmatpush2.msra.mxu0 0.0
    %2495 = vmatprep.subr.mxu0 0.0
    %2496 = vmatpush2.msra.mxu0 0.0
    %2497 = vmatprep.subr.mxu0 0.0
    %2498 = vmatpush2.msra.mxu0 0.0
    %2499 = vmatprep.subr.mxu0 0.0
    %2500 = vmatpush2.msra.mxu0 0.0
    %2501 = vmatprep.subr.mxu0 0.0
    %2502 = vmatpush2.msra.mxu0 0.0
    %2503 = vmatprep.subr.mxu0 0.0
    %2504 = vmatpush2.msra.mxu0 0.0
    %2505 = vmatprep.mubr.f32.mxu0 0.0
    %v2506 = vand.u32 %v1864, 4294901760
    %2507 = vmatmul.mubr.f32.gmra.mxu0 %v2506
    %v2508 = vpop.f32.mrf.mxu0
    %v2509 = vadd.f32 %v2421, %v2508
    %v2510 = vpop.f32.mrf.mxu0
    %v2511 = vadd.f32 %v2423, %v2510
    %2512 = vdwg.mxu0
    %v2514 = vsel %vm720, %v1851, 0
    %2516 = vmatprep.subr.mxu0 0.0
    %2517 = vmatpush1.msra.mxu0 0.0
    %2518 = vmatprep.subr.mxu0 0.0
    %2519 = vmatpush1.msra.mxu0 0.0
    %2520 = vmatprep.subr.mxu0 0.0
    %2521 = vmatpush1.msra.mxu0 0.0
    %2522 = vmatprep.subr.mxu0 0.0
    %2523 = vmatpush1.msra.mxu0 0.0
    %2524 = vmatprep.subr.mxu0 0.0
    %2525 = vmatpush1.msra.mxu0 0.0
    %2526 = vmatprep.subr.mxu0 0.0
    %2527 = vmatpush1.msra.mxu0 0.0
    %2528 = vmatprep.subr.mxu0 0.0
    %2529 = vmatpush1.msra.mxu0 0.0
    %2530 = vmatprep.subr.mxu0 0.0
    %2531 = vmatpush1.msra.mxu0 0.0
    %2532 = vmatprep.subr.mxu0 0.0
    %2533 = vmatpush1.msra.mxu0 0.0
    %2534 = vmatprep.subr.mxu0 0.0
    %2535 = vmatpush1.msra.mxu0 0.0
    %2536 = vmatprep.subr.mxu0 0.0
    %2537 = vmatpush1.msra.mxu0 0.0
    %2538 = vmatprep.subr.mxu0 0.0
    %2539 = vmatpush1.msra.mxu0 0.0
    %2540 = vmatprep.subr.mxu0 0.0
    %2541 = vmatpush1.msra.mxu0 0.0
    %2542 = vmatprep.subr.mxu0 0.0
    %2543 = vmatpush1.msra.mxu0 0.0
    %2544 = vmatprep.subr.mxu0 0.0
    %2545 = vmatpush1.msra.mxu0 %v48
    %2546 = vmatprep.subr.mxu0 0.0
    %2547 = vmatpush1.msra.mxu0 %v46
    %2548 = vmatprep.subr.mxu0 0.0
    %2549 = vmatpush2.msra.mxu0 0.0
    %2550 = vmatprep.subr.mxu0 0.0
    %2551 = vmatpush2.msra.mxu0 0.0
    %2552 = vmatprep.subr.mxu0 0.0
    %2553 = vmatpush2.msra.mxu0 0.0
    %2554 = vmatprep.subr.mxu0 0.0
    %2555 = vmatpush2.msra.mxu0 0.0
    %2556 = vmatprep.subr.mxu0 0.0
    %2557 = vmatpush2.msra.mxu0 0.0
    %2558 = vmatprep.subr.mxu0 0.0
    %2559 = vmatpush2.msra.mxu0 0.0
    %2560 = vmatprep.subr.mxu0 0.0
    %2561 = vmatpush2.msra.mxu0 0.0
    %2562 = vmatprep.subr.mxu0 0.0
    %2563 = vmatpush2.msra.mxu0 0.0
    %2564 = vmatprep.subr.mxu0 0.0
    %2565 = vmatpush2.msra.mxu0 0.0
    %2566 = vmatprep.subr.mxu0 0.0
    %2567 = vmatpush2.msra.mxu0 0.0
    %2568 = vmatprep.subr.mxu0 0.0
    %2569 = vmatpush2.msra.mxu0 0.0
    %2570 = vmatprep.subr.mxu0 0.0
    %2571 = vmatpush2.msra.mxu0 0.0
    %2572 = vmatprep.subr.mxu0 0.0
    %2573 = vmatpush2.msra.mxu0 0.0
    %2574 = vmatprep.subr.mxu0 0.0
    %2575 = vmatpush2.msra.mxu0 0.0
    %2576 = vmatprep.subr.mxu0 0.0
    %2577 = vmatpush2.msra.mxu0 0.0
    %2578 = vmatprep.subr.mxu0 0.0
    %2579 = vmatpush2.msra.mxu0 0.0
    %2580 = vmatprep.mubr.f32.mxu0 0.0
    %2581 = vmatmul.mubr.f32.gmra.mxu0 %v2514
    %v2582 = vpop.f32.mrf.mxu0
    %v2583 = vadd.f32 %v2509, %v2582
    %v2584 = vpop.f32.mrf.mxu0
    %2585 = vdwg.mxu0
    %v2587 = vsel %vm720, %v1853, 0
    %2589 = vmatprep.subr.mxu0 0.0
    %2590 = vmatpush1.msra.mxu0 0.0
    %2591 = vmatprep.subr.mxu0 0.0
    %2592 = vmatpush1.msra.mxu0 0.0
    %2593 = vmatprep.subr.mxu0 0.0
    %2594 = vmatpush1.msra.mxu0 0.0
    %2595 = vmatprep.subr.mxu0 0.0
    %2596 = vmatpush1.msra.mxu0 0.0
    %2597 = vmatprep.subr.mxu0 0.0
    %2598 = vmatpush1.msra.mxu0 0.0
    %2599 = vmatprep.subr.mxu0 0.0
    %2600 = vmatpush1.msra.mxu0 0.0
    %2601 = vmatprep.subr.mxu0 0.0
    %2602 = vmatpush1.msra.mxu0 0.0
    %2603 = vmatprep.subr.mxu0 0.0
    %2604 = vmatpush1.msra.mxu0 0.0
    %2605 = vmatprep.subr.mxu0 0.0
    %2606 = vmatpush1.msra.mxu0 0.0
    %2607 = vmatprep.subr.mxu0 0.0
    %2608 = vmatpush1.msra.mxu0 0.0
    %2609 = vmatprep.subr.mxu0 0.0
    %2610 = vmatpush1.msra.mxu0 0.0
    %2611 = vmatprep.subr.mxu0 0.0
    %2612 = vmatpush1.msra.mxu0 0.0
    %2613 = vmatprep.subr.mxu0 0.0
    %2614 = vmatpush1.msra.mxu0 0.0
    %2615 = vmatprep.subr.mxu0 0.0
    %2616 = vmatpush1.msra.mxu0 0.0
    %2617 = vmatprep.subr.mxu0 0.0
    %2618 = vmatpush1.msra.mxu0 %v49
    %2619 = vmatprep.subr.mxu0 0.0
    %2620 = vmatpush1.msra.mxu0 %v47
    %2621 = vmatprep.subr.mxu0 0.0
    %2622 = vmatpush2.msra.mxu0 0.0
    %2623 = vmatprep.subr.mxu0 0.0
    %2624 = vmatpush2.msra.mxu0 0.0
    %2625 = vmatprep.subr.mxu0 0.0
    %2626 = vmatpush2.msra.mxu0 0.0
    %2627 = vmatprep.subr.mxu0 0.0
    %2628 = vmatpush2.msra.mxu0 0.0
    %2629 = vmatprep.subr.mxu0 0.0
    %2630 = vmatpush2.msra.mxu0 0.0
    %2631 = vmatprep.subr.mxu0 0.0
    %2632 = vmatpush2.msra.mxu0 0.0
    %2633 = vmatprep.subr.mxu0 0.0
    %2634 = vmatpush2.msra.mxu0 0.0
    %2635 = vmatprep.subr.mxu0 0.0
    %2636 = vmatpush2.msra.mxu0 0.0
    %2637 = vmatprep.subr.mxu0 0.0
    %2638 = vmatpush2.msra.mxu0 0.0
    %2639 = vmatprep.subr.mxu0 0.0
    %2640 = vmatpush2.msra.mxu0 0.0
    %2641 = vmatprep.subr.mxu0 0.0
    %2642 = vmatpush2.msra.mxu0 0.0
    %2643 = vmatprep.subr.mxu0 0.0
    %2644 = vmatpush2.msra.mxu0 0.0
    %2645 = vmatprep.subr.mxu0 0.0
    %2646 = vmatpush2.msra.mxu0 0.0
    %2647 = vmatprep.subr.mxu0 0.0
    %2648 = vmatpush2.msra.mxu0 0.0
    %2649 = vmatprep.subr.mxu0 0.0
    %2650 = vmatpush2.msra.mxu0 0.0
    %2651 = vmatprep.subr.mxu0 0.0
    %2652 = vmatpush2.msra.mxu0 0.0
    %2653 = vmatprep.mubr.f32.mxu0 0.0
    %2654 = vmatmul.mubr.f32.gmra.mxu0 %v2587
    %v2655 = vpop.f32.mrf.mxu0
    %v2656 = vadd.f32 %v2511, %v2655
    %v2657 = vpop.f32.mrf.mxu0
    %2658 = vdwg.mxu0
    %s2659 = scalar_lea.vmem %s0, 4
    %v2660 = vld [vmem:[%s2659] sm:$0x3]
    %2662 = vset.pattern.permute.xlu0 0
    %2663 = vperm.xlu0 %2662, %v2660
    %v2664 = vpop.permute.xlu0 %2663
    %s2666 = scalar_lea.vmem %s0, 10
    %v2667 = vld [vmem:[%s2666] sm:$0x3]
    %2669 = vset.pattern.permute.xlu0 0
    %2670 = vperm.xlu0 %2669, %v2667
    %v2671 = vpop.permute.xlu0 %2670
    %v2673 = vsub.f32 1.0, %v2664
    %v2674 = vsub.f32 1.0, %v2671
    %v2675 = vxor.u32 %v2583, 2147483648
    %v2676 = vmul.f32 %v2675, 1.442695
    %v2677 = vpow.pop %v2676
    %v2678 = vadd.f32 %v2677, 1.0
    %v2679 = vrcp.pop %v2678
    %v2680 = vmul.f32 1.0, %v2679
    %v2681 = vtanh.pop %v2583
    %v2682 = vmul.f32 %v2680, %v1807
    %2684 = vrot.lane.b32.xlu0 %v2681, 64
    %v2685 = vpop.permute.xlu0 %2684
    %v2687 = vmul.f32 %v2680, %v2685
    %2689 = vrot.lane.b32.xlu0 %v2687, 32
    %v2690 = vpop.permute.xlu0 %2689
    %v2692 = vadd.f32 %v2682, %v2690
    %v2693 = vtanh.pop %v2692
    %2695 = vrot.lane.b32.xlu0 %v2693, 64
    %v2696 = vpop.permute.xlu0 %2695
    %v2698 = vmul.f32 %v2680, %v2696
    %v2699 = vmul.f32 %v2664, %v2698
    %v2700 = vmul.f32 %v2673, %v1804
    %v2701 = vadd.f32 %v2699, %v2700
    %v2702 = vmul.f32 %v2664, %v2692
    %v2703 = vmul.f32 %v2673, %v1807
    %v2704 = vadd.f32 %v2702, %v2703
    %v2705 = vxor.u32 %v2656, 2147483648
    %v2706 = vmul.f32 %v2705, 1.442695
    %v2707 = vpow.pop %v2706
    %v2708 = vadd.f32 %v2707, 1.0
    %v2709 = vrcp.pop %v2708
    %v2710 = vmul.f32 1.0, %v2709
    %v2711 = vtanh.pop %v2656
    %v2712 = vmul.f32 %v2710, %v1837
    %2714 = vrot.lane.b32.xlu0 %v2711, 64
    %v2715 = vpop.permute.xlu0 %2714
    %v2717 = vmul.f32 %v2710, %v2715
    %2719 = vrot.lane.b32.xlu0 %v2717, 32
    %v2720 = vpop.permute.xlu0 %2719
    %v2722 = vadd.f32 %v2712, %v2720
    %v2723 = vtanh.pop %v2722
    %2725 = vrot.lane.b32.xlu0 %v2723, 64
    %v2726 = vpop.permute.xlu0 %2725
    %v2728 = vmul.f32 %v2710, %v2726
    %v2729 = vmul.f32 %v2671, %v2728
    %v2730 = vmul.f32 %v2674, %v1834
    %v2731 = vadd.f32 %v2729, %v2730
    %v2732 = vmul.f32 %v2671, %v2722
    %v2733 = vmul.f32 %v2674, %v1837
    %v2734 = vadd.f32 %v2732, %v2733
    %2736 = vrot.lane.b32.xlu0 %v2699, 32
    %v2737 = vpop.permute.xlu0 %2736
    %s2739 = scalar_lea.vmem [#allocation7], 4
    %2740 = vst.msk [vmem:[%s2739] sm:$0x3] %vm944, %v2737
    %2742 = vrot.lane.b32.xlu0 %v2729, 32
    %v2743 = vpop.permute.xlu0 %2742
    %s2745 = scalar_lea.vmem [#allocation7], 26
    %2746 = vst.msk [vmem:[%s2745] sm:$0x3] %vm944, %v2743
    %s2747 = scalar_lea.vmem %s1, 6
    %v2748 = vld [vmem:[%s2747] sm:$0x3]
    %s2749 = scalar_lea.vmem %s1, 8
    %v2750 = vld [vmem:[%s2749] sm:$0x3]
    %2752 = vrot.lane.b32.xlu0 %v2701, 32
    %v2753 = vpop.permute.xlu0 %2752
    %2756 = vrot.lane.b32.xlu0 %v2731, 64
    %v2757 = vpop.permute.xlu0 %2756
    %v2759 = vsel %vm964, %v2753, %v2757
    %v2761 = vsel %vm69, %v2759, 0
    %2763 = vmatprep.subr.mxu0 0.0
    %2764 = vmatpush1.msra.mxu0 0.0
    %2765 = vmatprep.subr.mxu0 0.0
    %2766 = vmatpush1.msra.mxu0 0.0
    %2767 = vmatprep.subr.mxu0 0.0
    %2768 = vmatpush1.msra.mxu0 0.0
    %2769 = vmatprep.subr.mxu0 0.0
    %2770 = vmatpush1.msra.mxu0 0.0
    %2771 = vmatprep.subr.mxu0 0.0
    %2772 = vmatpush1.msra.mxu0 0.0
    %2773 = vmatprep.subr.mxu0 0.0
    %2774 = vmatpush1.msra.mxu0 0.0
    %2775 = vmatprep.subr.mxu0 0.0
    %2776 = vmatpush1.msra.mxu0 0.0
    %2777 = vmatprep.subr.mxu0 0.0
    %2778 = vmatpush1.msra.mxu0 0.0
    %v2779 = vand.u32 %v65, 4294901760
    %2780 = vmatprep.subr.mxu0 %v2779
    %v2781 = vand.u32 %v64, 4294901760
    %2782 = vmatpush1.msra.mxu0 %v2781
    %v2783 = vand.u32 %v63, 4294901760
    %2784 = vmatprep.subr.mxu0 %v2783
    %v2785 = vand.u32 %v62, 4294901760
    %2786 = vmatpush1.msra.mxu0 %v2785
    %v2787 = vand.u32 %v61, 4294901760
    %2788 = vmatprep.subr.mxu0 %v2787
    %v2789 = vand.u32 %v60, 4294901760
    %2790 = vmatpush1.msra.mxu0 %v2789
    %v2791 = vand.u32 %v59, 4294901760
    %2792 = vmatprep.subr.mxu0 %v2791
    %v2793 = vand.u32 %v58, 4294901760
    %2794 = vmatpush1.msra.mxu0 %v2793
    %v2795 = vand.u32 %v57, 4294901760
    %2796 = vmatprep.subr.mxu0 %v2795
    %v2797 = vand.u32 %v56, 4294901760
    %2798 = vmatpush1.msra.mxu0 %v2797
    %v2799 = vand.u32 %v55, 4294901760
    %2800 = vmatprep.subr.mxu0 %v2799
    %v2801 = vand.u32 %v54, 4294901760
    %2802 = vmatpush1.msra.mxu0 %v2801
    %v2803 = vand.u32 %v53, 4294901760
    %2804 = vmatprep.subr.mxu0 %v2803
    %v2805 = vand.u32 %v52, 4294901760
    %2806 = vmatpush1.msra.mxu0 %v2805
    %v2807 = vand.u32 %v51, 4294901760
    %2808 = vmatprep.subr.mxu0 %v2807
    %v2809 = vand.u32 %v50, 4294901760
    %2810 = vmatpush1.msra.mxu0 %v2809
    %2811 = vmatprep.subr.mxu0 0.0
    %2812 = vmatpush2.msra.mxu0 0.0
    %2813 = vmatprep.subr.mxu0 0.0
    %2814 = vmatpush2.msra.mxu0 0.0
    %2815 = vmatprep.subr.mxu0 0.0
    %2816 = vmatpush2.msra.mxu0 0.0
    %2817 = vmatprep.subr.mxu0 0.0
    %2818 = vmatpush2.msra.mxu0 0.0
    %2819 = vmatprep.subr.mxu0 0.0
    %2820 = vmatpush2.msra.mxu0 0.0
    %2821 = vmatprep.subr.mxu0 0.0
    %2822 = vmatpush2.msra.mxu0 0.0
    %2823 = vmatprep.subr.mxu0 0.0
    %2824 = vmatpush2.msra.mxu0 0.0
    %2825 = vmatprep.subr.mxu0 0.0
    %2826 = vmatpush2.msra.mxu0 0.0
    %2827 = vmatprep.subr.mxu0 0.0
    %2828 = vmatpush2.msra.mxu0 0.0
    %2829 = vmatprep.subr.mxu0 0.0
    %2830 = vmatpush2.msra.mxu0 0.0
    %2831 = vmatprep.subr.mxu0 0.0
    %2832 = vmatpush2.msra.mxu0 0.0
    %2833 = vmatprep.subr.mxu0 0.0
    %2834 = vmatpush2.msra.mxu0 0.0
    %2835 = vmatprep.subr.mxu0 0.0
    %2836 = vmatpush2.msra.mxu0 0.0
    %2837 = vmatprep.subr.mxu0 0.0
    %2838 = vmatpush2.msra.mxu0 0.0
    %2839 = vmatprep.subr.mxu0 0.0
    %2840 = vmatpush2.msra.mxu0 0.0
    %2841 = vmatprep.subr.mxu0 0.0
    %2842 = vmatpush2.msra.mxu0 0.0
    %2843 = vmatprep.mubr.f32.mxu0 0.0
    %v2844 = vand.u32 %v2761, 4294901760
    %v2845 = vsub.f32 %v2761, %v2844
    %v2846 = vand.u32 %v2845, 4294901760
    %v2847 = vsub.f32 %v2845, %v2846
    %v2848 = vand.u32 %v2847, 4294901760
    %2849 = vmatmul.mubr.f32.gmra.mxu0 %v2848
    %v2850 = vpop.f32.mrf.mxu0
    %v2851 = vadd.f32 0.0, %v2850
    %v2852 = vpop.f32.mrf.mxu0
    %v2853 = vadd.f32 0.0, %v2852
    %2854 = vdwg.mxu0
    %2855 = vmatprep.subr.mxu0 0.0
    %2856 = vmatpush1.msra.mxu0 0.0
    %2857 = vmatprep.subr.mxu0 0.0
    %2858 = vmatpush1.msra.mxu0 0.0
    %2859 = vmatprep.subr.mxu0 0.0
    %2860 = vmatpush1.msra.mxu0 0.0
    %2861 = vmatprep.subr.mxu0 0.0
    %2862 = vmatpush1.msra.mxu0 0.0
    %2863 = vmatprep.subr.mxu0 0.0
    %2864 = vmatpush1.msra.mxu0 0.0
    %2865 = vmatprep.subr.mxu0 0.0
    %2866 = vmatpush1.msra.mxu0 0.0
    %2867 = vmatprep.subr.mxu0 0.0
    %2868 = vmatpush1.msra.mxu0 0.0
    %2869 = vmatprep.subr.mxu0 0.0
    %2870 = vmatpush1.msra.mxu0 0.0
    %v2871 = vand.u32 %v65, 4294901760
    %v2872 = vsub.f32 %v65, %v2871
    %v2873 = vand.u32 %v2872, 4294901760
    %v2874 = vsub.f32 %v2872, %v2873
    %v2875 = vand.u32 %v2874, 4294901760
    %2876 = vmatprep.subr.mxu0 %v2875
    %v2877 = vand.u32 %v64, 4294901760
    %v2878 = vsub.f32 %v64, %v2877
    %v2879 = vand.u32 %v2878, 4294901760
    %v2880 = vsub.f32 %v2878, %v2879
    %v2881 = vand.u32 %v2880, 4294901760
    %2882 = vmatpush1.msra.mxu0 %v2881
    %v2883 = vand.u32 %v63, 4294901760
    %v2884 = vsub.f32 %v63, %v2883
    %v2885 = vand.u32 %v2884, 4294901760
    %v2886 = vsub.f32 %v2884, %v2885
    %v2887 = vand.u32 %v2886, 4294901760
    %2888 = vmatprep.subr.mxu0 %v2887
    %v2889 = vand.u32 %v62, 4294901760
    %v2890 = vsub.f32 %v62, %v2889
    %v2891 = vand.u32 %v2890, 4294901760
    %v2892 = vsub.f32 %v2890, %v2891
    %v2893 = vand.u32 %v2892, 4294901760
    %2894 = vmatpush1.msra.mxu0 %v2893
    %v2895 = vand.u32 %v61, 4294901760
    %v2896 = vsub.f32 %v61, %v2895
    %v2897 = vand.u32 %v2896, 4294901760
    %v2898 = vsub.f32 %v2896, %v2897
    %v2899 = vand.u32 %v2898, 4294901760
    %2900 = vmatprep.subr.mxu0 %v2899
    %v2901 = vand.u32 %v60, 4294901760
    %v2902 = vsub.f32 %v60, %v2901
    %v2903 = vand.u32 %v2902, 4294901760
    %v2904 = vsub.f32 %v2902, %v2903
    %v2905 = vand.u32 %v2904, 4294901760
    %2906 = vmatpush1.msra.mxu0 %v2905
    %v2907 = vand.u32 %v59, 4294901760
    %v2908 = vsub.f32 %v59, %v2907
    %v2909 = vand.u32 %v2908, 4294901760
    %v2910 = vsub.f32 %v2908, %v2909
    %v2911 = vand.u32 %v2910, 4294901760
    %2912 = vmatprep.subr.mxu0 %v2911
    %v2913 = vand.u32 %v58, 4294901760
    %v2914 = vsub.f32 %v58, %v2913
    %v2915 = vand.u32 %v2914, 4294901760
    %v2916 = vsub.f32 %v2914, %v2915
    %v2917 = vand.u32 %v2916, 4294901760
    %2918 = vmatpush1.msra.mxu0 %v2917
    %v2919 = vand.u32 %v57, 4294901760
    %v2920 = vsub.f32 %v57, %v2919
    %v2921 = vand.u32 %v2920, 4294901760
    %v2922 = vsub.f32 %v2920, %v2921
    %v2923 = vand.u32 %v2922, 4294901760
    %2924 = vmatprep.subr.mxu0 %v2923
    %v2925 = vand.u32 %v56, 4294901760
    %v2926 = vsub.f32 %v56, %v2925
    %v2927 = vand.u32 %v2926, 4294901760
    %v2928 = vsub.f32 %v2926, %v2927
    %v2929 = vand.u32 %v2928, 4294901760
    %2930 = vmatpush1.msra.mxu0 %v2929
    %v2931 = vand.u32 %v55, 4294901760
    %v2932 = vsub.f32 %v55, %v2931
    %v2933 = vand.u32 %v2932, 4294901760
    %v2934 = vsub.f32 %v2932, %v2933
    %v2935 = vand.u32 %v2934, 4294901760
    %2936 = vmatprep.subr.mxu0 %v2935
    %v2937 = vand.u32 %v54, 4294901760
    %v2938 = vsub.f32 %v54, %v2937
    %v2939 = vand.u32 %v2938, 4294901760
    %v2940 = vsub.f32 %v2938, %v2939
    %v2941 = vand.u32 %v2940, 4294901760
    %2942 = vmatpush1.msra.mxu0 %v2941
    %v2943 = vand.u32 %v53, 4294901760
    %v2944 = vsub.f32 %v53, %v2943
    %v2945 = vand.u32 %v2944, 4294901760
    %v2946 = vsub.f32 %v2944, %v2945
    %v2947 = vand.u32 %v2946, 4294901760
    %2948 = vmatprep.subr.mxu0 %v2947
    %v2949 = vand.u32 %v52, 4294901760
    %v2950 = vsub.f32 %v52, %v2949
    %v2951 = vand.u32 %v2950, 4294901760
    %v2952 = vsub.f32 %v2950, %v2951
    %v2953 = vand.u32 %v2952, 4294901760
    %2954 = vmatpush1.msra.mxu0 %v2953
    %v2955 = vand.u32 %v51, 4294901760
    %v2956 = vsub.f32 %v51, %v2955
    %v2957 = vand.u32 %v2956, 4294901760
    %v2958 = vsub.f32 %v2956, %v2957
    %v2959 = vand.u32 %v2958, 4294901760
    %2960 = vmatprep.subr.mxu0 %v2959
    %v2961 = vand.u32 %v50, 4294901760
    %v2962 = vsub.f32 %v50, %v2961
    %v2963 = vand.u32 %v2962, 4294901760
    %v2964 = vsub.f32 %v2962, %v2963
    %v2965 = vand.u32 %v2964, 4294901760
    %2966 = vmatpush1.msra.mxu0 %v2965
    %2967 = vmatprep.subr.mxu0 0.0
    %2968 = vmatpush2.msra.mxu0 0.0
    %2969 = vmatprep.subr.mxu0 0.0
    %2970 = vmatpush2.msra.mxu0 0.0
    %2971 = vmatprep.subr.mxu0 0.0
    %2972 = vmatpush2.msra.mxu0 0.0
    %2973 = vmatprep.subr.mxu0 0.0
    %2974 = vmatpush2.msra.mxu0 0.0
    %2975 = vmatprep.subr.mxu0 0.0
    %2976 = vmatpush2.msra.mxu0 0.0
    %2977 = vmatprep.subr.mxu0 0.0
    %2978 = vmatpush2.msra.mxu0 0.0
    %2979 = vmatprep.subr.mxu0 0.0
    %2980 = vmatpush2.msra.mxu0 0.0
    %2981 = vmatprep.subr.mxu0 0.0
    %2982 = vmatpush2.msra.mxu0 0.0
    %2983 = vmatprep.subr.mxu0 0.0
    %2984 = vmatpush2.msra.mxu0 0.0
    %2985 = vmatprep.subr.mxu0 0.0
    %2986 = vmatpush2.msra.mxu0 0.0
    %2987 = vmatprep.subr.mxu0 0.0
    %2988 = vmatpush2.msra.mxu0 0.0
    %2989 = vmatprep.subr.mxu0 0.0
    %2990 = vmatpush2.msra.mxu0 0.0
    %2991 = vmatprep.subr.mxu0 0.0
    %2992 = vmatpush2.msra.mxu0 0.0
    %2993 = vmatprep.subr.mxu0 0.0
    %2994 = vmatpush2.msra.mxu0 0.0
    %2995 = vmatprep.subr.mxu0 0.0
    %2996 = vmatpush2.msra.mxu0 0.0
    %2997 = vmatprep.subr.mxu0 0.0
    %2998 = vmatpush2.msra.mxu0 0.0
    %2999 = vmatprep.mubr.f32.mxu0 0.0
    %v3000 = vand.u32 %v2761, 4294901760
    %3001 = vmatmul.mubr.f32.gmra.mxu0 %v3000
    %v3002 = vpop.f32.mrf.mxu0
    %v3003 = vadd.f32 %v2851, %v3002
    %v3004 = vpop.f32.mrf.mxu0
    %v3005 = vadd.f32 %v2853, %v3004
    %3006 = vdwg.mxu0
    %3007 = vmatprep.subr.mxu0 0.0
    %3008 = vmatpush1.msra.mxu0 0.0
    %3009 = vmatprep.subr.mxu0 0.0
    %3010 = vmatpush1.msra.mxu0 0.0
    %3011 = vmatprep.subr.mxu0 0.0
    %3012 = vmatpush1.msra.mxu0 0.0
    %3013 = vmatprep.subr.mxu0 0.0
    %3014 = vmatpush1.msra.mxu0 0.0
    %3015 = vmatprep.subr.mxu0 0.0
    %3016 = vmatpush1.msra.mxu0 0.0
    %3017 = vmatprep.subr.mxu0 0.0
    %3018 = vmatpush1.msra.mxu0 0.0
    %3019 = vmatprep.subr.mxu0 0.0
    %3020 = vmatpush1.msra.mxu0 0.0
    %3021 = vmatprep.subr.mxu0 0.0
    %3022 = vmatpush1.msra.mxu0 0.0
    %v3023 = vand.u32 %v65, 4294901760
    %v3024 = vsub.f32 %v65, %v3023
    %3025 = vmatprep.subr.mxu0 %v3024
    %v3026 = vand.u32 %v64, 4294901760
    %v3027 = vsub.f32 %v64, %v3026
    %3028 = vmatpush1.msra.mxu0 %v3027
    %v3029 = vand.u32 %v63, 4294901760
    %v3030 = vsub.f32 %v63, %v3029
    %3031 = vmatprep.subr.mxu0 %v3030
    %v3032 = vand.u32 %v62, 4294901760
    %v3033 = vsub.f32 %v62, %v3032
    %3034 = vmatpush1.msra.mxu0 %v3033
    %v3035 = vand.u32 %v61, 4294901760
    %v3036 = vsub.f32 %v61, %v3035
    %3037 = vmatprep.subr.mxu0 %v3036
    %v3038 = vand.u32 %v60, 4294901760
    %v3039 = vsub.f32 %v60, %v3038
    %3040 = vmatpush1.msra.mxu0 %v3039
    %v3041 = vand.u32 %v59, 4294901760
    %v3042 = vsub.f32 %v59, %v3041
    %3043 = vmatprep.subr.mxu0 %v3042
    %v3044 = vand.u32 %v58, 4294901760
    %v3045 = vsub.f32 %v58, %v3044
    %3046 = vmatpush1.msra.mxu0 %v3045
    %v3047 = vand.u32 %v57, 4294901760
    %v3048 = vsub.f32 %v57, %v3047
    %3049 = vmatprep.subr.mxu0 %v3048
    %v3050 = vand.u32 %v56, 4294901760
    %v3051 = vsub.f32 %v56, %v3050
    %3052 = vmatpush1.msra.mxu0 %v3051
    %v3053 = vand.u32 %v55, 4294901760
    %v3054 = vsub.f32 %v55, %v3053
    %3055 = vmatprep.subr.mxu0 %v3054
    %v3056 = vand.u32 %v54, 4294901760
    %v3057 = vsub.f32 %v54, %v3056
    %3058 = vmatpush1.msra.mxu0 %v3057
    %v3059 = vand.u32 %v53, 4294901760
    %v3060 = vsub.f32 %v53, %v3059
    %3061 = vmatprep.subr.mxu0 %v3060
    %v3062 = vand.u32 %v52, 4294901760
    %v3063 = vsub.f32 %v52, %v3062
    %3064 = vmatpush1.msra.mxu0 %v3063
    %v3065 = vand.u32 %v51, 4294901760
    %v3066 = vsub.f32 %v51, %v3065
    %3067 = vmatprep.subr.mxu0 %v3066
    %v3068 = vand.u32 %v50, 4294901760
    %v3069 = vsub.f32 %v50, %v3068
    %3070 = vmatpush1.msra.mxu0 %v3069
    %3071 = vmatprep.subr.mxu0 0.0
    %3072 = vmatpush2.msra.mxu0 0.0
    %3073 = vmatprep.subr.mxu0 0.0
    %3074 = vmatpush2.msra.mxu0 0.0
    %3075 = vmatprep.subr.mxu0 0.0
    %3076 = vmatpush2.msra.mxu0 0.0
    %3077 = vmatprep.subr.mxu0 0.0
    %3078 = vmatpush2.msra.mxu0 0.0
    %3079 = vmatprep.subr.mxu0 0.0
    %3080 = vmatpush2.msra.mxu0 0.0
    %3081 = vmatprep.subr.mxu0 0.0
    %3082 = vmatpush2.msra.mxu0 0.0
    %3083 = vmatprep.subr.mxu0 0.0
    %3084 = vmatpush2.msra.mxu0 0.0
    %3085 = vmatprep.subr.mxu0 0.0
    %3086 = vmatpush2.msra.mxu0 0.0
    %3087 = vmatprep.subr.mxu0 0.0
    %3088 = vmatpush2.msra.mxu0 0.0
    %3089 = vmatprep.subr.mxu0 0.0
    %3090 = vmatpush2.msra.mxu0 0.0
    %3091 = vmatprep.subr.mxu0 0.0
    %3092 = vmatpush2.msra.mxu0 0.0
    %3093 = vmatprep.subr.mxu0 0.0
    %3094 = vmatpush2.msra.mxu0 0.0
    %3095 = vmatprep.subr.mxu0 0.0
    %3096 = vmatpush2.msra.mxu0 0.0
    %3097 = vmatprep.subr.mxu0 0.0
    %3098 = vmatpush2.msra.mxu0 0.0
    %3099 = vmatprep.subr.mxu0 0.0
    %3100 = vmatpush2.msra.mxu0 0.0
    %3101 = vmatprep.subr.mxu0 0.0
    %3102 = vmatpush2.msra.mxu0 0.0
    %3103 = vmatprep.mubr.f32.mxu0 0.0
    %v3104 = vand.u32 %v2761, 4294901760
    %v3105 = vsub.f32 %v2761, %v3104
    %3106 = vmatmul.mubr.f32.gmra.mxu0 %v3105
    %v3107 = vpop.f32.mrf.mxu0
    %v3108 = vadd.f32 %v3003, %v3107
    %v3109 = vpop.f32.mrf.mxu0
    %v3110 = vadd.f32 %v3005, %v3109
    %3111 = vdwg.mxu0
    %3112 = vmatprep.subr.mxu0 0.0
    %3113 = vmatpush1.msra.mxu0 0.0
    %3114 = vmatprep.subr.mxu0 0.0
    %3115 = vmatpush1.msra.mxu0 0.0
    %3116 = vmatprep.subr.mxu0 0.0
    %3117 = vmatpush1.msra.mxu0 0.0
    %3118 = vmatprep.subr.mxu0 0.0
    %3119 = vmatpush1.msra.mxu0 0.0
    %3120 = vmatprep.subr.mxu0 0.0
    %3121 = vmatpush1.msra.mxu0 0.0
    %3122 = vmatprep.subr.mxu0 0.0
    %3123 = vmatpush1.msra.mxu0 0.0
    %3124 = vmatprep.subr.mxu0 0.0
    %3125 = vmatpush1.msra.mxu0 0.0
    %3126 = vmatprep.subr.mxu0 0.0
    %3127 = vmatpush1.msra.mxu0 0.0
    %v3128 = vand.u32 %v65, 4294901760
    %3129 = vmatprep.subr.mxu0 %v3128
    %v3130 = vand.u32 %v64, 4294901760
    %3131 = vmatpush1.msra.mxu0 %v3130
    %v3132 = vand.u32 %v63, 4294901760
    %3133 = vmatprep.subr.mxu0 %v3132
    %v3134 = vand.u32 %v62, 4294901760
    %3135 = vmatpush1.msra.mxu0 %v3134
    %v3136 = vand.u32 %v61, 4294901760
    %3137 = vmatprep.subr.mxu0 %v3136
    %v3138 = vand.u32 %v60, 4294901760
    %3139 = vmatpush1.msra.mxu0 %v3138
    %v3140 = vand.u32 %v59, 4294901760
    %3141 = vmatprep.subr.mxu0 %v3140
    %v3142 = vand.u32 %v58, 4294901760
    %3143 = vmatpush1.msra.mxu0 %v3142
    %v3144 = vand.u32 %v57, 4294901760
    %3145 = vmatprep.subr.mxu0 %v3144
    %v3146 = vand.u32 %v56, 4294901760
    %3147 = vmatpush1.msra.mxu0 %v3146
    %v3148 = vand.u32 %v55, 4294901760
    %3149 = vmatprep.subr.mxu0 %v3148
    %v3150 = vand.u32 %v54, 4294901760
    %3151 = vmatpush1.msra.mxu0 %v3150
    %v3152 = vand.u32 %v53, 4294901760
    %3153 = vmatprep.subr.mxu0 %v3152
    %v3154 = vand.u32 %v52, 4294901760
    %3155 = vmatpush1.msra.mxu0 %v3154
    %v3156 = vand.u32 %v51, 4294901760
    %3157 = vmatprep.subr.mxu0 %v3156
    %v3158 = vand.u32 %v50, 4294901760
    %3159 = vmatpush1.msra.mxu0 %v3158
    %3160 = vmatprep.subr.mxu0 0.0
    %3161 = vmatpush2.msra.mxu0 0.0
    %3162 = vmatprep.subr.mxu0 0.0
    %3163 = vmatpush2.msra.mxu0 0.0
    %3164 = vmatprep.subr.mxu0 0.0
    %3165 = vmatpush2.msra.mxu0 0.0
    %3166 = vmatprep.subr.mxu0 0.0
    %3167 = vmatpush2.msra.mxu0 0.0
    %3168 = vmatprep.subr.mxu0 0.0
    %3169 = vmatpush2.msra.mxu0 0.0
    %3170 = vmatprep.subr.mxu0 0.0
    %3171 = vmatpush2.msra.mxu0 0.0
    %3172 = vmatprep.subr.mxu0 0.0
    %3173 = vmatpush2.msra.mxu0 0.0
    %3174 = vmatprep.subr.mxu0 0.0
    %3175 = vmatpush2.msra.mxu0 0.0
    %3176 = vmatprep.subr.mxu0 0.0
    %3177 = vmatpush2.msra.mxu0 0.0
    %3178 = vmatprep.subr.mxu0 0.0
    %3179 = vmatpush2.msra.mxu0 0.0
    %3180 = vmatprep.subr.mxu0 0.0
    %3181 = vmatpush2.msra.mxu0 0.0
    %3182 = vmatprep.subr.mxu0 0.0
    %3183 = vmatpush2.msra.mxu0 0.0
    %3184 = vmatprep.subr.mxu0 0.0
    %3185 = vmatpush2.msra.mxu0 0.0
    %3186 = vmatprep.subr.mxu0 0.0
    %3187 = vmatpush2.msra.mxu0 0.0
    %3188 = vmatprep.subr.mxu0 0.0
    %3189 = vmatpush2.msra.mxu0 0.0
    %3190 = vmatprep.subr.mxu0 0.0
    %3191 = vmatpush2.msra.mxu0 0.0
    %3192 = vmatprep.mubr.f32.mxu0 0.0
    %v3193 = vand.u32 %v2761, 4294901760
    %v3194 = vsub.f32 %v2761, %v3193
    %v3195 = vand.u32 %v3194, 4294901760
    %3196 = vmatmul.mubr.f32.gmra.mxu0 %v3195
    %v3197 = vpop.f32.mrf.mxu0
    %v3198 = vadd.f32 %v3108, %v3197
    %v3199 = vpop.f32.mrf.mxu0
    %v3200 = vadd.f32 %v3110, %v3199
    %3201 = vdwg.mxu0
    %3202 = vmatprep.subr.mxu0 0.0
    %3203 = vmatpush1.msra.mxu0 0.0
    %3204 = vmatprep.subr.mxu0 0.0
    %3205 = vmatpush1.msra.mxu0 0.0
    %3206 = vmatprep.subr.mxu0 0.0
    %3207 = vmatpush1.msra.mxu0 0.0
    %3208 = vmatprep.subr.mxu0 0.0
    %3209 = vmatpush1.msra.mxu0 0.0
    %3210 = vmatprep.subr.mxu0 0.0
    %3211 = vmatpush1.msra.mxu0 0.0
    %3212 = vmatprep.subr.mxu0 0.0
    %3213 = vmatpush1.msra.mxu0 0.0
    %3214 = vmatprep.subr.mxu0 0.0
    %3215 = vmatpush1.msra.mxu0 0.0
    %3216 = vmatprep.subr.mxu0 0.0
    %3217 = vmatpush1.msra.mxu0 0.0
    %v3218 = vand.u32 %v65, 4294901760
    %v3219 = vsub.f32 %v65, %v3218
    %v3220 = vand.u32 %v3219, 4294901760
    %3221 = vmatprep.subr.mxu0 %v3220
    %v3222 = vand.u32 %v64, 4294901760
    %v3223 = vsub.f32 %v64, %v3222
    %v3224 = vand.u32 %v3223, 4294901760
    %3225 = vmatpush1.msra.mxu0 %v3224
    %v3226 = vand.u32 %v63, 4294901760
    %v3227 = vsub.f32 %v63, %v3226
    %v3228 = vand.u32 %v3227, 4294901760
    %3229 = vmatprep.subr.mxu0 %v3228
    %v3230 = vand.u32 %v62, 4294901760
    %v3231 = vsub.f32 %v62, %v3230
    %v3232 = vand.u32 %v3231, 4294901760
    %3233 = vmatpush1.msra.mxu0 %v3232
    %v3234 = vand.u32 %v61, 4294901760
    %v3235 = vsub.f32 %v61, %v3234
    %v3236 = vand.u32 %v3235, 4294901760
    %3237 = vmatprep.subr.mxu0 %v3236
    %v3238 = vand.u32 %v60, 4294901760
    %v3239 = vsub.f32 %v60, %v3238
    %v3240 = vand.u32 %v3239, 4294901760
    %3241 = vmatpush1.msra.mxu0 %v3240
    %v3242 = vand.u32 %v59, 4294901760
    %v3243 = vsub.f32 %v59, %v3242
    %v3244 = vand.u32 %v3243, 4294901760
    %3245 = vmatprep.subr.mxu0 %v3244
    %v3246 = vand.u32 %v58, 4294901760
    %v3247 = vsub.f32 %v58, %v3246
    %v3248 = vand.u32 %v3247, 4294901760
    %3249 = vmatpush1.msra.mxu0 %v3248
    %v3250 = vand.u32 %v57, 4294901760
    %v3251 = vsub.f32 %v57, %v3250
    %v3252 = vand.u32 %v3251, 4294901760
    %3253 = vmatprep.subr.mxu0 %v3252
    %v3254 = vand.u32 %v56, 4294901760
    %v3255 = vsub.f32 %v56, %v3254
    %v3256 = vand.u32 %v3255, 4294901760
    %3257 = vmatpush1.msra.mxu0 %v3256
    %v3258 = vand.u32 %v55, 4294901760
    %v3259 = vsub.f32 %v55, %v3258
    %v3260 = vand.u32 %v3259, 4294901760
    %3261 = vmatprep.subr.mxu0 %v3260
    %v3262 = vand.u32 %v54, 4294901760
    %v3263 = vsub.f32 %v54, %v3262
    %v3264 = vand.u32 %v3263, 4294901760
    %3265 = vmatpush1.msra.mxu0 %v3264
    %v3266 = vand.u32 %v53, 4294901760
    %v3267 = vsub.f32 %v53, %v3266
    %v3268 = vand.u32 %v3267, 4294901760
    %3269 = vmatprep.subr.mxu0 %v3268
    %v3270 = vand.u32 %v52, 4294901760
    %v3271 = vsub.f32 %v52, %v3270
    %v3272 = vand.u32 %v3271, 4294901760
    %3273 = vmatpush1.msra.mxu0 %v3272
    %v3274 = vand.u32 %v51, 4294901760
    %v3275 = vsub.f32 %v51, %v3274
    %v3276 = vand.u32 %v3275, 4294901760
    %3277 = vmatprep.subr.mxu0 %v3276
    %v3278 = vand.u32 %v50, 4294901760
    %v3279 = vsub.f32 %v50, %v3278
    %v3280 = vand.u32 %v3279, 4294901760
    %3281 = vmatpush1.msra.mxu0 %v3280
    %3282 = vmatprep.subr.mxu0 0.0
    %3283 = vmatpush2.msra.mxu0 0.0
    %3284 = vmatprep.subr.mxu0 0.0
    %3285 = vmatpush2.msra.mxu0 0.0
    %3286 = vmatprep.subr.mxu0 0.0
    %3287 = vmatpush2.msra.mxu0 0.0
    %3288 = vmatprep.subr.mxu0 0.0
    %3289 = vmatpush2.msra.mxu0 0.0
    %3290 = vmatprep.subr.mxu0 0.0
    %3291 = vmatpush2.msra.mxu0 0.0
    %3292 = vmatprep.subr.mxu0 0.0
    %3293 = vmatpush2.msra.mxu0 0.0
    %3294 = vmatprep.subr.mxu0 0.0
    %3295 = vmatpush2.msra.mxu0 0.0
    %3296 = vmatprep.subr.mxu0 0.0
    %3297 = vmatpush2.msra.mxu0 0.0
    %3298 = vmatprep.subr.mxu0 0.0
    %3299 = vmatpush2.msra.mxu0 0.0
    %3300 = vmatprep.subr.mxu0 0.0
    %3301 = vmatpush2.msra.mxu0 0.0
    %3302 = vmatprep.subr.mxu0 0.0
    %3303 = vmatpush2.msra.mxu0 0.0
    %3304 = vmatprep.subr.mxu0 0.0
    %3305 = vmatpush2.msra.mxu0 0.0
    %3306 = vmatprep.subr.mxu0 0.0
    %3307 = vmatpush2.msra.mxu0 0.0
    %3308 = vmatprep.subr.mxu0 0.0
    %3309 = vmatpush2.msra.mxu0 0.0
    %3310 = vmatprep.subr.mxu0 0.0
    %3311 = vmatpush2.msra.mxu0 0.0
    %3312 = vmatprep.subr.mxu0 0.0
    %3313 = vmatpush2.msra.mxu0 0.0
    %3314 = vmatprep.mubr.f32.mxu0 0.0
    %v3315 = vand.u32 %v2761, 4294901760
    %3316 = vmatmul.mubr.f32.gmra.mxu0 %v3315
    %v3317 = vpop.f32.mrf.mxu0
    %v3318 = vadd.f32 %v3198, %v3317
    %v3319 = vpop.f32.mrf.mxu0
    %v3320 = vadd.f32 %v3200, %v3319
    %3321 = vdwg.mxu0
    %3322 = vmatprep.subr.mxu0 0.0
    %3323 = vmatpush1.msra.mxu0 0.0
    %3324 = vmatprep.subr.mxu0 0.0
    %3325 = vmatpush1.msra.mxu0 0.0
    %3326 = vmatprep.subr.mxu0 0.0
    %3327 = vmatpush1.msra.mxu0 0.0
    %3328 = vmatprep.subr.mxu0 0.0
    %3329 = vmatpush1.msra.mxu0 0.0
    %3330 = vmatprep.subr.mxu0 0.0
    %3331 = vmatpush1.msra.mxu0 0.0
    %3332 = vmatprep.subr.mxu0 0.0
    %3333 = vmatpush1.msra.mxu0 0.0
    %3334 = vmatprep.subr.mxu0 0.0
    %3335 = vmatpush1.msra.mxu0 0.0
    %3336 = vmatprep.subr.mxu0 0.0
    %3337 = vmatpush1.msra.mxu0 0.0
    %v3338 = vand.u32 %v65, 4294901760
    %3339 = vmatprep.subr.mxu0 %v3338
    %v3340 = vand.u32 %v64, 4294901760
    %3341 = vmatpush1.msra.mxu0 %v3340
    %v3342 = vand.u32 %v63, 4294901760
    %3343 = vmatprep.subr.mxu0 %v3342
    %v3344 = vand.u32 %v62, 4294901760
    %3345 = vmatpush1.msra.mxu0 %v3344
    %v3346 = vand.u32 %v61, 4294901760
    %3347 = vmatprep.subr.mxu0 %v3346
    %v3348 = vand.u32 %v60, 4294901760
    %3349 = vmatpush1.msra.mxu0 %v3348
    %v3350 = vand.u32 %v59, 4294901760
    %3351 = vmatprep.subr.mxu0 %v3350
    %v3352 = vand.u32 %v58, 4294901760
    %3353 = vmatpush1.msra.mxu0 %v3352
    %v3354 = vand.u32 %v57, 4294901760
    %3355 = vmatprep.subr.mxu0 %v3354
    %v3356 = vand.u32 %v56, 4294901760
    %3357 = vmatpush1.msra.mxu0 %v3356
    %v3358 = vand.u32 %v55, 4294901760
    %3359 = vmatprep.subr.mxu0 %v3358
    %v3360 = vand.u32 %v54, 4294901760
    %3361 = vmatpush1.msra.mxu0 %v3360
    %v3362 = vand.u32 %v53, 4294901760
    %3363 = vmatprep.subr.mxu0 %v3362
    %v3364 = vand.u32 %v52, 4294901760
    %3365 = vmatpush1.msra.mxu0 %v3364
    %v3366 = vand.u32 %v51, 4294901760
    %3367 = vmatprep.subr.mxu0 %v3366
    %v3368 = vand.u32 %v50, 4294901760
    %3369 = vmatpush1.msra.mxu0 %v3368
    %3370 = vmatprep.subr.mxu0 0.0
    %3371 = vmatpush2.msra.mxu0 0.0
    %3372 = vmatprep.subr.mxu0 0.0
    %3373 = vmatpush2.msra.mxu0 0.0
    %3374 = vmatprep.subr.mxu0 0.0
    %3375 = vmatpush2.msra.mxu0 0.0
    %3376 = vmatprep.subr.mxu0 0.0
    %3377 = vmatpush2.msra.mxu0 0.0
    %3378 = vmatprep.subr.mxu0 0.0
    %3379 = vmatpush2.msra.mxu0 0.0
    %3380 = vmatprep.subr.mxu0 0.0
    %3381 = vmatpush2.msra.mxu0 0.0
    %3382 = vmatprep.subr.mxu0 0.0
    %3383 = vmatpush2.msra.mxu0 0.0
    %3384 = vmatprep.subr.mxu0 0.0
    %3385 = vmatpush2.msra.mxu0 0.0
    %3386 = vmatprep.subr.mxu0 0.0
    %3387 = vmatpush2.msra.mxu0 0.0
    %3388 = vmatprep.subr.mxu0 0.0
    %3389 = vmatpush2.msra.mxu0 0.0
    %3390 = vmatprep.subr.mxu0 0.0
    %3391 = vmatpush2.msra.mxu0 0.0
    %3392 = vmatprep.subr.mxu0 0.0
    %3393 = vmatpush2.msra.mxu0 0.0
    %3394 = vmatprep.subr.mxu0 0.0
    %3395 = vmatpush2.msra.mxu0 0.0
    %3396 = vmatprep.subr.mxu0 0.0
    %3397 = vmatpush2.msra.mxu0 0.0
    %3398 = vmatprep.subr.mxu0 0.0
    %3399 = vmatpush2.msra.mxu0 0.0
    %3400 = vmatprep.subr.mxu0 0.0
    %3401 = vmatpush2.msra.mxu0 0.0
    %3402 = vmatprep.mubr.f32.mxu0 0.0
    %v3403 = vand.u32 %v2761, 4294901760
    %3404 = vmatmul.mubr.f32.gmra.mxu0 %v3403
    %v3405 = vpop.f32.mrf.mxu0
    %v3406 = vadd.f32 %v3318, %v3405
    %v3407 = vpop.f32.mrf.mxu0
    %v3408 = vadd.f32 %v3320, %v3407
    %3409 = vdwg.mxu0
    %v3411 = vsel %vm720, %v2748, 0
    %3413 = vmatprep.subr.mxu0 0.0
    %3414 = vmatpush1.msra.mxu0 0.0
    %3415 = vmatprep.subr.mxu0 0.0
    %3416 = vmatpush1.msra.mxu0 0.0
    %3417 = vmatprep.subr.mxu0 0.0
    %3418 = vmatpush1.msra.mxu0 0.0
    %3419 = vmatprep.subr.mxu0 0.0
    %3420 = vmatpush1.msra.mxu0 0.0
    %3421 = vmatprep.subr.mxu0 0.0
    %3422 = vmatpush1.msra.mxu0 0.0
    %3423 = vmatprep.subr.mxu0 0.0
    %3424 = vmatpush1.msra.mxu0 0.0
    %3425 = vmatprep.subr.mxu0 0.0
    %3426 = vmatpush1.msra.mxu0 0.0
    %3427 = vmatprep.subr.mxu0 0.0
    %3428 = vmatpush1.msra.mxu0 0.0
    %3429 = vmatprep.subr.mxu0 0.0
    %3430 = vmatpush1.msra.mxu0 0.0
    %3431 = vmatprep.subr.mxu0 0.0
    %3432 = vmatpush1.msra.mxu0 0.0
    %3433 = vmatprep.subr.mxu0 0.0
    %3434 = vmatpush1.msra.mxu0 0.0
    %3435 = vmatprep.subr.mxu0 0.0
    %3436 = vmatpush1.msra.mxu0 0.0
    %3437 = vmatprep.subr.mxu0 0.0
    %3438 = vmatpush1.msra.mxu0 0.0
    %3439 = vmatprep.subr.mxu0 0.0
    %3440 = vmatpush1.msra.mxu0 0.0
    %3441 = vmatprep.subr.mxu0 0.0
    %3442 = vmatpush1.msra.mxu0 %v48
    %3443 = vmatprep.subr.mxu0 0.0
    %3444 = vmatpush1.msra.mxu0 %v46
    %3445 = vmatprep.subr.mxu0 0.0
    %3446 = vmatpush2.msra.mxu0 0.0
    %3447 = vmatprep.subr.mxu0 0.0
    %3448 = vmatpush2.msra.mxu0 0.0
    %3449 = vmatprep.subr.mxu0 0.0
    %3450 = vmatpush2.msra.mxu0 0.0
    %3451 = vmatprep.subr.mxu0 0.0
    %3452 = vmatpush2.msra.mxu0 0.0
    %3453 = vmatprep.subr.mxu0 0.0
    %3454 = vmatpush2.msra.mxu0 0.0
    %3455 = vmatprep.subr.mxu0 0.0
    %3456 = vmatpush2.msra.mxu0 0.0
    %3457 = vmatprep.subr.mxu0 0.0
    %3458 = vmatpush2.msra.mxu0 0.0
    %3459 = vmatprep.subr.mxu0 0.0
    %3460 = vmatpush2.msra.mxu0 0.0
    %3461 = vmatprep.subr.mxu0 0.0
    %3462 = vmatpush2.msra.mxu0 0.0
    %3463 = vmatprep.subr.mxu0 0.0
    %3464 = vmatpush2.msra.mxu0 0.0
    %3465 = vmatprep.subr.mxu0 0.0
    %3466 = vmatpush2.msra.mxu0 0.0
    %3467 = vmatprep.subr.mxu0 0.0
    %3468 = vmatpush2.msra.mxu0 0.0
    %3469 = vmatprep.subr.mxu0 0.0
    %3470 = vmatpush2.msra.mxu0 0.0
    %3471 = vmatprep.subr.mxu0 0.0
    %3472 = vmatpush2.msra.mxu0 0.0
    %3473 = vmatprep.subr.mxu0 0.0
    %3474 = vmatpush2.msra.mxu0 0.0
    %3475 = vmatprep.subr.mxu0 0.0
    %3476 = vmatpush2.msra.mxu0 0.0
    %3477 = vmatprep.mubr.f32.mxu0 0.0
    %3478 = vmatmul.mubr.f32.gmra.mxu0 %v3411
    %v3479 = vpop.f32.mrf.mxu0
    %v3480 = vadd.f32 %v3406, %v3479
    %v3481 = vpop.f32.mrf.mxu0
    %3482 = vdwg.mxu0
    %v3484 = vsel %vm720, %v2750, 0
    %3486 = vmatprep.subr.mxu0 0.0
    %3487 = vmatpush1.msra.mxu0 0.0
    %3488 = vmatprep.subr.mxu0 0.0
    %3489 = vmatpush1.msra.mxu0 0.0
    %3490 = vmatprep.subr.mxu0 0.0
    %3491 = vmatpush1.msra.mxu0 0.0
    %3492 = vmatprep.subr.mxu0 0.0
    %3493 = vmatpush1.msra.mxu0 0.0
    %3494 = vmatprep.subr.mxu0 0.0
    %3495 = vmatpush1.msra.mxu0 0.0
    %3496 = vmatprep.subr.mxu0 0.0
    %3497 = vmatpush1.msra.mxu0 0.0
    %3498 = vmatprep.subr.mxu0 0.0
    %3499 = vmatpush1.msra.mxu0 0.0
    %3500 = vmatprep.subr.mxu0 0.0
    %3501 = vmatpush1.msra.mxu0 0.0
    %3502 = vmatprep.subr.mxu0 0.0
    %3503 = vmatpush1.msra.mxu0 0.0
    %3504 = vmatprep.subr.mxu0 0.0
    %3505 = vmatpush1.msra.mxu0 0.0
    %3506 = vmatprep.subr.mxu0 0.0
    %3507 = vmatpush1.msra.mxu0 0.0
    %3508 = vmatprep.subr.mxu0 0.0
    %3509 = vmatpush1.msra.mxu0 0.0
    %3510 = vmatprep.subr.mxu0 0.0
    %3511 = vmatpush1.msra.mxu0 0.0
    %3512 = vmatprep.subr.mxu0 0.0
    %3513 = vmatpush1.msra.mxu0 0.0
    %3514 = vmatprep.subr.mxu0 0.0
    %3515 = vmatpush1.msra.mxu0 %v49
    %3516 = vmatprep.subr.mxu0 0.0
    %3517 = vmatpush1.msra.mxu0 %v47
    %3518 = vmatprep.subr.mxu0 0.0
    %3519 = vmatpush2.msra.mxu0 0.0
    %3520 = vmatprep.subr.mxu0 0.0
    %3521 = vmatpush2.msra.mxu0 0.0
    %3522 = vmatprep.subr.mxu0 0.0
    %3523 = vmatpush2.msra.mxu0 0.0
    %3524 = vmatprep.subr.mxu0 0.0
    %3525 = vmatpush2.msra.mxu0 0.0
    %3526 = vmatprep.subr.mxu0 0.0
    %3527 = vmatpush2.msra.mxu0 0.0
    %3528 = vmatprep.subr.mxu0 0.0
    %3529 = vmatpush2.msra.mxu0 0.0
    %3530 = vmatprep.subr.mxu0 0.0
    %3531 = vmatpush2.msra.mxu0 0.0
    %3532 = vmatprep.subr.mxu0 0.0
    %3533 = vmatpush2.msra.mxu0 0.0
    %3534 = vmatprep.subr.mxu0 0.0
    %3535 = vmatpush2.msra.mxu0 0.0
    %3536 = vmatprep.subr.mxu0 0.0
    %3537 = vmatpush2.msra.mxu0 0.0
    %3538 = vmatprep.subr.mxu0 0.0
    %3539 = vmatpush2.msra.mxu0 0.0
    %3540 = vmatprep.subr.mxu0 0.0
    %3541 = vmatpush2.msra.mxu0 0.0
    %3542 = vmatprep.subr.mxu0 0.0
    %3543 = vmatpush2.msra.mxu0 0.0
    %3544 = vmatprep.subr.mxu0 0.0
    %3545 = vmatpush2.msra.mxu0 0.0
    %3546 = vmatprep.subr.mxu0 0.0
    %3547 = vmatpush2.msra.mxu0 0.0
    %3548 = vmatprep.subr.mxu0 0.0
    %3549 = vmatpush2.msra.mxu0 0.0
    %3550 = vmatprep.mubr.f32.mxu0 0.0
    %3551 = vmatmul.mubr.f32.gmra.mxu0 %v3484
    %v3552 = vpop.f32.mrf.mxu0
    %v3553 = vadd.f32 %v3408, %v3552
    %v3554 = vpop.f32.mrf.mxu0
    %3555 = vdwg.mxu0
    %s3556 = scalar_lea.vmem %s0, 6
    %v3557 = vld [vmem:[%s3556] sm:$0x3]
    %3559 = vset.pattern.permute.xlu0 0
    %3560 = vperm.xlu0 %3559, %v3557
    %v3561 = vpop.permute.xlu0 %3560
    %s3563 = scalar_lea.vmem %s0, 8
    %v3564 = vld [vmem:[%s3563] sm:$0x3]
    %3566 = vset.pattern.permute.xlu0 0
    %3567 = vperm.xlu0 %3566, %v3564
    %v3568 = vpop.permute.xlu0 %3567
    %v3570 = vsub.f32 1.0, %v3561
    %v3571 = vsub.f32 1.0, %v3568
    %v3572 = vxor.u32 %v3480, 2147483648
    %v3573 = vmul.f32 %v3572, 1.442695
    %v3574 = vpow.pop %v3573
    %v3575 = vadd.f32 %v3574, 1.0
    %v3576 = vrcp.pop %v3575
    %v3577 = vmul.f32 1.0, %v3576
    %v3578 = vtanh.pop %v3480
    %v3579 = vmul.f32 %v3577, %v2704
    %3581 = vrot.lane.b32.xlu0 %v3578, 64
    %v3582 = vpop.permute.xlu0 %3581
    %v3584 = vmul.f32 %v3577, %v3582
    %3586 = vrot.lane.b32.xlu0 %v3584, 32
    %v3587 = vpop.permute.xlu0 %3586
    %v3589 = vadd.f32 %v3579, %v3587
    %v3590 = vtanh.pop %v3589
    %3592 = vrot.lane.b32.xlu0 %v3590, 64
    %v3593 = vpop.permute.xlu0 %3592
    %v3595 = vmul.f32 %v3577, %v3593
    %v3596 = vmul.f32 %v3561, %v3595
    %v3597 = vmul.f32 %v3570, %v2701
    %v3598 = vadd.f32 %v3596, %v3597
    %v3599 = vmul.f32 %v3561, %v3589
    %v3600 = vmul.f32 %v3570, %v2704
    %v3601 = vadd.f32 %v3599, %v3600
    %v3602 = vxor.u32 %v3553, 2147483648
    %v3603 = vmul.f32 %v3602, 1.442695
    %v3604 = vpow.pop %v3603
    %v3605 = vadd.f32 %v3604, 1.0
    %v3606 = vrcp.pop %v3605
    %v3607 = vmul.f32 1.0, %v3606
    %v3608 = vtanh.pop %v3553
    %v3609 = vmul.f32 %v3607, %v2734
    %3611 = vrot.lane.b32.xlu0 %v3608, 64
    %v3612 = vpop.permute.xlu0 %3611
    %v3614 = vmul.f32 %v3607, %v3612
    %3616 = vrot.lane.b32.xlu0 %v3614, 32
    %v3617 = vpop.permute.xlu0 %3616
    %v3619 = vadd.f32 %v3609, %v3617
    %v3620 = vtanh.pop %v3619
    %3622 = vrot.lane.b32.xlu0 %v3620, 64
    %v3623 = vpop.permute.xlu0 %3622
    %v3625 = vmul.f32 %v3607, %v3623
    %v3626 = vmul.f32 %v3568, %v3625
    %v3627 = vmul.f32 %v3571, %v2731
    %v3628 = vadd.f32 %v3626, %v3627
    %v3629 = vmul.f32 %v3568, %v3619
    %v3630 = vmul.f32 %v3571, %v2734
    %v3631 = vadd.f32 %v3629, %v3630
    %3633 = vrot.lane.b32.xlu0 %v3596, 32
    %v3634 = vpop.permute.xlu0 %3633
    %s3636 = scalar_lea.vmem [#allocation7], 6
    %3637 = vst.msk [vmem:[%s3636] sm:$0x3] %vm944, %v3634
    %3639 = vrot.lane.b32.xlu0 %v3626, 32
    %v3640 = vpop.permute.xlu0 %3639
    %s3642 = scalar_lea.vmem [#allocation7], 24
    %3643 = vst.msk [vmem:[%s3642] sm:$0x3] %vm944, %v3640
    %v3644 = vld [vmem:[%s2749] sm:$0x3]
    %v3645 = vld [vmem:[%s2747] sm:$0x3]
    %3647 = vrot.lane.b32.xlu0 %v3598, 32
    %v3648 = vpop.permute.xlu0 %3647
    %3651 = vrot.lane.b32.xlu0 %v3628, 64
    %v3652 = vpop.permute.xlu0 %3651
    %v3654 = vsel %vm964, %v3648, %v3652
    %v3656 = vsel %vm69, %v3654, 0
    %3658 = vmatprep.subr.mxu0 0.0
    %3659 = vmatpush1.msra.mxu0 0.0
    %3660 = vmatprep.subr.mxu0 0.0
    %3661 = vmatpush1.msra.mxu0 0.0
    %3662 = vmatprep.subr.mxu0 0.0
    %3663 = vmatpush1.msra.mxu0 0.0
    %3664 = vmatprep.subr.mxu0 0.0
    %3665 = vmatpush1.msra.mxu0 0.0
    %3666 = vmatprep.subr.mxu0 0.0
    %3667 = vmatpush1.msra.mxu0 0.0
    %3668 = vmatprep.subr.mxu0 0.0
    %3669 = vmatpush1.msra.mxu0 0.0
    %3670 = vmatprep.subr.mxu0 0.0
    %3671 = vmatpush1.msra.mxu0 0.0
    %3672 = vmatprep.subr.mxu0 0.0
    %3673 = vmatpush1.msra.mxu0 0.0
    %v3674 = vand.u32 %v65, 4294901760
    %3675 = vmatprep.subr.mxu0 %v3674
    %v3676 = vand.u32 %v64, 4294901760
    %3677 = vmatpush1.msra.mxu0 %v3676
    %v3678 = vand.u32 %v63, 4294901760
    %3679 = vmatprep.subr.mxu0 %v3678
    %v3680 = vand.u32 %v62, 4294901760
    %3681 = vmatpush1.msra.mxu0 %v3680
    %v3682 = vand.u32 %v61, 4294901760
    %3683 = vmatprep.subr.mxu0 %v3682
    %v3684 = vand.u32 %v60, 4294901760
    %3685 = vmatpush1.msra.mxu0 %v3684
    %v3686 = vand.u32 %v59, 4294901760
    %3687 = vmatprep.subr.mxu0 %v3686
    %v3688 = vand.u32 %v58, 4294901760
    %3689 = vmatpush1.msra.mxu0 %v3688
    %v3690 = vand.u32 %v57, 4294901760
    %3691 = vmatprep.subr.mxu0 %v3690
    %v3692 = vand.u32 %v56, 4294901760
    %3693 = vmatpush1.msra.mxu0 %v3692
    %v3694 = vand.u32 %v55, 4294901760
    %3695 = vmatprep.subr.mxu0 %v3694
    %v3696 = vand.u32 %v54, 4294901760
    %3697 = vmatpush1.msra.mxu0 %v3696
    %v3698 = vand.u32 %v53, 4294901760
    %3699 = vmatprep.subr.mxu0 %v3698
    %v3700 = vand.u32 %v52, 4294901760
    %3701 = vmatpush1.msra.mxu0 %v3700
    %v3702 = vand.u32 %v51, 4294901760
    %3703 = vmatprep.subr.mxu0 %v3702
    %v3704 = vand.u32 %v50, 4294901760
    %3705 = vmatpush1.msra.mxu0 %v3704
    %3706 = vmatprep.subr.mxu0 0.0
    %3707 = vmatpush2.msra.mxu0 0.0
    %3708 = vmatprep.subr.mxu0 0.0
    %3709 = vmatpush2.msra.mxu0 0.0
    %3710 = vmatprep.subr.mxu0 0.0
    %3711 = vmatpush2.msra.mxu0 0.0
    %3712 = vmatprep.subr.mxu0 0.0
    %3713 = vmatpush2.msra.mxu0 0.0
    %3714 = vmatprep.subr.mxu0 0.0
    %3715 = vmatpush2.msra.mxu0 0.0
    %3716 = vmatprep.subr.mxu0 0.0
    %3717 = vmatpush2.msra.mxu0 0.0
    %3718 = vmatprep.subr.mxu0 0.0
    %3719 = vmatpush2.msra.mxu0 0.0
    %3720 = vmatprep.subr.mxu0 0.0
    %3721 = vmatpush2.msra.mxu0 0.0
    %3722 = vmatprep.subr.mxu0 0.0
    %3723 = vmatpush2.msra.mxu0 0.0
    %3724 = vmatprep.subr.mxu0 0.0
    %3725 = vmatpush2.msra.mxu0 0.0
    %3726 = vmatprep.subr.mxu0 0.0
    %3727 = vmatpush2.msra.mxu0 0.0
    %3728 = vmatprep.subr.mxu0 0.0
    %3729 = vmatpush2.msra.mxu0 0.0
    %3730 = vmatprep.subr.mxu0 0.0
    %3731 = vmatpush2.msra.mxu0 0.0
    %3732 = vmatprep.subr.mxu0 0.0
    %3733 = vmatpush2.msra.mxu0 0.0
    %3734 = vmatprep.subr.mxu0 0.0
    %3735 = vmatpush2.msra.mxu0 0.0
    %3736 = vmatprep.subr.mxu0 0.0
    %3737 = vmatpush2.msra.mxu0 0.0
    %3738 = vmatprep.mubr.f32.mxu0 0.0
    %v3739 = vand.u32 %v3656, 4294901760
    %v3740 = vsub.f32 %v3656, %v3739
    %v3741 = vand.u32 %v3740, 4294901760
    %v3742 = vsub.f32 %v3740, %v3741
    %v3743 = vand.u32 %v3742, 4294901760
    %3744 = vmatmul.mubr.f32.gmra.mxu0 %v3743
    %v3745 = vpop.f32.mrf.mxu0
    %v3746 = vadd.f32 0.0, %v3745
    %v3747 = vpop.f32.mrf.mxu0
    %v3748 = vadd.f32 0.0, %v3747
    %3749 = vdwg.mxu0
    %3750 = vmatprep.subr.mxu0 0.0
    %3751 = vmatpush1.msra.mxu0 0.0
    %3752 = vmatprep.subr.mxu0 0.0
    %3753 = vmatpush1.msra.mxu0 0.0
    %3754 = vmatprep.subr.mxu0 0.0
    %3755 = vmatpush1.msra.mxu0 0.0
    %3756 = vmatprep.subr.mxu0 0.0
    %3757 = vmatpush1.msra.mxu0 0.0
    %3758 = vmatprep.subr.mxu0 0.0
    %3759 = vmatpush1.msra.mxu0 0.0
    %3760 = vmatprep.subr.mxu0 0.0
    %3761 = vmatpush1.msra.mxu0 0.0
    %3762 = vmatprep.subr.mxu0 0.0
    %3763 = vmatpush1.msra.mxu0 0.0
    %3764 = vmatprep.subr.mxu0 0.0
    %3765 = vmatpush1.msra.mxu0 0.0
    %v3766 = vand.u32 %v65, 4294901760
    %v3767 = vsub.f32 %v65, %v3766
    %v3768 = vand.u32 %v3767, 4294901760
    %v3769 = vsub.f32 %v3767, %v3768
    %v3770 = vand.u32 %v3769, 4294901760
    %3771 = vmatprep.subr.mxu0 %v3770
    %v3772 = vand.u32 %v64, 4294901760
    %v3773 = vsub.f32 %v64, %v3772
    %v3774 = vand.u32 %v3773, 4294901760
    %v3775 = vsub.f32 %v3773, %v3774
    %v3776 = vand.u32 %v3775, 4294901760
    %3777 = vmatpush1.msra.mxu0 %v3776
    %v3778 = vand.u32 %v63, 4294901760
    %v3779 = vsub.f32 %v63, %v3778
    %v3780 = vand.u32 %v3779, 4294901760
    %v3781 = vsub.f32 %v3779, %v3780
    %v3782 = vand.u32 %v3781, 4294901760
    %3783 = vmatprep.subr.mxu0 %v3782
    %v3784 = vand.u32 %v62, 4294901760
    %v3785 = vsub.f32 %v62, %v3784
    %v3786 = vand.u32 %v3785, 4294901760
    %v3787 = vsub.f32 %v3785, %v3786
    %v3788 = vand.u32 %v3787, 4294901760
    %3789 = vmatpush1.msra.mxu0 %v3788
    %v3790 = vand.u32 %v61, 4294901760
    %v3791 = vsub.f32 %v61, %v3790
    %v3792 = vand.u32 %v3791, 4294901760
    %v3793 = vsub.f32 %v3791, %v3792
    %v3794 = vand.u32 %v3793, 4294901760
    %3795 = vmatprep.subr.mxu0 %v3794
    %v3796 = vand.u32 %v60, 4294901760
    %v3797 = vsub.f32 %v60, %v3796
    %v3798 = vand.u32 %v3797, 4294901760
    %v3799 = vsub.f32 %v3797, %v3798
    %v3800 = vand.u32 %v3799, 4294901760
    %3801 = vmatpush1.msra.mxu0 %v3800
    %v3802 = vand.u32 %v59, 4294901760
    %v3803 = vsub.f32 %v59, %v3802
    %v3804 = vand.u32 %v3803, 4294901760
    %v3805 = vsub.f32 %v3803, %v3804
    %v3806 = vand.u32 %v3805, 4294901760
    %3807 = vmatprep.subr.mxu0 %v3806
    %v3808 = vand.u32 %v58, 4294901760
    %v3809 = vsub.f32 %v58, %v3808
    %v3810 = vand.u32 %v3809, 4294901760
    %v3811 = vsub.f32 %v3809, %v3810
    %v3812 = vand.u32 %v3811, 4294901760
    %3813 = vmatpush1.msra.mxu0 %v3812
    %v3814 = vand.u32 %v57, 4294901760
    %v3815 = vsub.f32 %v57, %v3814
    %v3816 = vand.u32 %v3815, 4294901760
    %v3817 = vsub.f32 %v3815, %v3816
    %v3818 = vand.u32 %v3817, 4294901760
    %3819 = vmatprep.subr.mxu0 %v3818
    %v3820 = vand.u32 %v56, 4294901760
    %v3821 = vsub.f32 %v56, %v3820
    %v3822 = vand.u32 %v3821, 4294901760
    %v3823 = vsub.f32 %v3821, %v3822
    %v3824 = vand.u32 %v3823, 4294901760
    %3825 = vmatpush1.msra.mxu0 %v3824
    %v3826 = vand.u32 %v55, 4294901760
    %v3827 = vsub.f32 %v55, %v3826
    %v3828 = vand.u32 %v3827, 4294901760
    %v3829 = vsub.f32 %v3827, %v3828
    %v3830 = vand.u32 %v3829, 4294901760
    %3831 = vmatprep.subr.mxu0 %v3830
    %v3832 = vand.u32 %v54, 4294901760
    %v3833 = vsub.f32 %v54, %v3832
    %v3834 = vand.u32 %v3833, 4294901760
    %v3835 = vsub.f32 %v3833, %v3834
    %v3836 = vand.u32 %v3835, 4294901760
    %3837 = vmatpush1.msra.mxu0 %v3836
    %v3838 = vand.u32 %v53, 4294901760
    %v3839 = vsub.f32 %v53, %v3838
    %v3840 = vand.u32 %v3839, 4294901760
    %v3841 = vsub.f32 %v3839, %v3840
    %v3842 = vand.u32 %v3841, 4294901760
    %3843 = vmatprep.subr.mxu0 %v3842
    %v3844 = vand.u32 %v52, 4294901760
    %v3845 = vsub.f32 %v52, %v3844
    %v3846 = vand.u32 %v3845, 4294901760
    %v3847 = vsub.f32 %v3845, %v3846
    %v3848 = vand.u32 %v3847, 4294901760
    %3849 = vmatpush1.msra.mxu0 %v3848
    %v3850 = vand.u32 %v51, 4294901760
    %v3851 = vsub.f32 %v51, %v3850
    %v3852 = vand.u32 %v3851, 4294901760
    %v3853 = vsub.f32 %v3851, %v3852
    %v3854 = vand.u32 %v3853, 4294901760
    %3855 = vmatprep.subr.mxu0 %v3854
    %v3856 = vand.u32 %v50, 4294901760
    %v3857 = vsub.f32 %v50, %v3856
    %v3858 = vand.u32 %v3857, 4294901760
    %v3859 = vsub.f32 %v3857, %v3858
    %v3860 = vand.u32 %v3859, 4294901760
    %3861 = vmatpush1.msra.mxu0 %v3860
    %3862 = vmatprep.subr.mxu0 0.0
    %3863 = vmatpush2.msra.mxu0 0.0
    %3864 = vmatprep.subr.mxu0 0.0
    %3865 = vmatpush2.msra.mxu0 0.0
    %3866 = vmatprep.subr.mxu0 0.0
    %3867 = vmatpush2.msra.mxu0 0.0
    %3868 = vmatprep.subr.mxu0 0.0
    %3869 = vmatpush2.msra.mxu0 0.0
    %3870 = vmatprep.subr.mxu0 0.0
    %3871 = vmatpush2.msra.mxu0 0.0
    %3872 = vmatprep.subr.mxu0 0.0
    %3873 = vmatpush2.msra.mxu0 0.0
    %3874 = vmatprep.subr.mxu0 0.0
    %3875 = vmatpush2.msra.mxu0 0.0
    %3876 = vmatprep.subr.mxu0 0.0
    %3877 = vmatpush2.msra.mxu0 0.0
    %3878 = vmatprep.subr.mxu0 0.0
    %3879 = vmatpush2.msra.mxu0 0.0
    %3880 = vmatprep.subr.mxu0 0.0
    %3881 = vmatpush2.msra.mxu0 0.0
    %3882 = vmatprep.subr.mxu0 0.0
    %3883 = vmatpush2.msra.mxu0 0.0
    %3884 = vmatprep.subr.mxu0 0.0
    %3885 = vmatpush2.msra.mxu0 0.0
    %3886 = vmatprep.subr.mxu0 0.0
    %3887 = vmatpush2.msra.mxu0 0.0
    %3888 = vmatprep.subr.mxu0 0.0
    %3889 = vmatpush2.msra.mxu0 0.0
    %3890 = vmatprep.subr.mxu0 0.0
    %3891 = vmatpush2.msra.mxu0 0.0
    %3892 = vmatprep.subr.mxu0 0.0
    %3893 = vmatpush2.msra.mxu0 0.0
    %3894 = vmatprep.mubr.f32.mxu0 0.0
    %v3895 = vand.u32 %v3656, 4294901760
    %3896 = vmatmul.mubr.f32.gmra.mxu0 %v3895
    %v3897 = vpop.f32.mrf.mxu0
    %v3898 = vadd.f32 %v3746, %v3897
    %v3899 = vpop.f32.mrf.mxu0
    %v3900 = vadd.f32 %v3748, %v3899
    %3901 = vdwg.mxu0
    %3902 = vmatprep.subr.mxu0 0.0
    %3903 = vmatpush1.msra.mxu0 0.0
    %3904 = vmatprep.subr.mxu0 0.0
    %3905 = vmatpush1.msra.mxu0 0.0
    %3906 = vmatprep.subr.mxu0 0.0
    %3907 = vmatpush1.msra.mxu0 0.0
    %3908 = vmatprep.subr.mxu0 0.0
    %3909 = vmatpush1.msra.mxu0 0.0
    %3910 = vmatprep.subr.mxu0 0.0
    %3911 = vmatpush1.msra.mxu0 0.0
    %3912 = vmatprep.subr.mxu0 0.0
    %3913 = vmatpush1.msra.mxu0 0.0
    %3914 = vmatprep.subr.mxu0 0.0
    %3915 = vmatpush1.msra.mxu0 0.0
    %3916 = vmatprep.subr.mxu0 0.0
    %3917 = vmatpush1.msra.mxu0 0.0
    %v3918 = vand.u32 %v65, 4294901760
    %v3919 = vsub.f32 %v65, %v3918
    %3920 = vmatprep.subr.mxu0 %v3919
    %v3921 = vand.u32 %v64, 4294901760
    %v3922 = vsub.f32 %v64, %v3921
    %3923 = vmatpush1.msra.mxu0 %v3922
    %v3924 = vand.u32 %v63, 4294901760
    %v3925 = vsub.f32 %v63, %v3924
    %3926 = vmatprep.subr.mxu0 %v3925
    %v3927 = vand.u32 %v62, 4294901760
    %v3928 = vsub.f32 %v62, %v3927
    %3929 = vmatpush1.msra.mxu0 %v3928
    %v3930 = vand.u32 %v61, 4294901760
    %v3931 = vsub.f32 %v61, %v3930
    %3932 = vmatprep.subr.mxu0 %v3931
    %v3933 = vand.u32 %v60, 4294901760
    %v3934 = vsub.f32 %v60, %v3933
    %3935 = vmatpush1.msra.mxu0 %v3934
    %v3936 = vand.u32 %v59, 4294901760
    %v3937 = vsub.f32 %v59, %v3936
    %3938 = vmatprep.subr.mxu0 %v3937
    %v3939 = vand.u32 %v58, 4294901760
    %v3940 = vsub.f32 %v58, %v3939
    %3941 = vmatpush1.msra.mxu0 %v3940
    %v3942 = vand.u32 %v57, 4294901760
    %v3943 = vsub.f32 %v57, %v3942
    %3944 = vmatprep.subr.mxu0 %v3943
    %v3945 = vand.u32 %v56, 4294901760
    %v3946 = vsub.f32 %v56, %v3945
    %3947 = vmatpush1.msra.mxu0 %v3946
    %v3948 = vand.u32 %v55, 4294901760
    %v3949 = vsub.f32 %v55, %v3948
    %3950 = vmatprep.subr.mxu0 %v3949
    %v3951 = vand.u32 %v54, 4294901760
    %v3952 = vsub.f32 %v54, %v3951
    %3953 = vmatpush1.msra.mxu0 %v3952
    %v3954 = vand.u32 %v53, 4294901760
    %v3955 = vsub.f32 %v53, %v3954
    %3956 = vmatprep.subr.mxu0 %v3955
    %v3957 = vand.u32 %v52, 4294901760
    %v3958 = vsub.f32 %v52, %v3957
    %3959 = vmatpush1.msra.mxu0 %v3958
    %v3960 = vand.u32 %v51, 4294901760
    %v3961 = vsub.f32 %v51, %v3960
    %3962 = vmatprep.subr.mxu0 %v3961
    %v3963 = vand.u32 %v50, 4294901760
    %v3964 = vsub.f32 %v50, %v3963
    %3965 = vmatpush1.msra.mxu0 %v3964
    %3966 = vmatprep.subr.mxu0 0.0
    %3967 = vmatpush2.msra.mxu0 0.0
    %3968 = vmatprep.subr.mxu0 0.0
    %3969 = vmatpush2.msra.mxu0 0.0
    %3970 = vmatprep.subr.mxu0 0.0
    %3971 = vmatpush2.msra.mxu0 0.0
    %3972 = vmatprep.subr.mxu0 0.0
    %3973 = vmatpush2.msra.mxu0 0.0
    %3974 = vmatprep.subr.mxu0 0.0
    %3975 = vmatpush2.msra.mxu0 0.0
    %3976 = vmatprep.subr.mxu0 0.0
    %3977 = vmatpush2.msra.mxu0 0.0
    %3978 = vmatprep.subr.mxu0 0.0
    %3979 = vmatpush2.msra.mxu0 0.0
    %3980 = vmatprep.subr.mxu0 0.0
    %3981 = vmatpush2.msra.mxu0 0.0
    %3982 = vmatprep.subr.mxu0 0.0
    %3983 = vmatpush2.msra.mxu0 0.0
    %3984 = vmatprep.subr.mxu0 0.0
    %3985 = vmatpush2.msra.mxu0 0.0
    %3986 = vmatprep.subr.mxu0 0.0
    %3987 = vmatpush2.msra.mxu0 0.0
    %3988 = vmatprep.subr.mxu0 0.0
    %3989 = vmatpush2.msra.mxu0 0.0
    %3990 = vmatprep.subr.mxu0 0.0
    %3991 = vmatpush2.msra.mxu0 0.0
    %3992 = vmatprep.subr.mxu0 0.0
    %3993 = vmatpush2.msra.mxu0 0.0
    %3994 = vmatprep.subr.mxu0 0.0
    %3995 = vmatpush2.msra.mxu0 0.0
    %3996 = vmatprep.subr.mxu0 0.0
    %3997 = vmatpush2.msra.mxu0 0.0
    %3998 = vmatprep.mubr.f32.mxu0 0.0
    %v3999 = vand.u32 %v3656, 4294901760
    %v4000 = vsub.f32 %v3656, %v3999
    %4001 = vmatmul.mubr.f32.gmra.mxu0 %v4000
    %v4002 = vpop.f32.mrf.mxu0
    %v4003 = vadd.f32 %v3898, %v4002
    %v4004 = vpop.f32.mrf.mxu0
    %v4005 = vadd.f32 %v3900, %v4004
    %4006 = vdwg.mxu0
    %4007 = vmatprep.subr.mxu0 0.0
    %4008 = vmatpush1.msra.mxu0 0.0
    %4009 = vmatprep.subr.mxu0 0.0
    %4010 = vmatpush1.msra.mxu0 0.0
    %4011 = vmatprep.subr.mxu0 0.0
    %4012 = vmatpush1.msra.mxu0 0.0
    %4013 = vmatprep.subr.mxu0 0.0
    %4014 = vmatpush1.msra.mxu0 0.0
    %4015 = vmatprep.subr.mxu0 0.0
    %4016 = vmatpush1.msra.mxu0 0.0
    %4017 = vmatprep.subr.mxu0 0.0
    %4018 = vmatpush1.msra.mxu0 0.0
    %4019 = vmatprep.subr.mxu0 0.0
    %4020 = vmatpush1.msra.mxu0 0.0
    %4021 = vmatprep.subr.mxu0 0.0
    %4022 = vmatpush1.msra.mxu0 0.0
    %v4023 = vand.u32 %v65, 4294901760
    %4024 = vmatprep.subr.mxu0 %v4023
    %v4025 = vand.u32 %v64, 4294901760
    %4026 = vmatpush1.msra.mxu0 %v4025
    %v4027 = vand.u32 %v63, 4294901760
    %4028 = vmatprep.subr.mxu0 %v4027
    %v4029 = vand.u32 %v62, 4294901760
    %4030 = vmatpush1.msra.mxu0 %v4029
    %v4031 = vand.u32 %v61, 4294901760
    %4032 = vmatprep.subr.mxu0 %v4031
    %v4033 = vand.u32 %v60, 4294901760
    %4034 = vmatpush1.msra.mxu0 %v4033
    %v4035 = vand.u32 %v59, 4294901760
    %4036 = vmatprep.subr.mxu0 %v4035
    %v4037 = vand.u32 %v58, 4294901760
    %4038 = vmatpush1.msra.mxu0 %v4037
    %v4039 = vand.u32 %v57, 4294901760
    %4040 = vmatprep.subr.mxu0 %v4039
    %v4041 = vand.u32 %v56, 4294901760
    %4042 = vmatpush1.msra.mxu0 %v4041
    %v4043 = vand.u32 %v55, 4294901760
    %4044 = vmatprep.subr.mxu0 %v4043
    %v4045 = vand.u32 %v54, 4294901760
    %4046 = vmatpush1.msra.mxu0 %v4045
    %v4047 = vand.u32 %v53, 4294901760
    %4048 = vmatprep.subr.mxu0 %v4047
    %v4049 = vand.u32 %v52, 4294901760
    %4050 = vmatpush1.msra.mxu0 %v4049
    %v4051 = vand.u32 %v51, 4294901760
    %4052 = vmatprep.subr.mxu0 %v4051
    %v4053 = vand.u32 %v50, 4294901760
    %4054 = vmatpush1.msra.mxu0 %v4053
    %4055 = vmatprep.subr.mxu0 0.0
    %4056 = vmatpush2.msra.mxu0 0.0
    %4057 = vmatprep.subr.mxu0 0.0
    %4058 = vmatpush2.msra.mxu0 0.0
    %4059 = vmatprep.subr.mxu0 0.0
    %4060 = vmatpush2.msra.mxu0 0.0
    %4061 = vmatprep.subr.mxu0 0.0
    %4062 = vmatpush2.msra.mxu0 0.0
    %4063 = vmatprep.subr.mxu0 0.0
    %4064 = vmatpush2.msra.mxu0 0.0
    %4065 = vmatprep.subr.mxu0 0.0
    %4066 = vmatpush2.msra.mxu0 0.0
    %4067 = vmatprep.subr.mxu0 0.0
    %4068 = vmatpush2.msra.mxu0 0.0
    %4069 = vmatprep.subr.mxu0 0.0
    %4070 = vmatpush2.msra.mxu0 0.0
    %4071 = vmatprep.subr.mxu0 0.0
    %4072 = vmatpush2.msra.mxu0 0.0
    %4073 = vmatprep.subr.mxu0 0.0
    %4074 = vmatpush2.msra.mxu0 0.0
    %4075 = vmatprep.subr.mxu0 0.0
    %4076 = vmatpush2.msra.mxu0 0.0
    %4077 = vmatprep.subr.mxu0 0.0
    %4078 = vmatpush2.msra.mxu0 0.0
    %4079 = vmatprep.subr.mxu0 0.0
    %4080 = vmatpush2.msra.mxu0 0.0
    %4081 = vmatprep.subr.mxu0 0.0
    %4082 = vmatpush2.msra.mxu0 0.0
    %4083 = vmatprep.subr.mxu0 0.0
    %4084 = vmatpush2.msra.mxu0 0.0
    %4085 = vmatprep.subr.mxu0 0.0
    %4086 = vmatpush2.msra.mxu0 0.0
    %4087 = vmatprep.mubr.f32.mxu0 0.0
    %v4088 = vand.u32 %v3656, 4294901760
    %v4089 = vsub.f32 %v3656, %v4088
    %v4090 = vand.u32 %v4089, 4294901760
    %4091 = vmatmul.mubr.f32.gmra.mxu0 %v4090
    %v4092 = vpop.f32.mrf.mxu0
    %v4093 = vadd.f32 %v4003, %v4092
    %v4094 = vpop.f32.mrf.mxu0
    %v4095 = vadd.f32 %v4005, %v4094
    %4096 = vdwg.mxu0
    %4097 = vmatprep.subr.mxu0 0.0
    %4098 = vmatpush1.msra.mxu0 0.0
    %4099 = vmatprep.subr.mxu0 0.0
    %4100 = vmatpush1.msra.mxu0 0.0
    %4101 = vmatprep.subr.mxu0 0.0
    %4102 = vmatpush1.msra.mxu0 0.0
    %4103 = vmatprep.subr.mxu0 0.0
    %4104 = vmatpush1.msra.mxu0 0.0
    %4105 = vmatprep.subr.mxu0 0.0
    %4106 = vmatpush1.msra.mxu0 0.0
    %4107 = vmatprep.subr.mxu0 0.0
    %4108 = vmatpush1.msra.mxu0 0.0
    %4109 = vmatprep.subr.mxu0 0.0
    %4110 = vmatpush1.msra.mxu0 0.0
    %4111 = vmatprep.subr.mxu0 0.0
    %4112 = vmatpush1.msra.mxu0 0.0
    %v4113 = vand.u32 %v65, 4294901760
    %v4114 = vsub.f32 %v65, %v4113
    %v4115 = vand.u32 %v4114, 4294901760
    %4116 = vmatprep.subr.mxu0 %v4115
    %v4117 = vand.u32 %v64, 4294901760
    %v4118 = vsub.f32 %v64, %v4117
    %v4119 = vand.u32 %v4118, 4294901760
    %4120 = vmatpush1.msra.mxu0 %v4119
    %v4121 = vand.u32 %v63, 4294901760
    %v4122 = vsub.f32 %v63, %v4121
    %v4123 = vand.u32 %v4122, 4294901760
    %4124 = vmatprep.subr.mxu0 %v4123
    %v4125 = vand.u32 %v62, 4294901760
    %v4126 = vsub.f32 %v62, %v4125
    %v4127 = vand.u32 %v4126, 4294901760
    %4128 = vmatpush1.msra.mxu0 %v4127
    %v4129 = vand.u32 %v61, 4294901760
    %v4130 = vsub.f32 %v61, %v4129
    %v4131 = vand.u32 %v4130, 4294901760
    %4132 = vmatprep.subr.mxu0 %v4131
    %v4133 = vand.u32 %v60, 4294901760
    %v4134 = vsub.f32 %v60, %v4133
    %v4135 = vand.u32 %v4134, 4294901760
    %4136 = vmatpush1.msra.mxu0 %v4135
    %v4137 = vand.u32 %v59, 4294901760
    %v4138 = vsub.f32 %v59, %v4137
    %v4139 = vand.u32 %v4138, 4294901760
    %4140 = vmatprep.subr.mxu0 %v4139
    %v4141 = vand.u32 %v58, 4294901760
    %v4142 = vsub.f32 %v58, %v4141
    %v4143 = vand.u32 %v4142, 4294901760
    %4144 = vmatpush1.msra.mxu0 %v4143
    %v4145 = vand.u32 %v57, 4294901760
    %v4146 = vsub.f32 %v57, %v4145
    %v4147 = vand.u32 %v4146, 4294901760
    %4148 = vmatprep.subr.mxu0 %v4147
    %v4149 = vand.u32 %v56, 4294901760
    %v4150 = vsub.f32 %v56, %v4149
    %v4151 = vand.u32 %v4150, 4294901760
    %4152 = vmatpush1.msra.mxu0 %v4151
    %v4153 = vand.u32 %v55, 4294901760
    %v4154 = vsub.f32 %v55, %v4153
    %v4155 = vand.u32 %v4154, 4294901760
    %4156 = vmatprep.subr.mxu0 %v4155
    %v4157 = vand.u32 %v54, 4294901760
    %v4158 = vsub.f32 %v54, %v4157
    %v4159 = vand.u32 %v4158, 4294901760
    %4160 = vmatpush1.msra.mxu0 %v4159
    %v4161 = vand.u32 %v53, 4294901760
    %v4162 = vsub.f32 %v53, %v4161
    %v4163 = vand.u32 %v4162, 4294901760
    %4164 = vmatprep.subr.mxu0 %v4163
    %v4165 = vand.u32 %v52, 4294901760
    %v4166 = vsub.f32 %v52, %v4165
    %v4167 = vand.u32 %v4166, 4294901760
    %4168 = vmatpush1.msra.mxu0 %v4167
    %v4169 = vand.u32 %v51, 4294901760
    %v4170 = vsub.f32 %v51, %v4169
    %v4171 = vand.u32 %v4170, 4294901760
    %4172 = vmatprep.subr.mxu0 %v4171
    %v4173 = vand.u32 %v50, 4294901760
    %v4174 = vsub.f32 %v50, %v4173
    %v4175 = vand.u32 %v4174, 4294901760
    %4176 = vmatpush1.msra.mxu0 %v4175
    %4177 = vmatprep.subr.mxu0 0.0
    %4178 = vmatpush2.msra.mxu0 0.0
    %4179 = vmatprep.subr.mxu0 0.0
    %4180 = vmatpush2.msra.mxu0 0.0
    %4181 = vmatprep.subr.mxu0 0.0
    %4182 = vmatpush2.msra.mxu0 0.0
    %4183 = vmatprep.subr.mxu0 0.0
    %4184 = vmatpush2.msra.mxu0 0.0
    %4185 = vmatprep.subr.mxu0 0.0
    %4186 = vmatpush2.msra.mxu0 0.0
    %4187 = vmatprep.subr.mxu0 0.0
    %4188 = vmatpush2.msra.mxu0 0.0
    %4189 = vmatprep.subr.mxu0 0.0
    %4190 = vmatpush2.msra.mxu0 0.0
    %4191 = vmatprep.subr.mxu0 0.0
    %4192 = vmatpush2.msra.mxu0 0.0
    %4193 = vmatprep.subr.mxu0 0.0
    %4194 = vmatpush2.msra.mxu0 0.0
    %4195 = vmatprep.subr.mxu0 0.0
    %4196 = vmatpush2.msra.mxu0 0.0
    %4197 = vmatprep.subr.mxu0 0.0
    %4198 = vmatpush2.msra.mxu0 0.0
    %4199 = vmatprep.subr.mxu0 0.0
    %4200 = vmatpush2.msra.mxu0 0.0
    %4201 = vmatprep.subr.mxu0 0.0
    %4202 = vmatpush2.msra.mxu0 0.0
    %4203 = vmatprep.subr.mxu0 0.0
    %4204 = vmatpush2.msra.mxu0 0.0
    %4205 = vmatprep.subr.mxu0 0.0
    %4206 = vmatpush2.msra.mxu0 0.0
    %4207 = vmatprep.subr.mxu0 0.0
    %4208 = vmatpush2.msra.mxu0 0.0
    %4209 = vmatprep.mubr.f32.mxu0 0.0
    %v4210 = vand.u32 %v3656, 4294901760
    %4211 = vmatmul.mubr.f32.gmra.mxu0 %v4210
    %v4212 = vpop.f32.mrf.mxu0
    %v4213 = vadd.f32 %v4093, %v4212
    %v4214 = vpop.f32.mrf.mxu0
    %v4215 = vadd.f32 %v4095, %v4214
    %4216 = vdwg.mxu0
    %4217 = vmatprep.subr.mxu0 0.0
    %4218 = vmatpush1.msra.mxu0 0.0
    %4219 = vmatprep.subr.mxu0 0.0
    %4220 = vmatpush1.msra.mxu0 0.0
    %4221 = vmatprep.subr.mxu0 0.0
    %4222 = vmatpush1.msra.mxu0 0.0
    %4223 = vmatprep.subr.mxu0 0.0
    %4224 = vmatpush1.msra.mxu0 0.0
    %4225 = vmatprep.subr.mxu0 0.0
    %4226 = vmatpush1.msra.mxu0 0.0
    %4227 = vmatprep.subr.mxu0 0.0
    %4228 = vmatpush1.msra.mxu0 0.0
    %4229 = vmatprep.subr.mxu0 0.0
    %4230 = vmatpush1.msra.mxu0 0.0
    %4231 = vmatprep.subr.mxu0 0.0
    %4232 = vmatpush1.msra.mxu0 0.0
    %v4233 = vand.u32 %v65, 4294901760
    %4234 = vmatprep.subr.mxu0 %v4233
    %v4235 = vand.u32 %v64, 4294901760
    %4236 = vmatpush1.msra.mxu0 %v4235
    %v4237 = vand.u32 %v63, 4294901760
    %4238 = vmatprep.subr.mxu0 %v4237
    %v4239 = vand.u32 %v62, 4294901760
    %4240 = vmatpush1.msra.mxu0 %v4239
    %v4241 = vand.u32 %v61, 4294901760
    %4242 = vmatprep.subr.mxu0 %v4241
    %v4243 = vand.u32 %v60, 4294901760
    %4244 = vmatpush1.msra.mxu0 %v4243
    %v4245 = vand.u32 %v59, 4294901760
    %4246 = vmatprep.subr.mxu0 %v4245
    %v4247 = vand.u32 %v58, 4294901760
    %4248 = vmatpush1.msra.mxu0 %v4247
    %v4249 = vand.u32 %v57, 4294901760
    %4250 = vmatprep.subr.mxu0 %v4249
    %v4251 = vand.u32 %v56, 4294901760
    %4252 = vmatpush1.msra.mxu0 %v4251
    %v4253 = vand.u32 %v55, 4294901760
    %4254 = vmatprep.subr.mxu0 %v4253
    %v4255 = vand.u32 %v54, 4294901760
    %4256 = vmatpush1.msra.mxu0 %v4255
    %v4257 = vand.u32 %v53, 4294901760
    %4258 = vmatprep.subr.mxu0 %v4257
    %v4259 = vand.u32 %v52, 4294901760
    %4260 = vmatpush1.msra.mxu0 %v4259
    %v4261 = vand.u32 %v51, 4294901760
    %4262 = vmatprep.subr.mxu0 %v4261
    %v4263 = vand.u32 %v50, 4294901760
    %4264 = vmatpush1.msra.mxu0 %v4263
    %4265 = vmatprep.subr.mxu0 0.0
    %4266 = vmatpush2.msra.mxu0 0.0
    %4267 = vmatprep.subr.mxu0 0.0
    %4268 = vmatpush2.msra.mxu0 0.0
    %4269 = vmatprep.subr.mxu0 0.0
    %4270 = vmatpush2.msra.mxu0 0.0
    %4271 = vmatprep.subr.mxu0 0.0
    %4272 = vmatpush2.msra.mxu0 0.0
    %4273 = vmatprep.subr.mxu0 0.0
    %4274 = vmatpush2.msra.mxu0 0.0
    %4275 = vmatprep.subr.mxu0 0.0
    %4276 = vmatpush2.msra.mxu0 0.0
    %4277 = vmatprep.subr.mxu0 0.0
    %4278 = vmatpush2.msra.mxu0 0.0
    %4279 = vmatprep.subr.mxu0 0.0
    %4280 = vmatpush2.msra.mxu0 0.0
    %4281 = vmatprep.subr.mxu0 0.0
    %4282 = vmatpush2.msra.mxu0 0.0
    %4283 = vmatprep.subr.mxu0 0.0
    %4284 = vmatpush2.msra.mxu0 0.0
    %4285 = vmatprep.subr.mxu0 0.0
    %4286 = vmatpush2.msra.mxu0 0.0
    %4287 = vmatprep.subr.mxu0 0.0
    %4288 = vmatpush2.msra.mxu0 0.0
    %4289 = vmatprep.subr.mxu0 0.0
    %4290 = vmatpush2.msra.mxu0 0.0
    %4291 = vmatprep.subr.mxu0 0.0
    %4292 = vmatpush2.msra.mxu0 0.0
    %4293 = vmatprep.subr.mxu0 0.0
    %4294 = vmatpush2.msra.mxu0 0.0
    %4295 = vmatprep.subr.mxu0 0.0
    %4296 = vmatpush2.msra.mxu0 0.0
    %4297 = vmatprep.mubr.f32.mxu0 0.0
    %v4298 = vand.u32 %v3656, 4294901760
    %4299 = vmatmul.mubr.f32.gmra.mxu0 %v4298
    %v4300 = vpop.f32.mrf.mxu0
    %v4301 = vadd.f32 %v4213, %v4300
    %v4302 = vpop.f32.mrf.mxu0
    %v4303 = vadd.f32 %v4215, %v4302
    %4304 = vdwg.mxu0
    %v4306 = vsel %vm720, %v3644, 0
    %4308 = vmatprep.subr.mxu0 0.0
    %4309 = vmatpush1.msra.mxu0 0.0
    %4310 = vmatprep.subr.mxu0 0.0
    %4311 = vmatpush1.msra.mxu0 0.0
    %4312 = vmatprep.subr.mxu0 0.0
    %4313 = vmatpush1.msra.mxu0 0.0
    %4314 = vmatprep.subr.mxu0 0.0
    %4315 = vmatpush1.msra.mxu0 0.0
    %4316 = vmatprep.subr.mxu0 0.0
    %4317 = vmatpush1.msra.mxu0 0.0
    %4318 = vmatprep.subr.mxu0 0.0
    %4319 = vmatpush1.msra.mxu0 0.0
    %4320 = vmatprep.subr.mxu0 0.0
    %4321 = vmatpush1.msra.mxu0 0.0
    %4322 = vmatprep.subr.mxu0 0.0
    %4323 = vmatpush1.msra.mxu0 0.0
    %4324 = vmatprep.subr.mxu0 0.0
    %4325 = vmatpush1.msra.mxu0 0.0
    %4326 = vmatprep.subr.mxu0 0.0
    %4327 = vmatpush1.msra.mxu0 0.0
    %4328 = vmatprep.subr.mxu0 0.0
    %4329 = vmatpush1.msra.mxu0 0.0
    %4330 = vmatprep.subr.mxu0 0.0
    %4331 = vmatpush1.msra.mxu0 0.0
    %4332 = vmatprep.subr.mxu0 0.0
    %4333 = vmatpush1.msra.mxu0 0.0
    %4334 = vmatprep.subr.mxu0 0.0
    %4335 = vmatpush1.msra.mxu0 0.0
    %4336 = vmatprep.subr.mxu0 0.0
    %4337 = vmatpush1.msra.mxu0 %v48
    %4338 = vmatprep.subr.mxu0 0.0
    %4339 = vmatpush1.msra.mxu0 %v46
    %4340 = vmatprep.subr.mxu0 0.0
    %4341 = vmatpush2.msra.mxu0 0.0
    %4342 = vmatprep.subr.mxu0 0.0
    %4343 = vmatpush2.msra.mxu0 0.0
    %4344 = vmatprep.subr.mxu0 0.0
    %4345 = vmatpush2.msra.mxu0 0.0
    %4346 = vmatprep.subr.mxu0 0.0
    %4347 = vmatpush2.msra.mxu0 0.0
    %4348 = vmatprep.subr.mxu0 0.0
    %4349 = vmatpush2.msra.mxu0 0.0
    %4350 = vmatprep.subr.mxu0 0.0
    %4351 = vmatpush2.msra.mxu0 0.0
    %4352 = vmatprep.subr.mxu0 0.0
    %4353 = vmatpush2.msra.mxu0 0.0
    %4354 = vmatprep.subr.mxu0 0.0
    %4355 = vmatpush2.msra.mxu0 0.0
    %4356 = vmatprep.subr.mxu0 0.0
    %4357 = vmatpush2.msra.mxu0 0.0
    %4358 = vmatprep.subr.mxu0 0.0
    %4359 = vmatpush2.msra.mxu0 0.0
    %4360 = vmatprep.subr.mxu0 0.0
    %4361 = vmatpush2.msra.mxu0 0.0
    %4362 = vmatprep.subr.mxu0 0.0
    %4363 = vmatpush2.msra.mxu0 0.0
    %4364 = vmatprep.subr.mxu0 0.0
    %4365 = vmatpush2.msra.mxu0 0.0
    %4366 = vmatprep.subr.mxu0 0.0
    %4367 = vmatpush2.msra.mxu0 0.0
    %4368 = vmatprep.subr.mxu0 0.0
    %4369 = vmatpush2.msra.mxu0 0.0
    %4370 = vmatprep.subr.mxu0 0.0
    %4371 = vmatpush2.msra.mxu0 0.0
    %4372 = vmatprep.mubr.f32.mxu0 0.0
    %4373 = vmatmul.mubr.f32.gmra.mxu0 %v4306
    %v4374 = vpop.f32.mrf.mxu0
    %v4375 = vadd.f32 %v4301, %v4374
    %v4376 = vpop.f32.mrf.mxu0
    %4377 = vdwg.mxu0
    %v4379 = vsel %vm720, %v3645, 0
    %4381 = vmatprep.subr.mxu0 0.0
    %4382 = vmatpush1.msra.mxu0 0.0
    %4383 = vmatprep.subr.mxu0 0.0
    %4384 = vmatpush1.msra.mxu0 0.0
    %4385 = vmatprep.subr.mxu0 0.0
    %4386 = vmatpush1.msra.mxu0 0.0
    %4387 = vmatprep.subr.mxu0 0.0
    %4388 = vmatpush1.msra.mxu0 0.0
    %4389 = vmatprep.subr.mxu0 0.0
    %4390 = vmatpush1.msra.mxu0 0.0
    %4391 = vmatprep.subr.mxu0 0.0
    %4392 = vmatpush1.msra.mxu0 0.0
    %4393 = vmatprep.subr.mxu0 0.0
    %4394 = vmatpush1.msra.mxu0 0.0
    %4395 = vmatprep.subr.mxu0 0.0
    %4396 = vmatpush1.msra.mxu0 0.0
    %4397 = vmatprep.subr.mxu0 0.0
    %4398 = vmatpush1.msra.mxu0 0.0
    %4399 = vmatprep.subr.mxu0 0.0
    %4400 = vmatpush1.msra.mxu0 0.0
    %4401 = vmatprep.subr.mxu0 0.0
    %4402 = vmatpush1.msra.mxu0 0.0
    %4403 = vmatprep.subr.mxu0 0.0
    %4404 = vmatpush1.msra.mxu0 0.0
    %4405 = vmatprep.subr.mxu0 0.0
    %4406 = vmatpush1.msra.mxu0 0.0
    %4407 = vmatprep.subr.mxu0 0.0
    %4408 = vmatpush1.msra.mxu0 0.0
    %4409 = vmatprep.subr.mxu0 0.0
    %4410 = vmatpush1.msra.mxu0 %v49
    %4411 = vmatprep.subr.mxu0 0.0
    %4412 = vmatpush1.msra.mxu0 %v47
    %4413 = vmatprep.subr.mxu0 0.0
    %4414 = vmatpush2.msra.mxu0 0.0
    %4415 = vmatprep.subr.mxu0 0.0
    %4416 = vmatpush2.msra.mxu0 0.0
    %4417 = vmatprep.subr.mxu0 0.0
    %4418 = vmatpush2.msra.mxu0 0.0
    %4419 = vmatprep.subr.mxu0 0.0
    %4420 = vmatpush2.msra.mxu0 0.0
    %4421 = vmatprep.subr.mxu0 0.0
    %4422 = vmatpush2.msra.mxu0 0.0
    %4423 = vmatprep.subr.mxu0 0.0
    %4424 = vmatpush2.msra.mxu0 0.0
    %4425 = vmatprep.subr.mxu0 0.0
    %4426 = vmatpush2.msra.mxu0 0.0
    %4427 = vmatprep.subr.mxu0 0.0
    %4428 = vmatpush2.msra.mxu0 0.0
    %4429 = vmatprep.subr.mxu0 0.0
    %4430 = vmatpush2.msra.mxu0 0.0
    %4431 = vmatprep.subr.mxu0 0.0
    %4432 = vmatpush2.msra.mxu0 0.0
    %4433 = vmatprep.subr.mxu0 0.0
    %4434 = vmatpush2.msra.mxu0 0.0
    %4435 = vmatprep.subr.mxu0 0.0
    %4436 = vmatpush2.msra.mxu0 0.0
    %4437 = vmatprep.subr.mxu0 0.0
    %4438 = vmatpush2.msra.mxu0 0.0
    %4439 = vmatprep.subr.mxu0 0.0
    %4440 = vmatpush2.msra.mxu0 0.0
    %4441 = vmatprep.subr.mxu0 0.0
    %4442 = vmatpush2.msra.mxu0 0.0
    %4443 = vmatprep.subr.mxu0 0.0
    %4444 = vmatpush2.msra.mxu0 0.0
    %4445 = vmatprep.mubr.f32.mxu0 0.0
    %4446 = vmatmul.mubr.f32.gmra.mxu0 %v4379
    %v4447 = vpop.f32.mrf.mxu0
    %v4448 = vadd.f32 %v4303, %v4447
    %v4449 = vpop.f32.mrf.mxu0
    %4450 = vdwg.mxu0
    %v4451 = vld [vmem:[%s3563] sm:$0x3]
    %4453 = vset.pattern.permute.xlu0 0
    %4454 = vperm.xlu0 %4453, %v4451
    %v4455 = vpop.permute.xlu0 %4454
    %v4457 = vld [vmem:[%s3556] sm:$0x3]
    %4459 = vset.pattern.permute.xlu0 0
    %4460 = vperm.xlu0 %4459, %v4457
    %v4461 = vpop.permute.xlu0 %4460
    %v4463 = vsub.f32 1.0, %v4455
    %v4464 = vsub.f32 1.0, %v4461
    %v4465 = vxor.u32 %v4375, 2147483648
    %v4466 = vmul.f32 %v4465, 1.442695
    %v4467 = vpow.pop %v4466
    %v4468 = vadd.f32 %v4467, 1.0
    %v4469 = vrcp.pop %v4468
    %v4470 = vmul.f32 1.0, %v4469
    %v4471 = vtanh.pop %v4375
    %v4472 = vmul.f32 %v4470, %v3601
    %4474 = vrot.lane.b32.xlu0 %v4471, 64
    %v4475 = vpop.permute.xlu0 %4474
    %v4477 = vmul.f32 %v4470, %v4475
    %4479 = vrot.lane.b32.xlu0 %v4477, 32
    %v4480 = vpop.permute.xlu0 %4479
    %v4482 = vadd.f32 %v4472, %v4480
    %v4483 = vtanh.pop %v4482
    %4485 = vrot.lane.b32.xlu0 %v4483, 64
    %v4486 = vpop.permute.xlu0 %4485
    %v4488 = vmul.f32 %v4470, %v4486
    %v4489 = vmul.f32 %v4455, %v4488
    %v4490 = vmul.f32 %v4463, %v3598
    %v4491 = vadd.f32 %v4489, %v4490
    %v4492 = vmul.f32 %v4455, %v4482
    %v4493 = vmul.f32 %v4463, %v3601
    %v4494 = vadd.f32 %v4492, %v4493
    %v4495 = vxor.u32 %v4448, 2147483648
    %v4496 = vmul.f32 %v4495, 1.442695
    %v4497 = vpow.pop %v4496
    %v4498 = vadd.f32 %v4497, 1.0
    %v4499 = vrcp.pop %v4498
    %v4500 = vmul.f32 1.0, %v4499
    %v4501 = vtanh.pop %v4448
    %v4502 = vmul.f32 %v4500, %v3631
    %4504 = vrot.lane.b32.xlu0 %v4501, 64
    %v4505 = vpop.permute.xlu0 %4504
    %v4507 = vmul.f32 %v4500, %v4505
    %4509 = vrot.lane.b32.xlu0 %v4507, 32
    %v4510 = vpop.permute.xlu0 %4509
    %v4512 = vadd.f32 %v4502, %v4510
    %v4513 = vtanh.pop %v4512
    %4515 = vrot.lane.b32.xlu0 %v4513, 64
    %v4516 = vpop.permute.xlu0 %4515
    %v4518 = vmul.f32 %v4500, %v4516
    %v4519 = vmul.f32 %v4461, %v4518
    %v4520 = vmul.f32 %v4464, %v3628
    %v4521 = vadd.f32 %v4519, %v4520
    %v4522 = vmul.f32 %v4461, %v4512
    %v4523 = vmul.f32 %v4464, %v3631
    %v4524 = vadd.f32 %v4522, %v4523
    %4526 = vrot.lane.b32.xlu0 %v4489, 32
    %v4527 = vpop.permute.xlu0 %4526
    %s4529 = scalar_lea.vmem [#allocation7], 8
    %4530 = vst.msk [vmem:[%s4529] sm:$0x3] %vm944, %v4527
    %4532 = vrot.lane.b32.xlu0 %v4519, 32
    %v4533 = vpop.permute.xlu0 %4532
    %s4535 = scalar_lea.vmem [#allocation7], 22
    %4536 = vst.msk [vmem:[%s4535] sm:$0x3] %vm944, %v4533
    %v4537 = vld [vmem:[%s1852] sm:$0x3]
    %v4538 = vld [vmem:[%s1850] sm:$0x3]
    %4540 = vrot.lane.b32.xlu0 %v4491, 32
    %v4541 = vpop.permute.xlu0 %4540
    %4544 = vrot.lane.b32.xlu0 %v4521, 64
    %v4545 = vpop.permute.xlu0 %4544
    %v4547 = vsel %vm964, %v4541, %v4545
    %v4549 = vsel %vm69, %v4547, 0
    %4551 = vmatprep.subr.mxu0 0.0
    %4552 = vmatpush1.msra.mxu0 0.0
    %4553 = vmatprep.subr.mxu0 0.0
    %4554 = vmatpush1.msra.mxu0 0.0
    %4555 = vmatprep.subr.mxu0 0.0
    %4556 = vmatpush1.msra.mxu0 0.0
    %4557 = vmatprep.subr.mxu0 0.0
    %4558 = vmatpush1.msra.mxu0 0.0
    %4559 = vmatprep.subr.mxu0 0.0
    %4560 = vmatpush1.msra.mxu0 0.0
    %4561 = vmatprep.subr.mxu0 0.0
    %4562 = vmatpush1.msra.mxu0 0.0
    %4563 = vmatprep.subr.mxu0 0.0
    %4564 = vmatpush1.msra.mxu0 0.0
    %4565 = vmatprep.subr.mxu0 0.0
    %4566 = vmatpush1.msra.mxu0 0.0
    %v4567 = vand.u32 %v65, 4294901760
    %4568 = vmatprep.subr.mxu0 %v4567
    %v4569 = vand.u32 %v64, 4294901760
    %4570 = vmatpush1.msra.mxu0 %v4569
    %v4571 = vand.u32 %v63, 4294901760
    %4572 = vmatprep.subr.mxu0 %v4571
    %v4573 = vand.u32 %v62, 4294901760
    %4574 = vmatpush1.msra.mxu0 %v4573
    %v4575 = vand.u32 %v61, 4294901760
    %4576 = vmatprep.subr.mxu0 %v4575
    %v4577 = vand.u32 %v60, 4294901760
    %4578 = vmatpush1.msra.mxu0 %v4577
    %v4579 = vand.u32 %v59, 4294901760
    %4580 = vmatprep.subr.mxu0 %v4579
    %v4581 = vand.u32 %v58, 4294901760
    %4582 = vmatpush1.msra.mxu0 %v4581
    %v4583 = vand.u32 %v57, 4294901760
    %4584 = vmatprep.subr.mxu0 %v4583
    %v4585 = vand.u32 %v56, 4294901760
    %4586 = vmatpush1.msra.mxu0 %v4585
    %v4587 = vand.u32 %v55, 4294901760
    %4588 = vmatprep.subr.mxu0 %v4587
    %v4589 = vand.u32 %v54, 4294901760
    %4590 = vmatpush1.msra.mxu0 %v4589
    %v4591 = vand.u32 %v53, 4294901760
    %4592 = vmatprep.subr.mxu0 %v4591
    %v4593 = vand.u32 %v52, 4294901760
    %4594 = vmatpush1.msra.mxu0 %v4593
    %v4595 = vand.u32 %v51, 4294901760
    %4596 = vmatprep.subr.mxu0 %v4595
    %v4597 = vand.u32 %v50, 4294901760
    %4598 = vmatpush1.msra.mxu0 %v4597
    %4599 = vmatprep.subr.mxu0 0.0
    %4600 = vmatpush2.msra.mxu0 0.0
    %4601 = vmatprep.subr.mxu0 0.0
    %4602 = vmatpush2.msra.mxu0 0.0
    %4603 = vmatprep.subr.mxu0 0.0
    %4604 = vmatpush2.msra.mxu0 0.0
    %4605 = vmatprep.subr.mxu0 0.0
    %4606 = vmatpush2.msra.mxu0 0.0
    %4607 = vmatprep.subr.mxu0 0.0
    %4608 = vmatpush2.msra.mxu0 0.0
    %4609 = vmatprep.subr.mxu0 0.0
    %4610 = vmatpush2.msra.mxu0 0.0
    %4611 = vmatprep.subr.mxu0 0.0
    %4612 = vmatpush2.msra.mxu0 0.0
    %4613 = vmatprep.subr.mxu0 0.0
    %4614 = vmatpush2.msra.mxu0 0.0
    %4615 = vmatprep.subr.mxu0 0.0
    %4616 = vmatpush2.msra.mxu0 0.0
    %4617 = vmatprep.subr.mxu0 0.0
    %4618 = vmatpush2.msra.mxu0 0.0
    %4619 = vmatprep.subr.mxu0 0.0
    %4620 = vmatpush2.msra.mxu0 0.0
    %4621 = vmatprep.subr.mxu0 0.0
    %4622 = vmatpush2.msra.mxu0 0.0
    %4623 = vmatprep.subr.mxu0 0.0
    %4624 = vmatpush2.msra.mxu0 0.0
    %4625 = vmatprep.subr.mxu0 0.0
    %4626 = vmatpush2.msra.mxu0 0.0
    %4627 = vmatprep.subr.mxu0 0.0
    %4628 = vmatpush2.msra.mxu0 0.0
    %4629 = vmatprep.subr.mxu0 0.0
    %4630 = vmatpush2.msra.mxu0 0.0
    %4631 = vmatprep.mubr.f32.mxu0 0.0
    %v4632 = vand.u32 %v4549, 4294901760
    %v4633 = vsub.f32 %v4549, %v4632
    %v4634 = vand.u32 %v4633, 4294901760
    %v4635 = vsub.f32 %v4633, %v4634
    %v4636 = vand.u32 %v4635, 4294901760
    %4637 = vmatmul.mubr.f32.gmra.mxu0 %v4636
    %v4638 = vpop.f32.mrf.mxu0
    %v4639 = vadd.f32 0.0, %v4638
    %v4640 = vpop.f32.mrf.mxu0
    %v4641 = vadd.f32 0.0, %v4640
    %4642 = vdwg.mxu0
    %4643 = vmatprep.subr.mxu0 0.0
    %4644 = vmatpush1.msra.mxu0 0.0
    %4645 = vmatprep.subr.mxu0 0.0
    %4646 = vmatpush1.msra.mxu0 0.0
    %4647 = vmatprep.subr.mxu0 0.0
    %4648 = vmatpush1.msra.mxu0 0.0
    %4649 = vmatprep.subr.mxu0 0.0
    %4650 = vmatpush1.msra.mxu0 0.0
    %4651 = vmatprep.subr.mxu0 0.0
    %4652 = vmatpush1.msra.mxu0 0.0
    %4653 = vmatprep.subr.mxu0 0.0
    %4654 = vmatpush1.msra.mxu0 0.0
    %4655 = vmatprep.subr.mxu0 0.0
    %4656 = vmatpush1.msra.mxu0 0.0
    %4657 = vmatprep.subr.mxu0 0.0
    %4658 = vmatpush1.msra.mxu0 0.0
    %v4659 = vand.u32 %v65, 4294901760
    %v4660 = vsub.f32 %v65, %v4659
    %v4661 = vand.u32 %v4660, 4294901760
    %v4662 = vsub.f32 %v4660, %v4661
    %v4663 = vand.u32 %v4662, 4294901760
    %4664 = vmatprep.subr.mxu0 %v4663
    %v4665 = vand.u32 %v64, 4294901760
    %v4666 = vsub.f32 %v64, %v4665
    %v4667 = vand.u32 %v4666, 4294901760
    %v4668 = vsub.f32 %v4666, %v4667
    %v4669 = vand.u32 %v4668, 4294901760
    %4670 = vmatpush1.msra.mxu0 %v4669
    %v4671 = vand.u32 %v63, 4294901760
    %v4672 = vsub.f32 %v63, %v4671
    %v4673 = vand.u32 %v4672, 4294901760
    %v4674 = vsub.f32 %v4672, %v4673
    %v4675 = vand.u32 %v4674, 4294901760
    %4676 = vmatprep.subr.mxu0 %v4675
    %v4677 = vand.u32 %v62, 4294901760
    %v4678 = vsub.f32 %v62, %v4677
    %v4679 = vand.u32 %v4678, 4294901760
    %v4680 = vsub.f32 %v4678, %v4679
    %v4681 = vand.u32 %v4680, 4294901760
    %4682 = vmatpush1.msra.mxu0 %v4681
    %v4683 = vand.u32 %v61, 4294901760
    %v4684 = vsub.f32 %v61, %v4683
    %v4685 = vand.u32 %v4684, 4294901760
    %v4686 = vsub.f32 %v4684, %v4685
    %v4687 = vand.u32 %v4686, 4294901760
    %4688 = vmatprep.subr.mxu0 %v4687
    %v4689 = vand.u32 %v60, 4294901760
    %v4690 = vsub.f32 %v60, %v4689
    %v4691 = vand.u32 %v4690, 4294901760
    %v4692 = vsub.f32 %v4690, %v4691
    %v4693 = vand.u32 %v4692, 4294901760
    %4694 = vmatpush1.msra.mxu0 %v4693
    %v4695 = vand.u32 %v59, 4294901760
    %v4696 = vsub.f32 %v59, %v4695
    %v4697 = vand.u32 %v4696, 4294901760
    %v4698 = vsub.f32 %v4696, %v4697
    %v4699 = vand.u32 %v4698, 4294901760
    %4700 = vmatprep.subr.mxu0 %v4699
    %v4701 = vand.u32 %v58, 4294901760
    %v4702 = vsub.f32 %v58, %v4701
    %v4703 = vand.u32 %v4702, 4294901760
    %v4704 = vsub.f32 %v4702, %v4703
    %v4705 = vand.u32 %v4704, 4294901760
    %4706 = vmatpush1.msra.mxu0 %v4705
    %v4707 = vand.u32 %v57, 4294901760
    %v4708 = vsub.f32 %v57, %v4707
    %v4709 = vand.u32 %v4708, 4294901760
    %v4710 = vsub.f32 %v4708, %v4709
    %v4711 = vand.u32 %v4710, 4294901760
    %4712 = vmatprep.subr.mxu0 %v4711
    %v4713 = vand.u32 %v56, 4294901760
    %v4714 = vsub.f32 %v56, %v4713
    %v4715 = vand.u32 %v4714, 4294901760
    %v4716 = vsub.f32 %v4714, %v4715
    %v4717 = vand.u32 %v4716, 4294901760
    %4718 = vmatpush1.msra.mxu0 %v4717
    %v4719 = vand.u32 %v55, 4294901760
    %v4720 = vsub.f32 %v55, %v4719
    %v4721 = vand.u32 %v4720, 4294901760
    %v4722 = vsub.f32 %v4720, %v4721
    %v4723 = vand.u32 %v4722, 4294901760
    %4724 = vmatprep.subr.mxu0 %v4723
    %v4725 = vand.u32 %v54, 4294901760
    %v4726 = vsub.f32 %v54, %v4725
    %v4727 = vand.u32 %v4726, 4294901760
    %v4728 = vsub.f32 %v4726, %v4727
    %v4729 = vand.u32 %v4728, 4294901760
    %4730 = vmatpush1.msra.mxu0 %v4729
    %v4731 = vand.u32 %v53, 4294901760
    %v4732 = vsub.f32 %v53, %v4731
    %v4733 = vand.u32 %v4732, 4294901760
    %v4734 = vsub.f32 %v4732, %v4733
    %v4735 = vand.u32 %v4734, 4294901760
    %4736 = vmatprep.subr.mxu0 %v4735
    %v4737 = vand.u32 %v52, 4294901760
    %v4738 = vsub.f32 %v52, %v4737
    %v4739 = vand.u32 %v4738, 4294901760
    %v4740 = vsub.f32 %v4738, %v4739
    %v4741 = vand.u32 %v4740, 4294901760
    %4742 = vmatpush1.msra.mxu0 %v4741
    %v4743 = vand.u32 %v51, 4294901760
    %v4744 = vsub.f32 %v51, %v4743
    %v4745 = vand.u32 %v4744, 4294901760
    %v4746 = vsub.f32 %v4744, %v4745
    %v4747 = vand.u32 %v4746, 4294901760
    %4748 = vmatprep.subr.mxu0 %v4747
    %v4749 = vand.u32 %v50, 4294901760
    %v4750 = vsub.f32 %v50, %v4749
    %v4751 = vand.u32 %v4750, 4294901760
    %v4752 = vsub.f32 %v4750, %v4751
    %v4753 = vand.u32 %v4752, 4294901760
    %4754 = vmatpush1.msra.mxu0 %v4753
    %4755 = vmatprep.subr.mxu0 0.0
    %4756 = vmatpush2.msra.mxu0 0.0
    %4757 = vmatprep.subr.mxu0 0.0
    %4758 = vmatpush2.msra.mxu0 0.0
    %4759 = vmatprep.subr.mxu0 0.0
    %4760 = vmatpush2.msra.mxu0 0.0
    %4761 = vmatprep.subr.mxu0 0.0
    %4762 = vmatpush2.msra.mxu0 0.0
    %4763 = vmatprep.subr.mxu0 0.0
    %4764 = vmatpush2.msra.mxu0 0.0
    %4765 = vmatprep.subr.mxu0 0.0
    %4766 = vmatpush2.msra.mxu0 0.0
    %4767 = vmatprep.subr.mxu0 0.0
    %4768 = vmatpush2.msra.mxu0 0.0
    %4769 = vmatprep.subr.mxu0 0.0
    %4770 = vmatpush2.msra.mxu0 0.0
    %4771 = vmatprep.subr.mxu0 0.0
    %4772 = vmatpush2.msra.mxu0 0.0
    %4773 = vmatprep.subr.mxu0 0.0
    %4774 = vmatpush2.msra.mxu0 0.0
    %4775 = vmatprep.subr.mxu0 0.0
    %4776 = vmatpush2.msra.mxu0 0.0
    %4777 = vmatprep.subr.mxu0 0.0
    %4778 = vmatpush2.msra.mxu0 0.0
    %4779 = vmatprep.subr.mxu0 0.0
    %4780 = vmatpush2.msra.mxu0 0.0
    %4781 = vmatprep.subr.mxu0 0.0
    %4782 = vmatpush2.msra.mxu0 0.0
    %4783 = vmatprep.subr.mxu0 0.0
    %4784 = vmatpush2.msra.mxu0 0.0
    %4785 = vmatprep.subr.mxu0 0.0
    %4786 = vmatpush2.msra.mxu0 0.0
    %4787 = vmatprep.mubr.f32.mxu0 0.0
    %v4788 = vand.u32 %v4549, 4294901760
    %4789 = vmatmul.mubr.f32.gmra.mxu0 %v4788
    %v4790 = vpop.f32.mrf.mxu0
    %v4791 = vadd.f32 %v4639, %v4790
    %v4792 = vpop.f32.mrf.mxu0
    %v4793 = vadd.f32 %v4641, %v4792
    %4794 = vdwg.mxu0
    %4795 = vmatprep.subr.mxu0 0.0
    %4796 = vmatpush1.msra.mxu0 0.0
    %4797 = vmatprep.subr.mxu0 0.0
    %4798 = vmatpush1.msra.mxu0 0.0
    %4799 = vmatprep.subr.mxu0 0.0
    %4800 = vmatpush1.msra.mxu0 0.0
    %4801 = vmatprep.subr.mxu0 0.0
    %4802 = vmatpush1.msra.mxu0 0.0
    %4803 = vmatprep.subr.mxu0 0.0
    %4804 = vmatpush1.msra.mxu0 0.0
    %4805 = vmatprep.subr.mxu0 0.0
    %4806 = vmatpush1.msra.mxu0 0.0
    %4807 = vmatprep.subr.mxu0 0.0
    %4808 = vmatpush1.msra.mxu0 0.0
    %4809 = vmatprep.subr.mxu0 0.0
    %4810 = vmatpush1.msra.mxu0 0.0
    %v4811 = vand.u32 %v65, 4294901760
    %v4812 = vsub.f32 %v65, %v4811
    %4813 = vmatprep.subr.mxu0 %v4812
    %v4814 = vand.u32 %v64, 4294901760
    %v4815 = vsub.f32 %v64, %v4814
    %4816 = vmatpush1.msra.mxu0 %v4815
    %v4817 = vand.u32 %v63, 4294901760
    %v4818 = vsub.f32 %v63, %v4817
    %4819 = vmatprep.subr.mxu0 %v4818
    %v4820 = vand.u32 %v62, 4294901760
    %v4821 = vsub.f32 %v62, %v4820
    %4822 = vmatpush1.msra.mxu0 %v4821
    %v4823 = vand.u32 %v61, 4294901760
    %v4824 = vsub.f32 %v61, %v4823
    %4825 = vmatprep.subr.mxu0 %v4824
    %v4826 = vand.u32 %v60, 4294901760
    %v4827 = vsub.f32 %v60, %v4826
    %4828 = vmatpush1.msra.mxu0 %v4827
    %v4829 = vand.u32 %v59, 4294901760
    %v4830 = vsub.f32 %v59, %v4829
    %4831 = vmatprep.subr.mxu0 %v4830
    %v4832 = vand.u32 %v58, 4294901760
    %v4833 = vsub.f32 %v58, %v4832
    %4834 = vmatpush1.msra.mxu0 %v4833
    %v4835 = vand.u32 %v57, 4294901760
    %v4836 = vsub.f32 %v57, %v4835
    %4837 = vmatprep.subr.mxu0 %v4836
    %v4838 = vand.u32 %v56, 4294901760
    %v4839 = vsub.f32 %v56, %v4838
    %4840 = vmatpush1.msra.mxu0 %v4839
    %v4841 = vand.u32 %v55, 4294901760
    %v4842 = vsub.f32 %v55, %v4841
    %4843 = vmatprep.subr.mxu0 %v4842
    %v4844 = vand.u32 %v54, 4294901760
    %v4845 = vsub.f32 %v54, %v4844
    %4846 = vmatpush1.msra.mxu0 %v4845
    %v4847 = vand.u32 %v53, 4294901760
    %v4848 = vsub.f32 %v53, %v4847
    %4849 = vmatprep.subr.mxu0 %v4848
    %v4850 = vand.u32 %v52, 4294901760
    %v4851 = vsub.f32 %v52, %v4850
    %4852 = vmatpush1.msra.mxu0 %v4851
    %v4853 = vand.u32 %v51, 4294901760
    %v4854 = vsub.f32 %v51, %v4853
    %4855 = vmatprep.subr.mxu0 %v4854
    %v4856 = vand.u32 %v50, 4294901760
    %v4857 = vsub.f32 %v50, %v4856
    %4858 = vmatpush1.msra.mxu0 %v4857
    %4859 = vmatprep.subr.mxu0 0.0
    %4860 = vmatpush2.msra.mxu0 0.0
    %4861 = vmatprep.subr.mxu0 0.0
    %4862 = vmatpush2.msra.mxu0 0.0
    %4863 = vmatprep.subr.mxu0 0.0
    %4864 = vmatpush2.msra.mxu0 0.0
    %4865 = vmatprep.subr.mxu0 0.0
    %4866 = vmatpush2.msra.mxu0 0.0
    %4867 = vmatprep.subr.mxu0 0.0
    %4868 = vmatpush2.msra.mxu0 0.0
    %4869 = vmatprep.subr.mxu0 0.0
    %4870 = vmatpush2.msra.mxu0 0.0
    %4871 = vmatprep.subr.mxu0 0.0
    %4872 = vmatpush2.msra.mxu0 0.0
    %4873 = vmatprep.subr.mxu0 0.0
    %4874 = vmatpush2.msra.mxu0 0.0
    %4875 = vmatprep.subr.mxu0 0.0
    %4876 = vmatpush2.msra.mxu0 0.0
    %4877 = vmatprep.subr.mxu0 0.0
    %4878 = vmatpush2.msra.mxu0 0.0
    %4879 = vmatprep.subr.mxu0 0.0
    %4880 = vmatpush2.msra.mxu0 0.0
    %4881 = vmatprep.subr.mxu0 0.0
    %4882 = vmatpush2.msra.mxu0 0.0
    %4883 = vmatprep.subr.mxu0 0.0
    %4884 = vmatpush2.msra.mxu0 0.0
    %4885 = vmatprep.subr.mxu0 0.0
    %4886 = vmatpush2.msra.mxu0 0.0
    %4887 = vmatprep.subr.mxu0 0.0
    %4888 = vmatpush2.msra.mxu0 0.0
    %4889 = vmatprep.subr.mxu0 0.0
    %4890 = vmatpush2.msra.mxu0 0.0
    %4891 = vmatprep.mubr.f32.mxu0 0.0
    %v4892 = vand.u32 %v4549, 4294901760
    %v4893 = vsub.f32 %v4549, %v4892
    %4894 = vmatmul.mubr.f32.gmra.mxu0 %v4893
    %v4895 = vpop.f32.mrf.mxu0
    %v4896 = vadd.f32 %v4791, %v4895
    %v4897 = vpop.f32.mrf.mxu0
    %v4898 = vadd.f32 %v4793, %v4897
    %4899 = vdwg.mxu0
    %4900 = vmatprep.subr.mxu0 0.0
    %4901 = vmatpush1.msra.mxu0 0.0
    %4902 = vmatprep.subr.mxu0 0.0
    %4903 = vmatpush1.msra.mxu0 0.0
    %4904 = vmatprep.subr.mxu0 0.0
    %4905 = vmatpush1.msra.mxu0 0.0
    %4906 = vmatprep.subr.mxu0 0.0
    %4907 = vmatpush1.msra.mxu0 0.0
    %4908 = vmatprep.subr.mxu0 0.0
    %4909 = vmatpush1.msra.mxu0 0.0
    %4910 = vmatprep.subr.mxu0 0.0
    %4911 = vmatpush1.msra.mxu0 0.0
    %4912 = vmatprep.subr.mxu0 0.0
    %4913 = vmatpush1.msra.mxu0 0.0
    %4914 = vmatprep.subr.mxu0 0.0
    %4915 = vmatpush1.msra.mxu0 0.0
    %v4916 = vand.u32 %v65, 4294901760
    %4917 = vmatprep.subr.mxu0 %v4916
    %v4918 = vand.u32 %v64, 4294901760
    %4919 = vmatpush1.msra.mxu0 %v4918
    %v4920 = vand.u32 %v63, 4294901760
    %4921 = vmatprep.subr.mxu0 %v4920
    %v4922 = vand.u32 %v62, 4294901760
    %4923 = vmatpush1.msra.mxu0 %v4922
    %v4924 = vand.u32 %v61, 4294901760
    %4925 = vmatprep.subr.mxu0 %v4924
    %v4926 = vand.u32 %v60, 4294901760
    %4927 = vmatpush1.msra.mxu0 %v4926
    %v4928 = vand.u32 %v59, 4294901760
    %4929 = vmatprep.subr.mxu0 %v4928
    %v4930 = vand.u32 %v58, 4294901760
    %4931 = vmatpush1.msra.mxu0 %v4930
    %v4932 = vand.u32 %v57, 4294901760
    %4933 = vmatprep.subr.mxu0 %v4932
    %v4934 = vand.u32 %v56, 4294901760
    %4935 = vmatpush1.msra.mxu0 %v4934
    %v4936 = vand.u32 %v55, 4294901760
    %4937 = vmatprep.subr.mxu0 %v4936
    %v4938 = vand.u32 %v54, 4294901760
    %4939 = vmatpush1.msra.mxu0 %v4938
    %v4940 = vand.u32 %v53, 4294901760
    %4941 = vmatprep.subr.mxu0 %v4940
    %v4942 = vand.u32 %v52, 4294901760
    %4943 = vmatpush1.msra.mxu0 %v4942
    %v4944 = vand.u32 %v51, 4294901760
    %4945 = vmatprep.subr.mxu0 %v4944
    %v4946 = vand.u32 %v50, 4294901760
    %4947 = vmatpush1.msra.mxu0 %v4946
    %4948 = vmatprep.subr.mxu0 0.0
    %4949 = vmatpush2.msra.mxu0 0.0
    %4950 = vmatprep.subr.mxu0 0.0
    %4951 = vmatpush2.msra.mxu0 0.0
    %4952 = vmatprep.subr.mxu0 0.0
    %4953 = vmatpush2.msra.mxu0 0.0
    %4954 = vmatprep.subr.mxu0 0.0
    %4955 = vmatpush2.msra.mxu0 0.0
    %4956 = vmatprep.subr.mxu0 0.0
    %4957 = vmatpush2.msra.mxu0 0.0
    %4958 = vmatprep.subr.mxu0 0.0
    %4959 = vmatpush2.msra.mxu0 0.0
    %4960 = vmatprep.subr.mxu0 0.0
    %4961 = vmatpush2.msra.mxu0 0.0
    %4962 = vmatprep.subr.mxu0 0.0
    %4963 = vmatpush2.msra.mxu0 0.0
    %4964 = vmatprep.subr.mxu0 0.0
    %4965 = vmatpush2.msra.mxu0 0.0
    %4966 = vmatprep.subr.mxu0 0.0
    %4967 = vmatpush2.msra.mxu0 0.0
    %4968 = vmatprep.subr.mxu0 0.0
    %4969 = vmatpush2.msra.mxu0 0.0
    %4970 = vmatprep.subr.mxu0 0.0
    %4971 = vmatpush2.msra.mxu0 0.0
    %4972 = vmatprep.subr.mxu0 0.0
    %4973 = vmatpush2.msra.mxu0 0.0
    %4974 = vmatprep.subr.mxu0 0.0
    %4975 = vmatpush2.msra.mxu0 0.0
    %4976 = vmatprep.subr.mxu0 0.0
    %4977 = vmatpush2.msra.mxu0 0.0
    %4978 = vmatprep.subr.mxu0 0.0
    %4979 = vmatpush2.msra.mxu0 0.0
    %4980 = vmatprep.mubr.f32.mxu0 0.0
    %v4981 = vand.u32 %v4549, 4294901760
    %v4982 = vsub.f32 %v4549, %v4981
    %v4983 = vand.u32 %v4982, 4294901760
    %4984 = vmatmul.mubr.f32.gmra.mxu0 %v4983
    %v4985 = vpop.f32.mrf.mxu0
    %v4986 = vadd.f32 %v4896, %v4985
    %v4987 = vpop.f32.mrf.mxu0
    %v4988 = vadd.f32 %v4898, %v4987
    %4989 = vdwg.mxu0
    %4990 = vmatprep.subr.mxu0 0.0
    %4991 = vmatpush1.msra.mxu0 0.0
    %4992 = vmatprep.subr.mxu0 0.0
    %4993 = vmatpush1.msra.mxu0 0.0
    %4994 = vmatprep.subr.mxu0 0.0
    %4995 = vmatpush1.msra.mxu0 0.0
    %4996 = vmatprep.subr.mxu0 0.0
    %4997 = vmatpush1.msra.mxu0 0.0
    %4998 = vmatprep.subr.mxu0 0.0
    %4999 = vmatpush1.msra.mxu0 0.0
    %5000 = vmatprep.subr.mxu0 0.0
    %5001 = vmatpush1.msra.mxu0 0.0
    %5002 = vmatprep.subr.mxu0 0.0
    %5003 = vmatpush1.msra.mxu0 0.0
    %5004 = vmatprep.subr.mxu0 0.0
    %5005 = vmatpush1.msra.mxu0 0.0
    %v5006 = vand.u32 %v65, 4294901760
    %v5007 = vsub.f32 %v65, %v5006
    %v5008 = vand.u32 %v5007, 4294901760
    %5009 = vmatprep.subr.mxu0 %v5008
    %v5010 = vand.u32 %v64, 4294901760
    %v5011 = vsub.f32 %v64, %v5010
    %v5012 = vand.u32 %v5011, 4294901760
    %5013 = vmatpush1.msra.mxu0 %v5012
    %v5014 = vand.u32 %v63, 4294901760
    %v5015 = vsub.f32 %v63, %v5014
    %v5016 = vand.u32 %v5015, 4294901760
    %5017 = vmatprep.subr.mxu0 %v5016
    %v5018 = vand.u32 %v62, 4294901760
    %v5019 = vsub.f32 %v62, %v5018
    %v5020 = vand.u32 %v5019, 4294901760
    %5021 = vmatpush1.msra.mxu0 %v5020
    %v5022 = vand.u32 %v61, 4294901760
    %v5023 = vsub.f32 %v61, %v5022
    %v5024 = vand.u32 %v5023, 4294901760
    %5025 = vmatprep.subr.mxu0 %v5024
    %v5026 = vand.u32 %v60, 4294901760
    %v5027 = vsub.f32 %v60, %v5026
    %v5028 = vand.u32 %v5027, 4294901760
    %5029 = vmatpush1.msra.mxu0 %v5028
    %v5030 = vand.u32 %v59, 4294901760
    %v5031 = vsub.f32 %v59, %v5030
    %v5032 = vand.u32 %v5031, 4294901760
    %5033 = vmatprep.subr.mxu0 %v5032
    %v5034 = vand.u32 %v58, 4294901760
    %v5035 = vsub.f32 %v58, %v5034
    %v5036 = vand.u32 %v5035, 4294901760
    %5037 = vmatpush1.msra.mxu0 %v5036
    %v5038 = vand.u32 %v57, 4294901760
    %v5039 = vsub.f32 %v57, %v5038
    %v5040 = vand.u32 %v5039, 4294901760
    %5041 = vmatprep.subr.mxu0 %v5040
    %v5042 = vand.u32 %v56, 4294901760
    %v5043 = vsub.f32 %v56, %v5042
    %v5044 = vand.u32 %v5043, 4294901760
    %5045 = vmatpush1.msra.mxu0 %v5044
    %v5046 = vand.u32 %v55, 4294901760
    %v5047 = vsub.f32 %v55, %v5046
    %v5048 = vand.u32 %v5047, 4294901760
    %5049 = vmatprep.subr.mxu0 %v5048
    %v5050 = vand.u32 %v54, 4294901760
    %v5051 = vsub.f32 %v54, %v5050
    %v5052 = vand.u32 %v5051, 4294901760
    %5053 = vmatpush1.msra.mxu0 %v5052
    %v5054 = vand.u32 %v53, 4294901760
    %v5055 = vsub.f32 %v53, %v5054
    %v5056 = vand.u32 %v5055, 4294901760
    %5057 = vmatprep.subr.mxu0 %v5056
    %v5058 = vand.u32 %v52, 4294901760
    %v5059 = vsub.f32 %v52, %v5058
    %v5060 = vand.u32 %v5059, 4294901760
    %5061 = vmatpush1.msra.mxu0 %v5060
    %v5062 = vand.u32 %v51, 4294901760
    %v5063 = vsub.f32 %v51, %v5062
    %v5064 = vand.u32 %v5063, 4294901760
    %5065 = vmatprep.subr.mxu0 %v5064
    %v5066 = vand.u32 %v50, 4294901760
    %v5067 = vsub.f32 %v50, %v5066
    %v5068 = vand.u32 %v5067, 4294901760
    %5069 = vmatpush1.msra.mxu0 %v5068
    %5070 = vmatprep.subr.mxu0 0.0
    %5071 = vmatpush2.msra.mxu0 0.0
    %5072 = vmatprep.subr.mxu0 0.0
    %5073 = vmatpush2.msra.mxu0 0.0
    %5074 = vmatprep.subr.mxu0 0.0
    %5075 = vmatpush2.msra.mxu0 0.0
    %5076 = vmatprep.subr.mxu0 0.0
    %5077 = vmatpush2.msra.mxu0 0.0
    %5078 = vmatprep.subr.mxu0 0.0
    %5079 = vmatpush2.msra.mxu0 0.0
    %5080 = vmatprep.subr.mxu0 0.0
    %5081 = vmatpush2.msra.mxu0 0.0
    %5082 = vmatprep.subr.mxu0 0.0
    %5083 = vmatpush2.msra.mxu0 0.0
    %5084 = vmatprep.subr.mxu0 0.0
    %5085 = vmatpush2.msra.mxu0 0.0
    %5086 = vmatprep.subr.mxu0 0.0
    %5087 = vmatpush2.msra.mxu0 0.0
    %5088 = vmatprep.subr.mxu0 0.0
    %5089 = vmatpush2.msra.mxu0 0.0
    %5090 = vmatprep.subr.mxu0 0.0
    %5091 = vmatpush2.msra.mxu0 0.0
    %5092 = vmatprep.subr.mxu0 0.0
    %5093 = vmatpush2.msra.mxu0 0.0
    %5094 = vmatprep.subr.mxu0 0.0
    %5095 = vmatpush2.msra.mxu0 0.0
    %5096 = vmatprep.subr.mxu0 0.0
    %5097 = vmatpush2.msra.mxu0 0.0
    %5098 = vmatprep.subr.mxu0 0.0
    %5099 = vmatpush2.msra.mxu0 0.0
    %5100 = vmatprep.subr.mxu0 0.0
    %5101 = vmatpush2.msra.mxu0 0.0
    %5102 = vmatprep.mubr.f32.mxu0 0.0
    %v5103 = vand.u32 %v4549, 4294901760
    %5104 = vmatmul.mubr.f32.gmra.mxu0 %v5103
    %v5105 = vpop.f32.mrf.mxu0
    %v5106 = vadd.f32 %v4986, %v5105
    %v5107 = vpop.f32.mrf.mxu0
    %v5108 = vadd.f32 %v4988, %v5107
    %5109 = vdwg.mxu0
    %5110 = vmatprep.subr.mxu0 0.0
    %5111 = vmatpush1.msra.mxu0 0.0
    %5112 = vmatprep.subr.mxu0 0.0
    %5113 = vmatpush1.msra.mxu0 0.0
    %5114 = vmatprep.subr.mxu0 0.0
    %5115 = vmatpush1.msra.mxu0 0.0
    %5116 = vmatprep.subr.mxu0 0.0
    %5117 = vmatpush1.msra.mxu0 0.0
    %5118 = vmatprep.subr.mxu0 0.0
    %5119 = vmatpush1.msra.mxu0 0.0
    %5120 = vmatprep.subr.mxu0 0.0
    %5121 = vmatpush1.msra.mxu0 0.0
    %5122 = vmatprep.subr.mxu0 0.0
    %5123 = vmatpush1.msra.mxu0 0.0
    %5124 = vmatprep.subr.mxu0 0.0
    %5125 = vmatpush1.msra.mxu0 0.0
    %v5126 = vand.u32 %v65, 4294901760
    %5127 = vmatprep.subr.mxu0 %v5126
    %v5128 = vand.u32 %v64, 4294901760
    %5129 = vmatpush1.msra.mxu0 %v5128
    %v5130 = vand.u32 %v63, 4294901760
    %5131 = vmatprep.subr.mxu0 %v5130
    %v5132 = vand.u32 %v62, 4294901760
    %5133 = vmatpush1.msra.mxu0 %v5132
    %v5134 = vand.u32 %v61, 4294901760
    %5135 = vmatprep.subr.mxu0 %v5134
    %v5136 = vand.u32 %v60, 4294901760
    %5137 = vmatpush1.msra.mxu0 %v5136
    %v5138 = vand.u32 %v59, 4294901760
    %5139 = vmatprep.subr.mxu0 %v5138
    %v5140 = vand.u32 %v58, 4294901760
    %5141 = vmatpush1.msra.mxu0 %v5140
    %v5142 = vand.u32 %v57, 4294901760
    %5143 = vmatprep.subr.mxu0 %v5142
    %v5144 = vand.u32 %v56, 4294901760
    %5145 = vmatpush1.msra.mxu0 %v5144
    %v5146 = vand.u32 %v55, 4294901760
    %5147 = vmatprep.subr.mxu0 %v5146
    %v5148 = vand.u32 %v54, 4294901760
    %5149 = vmatpush1.msra.mxu0 %v5148
    %v5150 = vand.u32 %v53, 4294901760
    %5151 = vmatprep.subr.mxu0 %v5150
    %v5152 = vand.u32 %v52, 4294901760
    %5153 = vmatpush1.msra.mxu0 %v5152
    %v5154 = vand.u32 %v51, 4294901760
    %5155 = vmatprep.subr.mxu0 %v5154
    %v5156 = vand.u32 %v50, 4294901760
    %5157 = vmatpush1.msra.mxu0 %v5156
    %5158 = vmatprep.subr.mxu0 0.0
    %5159 = vmatpush2.msra.mxu0 0.0
    %5160 = vmatprep.subr.mxu0 0.0
    %5161 = vmatpush2.msra.mxu0 0.0
    %5162 = vmatprep.subr.mxu0 0.0
    %5163 = vmatpush2.msra.mxu0 0.0
    %5164 = vmatprep.subr.mxu0 0.0
    %5165 = vmatpush2.msra.mxu0 0.0
    %5166 = vmatprep.subr.mxu0 0.0
    %5167 = vmatpush2.msra.mxu0 0.0
    %5168 = vmatprep.subr.mxu0 0.0
    %5169 = vmatpush2.msra.mxu0 0.0
    %5170 = vmatprep.subr.mxu0 0.0
    %5171 = vmatpush2.msra.mxu0 0.0
    %5172 = vmatprep.subr.mxu0 0.0
    %5173 = vmatpush2.msra.mxu0 0.0
    %5174 = vmatprep.subr.mxu0 0.0
    %5175 = vmatpush2.msra.mxu0 0.0
    %5176 = vmatprep.subr.mxu0 0.0
    %5177 = vmatpush2.msra.mxu0 0.0
    %5178 = vmatprep.subr.mxu0 0.0
    %5179 = vmatpush2.msra.mxu0 0.0
    %5180 = vmatprep.subr.mxu0 0.0
    %5181 = vmatpush2.msra.mxu0 0.0
    %5182 = vmatprep.subr.mxu0 0.0
    %5183 = vmatpush2.msra.mxu0 0.0
    %5184 = vmatprep.subr.mxu0 0.0
    %5185 = vmatpush2.msra.mxu0 0.0
    %5186 = vmatprep.subr.mxu0 0.0
    %5187 = vmatpush2.msra.mxu0 0.0
    %5188 = vmatprep.subr.mxu0 0.0
    %5189 = vmatpush2.msra.mxu0 0.0
    %5190 = vmatprep.mubr.f32.mxu0 0.0
    %v5191 = vand.u32 %v4549, 4294901760
    %5192 = vmatmul.mubr.f32.gmra.mxu0 %v5191
    %v5193 = vpop.f32.mrf.mxu0
    %v5194 = vadd.f32 %v5106, %v5193
    %v5195 = vpop.f32.mrf.mxu0
    %v5196 = vadd.f32 %v5108, %v5195
    %5197 = vdwg.mxu0
    %v5199 = vsel %vm720, %v4537, 0
    %5201 = vmatprep.subr.mxu0 0.0
    %5202 = vmatpush1.msra.mxu0 0.0
    %5203 = vmatprep.subr.mxu0 0.0
    %5204 = vmatpush1.msra.mxu0 0.0
    %5205 = vmatprep.subr.mxu0 0.0
    %5206 = vmatpush1.msra.mxu0 0.0
    %5207 = vmatprep.subr.mxu0 0.0
    %5208 = vmatpush1.msra.mxu0 0.0
    %5209 = vmatprep.subr.mxu0 0.0
    %5210 = vmatpush1.msra.mxu0 0.0
    %5211 = vmatprep.subr.mxu0 0.0
    %5212 = vmatpush1.msra.mxu0 0.0
    %5213 = vmatprep.subr.mxu0 0.0
    %5214 = vmatpush1.msra.mxu0 0.0
    %5215 = vmatprep.subr.mxu0 0.0
    %5216 = vmatpush1.msra.mxu0 0.0
    %5217 = vmatprep.subr.mxu0 0.0
    %5218 = vmatpush1.msra.mxu0 0.0
    %5219 = vmatprep.subr.mxu0 0.0
    %5220 = vmatpush1.msra.mxu0 0.0
    %5221 = vmatprep.subr.mxu0 0.0
    %5222 = vmatpush1.msra.mxu0 0.0
    %5223 = vmatprep.subr.mxu0 0.0
    %5224 = vmatpush1.msra.mxu0 0.0
    %5225 = vmatprep.subr.mxu0 0.0
    %5226 = vmatpush1.msra.mxu0 0.0
    %5227 = vmatprep.subr.mxu0 0.0
    %5228 = vmatpush1.msra.mxu0 0.0
    %5229 = vmatprep.subr.mxu0 0.0
    %5230 = vmatpush1.msra.mxu0 %v48
    %5231 = vmatprep.subr.mxu0 0.0
    %5232 = vmatpush1.msra.mxu0 %v46
    %5233 = vmatprep.subr.mxu0 0.0
    %5234 = vmatpush2.msra.mxu0 0.0
    %5235 = vmatprep.subr.mxu0 0.0
    %5236 = vmatpush2.msra.mxu0 0.0
    %5237 = vmatprep.subr.mxu0 0.0
    %5238 = vmatpush2.msra.mxu0 0.0
    %5239 = vmatprep.subr.mxu0 0.0
    %5240 = vmatpush2.msra.mxu0 0.0
    %5241 = vmatprep.subr.mxu0 0.0
    %5242 = vmatpush2.msra.mxu0 0.0
    %5243 = vmatprep.subr.mxu0 0.0
    %5244 = vmatpush2.msra.mxu0 0.0
    %5245 = vmatprep.subr.mxu0 0.0
    %5246 = vmatpush2.msra.mxu0 0.0
    %5247 = vmatprep.subr.mxu0 0.0
    %5248 = vmatpush2.msra.mxu0 0.0
    %5249 = vmatprep.subr.mxu0 0.0
    %5250 = vmatpush2.msra.mxu0 0.0
    %5251 = vmatprep.subr.mxu0 0.0
    %5252 = vmatpush2.msra.mxu0 0.0
    %5253 = vmatprep.subr.mxu0 0.0
    %5254 = vmatpush2.msra.mxu0 0.0
    %5255 = vmatprep.subr.mxu0 0.0
    %5256 = vmatpush2.msra.mxu0 0.0
    %5257 = vmatprep.subr.mxu0 0.0
    %5258 = vmatpush2.msra.mxu0 0.0
    %5259 = vmatprep.subr.mxu0 0.0
    %5260 = vmatpush2.msra.mxu0 0.0
    %5261 = vmatprep.subr.mxu0 0.0
    %5262 = vmatpush2.msra.mxu0 0.0
    %5263 = vmatprep.subr.mxu0 0.0
    %5264 = vmatpush2.msra.mxu0 0.0
    %5265 = vmatprep.mubr.f32.mxu0 0.0
    %5266 = vmatmul.mubr.f32.gmra.mxu0 %v5199
    %v5267 = vpop.f32.mrf.mxu0
    %v5268 = vadd.f32 %v5194, %v5267
    %v5269 = vpop.f32.mrf.mxu0
    %5270 = vdwg.mxu0
    %v5272 = vsel %vm720, %v4538, 0
    %5274 = vmatprep.subr.mxu0 0.0
    %5275 = vmatpush1.msra.mxu0 0.0
    %5276 = vmatprep.subr.mxu0 0.0
    %5277 = vmatpush1.msra.mxu0 0.0
    %5278 = vmatprep.subr.mxu0 0.0
    %5279 = vmatpush1.msra.mxu0 0.0
    %5280 = vmatprep.subr.mxu0 0.0
    %5281 = vmatpush1.msra.mxu0 0.0
    %5282 = vmatprep.subr.mxu0 0.0
    %5283 = vmatpush1.msra.mxu0 0.0
    %5284 = vmatprep.subr.mxu0 0.0
    %5285 = vmatpush1.msra.mxu0 0.0
    %5286 = vmatprep.subr.mxu0 0.0
    %5287 = vmatpush1.msra.mxu0 0.0
    %5288 = vmatprep.subr.mxu0 0.0
    %5289 = vmatpush1.msra.mxu0 0.0
    %5290 = vmatprep.subr.mxu0 0.0
    %5291 = vmatpush1.msra.mxu0 0.0
    %5292 = vmatprep.subr.mxu0 0.0
    %5293 = vmatpush1.msra.mxu0 0.0
    %5294 = vmatprep.subr.mxu0 0.0
    %5295 = vmatpush1.msra.mxu0 0.0
    %5296 = vmatprep.subr.mxu0 0.0
    %5297 = vmatpush1.msra.mxu0 0.0
    %5298 = vmatprep.subr.mxu0 0.0
    %5299 = vmatpush1.msra.mxu0 0.0
    %5300 = vmatprep.subr.mxu0 0.0
    %5301 = vmatpush1.msra.mxu0 0.0
    %5302 = vmatprep.subr.mxu0 0.0
    %5303 = vmatpush1.msra.mxu0 %v49
    %5304 = vmatprep.subr.mxu0 0.0
    %5305 = vmatpush1.msra.mxu0 %v47
    %5306 = vmatprep.subr.mxu0 0.0
    %5307 = vmatpush2.msra.mxu0 0.0
    %5308 = vmatprep.subr.mxu0 0.0
    %5309 = vmatpush2.msra.mxu0 0.0
    %5310 = vmatprep.subr.mxu0 0.0
    %5311 = vmatpush2.msra.mxu0 0.0
    %5312 = vmatprep.subr.mxu0 0.0
    %5313 = vmatpush2.msra.mxu0 0.0
    %5314 = vmatprep.subr.mxu0 0.0
    %5315 = vmatpush2.msra.mxu0 0.0
    %5316 = vmatprep.subr.mxu0 0.0
    %5317 = vmatpush2.msra.mxu0 0.0
    %5318 = vmatprep.subr.mxu0 0.0
    %5319 = vmatpush2.msra.mxu0 0.0
    %5320 = vmatprep.subr.mxu0 0.0
    %5321 = vmatpush2.msra.mxu0 0.0
    %5322 = vmatprep.subr.mxu0 0.0
    %5323 = vmatpush2.msra.mxu0 0.0
    %5324 = vmatprep.subr.mxu0 0.0
    %5325 = vmatpush2.msra.mxu0 0.0
    %5326 = vmatprep.subr.mxu0 0.0
    %5327 = vmatpush2.msra.mxu0 0.0
    %5328 = vmatprep.subr.mxu0 0.0
    %5329 = vmatpush2.msra.mxu0 0.0
    %5330 = vmatprep.subr.mxu0 0.0
    %5331 = vmatpush2.msra.mxu0 0.0
    %5332 = vmatprep.subr.mxu0 0.0
    %5333 = vmatpush2.msra.mxu0 0.0
    %5334 = vmatprep.subr.mxu0 0.0
    %5335 = vmatpush2.msra.mxu0 0.0
    %5336 = vmatprep.subr.mxu0 0.0
    %5337 = vmatpush2.msra.mxu0 0.0
    %5338 = vmatprep.mubr.f32.mxu0 0.0
    %5339 = vmatmul.mubr.f32.gmra.mxu0 %v5272
    %v5340 = vpop.f32.mrf.mxu0
    %v5341 = vadd.f32 %v5196, %v5340
    %v5342 = vpop.f32.mrf.mxu0
    %5343 = vdwg.mxu0
    %v5344 = vld [vmem:[%s2666] sm:$0x3]
    %5346 = vset.pattern.permute.xlu0 0
    %5347 = vperm.xlu0 %5346, %v5344
    %v5348 = vpop.permute.xlu0 %5347
    %v5350 = vld [vmem:[%s2659] sm:$0x3]
    %5352 = vset.pattern.permute.xlu0 0
    %5353 = vperm.xlu0 %5352, %v5350
    %v5354 = vpop.permute.xlu0 %5353
    %v5356 = vsub.f32 1.0, %v5348
    %v5357 = vsub.f32 1.0, %v5354
    %v5358 = vxor.u32 %v5268, 2147483648
    %v5359 = vmul.f32 %v5358, 1.442695
    %v5360 = vpow.pop %v5359
    %v5361 = vadd.f32 %v5360, 1.0
    %v5362 = vrcp.pop %v5361
    %v5363 = vmul.f32 1.0, %v5362
    %v5364 = vtanh.pop %v5268
    %v5365 = vmul.f32 %v5363, %v4494
    %5367 = vrot.lane.b32.xlu0 %v5364, 64
    %v5368 = vpop.permute.xlu0 %5367
    %v5370 = vmul.f32 %v5363, %v5368
    %5372 = vrot.lane.b32.xlu0 %v5370, 32
    %v5373 = vpop.permute.xlu0 %5372
    %v5375 = vadd.f32 %v5365, %v5373
    %v5376 = vtanh.pop %v5375
    %5378 = vrot.lane.b32.xlu0 %v5376, 64
    %v5379 = vpop.permute.xlu0 %5378
    %v5381 = vmul.f32 %v5363, %v5379
    %v5382 = vmul.f32 %v5348, %v5381
    %v5383 = vmul.f32 %v5356, %v4491
    %v5384 = vadd.f32 %v5382, %v5383
    %v5385 = vmul.f32 %v5348, %v5375
    %v5386 = vmul.f32 %v5356, %v4494
    %v5387 = vadd.f32 %v5385, %v5386
    %v5388 = vxor.u32 %v5341, 2147483648
    %v5389 = vmul.f32 %v5388, 1.442695
    %v5390 = vpow.pop %v5389
    %v5391 = vadd.f32 %v5390, 1.0
    %v5392 = vrcp.pop %v5391
    %v5393 = vmul.f32 1.0, %v5392
    %v5394 = vtanh.pop %v5341
    %v5395 = vmul.f32 %v5393, %v4524
    %5397 = vrot.lane.b32.xlu0 %v5394, 64
    %v5398 = vpop.permute.xlu0 %5397
    %v5400 = vmul.f32 %v5393, %v5398
    %5402 = vrot.lane.b32.xlu0 %v5400, 32
    %v5403 = vpop.permute.xlu0 %5402
    %v5405 = vadd.f32 %v5395, %v5403
    %v5406 = vtanh.pop %v5405
    %5408 = vrot.lane.b32.xlu0 %v5406, 64
    %v5409 = vpop.permute.xlu0 %5408
    %v5411 = vmul.f32 %v5393, %v5409
    %v5412 = vmul.f32 %v5354, %v5411
    %v5413 = vmul.f32 %v5357, %v4521
    %v5414 = vadd.f32 %v5412, %v5413
    %v5415 = vmul.f32 %v5354, %v5405
    %v5416 = vmul.f32 %v5357, %v4524
    %v5417 = vadd.f32 %v5415, %v5416
    %5419 = vrot.lane.b32.xlu0 %v5382, 32
    %v5420 = vpop.permute.xlu0 %5419
    %s5422 = scalar_lea.vmem [#allocation7], 10
    %5423 = vst.msk [vmem:[%s5422] sm:$0x3] %vm944, %v5420
    %5425 = vrot.lane.b32.xlu0 %v5412, 32
    %v5426 = vpop.permute.xlu0 %5425
    %s5428 = scalar_lea.vmem [#allocation7], 20
    %5429 = vst.msk [vmem:[%s5428] sm:$0x3] %vm944, %v5426
    %v5430 = vld [vmem:[%s954] sm:$0x3]
    %v5431 = vld [vmem:[%s952] sm:$0x3]
    %5433 = vrot.lane.b32.xlu0 %v5384, 32
    %v5434 = vpop.permute.xlu0 %5433
    %5437 = vrot.lane.b32.xlu0 %v5414, 64
    %v5438 = vpop.permute.xlu0 %5437
    %v5440 = vsel %vm964, %v5434, %v5438
    %v5442 = vsel %vm69, %v5440, 0
    %5444 = vmatprep.subr.mxu0 0.0
    %5445 = vmatpush1.msra.mxu0 0.0
    %5446 = vmatprep.subr.mxu0 0.0
    %5447 = vmatpush1.msra.mxu0 0.0
    %5448 = vmatprep.subr.mxu0 0.0
    %5449 = vmatpush1.msra.mxu0 0.0
    %5450 = vmatprep.subr.mxu0 0.0
    %5451 = vmatpush1.msra.mxu0 0.0
    %5452 = vmatprep.subr.mxu0 0.0
    %5453 = vmatpush1.msra.mxu0 0.0
    %5454 = vmatprep.subr.mxu0 0.0
    %5455 = vmatpush1.msra.mxu0 0.0
    %5456 = vmatprep.subr.mxu0 0.0
    %5457 = vmatpush1.msra.mxu0 0.0
    %5458 = vmatprep.subr.mxu0 0.0
    %5459 = vmatpush1.msra.mxu0 0.0
    %v5460 = vand.u32 %v65, 4294901760
    %5461 = vmatprep.subr.mxu0 %v5460
    %v5462 = vand.u32 %v64, 4294901760
    %5463 = vmatpush1.msra.mxu0 %v5462
    %v5464 = vand.u32 %v63, 4294901760
    %5465 = vmatprep.subr.mxu0 %v5464
    %v5466 = vand.u32 %v62, 4294901760
    %5467 = vmatpush1.msra.mxu0 %v5466
    %v5468 = vand.u32 %v61, 4294901760
    %5469 = vmatprep.subr.mxu0 %v5468
    %v5470 = vand.u32 %v60, 4294901760
    %5471 = vmatpush1.msra.mxu0 %v5470
    %v5472 = vand.u32 %v59, 4294901760
    %5473 = vmatprep.subr.mxu0 %v5472
    %v5474 = vand.u32 %v58, 4294901760
    %5475 = vmatpush1.msra.mxu0 %v5474
    %v5476 = vand.u32 %v57, 4294901760
    %5477 = vmatprep.subr.mxu0 %v5476
    %v5478 = vand.u32 %v56, 4294901760
    %5479 = vmatpush1.msra.mxu0 %v5478
    %v5480 = vand.u32 %v55, 4294901760
    %5481 = vmatprep.subr.mxu0 %v5480
    %v5482 = vand.u32 %v54, 4294901760
    %5483 = vmatpush1.msra.mxu0 %v5482
    %v5484 = vand.u32 %v53, 4294901760
    %5485 = vmatprep.subr.mxu0 %v5484
    %v5486 = vand.u32 %v52, 4294901760
    %5487 = vmatpush1.msra.mxu0 %v5486
    %v5488 = vand.u32 %v51, 4294901760
    %5489 = vmatprep.subr.mxu0 %v5488
    %v5490 = vand.u32 %v50, 4294901760
    %5491 = vmatpush1.msra.mxu0 %v5490
    %5492 = vmatprep.subr.mxu0 0.0
    %5493 = vmatpush2.msra.mxu0 0.0
    %5494 = vmatprep.subr.mxu0 0.0
    %5495 = vmatpush2.msra.mxu0 0.0
    %5496 = vmatprep.subr.mxu0 0.0
    %5497 = vmatpush2.msra.mxu0 0.0
    %5498 = vmatprep.subr.mxu0 0.0
    %5499 = vmatpush2.msra.mxu0 0.0
    %5500 = vmatprep.subr.mxu0 0.0
    %5501 = vmatpush2.msra.mxu0 0.0
    %5502 = vmatprep.subr.mxu0 0.0
    %5503 = vmatpush2.msra.mxu0 0.0
    %5504 = vmatprep.subr.mxu0 0.0
    %5505 = vmatpush2.msra.mxu0 0.0
    %5506 = vmatprep.subr.mxu0 0.0
    %5507 = vmatpush2.msra.mxu0 0.0
    %5508 = vmatprep.subr.mxu0 0.0
    %5509 = vmatpush2.msra.mxu0 0.0
    %5510 = vmatprep.subr.mxu0 0.0
    %5511 = vmatpush2.msra.mxu0 0.0
    %5512 = vmatprep.subr.mxu0 0.0
    %5513 = vmatpush2.msra.mxu0 0.0
    %5514 = vmatprep.subr.mxu0 0.0
    %5515 = vmatpush2.msra.mxu0 0.0
    %5516 = vmatprep.subr.mxu0 0.0
    %5517 = vmatpush2.msra.mxu0 0.0
    %5518 = vmatprep.subr.mxu0 0.0
    %5519 = vmatpush2.msra.mxu0 0.0
    %5520 = vmatprep.subr.mxu0 0.0
    %5521 = vmatpush2.msra.mxu0 0.0
    %5522 = vmatprep.subr.mxu0 0.0
    %5523 = vmatpush2.msra.mxu0 0.0
    %5524 = vmatprep.mubr.f32.mxu0 0.0
    %v5525 = vand.u32 %v5442, 4294901760
    %v5526 = vsub.f32 %v5442, %v5525
    %v5527 = vand.u32 %v5526, 4294901760
    %v5528 = vsub.f32 %v5526, %v5527
    %v5529 = vand.u32 %v5528, 4294901760
    %5530 = vmatmul.mubr.f32.gmra.mxu0 %v5529
    %v5531 = vpop.f32.mrf.mxu0
    %v5532 = vadd.f32 0.0, %v5531
    %v5533 = vpop.f32.mrf.mxu0
    %v5534 = vadd.f32 0.0, %v5533
    %5535 = vdwg.mxu0
    %5536 = vmatprep.subr.mxu0 0.0
    %5537 = vmatpush1.msra.mxu0 0.0
    %5538 = vmatprep.subr.mxu0 0.0
    %5539 = vmatpush1.msra.mxu0 0.0
    %5540 = vmatprep.subr.mxu0 0.0
    %5541 = vmatpush1.msra.mxu0 0.0
    %5542 = vmatprep.subr.mxu0 0.0
    %5543 = vmatpush1.msra.mxu0 0.0
    %5544 = vmatprep.subr.mxu0 0.0
    %5545 = vmatpush1.msra.mxu0 0.0
    %5546 = vmatprep.subr.mxu0 0.0
    %5547 = vmatpush1.msra.mxu0 0.0
    %5548 = vmatprep.subr.mxu0 0.0
    %5549 = vmatpush1.msra.mxu0 0.0
    %5550 = vmatprep.subr.mxu0 0.0
    %5551 = vmatpush1.msra.mxu0 0.0
    %v5552 = vand.u32 %v65, 4294901760
    %v5553 = vsub.f32 %v65, %v5552
    %v5554 = vand.u32 %v5553, 4294901760
    %v5555 = vsub.f32 %v5553, %v5554
    %v5556 = vand.u32 %v5555, 4294901760
    %5557 = vmatprep.subr.mxu0 %v5556
    %v5558 = vand.u32 %v64, 4294901760
    %v5559 = vsub.f32 %v64, %v5558
    %v5560 = vand.u32 %v5559, 4294901760
    %v5561 = vsub.f32 %v5559, %v5560
    %v5562 = vand.u32 %v5561, 4294901760
    %5563 = vmatpush1.msra.mxu0 %v5562
    %v5564 = vand.u32 %v63, 4294901760
    %v5565 = vsub.f32 %v63, %v5564
    %v5566 = vand.u32 %v5565, 4294901760
    %v5567 = vsub.f32 %v5565, %v5566
    %v5568 = vand.u32 %v5567, 4294901760
    %5569 = vmatprep.subr.mxu0 %v5568
    %v5570 = vand.u32 %v62, 4294901760
    %v5571 = vsub.f32 %v62, %v5570
    %v5572 = vand.u32 %v5571, 4294901760
    %v5573 = vsub.f32 %v5571, %v5572
    %v5574 = vand.u32 %v5573, 4294901760
    %5575 = vmatpush1.msra.mxu0 %v5574
    %v5576 = vand.u32 %v61, 4294901760
    %v5577 = vsub.f32 %v61, %v5576
    %v5578 = vand.u32 %v5577, 4294901760
    %v5579 = vsub.f32 %v5577, %v5578
    %v5580 = vand.u32 %v5579, 4294901760
    %5581 = vmatprep.subr.mxu0 %v5580
    %v5582 = vand.u32 %v60, 4294901760
    %v5583 = vsub.f32 %v60, %v5582
    %v5584 = vand.u32 %v5583, 4294901760
    %v5585 = vsub.f32 %v5583, %v5584
    %v5586 = vand.u32 %v5585, 4294901760
    %5587 = vmatpush1.msra.mxu0 %v5586
    %v5588 = vand.u32 %v59, 4294901760
    %v5589 = vsub.f32 %v59, %v5588
    %v5590 = vand.u32 %v5589, 4294901760
    %v5591 = vsub.f32 %v5589, %v5590
    %v5592 = vand.u32 %v5591, 4294901760
    %5593 = vmatprep.subr.mxu0 %v5592
    %v5594 = vand.u32 %v58, 4294901760
    %v5595 = vsub.f32 %v58, %v5594
    %v5596 = vand.u32 %v5595, 4294901760
    %v5597 = vsub.f32 %v5595, %v5596
    %v5598 = vand.u32 %v5597, 4294901760
    %5599 = vmatpush1.msra.mxu0 %v5598
    %v5600 = vand.u32 %v57, 4294901760
    %v5601 = vsub.f32 %v57, %v5600
    %v5602 = vand.u32 %v5601, 4294901760
    %v5603 = vsub.f32 %v5601, %v5602
    %v5604 = vand.u32 %v5603, 4294901760
    %5605 = vmatprep.subr.mxu0 %v5604
    %v5606 = vand.u32 %v56, 4294901760
    %v5607 = vsub.f32 %v56, %v5606
    %v5608 = vand.u32 %v5607, 4294901760
    %v5609 = vsub.f32 %v5607, %v5608
    %v5610 = vand.u32 %v5609, 4294901760
    %5611 = vmatpush1.msra.mxu0 %v5610
    %v5612 = vand.u32 %v55, 4294901760
    %v5613 = vsub.f32 %v55, %v5612
    %v5614 = vand.u32 %v5613, 4294901760
    %v5615 = vsub.f32 %v5613, %v5614
    %v5616 = vand.u32 %v5615, 4294901760
    %5617 = vmatprep.subr.mxu0 %v5616
    %v5618 = vand.u32 %v54, 4294901760
    %v5619 = vsub.f32 %v54, %v5618
    %v5620 = vand.u32 %v5619, 4294901760
    %v5621 = vsub.f32 %v5619, %v5620
    %v5622 = vand.u32 %v5621, 4294901760
    %5623 = vmatpush1.msra.mxu0 %v5622
    %v5624 = vand.u32 %v53, 4294901760
    %v5625 = vsub.f32 %v53, %v5624
    %v5626 = vand.u32 %v5625, 4294901760
    %v5627 = vsub.f32 %v5625, %v5626
    %v5628 = vand.u32 %v5627, 4294901760
    %5629 = vmatprep.subr.mxu0 %v5628
    %v5630 = vand.u32 %v52, 4294901760
    %v5631 = vsub.f32 %v52, %v5630
    %v5632 = vand.u32 %v5631, 4294901760
    %v5633 = vsub.f32 %v5631, %v5632
    %v5634 = vand.u32 %v5633, 4294901760
    %5635 = vmatpush1.msra.mxu0 %v5634
    %v5636 = vand.u32 %v51, 4294901760
    %v5637 = vsub.f32 %v51, %v5636
    %v5638 = vand.u32 %v5637, 4294901760
    %v5639 = vsub.f32 %v5637, %v5638
    %v5640 = vand.u32 %v5639, 4294901760
    %5641 = vmatprep.subr.mxu0 %v5640
    %v5642 = vand.u32 %v50, 4294901760
    %v5643 = vsub.f32 %v50, %v5642
    %v5644 = vand.u32 %v5643, 4294901760
    %v5645 = vsub.f32 %v5643, %v5644
    %v5646 = vand.u32 %v5645, 4294901760
    %5647 = vmatpush1.msra.mxu0 %v5646
    %5648 = vmatprep.subr.mxu0 0.0
    %5649 = vmatpush2.msra.mxu0 0.0
    %5650 = vmatprep.subr.mxu0 0.0
    %5651 = vmatpush2.msra.mxu0 0.0
    %5652 = vmatprep.subr.mxu0 0.0
    %5653 = vmatpush2.msra.mxu0 0.0
    %5654 = vmatprep.subr.mxu0 0.0
    %5655 = vmatpush2.msra.mxu0 0.0
    %5656 = vmatprep.subr.mxu0 0.0
    %5657 = vmatpush2.msra.mxu0 0.0
    %5658 = vmatprep.subr.mxu0 0.0
    %5659 = vmatpush2.msra.mxu0 0.0
    %5660 = vmatprep.subr.mxu0 0.0
    %5661 = vmatpush2.msra.mxu0 0.0
    %5662 = vmatprep.subr.mxu0 0.0
    %5663 = vmatpush2.msra.mxu0 0.0
    %5664 = vmatprep.subr.mxu0 0.0
    %5665 = vmatpush2.msra.mxu0 0.0
    %5666 = vmatprep.subr.mxu0 0.0
    %5667 = vmatpush2.msra.mxu0 0.0
    %5668 = vmatprep.subr.mxu0 0.0
    %5669 = vmatpush2.msra.mxu0 0.0
    %5670 = vmatprep.subr.mxu0 0.0
    %5671 = vmatpush2.msra.mxu0 0.0
    %5672 = vmatprep.subr.mxu0 0.0
    %5673 = vmatpush2.msra.mxu0 0.0
    %5674 = vmatprep.subr.mxu0 0.0
    %5675 = vmatpush2.msra.mxu0 0.0
    %5676 = vmatprep.subr.mxu0 0.0
    %5677 = vmatpush2.msra.mxu0 0.0
    %5678 = vmatprep.subr.mxu0 0.0
    %5679 = vmatpush2.msra.mxu0 0.0
    %5680 = vmatprep.mubr.f32.mxu0 0.0
    %v5681 = vand.u32 %v5442, 4294901760
    %5682 = vmatmul.mubr.f32.gmra.mxu0 %v5681
    %v5683 = vpop.f32.mrf.mxu0
    %v5684 = vadd.f32 %v5532, %v5683
    %v5685 = vpop.f32.mrf.mxu0
    %v5686 = vadd.f32 %v5534, %v5685
    %5687 = vdwg.mxu0
    %5688 = vmatprep.subr.mxu0 0.0
    %5689 = vmatpush1.msra.mxu0 0.0
    %5690 = vmatprep.subr.mxu0 0.0
    %5691 = vmatpush1.msra.mxu0 0.0
    %5692 = vmatprep.subr.mxu0 0.0
    %5693 = vmatpush1.msra.mxu0 0.0
    %5694 = vmatprep.subr.mxu0 0.0
    %5695 = vmatpush1.msra.mxu0 0.0
    %5696 = vmatprep.subr.mxu0 0.0
    %5697 = vmatpush1.msra.mxu0 0.0
    %5698 = vmatprep.subr.mxu0 0.0
    %5699 = vmatpush1.msra.mxu0 0.0
    %5700 = vmatprep.subr.mxu0 0.0
    %5701 = vmatpush1.msra.mxu0 0.0
    %5702 = vmatprep.subr.mxu0 0.0
    %5703 = vmatpush1.msra.mxu0 0.0
    %v5704 = vand.u32 %v65, 4294901760
    %v5705 = vsub.f32 %v65, %v5704
    %5706 = vmatprep.subr.mxu0 %v5705
    %v5707 = vand.u32 %v64, 4294901760
    %v5708 = vsub.f32 %v64, %v5707
    %5709 = vmatpush1.msra.mxu0 %v5708
    %v5710 = vand.u32 %v63, 4294901760
    %v5711 = vsub.f32 %v63, %v5710
    %5712 = vmatprep.subr.mxu0 %v5711
    %v5713 = vand.u32 %v62, 4294901760
    %v5714 = vsub.f32 %v62, %v5713
    %5715 = vmatpush1.msra.mxu0 %v5714
    %v5716 = vand.u32 %v61, 4294901760
    %v5717 = vsub.f32 %v61, %v5716
    %5718 = vmatprep.subr.mxu0 %v5717
    %v5719 = vand.u32 %v60, 4294901760
    %v5720 = vsub.f32 %v60, %v5719
    %5721 = vmatpush1.msra.mxu0 %v5720
    %v5722 = vand.u32 %v59, 4294901760
    %v5723 = vsub.f32 %v59, %v5722
    %5724 = vmatprep.subr.mxu0 %v5723
    %v5725 = vand.u32 %v58, 4294901760
    %v5726 = vsub.f32 %v58, %v5725
    %5727 = vmatpush1.msra.mxu0 %v5726
    %v5728 = vand.u32 %v57, 4294901760
    %v5729 = vsub.f32 %v57, %v5728
    %5730 = vmatprep.subr.mxu0 %v5729
    %v5731 = vand.u32 %v56, 4294901760
    %v5732 = vsub.f32 %v56, %v5731
    %5733 = vmatpush1.msra.mxu0 %v5732
    %v5734 = vand.u32 %v55, 4294901760
    %v5735 = vsub.f32 %v55, %v5734
    %5736 = vmatprep.subr.mxu0 %v5735
    %v5737 = vand.u32 %v54, 4294901760
    %v5738 = vsub.f32 %v54, %v5737
    %5739 = vmatpush1.msra.mxu0 %v5738
    %v5740 = vand.u32 %v53, 4294901760
    %v5741 = vsub.f32 %v53, %v5740
    %5742 = vmatprep.subr.mxu0 %v5741
    %v5743 = vand.u32 %v52, 4294901760
    %v5744 = vsub.f32 %v52, %v5743
    %5745 = vmatpush1.msra.mxu0 %v5744
    %v5746 = vand.u32 %v51, 4294901760
    %v5747 = vsub.f32 %v51, %v5746
    %5748 = vmatprep.subr.mxu0 %v5747
    %v5749 = vand.u32 %v50, 4294901760
    %v5750 = vsub.f32 %v50, %v5749
    %5751 = vmatpush1.msra.mxu0 %v5750
    %5752 = vmatprep.subr.mxu0 0.0
    %5753 = vmatpush2.msra.mxu0 0.0
    %5754 = vmatprep.subr.mxu0 0.0
    %5755 = vmatpush2.msra.mxu0 0.0
    %5756 = vmatprep.subr.mxu0 0.0
    %5757 = vmatpush2.msra.mxu0 0.0
    %5758 = vmatprep.subr.mxu0 0.0
    %5759 = vmatpush2.msra.mxu0 0.0
    %5760 = vmatprep.subr.mxu0 0.0
    %5761 = vmatpush2.msra.mxu0 0.0
    %5762 = vmatprep.subr.mxu0 0.0
    %5763 = vmatpush2.msra.mxu0 0.0
    %5764 = vmatprep.subr.mxu0 0.0
    %5765 = vmatpush2.msra.mxu0 0.0
    %5766 = vmatprep.subr.mxu0 0.0
    %5767 = vmatpush2.msra.mxu0 0.0
    %5768 = vmatprep.subr.mxu0 0.0
    %5769 = vmatpush2.msra.mxu0 0.0
    %5770 = vmatprep.subr.mxu0 0.0
    %5771 = vmatpush2.msra.mxu0 0.0
    %5772 = vmatprep.subr.mxu0 0.0
    %5773 = vmatpush2.msra.mxu0 0.0
    %5774 = vmatprep.subr.mxu0 0.0
    %5775 = vmatpush2.msra.mxu0 0.0
    %5776 = vmatprep.subr.mxu0 0.0
    %5777 = vmatpush2.msra.mxu0 0.0
    %5778 = vmatprep.subr.mxu0 0.0
    %5779 = vmatpush2.msra.mxu0 0.0
    %5780 = vmatprep.subr.mxu0 0.0
    %5781 = vmatpush2.msra.mxu0 0.0
    %5782 = vmatprep.subr.mxu0 0.0
    %5783 = vmatpush2.msra.mxu0 0.0
    %5784 = vmatprep.mubr.f32.mxu0 0.0
    %v5785 = vand.u32 %v5442, 4294901760
    %v5786 = vsub.f32 %v5442, %v5785
    %5787 = vmatmul.mubr.f32.gmra.mxu0 %v5786
    %v5788 = vpop.f32.mrf.mxu0
    %v5789 = vadd.f32 %v5684, %v5788
    %v5790 = vpop.f32.mrf.mxu0
    %v5791 = vadd.f32 %v5686, %v5790
    %5792 = vdwg.mxu0
    %5793 = vmatprep.subr.mxu0 0.0
    %5794 = vmatpush1.msra.mxu0 0.0
    %5795 = vmatprep.subr.mxu0 0.0
    %5796 = vmatpush1.msra.mxu0 0.0
    %5797 = vmatprep.subr.mxu0 0.0
    %5798 = vmatpush1.msra.mxu0 0.0
    %5799 = vmatprep.subr.mxu0 0.0
    %5800 = vmatpush1.msra.mxu0 0.0
    %5801 = vmatprep.subr.mxu0 0.0
    %5802 = vmatpush1.msra.mxu0 0.0
    %5803 = vmatprep.subr.mxu0 0.0
    %5804 = vmatpush1.msra.mxu0 0.0
    %5805 = vmatprep.subr.mxu0 0.0
    %5806 = vmatpush1.msra.mxu0 0.0
    %5807 = vmatprep.subr.mxu0 0.0
    %5808 = vmatpush1.msra.mxu0 0.0
    %v5809 = vand.u32 %v65, 4294901760
    %5810 = vmatprep.subr.mxu0 %v5809
    %v5811 = vand.u32 %v64, 4294901760
    %5812 = vmatpush1.msra.mxu0 %v5811
    %v5813 = vand.u32 %v63, 4294901760
    %5814 = vmatprep.subr.mxu0 %v5813
    %v5815 = vand.u32 %v62, 4294901760
    %5816 = vmatpush1.msra.mxu0 %v5815
    %v5817 = vand.u32 %v61, 4294901760
    %5818 = vmatprep.subr.mxu0 %v5817
    %v5819 = vand.u32 %v60, 4294901760
    %5820 = vmatpush1.msra.mxu0 %v5819
    %v5821 = vand.u32 %v59, 4294901760
    %5822 = vmatprep.subr.mxu0 %v5821
    %v5823 = vand.u32 %v58, 4294901760
    %5824 = vmatpush1.msra.mxu0 %v5823
    %v5825 = vand.u32 %v57, 4294901760
    %5826 = vmatprep.subr.mxu0 %v5825
    %v5827 = vand.u32 %v56, 4294901760
    %5828 = vmatpush1.msra.mxu0 %v5827
    %v5829 = vand.u32 %v55, 4294901760
    %5830 = vmatprep.subr.mxu0 %v5829
    %v5831 = vand.u32 %v54, 4294901760
    %5832 = vmatpush1.msra.mxu0 %v5831
    %v5833 = vand.u32 %v53, 4294901760
    %5834 = vmatprep.subr.mxu0 %v5833
    %v5835 = vand.u32 %v52, 4294901760
    %5836 = vmatpush1.msra.mxu0 %v5835
    %v5837 = vand.u32 %v51, 4294901760
    %5838 = vmatprep.subr.mxu0 %v5837
    %v5839 = vand.u32 %v50, 4294901760
    %5840 = vmatpush1.msra.mxu0 %v5839
    %5841 = vmatprep.subr.mxu0 0.0
    %5842 = vmatpush2.msra.mxu0 0.0
    %5843 = vmatprep.subr.mxu0 0.0
    %5844 = vmatpush2.msra.mxu0 0.0
    %5845 = vmatprep.subr.mxu0 0.0
    %5846 = vmatpush2.msra.mxu0 0.0
    %5847 = vmatprep.subr.mxu0 0.0
    %5848 = vmatpush2.msra.mxu0 0.0
    %5849 = vmatprep.subr.mxu0 0.0
    %5850 = vmatpush2.msra.mxu0 0.0
    %5851 = vmatprep.subr.mxu0 0.0
    %5852 = vmatpush2.msra.mxu0 0.0
    %5853 = vmatprep.subr.mxu0 0.0
    %5854 = vmatpush2.msra.mxu0 0.0
    %5855 = vmatprep.subr.mxu0 0.0
    %5856 = vmatpush2.msra.mxu0 0.0
    %5857 = vmatprep.subr.mxu0 0.0
    %5858 = vmatpush2.msra.mxu0 0.0
    %5859 = vmatprep.subr.mxu0 0.0
    %5860 = vmatpush2.msra.mxu0 0.0
    %5861 = vmatprep.subr.mxu0 0.0
    %5862 = vmatpush2.msra.mxu0 0.0
    %5863 = vmatprep.subr.mxu0 0.0
    %5864 = vmatpush2.msra.mxu0 0.0
    %5865 = vmatprep.subr.mxu0 0.0
    %5866 = vmatpush2.msra.mxu0 0.0
    %5867 = vmatprep.subr.mxu0 0.0
    %5868 = vmatpush2.msra.mxu0 0.0
    %5869 = vmatprep.subr.mxu0 0.0
    %5870 = vmatpush2.msra.mxu0 0.0
    %5871 = vmatprep.subr.mxu0 0.0
    %5872 = vmatpush2.msra.mxu0 0.0
    %5873 = vmatprep.mubr.f32.mxu0 0.0
    %v5874 = vand.u32 %v5442, 4294901760
    %v5875 = vsub.f32 %v5442, %v5874
    %v5876 = vand.u32 %v5875, 4294901760
    %5877 = vmatmul.mubr.f32.gmra.mxu0 %v5876
    %v5878 = vpop.f32.mrf.mxu0
    %v5879 = vadd.f32 %v5789, %v5878
    %v5880 = vpop.f32.mrf.mxu0
    %v5881 = vadd.f32 %v5791, %v5880
    %5882 = vdwg.mxu0
    %5883 = vmatprep.subr.mxu0 0.0
    %5884 = vmatpush1.msra.mxu0 0.0
    %5885 = vmatprep.subr.mxu0 0.0
    %5886 = vmatpush1.msra.mxu0 0.0
    %5887 = vmatprep.subr.mxu0 0.0
    %5888 = vmatpush1.msra.mxu0 0.0
    %5889 = vmatprep.subr.mxu0 0.0
    %5890 = vmatpush1.msra.mxu0 0.0
    %5891 = vmatprep.subr.mxu0 0.0
    %5892 = vmatpush1.msra.mxu0 0.0
    %5893 = vmatprep.subr.mxu0 0.0
    %5894 = vmatpush1.msra.mxu0 0.0
    %5895 = vmatprep.subr.mxu0 0.0
    %5896 = vmatpush1.msra.mxu0 0.0
    %5897 = vmatprep.subr.mxu0 0.0
    %5898 = vmatpush1.msra.mxu0 0.0
    %v5899 = vand.u32 %v65, 4294901760
    %v5900 = vsub.f32 %v65, %v5899
    %v5901 = vand.u32 %v5900, 4294901760
    %5902 = vmatprep.subr.mxu0 %v5901
    %v5903 = vand.u32 %v64, 4294901760
    %v5904 = vsub.f32 %v64, %v5903
    %v5905 = vand.u32 %v5904, 4294901760
    %5906 = vmatpush1.msra.mxu0 %v5905
    %v5907 = vand.u32 %v63, 4294901760
    %v5908 = vsub.f32 %v63, %v5907
    %v5909 = vand.u32 %v5908, 4294901760
    %5910 = vmatprep.subr.mxu0 %v5909
    %v5911 = vand.u32 %v62, 4294901760
    %v5912 = vsub.f32 %v62, %v5911
    %v5913 = vand.u32 %v5912, 4294901760
    %5914 = vmatpush1.msra.mxu0 %v5913
    %v5915 = vand.u32 %v61, 4294901760
    %v5916 = vsub.f32 %v61, %v5915
    %v5917 = vand.u32 %v5916, 4294901760
    %5918 = vmatprep.subr.mxu0 %v5917
    %v5919 = vand.u32 %v60, 4294901760
    %v5920 = vsub.f32 %v60, %v5919
    %v5921 = vand.u32 %v5920, 4294901760
    %5922 = vmatpush1.msra.mxu0 %v5921
    %v5923 = vand.u32 %v59, 4294901760
    %v5924 = vsub.f32 %v59, %v5923
    %v5925 = vand.u32 %v5924, 4294901760
    %5926 = vmatprep.subr.mxu0 %v5925
    %v5927 = vand.u32 %v58, 4294901760
    %v5928 = vsub.f32 %v58, %v5927
    %v5929 = vand.u32 %v5928, 4294901760
    %5930 = vmatpush1.msra.mxu0 %v5929
    %v5931 = vand.u32 %v57, 4294901760
    %v5932 = vsub.f32 %v57, %v5931
    %v5933 = vand.u32 %v5932, 4294901760
    %5934 = vmatprep.subr.mxu0 %v5933
    %v5935 = vand.u32 %v56, 4294901760
    %v5936 = vsub.f32 %v56, %v5935
    %v5937 = vand.u32 %v5936, 4294901760
    %5938 = vmatpush1.msra.mxu0 %v5937
    %v5939 = vand.u32 %v55, 4294901760
    %v5940 = vsub.f32 %v55, %v5939
    %v5941 = vand.u32 %v5940, 4294901760
    %5942 = vmatprep.subr.mxu0 %v5941
    %v5943 = vand.u32 %v54, 4294901760
    %v5944 = vsub.f32 %v54, %v5943
    %v5945 = vand.u32 %v5944, 4294901760
    %5946 = vmatpush1.msra.mxu0 %v5945
    %v5947 = vand.u32 %v53, 4294901760
    %v5948 = vsub.f32 %v53, %v5947
    %v5949 = vand.u32 %v5948, 4294901760
    %5950 = vmatprep.subr.mxu0 %v5949
    %v5951 = vand.u32 %v52, 4294901760
    %v5952 = vsub.f32 %v52, %v5951
    %v5953 = vand.u32 %v5952, 4294901760
    %5954 = vmatpush1.msra.mxu0 %v5953
    %v5955 = vand.u32 %v51, 4294901760
    %v5956 = vsub.f32 %v51, %v5955
    %v5957 = vand.u32 %v5956, 4294901760
    %5958 = vmatprep.subr.mxu0 %v5957
    %v5959 = vand.u32 %v50, 4294901760
    %v5960 = vsub.f32 %v50, %v5959
    %v5961 = vand.u32 %v5960, 4294901760
    %5962 = vmatpush1.msra.mxu0 %v5961
    %5963 = vmatprep.subr.mxu0 0.0
    %5964 = vmatpush2.msra.mxu0 0.0
    %5965 = vmatprep.subr.mxu0 0.0
    %5966 = vmatpush2.msra.mxu0 0.0
    %5967 = vmatprep.subr.mxu0 0.0
    %5968 = vmatpush2.msra.mxu0 0.0
    %5969 = vmatprep.subr.mxu0 0.0
    %5970 = vmatpush2.msra.mxu0 0.0
    %5971 = vmatprep.subr.mxu0 0.0
    %5972 = vmatpush2.msra.mxu0 0.0
    %5973 = vmatprep.subr.mxu0 0.0
    %5974 = vmatpush2.msra.mxu0 0.0
    %5975 = vmatprep.subr.mxu0 0.0
    %5976 = vmatpush2.msra.mxu0 0.0
    %5977 = vmatprep.subr.mxu0 0.0
    %5978 = vmatpush2.msra.mxu0 0.0
    %5979 = vmatprep.subr.mxu0 0.0
    %5980 = vmatpush2.msra.mxu0 0.0
    %5981 = vmatprep.subr.mxu0 0.0
    %5982 = vmatpush2.msra.mxu0 0.0
    %5983 = vmatprep.subr.mxu0 0.0
    %5984 = vmatpush2.msra.mxu0 0.0
    %5985 = vmatprep.subr.mxu0 0.0
    %5986 = vmatpush2.msra.mxu0 0.0
    %5987 = vmatprep.subr.mxu0 0.0
    %5988 = vmatpush2.msra.mxu0 0.0
    %5989 = vmatprep.subr.mxu0 0.0
    %5990 = vmatpush2.msra.mxu0 0.0
    %5991 = vmatprep.subr.mxu0 0.0
    %5992 = vmatpush2.msra.mxu0 0.0
    %5993 = vmatprep.subr.mxu0 0.0
    %5994 = vmatpush2.msra.mxu0 0.0
    %5995 = vmatprep.mubr.f32.mxu0 0.0
    %v5996 = vand.u32 %v5442, 4294901760
    %5997 = vmatmul.mubr.f32.gmra.mxu0 %v5996
    %v5998 = vpop.f32.mrf.mxu0
    %v5999 = vadd.f32 %v5879, %v5998
    %v6000 = vpop.f32.mrf.mxu0
    %v6001 = vadd.f32 %v5881, %v6000
    %6002 = vdwg.mxu0
    %6003 = vmatprep.subr.mxu0 0.0
    %6004 = vmatpush1.msra.mxu0 0.0
    %6005 = vmatprep.subr.mxu0 0.0
    %6006 = vmatpush1.msra.mxu0 0.0
    %6007 = vmatprep.subr.mxu0 0.0
    %6008 = vmatpush1.msra.mxu0 0.0
    %6009 = vmatprep.subr.mxu0 0.0
    %6010 = vmatpush1.msra.mxu0 0.0
    %6011 = vmatprep.subr.mxu0 0.0
    %6012 = vmatpush1.msra.mxu0 0.0
    %6013 = vmatprep.subr.mxu0 0.0
    %6014 = vmatpush1.msra.mxu0 0.0
    %6015 = vmatprep.subr.mxu0 0.0
    %6016 = vmatpush1.msra.mxu0 0.0
    %6017 = vmatprep.subr.mxu0 0.0
    %6018 = vmatpush1.msra.mxu0 0.0
    %v6019 = vand.u32 %v65, 4294901760
    %6020 = vmatprep.subr.mxu0 %v6019
    %v6021 = vand.u32 %v64, 4294901760
    %6022 = vmatpush1.msra.mxu0 %v6021
    %v6023 = vand.u32 %v63, 4294901760
    %6024 = vmatprep.subr.mxu0 %v6023
    %v6025 = vand.u32 %v62, 4294901760
    %6026 = vmatpush1.msra.mxu0 %v6025
    %v6027 = vand.u32 %v61, 4294901760
    %6028 = vmatprep.subr.mxu0 %v6027
    %v6029 = vand.u32 %v60, 4294901760
    %6030 = vmatpush1.msra.mxu0 %v6029
    %v6031 = vand.u32 %v59, 4294901760
    %6032 = vmatprep.subr.mxu0 %v6031
    %v6033 = vand.u32 %v58, 4294901760
    %6034 = vmatpush1.msra.mxu0 %v6033
    %v6035 = vand.u32 %v57, 4294901760
    %6036 = vmatprep.subr.mxu0 %v6035
    %v6037 = vand.u32 %v56, 4294901760
    %6038 = vmatpush1.msra.mxu0 %v6037
    %v6039 = vand.u32 %v55, 4294901760
    %6040 = vmatprep.subr.mxu0 %v6039
    %v6041 = vand.u32 %v54, 4294901760
    %6042 = vmatpush1.msra.mxu0 %v6041
    %v6043 = vand.u32 %v53, 4294901760
    %6044 = vmatprep.subr.mxu0 %v6043
    %v6045 = vand.u32 %v52, 4294901760
    %6046 = vmatpush1.msra.mxu0 %v6045
    %v6047 = vand.u32 %v51, 4294901760
    %6048 = vmatprep.subr.mxu0 %v6047
    %v6049 = vand.u32 %v50, 4294901760
    %6050 = vmatpush1.msra.mxu0 %v6049
    %6051 = vmatprep.subr.mxu0 0.0
    %6052 = vmatpush2.msra.mxu0 0.0
    %6053 = vmatprep.subr.mxu0 0.0
    %6054 = vmatpush2.msra.mxu0 0.0
    %6055 = vmatprep.subr.mxu0 0.0
    %6056 = vmatpush2.msra.mxu0 0.0
    %6057 = vmatprep.subr.mxu0 0.0
    %6058 = vmatpush2.msra.mxu0 0.0
    %6059 = vmatprep.subr.mxu0 0.0
    %6060 = vmatpush2.msra.mxu0 0.0
    %6061 = vmatprep.subr.mxu0 0.0
    %6062 = vmatpush2.msra.mxu0 0.0
    %6063 = vmatprep.subr.mxu0 0.0
    %6064 = vmatpush2.msra.mxu0 0.0
    %6065 = vmatprep.subr.mxu0 0.0
    %6066 = vmatpush2.msra.mxu0 0.0
    %6067 = vmatprep.subr.mxu0 0.0
    %6068 = vmatpush2.msra.mxu0 0.0
    %6069 = vmatprep.subr.mxu0 0.0
    %6070 = vmatpush2.msra.mxu0 0.0
    %6071 = vmatprep.subr.mxu0 0.0
    %6072 = vmatpush2.msra.mxu0 0.0
    %6073 = vmatprep.subr.mxu0 0.0
    %6074 = vmatpush2.msra.mxu0 0.0
    %6075 = vmatprep.subr.mxu0 0.0
    %6076 = vmatpush2.msra.mxu0 0.0
    %6077 = vmatprep.subr.mxu0 0.0
    %6078 = vmatpush2.msra.mxu0 0.0
    %6079 = vmatprep.subr.mxu0 0.0
    %6080 = vmatpush2.msra.mxu0 0.0
    %6081 = vmatprep.subr.mxu0 0.0
    %6082 = vmatpush2.msra.mxu0 0.0
    %6083 = vmatprep.mubr.f32.mxu0 0.0
    %v6084 = vand.u32 %v5442, 4294901760
    %6085 = vmatmul.mubr.f32.gmra.mxu0 %v6084
    %v6086 = vpop.f32.mrf.mxu0
    %v6087 = vadd.f32 %v5999, %v6086
    %v6088 = vpop.f32.mrf.mxu0
    %v6089 = vadd.f32 %v6001, %v6088
    %6090 = vdwg.mxu0
    %v6092 = vsel %vm720, %v5430, 0
    %6094 = vmatprep.subr.mxu0 0.0
    %6095 = vmatpush1.msra.mxu0 0.0
    %6096 = vmatprep.subr.mxu0 0.0
    %6097 = vmatpush1.msra.mxu0 0.0
    %6098 = vmatprep.subr.mxu0 0.0
    %6099 = vmatpush1.msra.mxu0 0.0
    %6100 = vmatprep.subr.mxu0 0.0
    %6101 = vmatpush1.msra.mxu0 0.0
    %6102 = vmatprep.subr.mxu0 0.0
    %6103 = vmatpush1.msra.mxu0 0.0
    %6104 = vmatprep.subr.mxu0 0.0
    %6105 = vmatpush1.msra.mxu0 0.0
    %6106 = vmatprep.subr.mxu0 0.0
    %6107 = vmatpush1.msra.mxu0 0.0
    %6108 = vmatprep.subr.mxu0 0.0
    %6109 = vmatpush1.msra.mxu0 0.0
    %6110 = vmatprep.subr.mxu0 0.0
    %6111 = vmatpush1.msra.mxu0 0.0
    %6112 = vmatprep.subr.mxu0 0.0
    %6113 = vmatpush1.msra.mxu0 0.0
    %6114 = vmatprep.subr.mxu0 0.0
    %6115 = vmatpush1.msra.mxu0 0.0
    %6116 = vmatprep.subr.mxu0 0.0
    %6117 = vmatpush1.msra.mxu0 0.0
    %6118 = vmatprep.subr.mxu0 0.0
    %6119 = vmatpush1.msra.mxu0 0.0
    %6120 = vmatprep.subr.mxu0 0.0
    %6121 = vmatpush1.msra.mxu0 0.0
    %6122 = vmatprep.subr.mxu0 0.0
    %6123 = vmatpush1.msra.mxu0 %v48
    %6124 = vmatprep.subr.mxu0 0.0
    %6125 = vmatpush1.msra.mxu0 %v46
    %6126 = vmatprep.subr.mxu0 0.0
    %6127 = vmatpush2.msra.mxu0 0.0
    %6128 = vmatprep.subr.mxu0 0.0
    %6129 = vmatpush2.msra.mxu0 0.0
    %6130 = vmatprep.subr.mxu0 0.0
    %6131 = vmatpush2.msra.mxu0 0.0
    %6132 = vmatprep.subr.mxu0 0.0
    %6133 = vmatpush2.msra.mxu0 0.0
    %6134 = vmatprep.subr.mxu0 0.0
    %6135 = vmatpush2.msra.mxu0 0.0
    %6136 = vmatprep.subr.mxu0 0.0
    %6137 = vmatpush2.msra.mxu0 0.0
    %6138 = vmatprep.subr.mxu0 0.0
    %6139 = vmatpush2.msra.mxu0 0.0
    %6140 = vmatprep.subr.mxu0 0.0
    %6141 = vmatpush2.msra.mxu0 0.0
    %6142 = vmatprep.subr.mxu0 0.0
    %6143 = vmatpush2.msra.mxu0 0.0
    %6144 = vmatprep.subr.mxu0 0.0
    %6145 = vmatpush2.msra.mxu0 0.0
    %6146 = vmatprep.subr.mxu0 0.0
    %6147 = vmatpush2.msra.mxu0 0.0
    %6148 = vmatprep.subr.mxu0 0.0
    %6149 = vmatpush2.msra.mxu0 0.0
    %6150 = vmatprep.subr.mxu0 0.0
    %6151 = vmatpush2.msra.mxu0 0.0
    %6152 = vmatprep.subr.mxu0 0.0
    %6153 = vmatpush2.msra.mxu0 0.0
    %6154 = vmatprep.subr.mxu0 0.0
    %6155 = vmatpush2.msra.mxu0 0.0
    %6156 = vmatprep.subr.mxu0 0.0
    %6157 = vmatpush2.msra.mxu0 0.0
    %6158 = vmatprep.mubr.f32.mxu0 0.0
    %6159 = vmatmul.mubr.f32.gmra.mxu0 %v6092
    %v6160 = vpop.f32.mrf.mxu0
    %v6161 = vadd.f32 %v6087, %v6160
    %v6162 = vpop.f32.mrf.mxu0
    %6163 = vdwg.mxu0
    %v6165 = vsel %vm720, %v5431, 0
    %6167 = vmatprep.subr.mxu0 0.0
    %6168 = vmatpush1.msra.mxu0 0.0
    %6169 = vmatprep.subr.mxu0 0.0
    %6170 = vmatpush1.msra.mxu0 0.0
    %6171 = vmatprep.subr.mxu0 0.0
    %6172 = vmatpush1.msra.mxu0 0.0
    %6173 = vmatprep.subr.mxu0 0.0
    %6174 = vmatpush1.msra.mxu0 0.0
    %6175 = vmatprep.subr.mxu0 0.0
    %6176 = vmatpush1.msra.mxu0 0.0
    %6177 = vmatprep.subr.mxu0 0.0
    %6178 = vmatpush1.msra.mxu0 0.0
    %6179 = vmatprep.subr.mxu0 0.0
    %6180 = vmatpush1.msra.mxu0 0.0
    %6181 = vmatprep.subr.mxu0 0.0
    %6182 = vmatpush1.msra.mxu0 0.0
    %6183 = vmatprep.subr.mxu0 0.0
    %6184 = vmatpush1.msra.mxu0 0.0
    %6185 = vmatprep.subr.mxu0 0.0
    %6186 = vmatpush1.msra.mxu0 0.0
    %6187 = vmatprep.subr.mxu0 0.0
    %6188 = vmatpush1.msra.mxu0 0.0
    %6189 = vmatprep.subr.mxu0 0.0
    %6190 = vmatpush1.msra.mxu0 0.0
    %6191 = vmatprep.subr.mxu0 0.0
    %6192 = vmatpush1.msra.mxu0 0.0
    %6193 = vmatprep.subr.mxu0 0.0
    %6194 = vmatpush1.msra.mxu0 0.0
    %6195 = vmatprep.subr.mxu0 0.0
    %6196 = vmatpush1.msra.mxu0 %v49
    %6197 = vmatprep.subr.mxu0 0.0
    %6198 = vmatpush1.msra.mxu0 %v47
    %6199 = vmatprep.subr.mxu0 0.0
    %6200 = vmatpush2.msra.mxu0 0.0
    %6201 = vmatprep.subr.mxu0 0.0
    %6202 = vmatpush2.msra.mxu0 0.0
    %6203 = vmatprep.subr.mxu0 0.0
    %6204 = vmatpush2.msra.mxu0 0.0
    %6205 = vmatprep.subr.mxu0 0.0
    %6206 = vmatpush2.msra.mxu0 0.0
    %6207 = vmatprep.subr.mxu0 0.0
    %6208 = vmatpush2.msra.mxu0 0.0
    %6209 = vmatprep.subr.mxu0 0.0
    %6210 = vmatpush2.msra.mxu0 0.0
    %6211 = vmatprep.subr.mxu0 0.0
    %6212 = vmatpush2.msra.mxu0 0.0
    %6213 = vmatprep.subr.mxu0 0.0
    %6214 = vmatpush2.msra.mxu0 0.0
    %6215 = vmatprep.subr.mxu0 0.0
    %6216 = vmatpush2.msra.mxu0 0.0
    %6217 = vmatprep.subr.mxu0 0.0
    %6218 = vmatpush2.msra.mxu0 0.0
    %6219 = vmatprep.subr.mxu0 0.0
    %6220 = vmatpush2.msra.mxu0 0.0
    %6221 = vmatprep.subr.mxu0 0.0
    %6222 = vmatpush2.msra.mxu0 0.0
    %6223 = vmatprep.subr.mxu0 0.0
    %6224 = vmatpush2.msra.mxu0 0.0
    %6225 = vmatprep.subr.mxu0 0.0
    %6226 = vmatpush2.msra.mxu0 0.0
    %6227 = vmatprep.subr.mxu0 0.0
    %6228 = vmatpush2.msra.mxu0 0.0
    %6229 = vmatprep.subr.mxu0 0.0
    %6230 = vmatpush2.msra.mxu0 0.0
    %6231 = vmatprep.mubr.f32.mxu0 0.0
    %6232 = vmatmul.mubr.f32.gmra.mxu0 %v6165
    %v6233 = vpop.f32.mrf.mxu0
    %v6234 = vadd.f32 %v6089, %v6233
    %v6235 = vpop.f32.mrf.mxu0
    %6236 = vdwg.mxu0
    %v6237 = vld [vmem:[%s1769] sm:$0x3]
    %6239 = vset.pattern.permute.xlu0 0
    %6240 = vperm.xlu0 %6239, %v6237
    %v6241 = vpop.permute.xlu0 %6240
    %v6243 = vld [vmem:[%s1762] sm:$0x3]
    %6245 = vset.pattern.permute.xlu0 0
    %6246 = vperm.xlu0 %6245, %v6243
    %v6247 = vpop.permute.xlu0 %6246
    %v6249 = vsub.f32 1.0, %v6241
    %v6250 = vsub.f32 1.0, %v6247
    %v6251 = vxor.u32 %v6161, 2147483648
    %v6252 = vmul.f32 %v6251, 1.442695
    %v6253 = vpow.pop %v6252
    %v6254 = vadd.f32 %v6253, 1.0
    %v6255 = vrcp.pop %v6254
    %v6256 = vmul.f32 1.0, %v6255
    %v6257 = vtanh.pop %v6161
    %v6258 = vmul.f32 %v6256, %v5387
    %6260 = vrot.lane.b32.xlu0 %v6257, 64
    %v6261 = vpop.permute.xlu0 %6260
    %v6263 = vmul.f32 %v6256, %v6261
    %6265 = vrot.lane.b32.xlu0 %v6263, 32
    %v6266 = vpop.permute.xlu0 %6265
    %v6268 = vadd.f32 %v6258, %v6266
    %v6269 = vtanh.pop %v6268
    %6271 = vrot.lane.b32.xlu0 %v6269, 64
    %v6272 = vpop.permute.xlu0 %6271
    %v6274 = vmul.f32 %v6256, %v6272
    %v6275 = vmul.f32 %v6241, %v6274
    %v6276 = vmul.f32 %v6249, %v5384
    %v6277 = vadd.f32 %v6275, %v6276
    %v6278 = vmul.f32 %v6241, %v6268
    %v6279 = vmul.f32 %v6249, %v5387
    %v6280 = vadd.f32 %v6278, %v6279
    %v6281 = vxor.u32 %v6234, 2147483648
    %v6282 = vmul.f32 %v6281, 1.442695
    %v6283 = vpow.pop %v6282
    %v6284 = vadd.f32 %v6283, 1.0
    %v6285 = vrcp.pop %v6284
    %v6286 = vmul.f32 1.0, %v6285
    %v6287 = vtanh.pop %v6234
    %v6288 = vmul.f32 %v6286, %v5417
    %6290 = vrot.lane.b32.xlu0 %v6287, 64
    %v6291 = vpop.permute.xlu0 %6290
    %v6293 = vmul.f32 %v6286, %v6291
    %6295 = vrot.lane.b32.xlu0 %v6293, 32
    %v6296 = vpop.permute.xlu0 %6295
    %v6298 = vadd.f32 %v6288, %v6296
    %v6299 = vtanh.pop %v6298
    %6301 = vrot.lane.b32.xlu0 %v6299, 64
    %v6302 = vpop.permute.xlu0 %6301
    %v6304 = vmul.f32 %v6286, %v6302
    %v6305 = vmul.f32 %v6247, %v6304
    %v6306 = vmul.f32 %v6250, %v5414
    %v6307 = vadd.f32 %v6305, %v6306
    %v6308 = vmul.f32 %v6247, %v6298
    %v6309 = vmul.f32 %v6250, %v5417
    %v6310 = vadd.f32 %v6308, %v6309
    %6312 = vrot.lane.b32.xlu0 %v6275, 32
    %v6313 = vpop.permute.xlu0 %6312
    %s6315 = scalar_lea.vmem [#allocation7], 12
    %6316 = vst.msk [vmem:[%s6315] sm:$0x3] %vm944, %v6313
    %6318 = vrot.lane.b32.xlu0 %v6305, 32
    %v6319 = vpop.permute.xlu0 %6318
    %s6321 = scalar_lea.vmem [#allocation7], 18
    %6322 = vst.msk [vmem:[%s6321] sm:$0x3] %vm944, %v6319
    %v6323 = vld [vmem:[%s67] sm:$0x3]
    %v6324 = vld [vmem:[%s1] sm:$0x3]
    %6326 = vrot.lane.b32.xlu0 %v6277, 32
    %v6327 = vpop.permute.xlu0 %6326
    %6330 = vrot.lane.b32.xlu0 %v6307, 64
    %v6331 = vpop.permute.xlu0 %6330
    %v6333 = vsel %vm964, %v6327, %v6331
    %v6335 = vsel %vm69, %v6333, 0
    %6337 = vmatprep.subr.mxu0 0.0
    %6338 = vmatpush1.msra.mxu0 0.0
    %6339 = vmatprep.subr.mxu0 0.0
    %6340 = vmatpush1.msra.mxu0 0.0
    %6341 = vmatprep.subr.mxu0 0.0
    %6342 = vmatpush1.msra.mxu0 0.0
    %6343 = vmatprep.subr.mxu0 0.0
    %6344 = vmatpush1.msra.mxu0 0.0
    %6345 = vmatprep.subr.mxu0 0.0
    %6346 = vmatpush1.msra.mxu0 0.0
    %6347 = vmatprep.subr.mxu0 0.0
    %6348 = vmatpush1.msra.mxu0 0.0
    %6349 = vmatprep.subr.mxu0 0.0
    %6350 = vmatpush1.msra.mxu0 0.0
    %6351 = vmatprep.subr.mxu0 0.0
    %6352 = vmatpush1.msra.mxu0 0.0
    %v6353 = vand.u32 %v65, 4294901760
    %6354 = vmatprep.subr.mxu0 %v6353
    %v6355 = vand.u32 %v64, 4294901760
    %6356 = vmatpush1.msra.mxu0 %v6355
    %v6357 = vand.u32 %v63, 4294901760
    %6358 = vmatprep.subr.mxu0 %v6357
    %v6359 = vand.u32 %v62, 4294901760
    %6360 = vmatpush1.msra.mxu0 %v6359
    %v6361 = vand.u32 %v61, 4294901760
    %6362 = vmatprep.subr.mxu0 %v6361
    %v6363 = vand.u32 %v60, 4294901760
    %6364 = vmatpush1.msra.mxu0 %v6363
    %v6365 = vand.u32 %v59, 4294901760
    %6366 = vmatprep.subr.mxu0 %v6365
    %v6367 = vand.u32 %v58, 4294901760
    %6368 = vmatpush1.msra.mxu0 %v6367
    %v6369 = vand.u32 %v57, 4294901760
    %6370 = vmatprep.subr.mxu0 %v6369
    %v6371 = vand.u32 %v56, 4294901760
    %6372 = vmatpush1.msra.mxu0 %v6371
    %v6373 = vand.u32 %v55, 4294901760
    %6374 = vmatprep.subr.mxu0 %v6373
    %v6375 = vand.u32 %v54, 4294901760
    %6376 = vmatpush1.msra.mxu0 %v6375
    %v6377 = vand.u32 %v53, 4294901760
    %6378 = vmatprep.subr.mxu0 %v6377
    %v6379 = vand.u32 %v52, 4294901760
    %6380 = vmatpush1.msra.mxu0 %v6379
    %v6381 = vand.u32 %v51, 4294901760
    %6382 = vmatprep.subr.mxu0 %v6381
    %v6383 = vand.u32 %v50, 4294901760
    %6384 = vmatpush1.msra.mxu0 %v6383
    %6385 = vmatprep.subr.mxu0 0.0
    %6386 = vmatpush2.msra.mxu0 0.0
    %6387 = vmatprep.subr.mxu0 0.0
    %6388 = vmatpush2.msra.mxu0 0.0
    %6389 = vmatprep.subr.mxu0 0.0
    %6390 = vmatpush2.msra.mxu0 0.0
    %6391 = vmatprep.subr.mxu0 0.0
    %6392 = vmatpush2.msra.mxu0 0.0
    %6393 = vmatprep.subr.mxu0 0.0
    %6394 = vmatpush2.msra.mxu0 0.0
    %6395 = vmatprep.subr.mxu0 0.0
    %6396 = vmatpush2.msra.mxu0 0.0
    %6397 = vmatprep.subr.mxu0 0.0
    %6398 = vmatpush2.msra.mxu0 0.0
    %6399 = vmatprep.subr.mxu0 0.0
    %6400 = vmatpush2.msra.mxu0 0.0
    %6401 = vmatprep.subr.mxu0 0.0
    %6402 = vmatpush2.msra.mxu0 0.0
    %6403 = vmatprep.subr.mxu0 0.0
    %6404 = vmatpush2.msra.mxu0 0.0
    %6405 = vmatprep.subr.mxu0 0.0
    %6406 = vmatpush2.msra.mxu0 0.0
    %6407 = vmatprep.subr.mxu0 0.0
    %6408 = vmatpush2.msra.mxu0 0.0
    %6409 = vmatprep.subr.mxu0 0.0
    %6410 = vmatpush2.msra.mxu0 0.0
    %6411 = vmatprep.subr.mxu0 0.0
    %6412 = vmatpush2.msra.mxu0 0.0
    %6413 = vmatprep.subr.mxu0 0.0
    %6414 = vmatpush2.msra.mxu0 0.0
    %6415 = vmatprep.subr.mxu0 0.0
    %6416 = vmatpush2.msra.mxu0 0.0
    %6417 = vmatprep.mubr.f32.mxu0 0.0
    %v6418 = vand.u32 %v6335, 4294901760
    %v6419 = vsub.f32 %v6335, %v6418
    %v6420 = vand.u32 %v6419, 4294901760
    %v6421 = vsub.f32 %v6419, %v6420
    %v6422 = vand.u32 %v6421, 4294901760
    %6423 = vmatmul.mubr.f32.gmra.mxu0 %v6422
    %v6424 = vpop.f32.mrf.mxu0
    %v6425 = vadd.f32 0.0, %v6424
    %v6426 = vpop.f32.mrf.mxu0
    %v6427 = vadd.f32 0.0, %v6426
    %6428 = vdwg.mxu0
    %6429 = vmatprep.subr.mxu0 0.0
    %6430 = vmatpush1.msra.mxu0 0.0
    %6431 = vmatprep.subr.mxu0 0.0
    %6432 = vmatpush1.msra.mxu0 0.0
    %6433 = vmatprep.subr.mxu0 0.0
    %6434 = vmatpush1.msra.mxu0 0.0
    %6435 = vmatprep.subr.mxu0 0.0
    %6436 = vmatpush1.msra.mxu0 0.0
    %6437 = vmatprep.subr.mxu0 0.0
    %6438 = vmatpush1.msra.mxu0 0.0
    %6439 = vmatprep.subr.mxu0 0.0
    %6440 = vmatpush1.msra.mxu0 0.0
    %6441 = vmatprep.subr.mxu0 0.0
    %6442 = vmatpush1.msra.mxu0 0.0
    %6443 = vmatprep.subr.mxu0 0.0
    %6444 = vmatpush1.msra.mxu0 0.0
    %v6445 = vand.u32 %v65, 4294901760
    %v6446 = vsub.f32 %v65, %v6445
    %v6447 = vand.u32 %v6446, 4294901760
    %v6448 = vsub.f32 %v6446, %v6447
    %v6449 = vand.u32 %v6448, 4294901760
    %6450 = vmatprep.subr.mxu0 %v6449
    %v6451 = vand.u32 %v64, 4294901760
    %v6452 = vsub.f32 %v64, %v6451
    %v6453 = vand.u32 %v6452, 4294901760
    %v6454 = vsub.f32 %v6452, %v6453
    %v6455 = vand.u32 %v6454, 4294901760
    %6456 = vmatpush1.msra.mxu0 %v6455
    %v6457 = vand.u32 %v63, 4294901760
    %v6458 = vsub.f32 %v63, %v6457
    %v6459 = vand.u32 %v6458, 4294901760
    %v6460 = vsub.f32 %v6458, %v6459
    %v6461 = vand.u32 %v6460, 4294901760
    %6462 = vmatprep.subr.mxu0 %v6461
    %v6463 = vand.u32 %v62, 4294901760
    %v6464 = vsub.f32 %v62, %v6463
    %v6465 = vand.u32 %v6464, 4294901760
    %v6466 = vsub.f32 %v6464, %v6465
    %v6467 = vand.u32 %v6466, 4294901760
    %6468 = vmatpush1.msra.mxu0 %v6467
    %v6469 = vand.u32 %v61, 4294901760
    %v6470 = vsub.f32 %v61, %v6469
    %v6471 = vand.u32 %v6470, 4294901760
    %v6472 = vsub.f32 %v6470, %v6471
    %v6473 = vand.u32 %v6472, 4294901760
    %6474 = vmatprep.subr.mxu0 %v6473
    %v6475 = vand.u32 %v60, 4294901760
    %v6476 = vsub.f32 %v60, %v6475
    %v6477 = vand.u32 %v6476, 4294901760
    %v6478 = vsub.f32 %v6476, %v6477
    %v6479 = vand.u32 %v6478, 4294901760
    %6480 = vmatpush1.msra.mxu0 %v6479
    %v6481 = vand.u32 %v59, 4294901760
    %v6482 = vsub.f32 %v59, %v6481
    %v6483 = vand.u32 %v6482, 4294901760
    %v6484 = vsub.f32 %v6482, %v6483
    %v6485 = vand.u32 %v6484, 4294901760
    %6486 = vmatprep.subr.mxu0 %v6485
    %v6487 = vand.u32 %v58, 4294901760
    %v6488 = vsub.f32 %v58, %v6487
    %v6489 = vand.u32 %v6488, 4294901760
    %v6490 = vsub.f32 %v6488, %v6489
    %v6491 = vand.u32 %v6490, 4294901760
    %6492 = vmatpush1.msra.mxu0 %v6491
    %v6493 = vand.u32 %v57, 4294901760
    %v6494 = vsub.f32 %v57, %v6493
    %v6495 = vand.u32 %v6494, 4294901760
    %v6496 = vsub.f32 %v6494, %v6495
    %v6497 = vand.u32 %v6496, 4294901760
    %6498 = vmatprep.subr.mxu0 %v6497
    %v6499 = vand.u32 %v56, 4294901760
    %v6500 = vsub.f32 %v56, %v6499
    %v6501 = vand.u32 %v6500, 4294901760
    %v6502 = vsub.f32 %v6500, %v6501
    %v6503 = vand.u32 %v6502, 4294901760
    %6504 = vmatpush1.msra.mxu0 %v6503
    %v6505 = vand.u32 %v55, 4294901760
    %v6506 = vsub.f32 %v55, %v6505
    %v6507 = vand.u32 %v6506, 4294901760
    %v6508 = vsub.f32 %v6506, %v6507
    %v6509 = vand.u32 %v6508, 4294901760
    %6510 = vmatprep.subr.mxu0 %v6509
    %v6511 = vand.u32 %v54, 4294901760
    %v6512 = vsub.f32 %v54, %v6511
    %v6513 = vand.u32 %v6512, 4294901760
    %v6514 = vsub.f32 %v6512, %v6513
    %v6515 = vand.u32 %v6514, 4294901760
    %6516 = vmatpush1.msra.mxu0 %v6515
    %v6517 = vand.u32 %v53, 4294901760
    %v6518 = vsub.f32 %v53, %v6517
    %v6519 = vand.u32 %v6518, 4294901760
    %v6520 = vsub.f32 %v6518, %v6519
    %v6521 = vand.u32 %v6520, 4294901760
    %6522 = vmatprep.subr.mxu0 %v6521
    %v6523 = vand.u32 %v52, 4294901760
    %v6524 = vsub.f32 %v52, %v6523
    %v6525 = vand.u32 %v6524, 4294901760
    %v6526 = vsub.f32 %v6524, %v6525
    %v6527 = vand.u32 %v6526, 4294901760
    %6528 = vmatpush1.msra.mxu0 %v6527
    %v6529 = vand.u32 %v51, 4294901760
    %v6530 = vsub.f32 %v51, %v6529
    %v6531 = vand.u32 %v6530, 4294901760
    %v6532 = vsub.f32 %v6530, %v6531
    %v6533 = vand.u32 %v6532, 4294901760
    %6534 = vmatprep.subr.mxu0 %v6533
    %v6535 = vand.u32 %v50, 4294901760
    %v6536 = vsub.f32 %v50, %v6535
    %v6537 = vand.u32 %v6536, 4294901760
    %v6538 = vsub.f32 %v6536, %v6537
    %v6539 = vand.u32 %v6538, 4294901760
    %6540 = vmatpush1.msra.mxu0 %v6539
    %6541 = vmatprep.subr.mxu0 0.0
    %6542 = vmatpush2.msra.mxu0 0.0
    %6543 = vmatprep.subr.mxu0 0.0
    %6544 = vmatpush2.msra.mxu0 0.0
    %6545 = vmatprep.subr.mxu0 0.0
    %6546 = vmatpush2.msra.mxu0 0.0
    %6547 = vmatprep.subr.mxu0 0.0
    %6548 = vmatpush2.msra.mxu0 0.0
    %6549 = vmatprep.subr.mxu0 0.0
    %6550 = vmatpush2.msra.mxu0 0.0
    %6551 = vmatprep.subr.mxu0 0.0
    %6552 = vmatpush2.msra.mxu0 0.0
    %6553 = vmatprep.subr.mxu0 0.0
    %6554 = vmatpush2.msra.mxu0 0.0
    %6555 = vmatprep.subr.mxu0 0.0
    %6556 = vmatpush2.msra.mxu0 0.0
    %6557 = vmatprep.subr.mxu0 0.0
    %6558 = vmatpush2.msra.mxu0 0.0
    %6559 = vmatprep.subr.mxu0 0.0
    %6560 = vmatpush2.msra.mxu0 0.0
    %6561 = vmatprep.subr.mxu0 0.0
    %6562 = vmatpush2.msra.mxu0 0.0
    %6563 = vmatprep.subr.mxu0 0.0
    %6564 = vmatpush2.msra.mxu0 0.0
    %6565 = vmatprep.subr.mxu0 0.0
    %6566 = vmatpush2.msra.mxu0 0.0
    %6567 = vmatprep.subr.mxu0 0.0
    %6568 = vmatpush2.msra.mxu0 0.0
    %6569 = vmatprep.subr.mxu0 0.0
    %6570 = vmatpush2.msra.mxu0 0.0
    %6571 = vmatprep.subr.mxu0 0.0
    %6572 = vmatpush2.msra.mxu0 0.0
    %6573 = vmatprep.mubr.f32.mxu0 0.0
    %v6574 = vand.u32 %v6335, 4294901760
    %6575 = vmatmul.mubr.f32.gmra.mxu0 %v6574
    %v6576 = vpop.f32.mrf.mxu0
    %v6577 = vadd.f32 %v6425, %v6576
    %v6578 = vpop.f32.mrf.mxu0
    %v6579 = vadd.f32 %v6427, %v6578
    %6580 = vdwg.mxu0
    %6581 = vmatprep.subr.mxu0 0.0
    %6582 = vmatpush1.msra.mxu0 0.0
    %6583 = vmatprep.subr.mxu0 0.0
    %6584 = vmatpush1.msra.mxu0 0.0
    %6585 = vmatprep.subr.mxu0 0.0
    %6586 = vmatpush1.msra.mxu0 0.0
    %6587 = vmatprep.subr.mxu0 0.0
    %6588 = vmatpush1.msra.mxu0 0.0
    %6589 = vmatprep.subr.mxu0 0.0
    %6590 = vmatpush1.msra.mxu0 0.0
    %6591 = vmatprep.subr.mxu0 0.0
    %6592 = vmatpush1.msra.mxu0 0.0
    %6593 = vmatprep.subr.mxu0 0.0
    %6594 = vmatpush1.msra.mxu0 0.0
    %6595 = vmatprep.subr.mxu0 0.0
    %6596 = vmatpush1.msra.mxu0 0.0
    %v6597 = vand.u32 %v65, 4294901760
    %v6598 = vsub.f32 %v65, %v6597
    %6599 = vmatprep.subr.mxu0 %v6598
    %v6600 = vand.u32 %v64, 4294901760
    %v6601 = vsub.f32 %v64, %v6600
    %6602 = vmatpush1.msra.mxu0 %v6601
    %v6603 = vand.u32 %v63, 4294901760
    %v6604 = vsub.f32 %v63, %v6603
    %6605 = vmatprep.subr.mxu0 %v6604
    %v6606 = vand.u32 %v62, 4294901760
    %v6607 = vsub.f32 %v62, %v6606
    %6608 = vmatpush1.msra.mxu0 %v6607
    %v6609 = vand.u32 %v61, 4294901760
    %v6610 = vsub.f32 %v61, %v6609
    %6611 = vmatprep.subr.mxu0 %v6610
    %v6612 = vand.u32 %v60, 4294901760
    %v6613 = vsub.f32 %v60, %v6612
    %6614 = vmatpush1.msra.mxu0 %v6613
    %v6615 = vand.u32 %v59, 4294901760
    %v6616 = vsub.f32 %v59, %v6615
    %6617 = vmatprep.subr.mxu0 %v6616
    %v6618 = vand.u32 %v58, 4294901760
    %v6619 = vsub.f32 %v58, %v6618
    %6620 = vmatpush1.msra.mxu0 %v6619
    %v6621 = vand.u32 %v57, 4294901760
    %v6622 = vsub.f32 %v57, %v6621
    %6623 = vmatprep.subr.mxu0 %v6622
    %v6624 = vand.u32 %v56, 4294901760
    %v6625 = vsub.f32 %v56, %v6624
    %6626 = vmatpush1.msra.mxu0 %v6625
    %v6627 = vand.u32 %v55, 4294901760
    %v6628 = vsub.f32 %v55, %v6627
    %6629 = vmatprep.subr.mxu0 %v6628
    %v6630 = vand.u32 %v54, 4294901760
    %v6631 = vsub.f32 %v54, %v6630
    %6632 = vmatpush1.msra.mxu0 %v6631
    %v6633 = vand.u32 %v53, 4294901760
    %v6634 = vsub.f32 %v53, %v6633
    %6635 = vmatprep.subr.mxu0 %v6634
    %v6636 = vand.u32 %v52, 4294901760
    %v6637 = vsub.f32 %v52, %v6636
    %6638 = vmatpush1.msra.mxu0 %v6637
    %v6639 = vand.u32 %v51, 4294901760
    %v6640 = vsub.f32 %v51, %v6639
    %6641 = vmatprep.subr.mxu0 %v6640
    %v6642 = vand.u32 %v50, 4294901760
    %v6643 = vsub.f32 %v50, %v6642
    %6644 = vmatpush1.msra.mxu0 %v6643
    %6645 = vmatprep.subr.mxu0 0.0
    %6646 = vmatpush2.msra.mxu0 0.0
    %6647 = vmatprep.subr.mxu0 0.0
    %6648 = vmatpush2.msra.mxu0 0.0
    %6649 = vmatprep.subr.mxu0 0.0
    %6650 = vmatpush2.msra.mxu0 0.0
    %6651 = vmatprep.subr.mxu0 0.0
    %6652 = vmatpush2.msra.mxu0 0.0
    %6653 = vmatprep.subr.mxu0 0.0
    %6654 = vmatpush2.msra.mxu0 0.0
    %6655 = vmatprep.subr.mxu0 0.0
    %6656 = vmatpush2.msra.mxu0 0.0
    %6657 = vmatprep.subr.mxu0 0.0
    %6658 = vmatpush2.msra.mxu0 0.0
    %6659 = vmatprep.subr.mxu0 0.0
    %6660 = vmatpush2.msra.mxu0 0.0
    %6661 = vmatprep.subr.mxu0 0.0
    %6662 = vmatpush2.msra.mxu0 0.0
    %6663 = vmatprep.subr.mxu0 0.0
    %6664 = vmatpush2.msra.mxu0 0.0
    %6665 = vmatprep.subr.mxu0 0.0
    %6666 = vmatpush2.msra.mxu0 0.0
    %6667 = vmatprep.subr.mxu0 0.0
    %6668 = vmatpush2.msra.mxu0 0.0
    %6669 = vmatprep.subr.mxu0 0.0
    %6670 = vmatpush2.msra.mxu0 0.0
    %6671 = vmatprep.subr.mxu0 0.0
    %6672 = vmatpush2.msra.mxu0 0.0
    %6673 = vmatprep.subr.mxu0 0.0
    %6674 = vmatpush2.msra.mxu0 0.0
    %6675 = vmatprep.subr.mxu0 0.0
    %6676 = vmatpush2.msra.mxu0 0.0
    %6677 = vmatprep.mubr.f32.mxu0 0.0
    %v6678 = vand.u32 %v6335, 4294901760
    %v6679 = vsub.f32 %v6335, %v6678
    %6680 = vmatmul.mubr.f32.gmra.mxu0 %v6679
    %v6681 = vpop.f32.mrf.mxu0
    %v6682 = vadd.f32 %v6577, %v6681
    %v6683 = vpop.f32.mrf.mxu0
    %v6684 = vadd.f32 %v6579, %v6683
    %6685 = vdwg.mxu0
    %6686 = vmatprep.subr.mxu0 0.0
    %6687 = vmatpush1.msra.mxu0 0.0
    %6688 = vmatprep.subr.mxu0 0.0
    %6689 = vmatpush1.msra.mxu0 0.0
    %6690 = vmatprep.subr.mxu0 0.0
    %6691 = vmatpush1.msra.mxu0 0.0
    %6692 = vmatprep.subr.mxu0 0.0
    %6693 = vmatpush1.msra.mxu0 0.0
    %6694 = vmatprep.subr.mxu0 0.0
    %6695 = vmatpush1.msra.mxu0 0.0
    %6696 = vmatprep.subr.mxu0 0.0
    %6697 = vmatpush1.msra.mxu0 0.0
    %6698 = vmatprep.subr.mxu0 0.0
    %6699 = vmatpush1.msra.mxu0 0.0
    %6700 = vmatprep.subr.mxu0 0.0
    %6701 = vmatpush1.msra.mxu0 0.0
    %v6702 = vand.u32 %v65, 4294901760
    %6703 = vmatprep.subr.mxu0 %v6702
    %v6704 = vand.u32 %v64, 4294901760
    %6705 = vmatpush1.msra.mxu0 %v6704
    %v6706 = vand.u32 %v63, 4294901760
    %6707 = vmatprep.subr.mxu0 %v6706
    %v6708 = vand.u32 %v62, 4294901760
    %6709 = vmatpush1.msra.mxu0 %v6708
    %v6710 = vand.u32 %v61, 4294901760
    %6711 = vmatprep.subr.mxu0 %v6710
    %v6712 = vand.u32 %v60, 4294901760
    %6713 = vmatpush1.msra.mxu0 %v6712
    %v6714 = vand.u32 %v59, 4294901760
    %6715 = vmatprep.subr.mxu0 %v6714
    %v6716 = vand.u32 %v58, 4294901760
    %6717 = vmatpush1.msra.mxu0 %v6716
    %v6718 = vand.u32 %v57, 4294901760
    %6719 = vmatprep.subr.mxu0 %v6718
    %v6720 = vand.u32 %v56, 4294901760
    %6721 = vmatpush1.msra.mxu0 %v6720
    %v6722 = vand.u32 %v55, 4294901760
    %6723 = vmatprep.subr.mxu0 %v6722
    %v6724 = vand.u32 %v54, 4294901760
    %6725 = vmatpush1.msra.mxu0 %v6724
    %v6726 = vand.u32 %v53, 4294901760
    %6727 = vmatprep.subr.mxu0 %v6726
    %v6728 = vand.u32 %v52, 4294901760
    %6729 = vmatpush1.msra.mxu0 %v6728
    %v6730 = vand.u32 %v51, 4294901760
    %6731 = vmatprep.subr.mxu0 %v6730
    %v6732 = vand.u32 %v50, 4294901760
    %6733 = vmatpush1.msra.mxu0 %v6732
    %6734 = vmatprep.subr.mxu0 0.0
    %6735 = vmatpush2.msra.mxu0 0.0
    %6736 = vmatprep.subr.mxu0 0.0
    %6737 = vmatpush2.msra.mxu0 0.0
    %6738 = vmatprep.subr.mxu0 0.0
    %6739 = vmatpush2.msra.mxu0 0.0
    %6740 = vmatprep.subr.mxu0 0.0
    %6741 = vmatpush2.msra.mxu0 0.0
    %6742 = vmatprep.subr.mxu0 0.0
    %6743 = vmatpush2.msra.mxu0 0.0
    %6744 = vmatprep.subr.mxu0 0.0
    %6745 = vmatpush2.msra.mxu0 0.0
    %6746 = vmatprep.subr.mxu0 0.0
    %6747 = vmatpush2.msra.mxu0 0.0
    %6748 = vmatprep.subr.mxu0 0.0
    %6749 = vmatpush2.msra.mxu0 0.0
    %6750 = vmatprep.subr.mxu0 0.0
    %6751 = vmatpush2.msra.mxu0 0.0
    %6752 = vmatprep.subr.mxu0 0.0
    %6753 = vmatpush2.msra.mxu0 0.0
    %6754 = vmatprep.subr.mxu0 0.0
    %6755 = vmatpush2.msra.mxu0 0.0
    %6756 = vmatprep.subr.mxu0 0.0
    %6757 = vmatpush2.msra.mxu0 0.0
    %6758 = vmatprep.subr.mxu0 0.0
    %6759 = vmatpush2.msra.mxu0 0.0
    %6760 = vmatprep.subr.mxu0 0.0
    %6761 = vmatpush2.msra.mxu0 0.0
    %6762 = vmatprep.subr.mxu0 0.0
    %6763 = vmatpush2.msra.mxu0 0.0
    %6764 = vmatprep.subr.mxu0 0.0
    %6765 = vmatpush2.msra.mxu0 0.0
    %6766 = vmatprep.mubr.f32.mxu0 0.0
    %v6767 = vand.u32 %v6335, 4294901760
    %v6768 = vsub.f32 %v6335, %v6767
    %v6769 = vand.u32 %v6768, 4294901760
    %6770 = vmatmul.mubr.f32.gmra.mxu0 %v6769
    %v6771 = vpop.f32.mrf.mxu0
    %v6772 = vadd.f32 %v6682, %v6771
    %v6773 = vpop.f32.mrf.mxu0
    %v6774 = vadd.f32 %v6684, %v6773
    %6775 = vdwg.mxu0
    %6776 = vmatprep.subr.mxu0 0.0
    %6777 = vmatpush1.msra.mxu0 0.0
    %6778 = vmatprep.subr.mxu0 0.0
    %6779 = vmatpush1.msra.mxu0 0.0
    %6780 = vmatprep.subr.mxu0 0.0
    %6781 = vmatpush1.msra.mxu0 0.0
    %6782 = vmatprep.subr.mxu0 0.0
    %6783 = vmatpush1.msra.mxu0 0.0
    %6784 = vmatprep.subr.mxu0 0.0
    %6785 = vmatpush1.msra.mxu0 0.0
    %6786 = vmatprep.subr.mxu0 0.0
    %6787 = vmatpush1.msra.mxu0 0.0
    %6788 = vmatprep.subr.mxu0 0.0
    %6789 = vmatpush1.msra.mxu0 0.0
    %6790 = vmatprep.subr.mxu0 0.0
    %6791 = vmatpush1.msra.mxu0 0.0
    %v6792 = vand.u32 %v65, 4294901760
    %v6793 = vsub.f32 %v65, %v6792
    %v6794 = vand.u32 %v6793, 4294901760
    %6795 = vmatprep.subr.mxu0 %v6794
    %v6796 = vand.u32 %v64, 4294901760
    %v6797 = vsub.f32 %v64, %v6796
    %v6798 = vand.u32 %v6797, 4294901760
    %6799 = vmatpush1.msra.mxu0 %v6798
    %v6800 = vand.u32 %v63, 4294901760
    %v6801 = vsub.f32 %v63, %v6800
    %v6802 = vand.u32 %v6801, 4294901760
    %6803 = vmatprep.subr.mxu0 %v6802
    %v6804 = vand.u32 %v62, 4294901760
    %v6805 = vsub.f32 %v62, %v6804
    %v6806 = vand.u32 %v6805, 4294901760
    %6807 = vmatpush1.msra.mxu0 %v6806
    %v6808 = vand.u32 %v61, 4294901760
    %v6809 = vsub.f32 %v61, %v6808
    %v6810 = vand.u32 %v6809, 4294901760
    %6811 = vmatprep.subr.mxu0 %v6810
    %v6812 = vand.u32 %v60, 4294901760
    %v6813 = vsub.f32 %v60, %v6812
    %v6814 = vand.u32 %v6813, 4294901760
    %6815 = vmatpush1.msra.mxu0 %v6814
    %v6816 = vand.u32 %v59, 4294901760
    %v6817 = vsub.f32 %v59, %v6816
    %v6818 = vand.u32 %v6817, 4294901760
    %6819 = vmatprep.subr.mxu0 %v6818
    %v6820 = vand.u32 %v58, 4294901760
    %v6821 = vsub.f32 %v58, %v6820
    %v6822 = vand.u32 %v6821, 4294901760
    %6823 = vmatpush1.msra.mxu0 %v6822
    %v6824 = vand.u32 %v57, 4294901760
    %v6825 = vsub.f32 %v57, %v6824
    %v6826 = vand.u32 %v6825, 4294901760
    %6827 = vmatprep.subr.mxu0 %v6826
    %v6828 = vand.u32 %v56, 4294901760
    %v6829 = vsub.f32 %v56, %v6828
    %v6830 = vand.u32 %v6829, 4294901760
    %6831 = vmatpush1.msra.mxu0 %v6830
    %v6832 = vand.u32 %v55, 4294901760
    %v6833 = vsub.f32 %v55, %v6832
    %v6834 = vand.u32 %v6833, 4294901760
    %6835 = vmatprep.subr.mxu0 %v6834
    %v6836 = vand.u32 %v54, 4294901760
    %v6837 = vsub.f32 %v54, %v6836
    %v6838 = vand.u32 %v6837, 4294901760
    %6839 = vmatpush1.msra.mxu0 %v6838
    %v6840 = vand.u32 %v53, 4294901760
    %v6841 = vsub.f32 %v53, %v6840
    %v6842 = vand.u32 %v6841, 4294901760
    %6843 = vmatprep.subr.mxu0 %v6842
    %v6844 = vand.u32 %v52, 4294901760
    %v6845 = vsub.f32 %v52, %v6844
    %v6846 = vand.u32 %v6845, 4294901760
    %6847 = vmatpush1.msra.mxu0 %v6846
    %v6848 = vand.u32 %v51, 4294901760
    %v6849 = vsub.f32 %v51, %v6848
    %v6850 = vand.u32 %v6849, 4294901760
    %6851 = vmatprep.subr.mxu0 %v6850
    %v6852 = vand.u32 %v50, 4294901760
    %v6853 = vsub.f32 %v50, %v6852
    %v6854 = vand.u32 %v6853, 4294901760
    %6855 = vmatpush1.msra.mxu0 %v6854
    %6856 = vmatprep.subr.mxu0 0.0
    %6857 = vmatpush2.msra.mxu0 0.0
    %6858 = vmatprep.subr.mxu0 0.0
    %6859 = vmatpush2.msra.mxu0 0.0
    %6860 = vmatprep.subr.mxu0 0.0
    %6861 = vmatpush2.msra.mxu0 0.0
    %6862 = vmatprep.subr.mxu0 0.0
    %6863 = vmatpush2.msra.mxu0 0.0
    %6864 = vmatprep.subr.mxu0 0.0
    %6865 = vmatpush2.msra.mxu0 0.0
    %6866 = vmatprep.subr.mxu0 0.0
    %6867 = vmatpush2.msra.mxu0 0.0
    %6868 = vmatprep.subr.mxu0 0.0
    %6869 = vmatpush2.msra.mxu0 0.0
    %6870 = vmatprep.subr.mxu0 0.0
    %6871 = vmatpush2.msra.mxu0 0.0
    %6872 = vmatprep.subr.mxu0 0.0
    %6873 = vmatpush2.msra.mxu0 0.0
    %6874 = vmatprep.subr.mxu0 0.0
    %6875 = vmatpush2.msra.mxu0 0.0
    %6876 = vmatprep.subr.mxu0 0.0
    %6877 = vmatpush2.msra.mxu0 0.0
    %6878 = vmatprep.subr.mxu0 0.0
    %6879 = vmatpush2.msra.mxu0 0.0
    %6880 = vmatprep.subr.mxu0 0.0
    %6881 = vmatpush2.msra.mxu0 0.0
    %6882 = vmatprep.subr.mxu0 0.0
    %6883 = vmatpush2.msra.mxu0 0.0
    %6884 = vmatprep.subr.mxu0 0.0
    %6885 = vmatpush2.msra.mxu0 0.0
    %6886 = vmatprep.subr.mxu0 0.0
    %6887 = vmatpush2.msra.mxu0 0.0
    %6888 = vmatprep.mubr.f32.mxu0 0.0
    %v6889 = vand.u32 %v6335, 4294901760
    %6890 = vmatmul.mubr.f32.gmra.mxu0 %v6889
    %v6891 = vpop.f32.mrf.mxu0
    %v6892 = vadd.f32 %v6772, %v6891
    %v6893 = vpop.f32.mrf.mxu0
    %v6894 = vadd.f32 %v6774, %v6893
    %6895 = vdwg.mxu0
    %6896 = vmatprep.subr.mxu0 0.0
    %6897 = vmatpush1.msra.mxu0 0.0
    %6898 = vmatprep.subr.mxu0 0.0
    %6899 = vmatpush1.msra.mxu0 0.0
    %6900 = vmatprep.subr.mxu0 0.0
    %6901 = vmatpush1.msra.mxu0 0.0
    %6902 = vmatprep.subr.mxu0 0.0
    %6903 = vmatpush1.msra.mxu0 0.0
    %6904 = vmatprep.subr.mxu0 0.0
    %6905 = vmatpush1.msra.mxu0 0.0
    %6906 = vmatprep.subr.mxu0 0.0
    %6907 = vmatpush1.msra.mxu0 0.0
    %6908 = vmatprep.subr.mxu0 0.0
    %6909 = vmatpush1.msra.mxu0 0.0
    %6910 = vmatprep.subr.mxu0 0.0
    %6911 = vmatpush1.msra.mxu0 0.0
    %v6912 = vand.u32 %v65, 4294901760
    %6913 = vmatprep.subr.mxu0 %v6912
    %v6914 = vand.u32 %v64, 4294901760
    %6915 = vmatpush1.msra.mxu0 %v6914
    %v6916 = vand.u32 %v63, 4294901760
    %6917 = vmatprep.subr.mxu0 %v6916
    %v6918 = vand.u32 %v62, 4294901760
    %6919 = vmatpush1.msra.mxu0 %v6918
    %v6920 = vand.u32 %v61, 4294901760
    %6921 = vmatprep.subr.mxu0 %v6920
    %v6922 = vand.u32 %v60, 4294901760
    %6923 = vmatpush1.msra.mxu0 %v6922
    %v6924 = vand.u32 %v59, 4294901760
    %6925 = vmatprep.subr.mxu0 %v6924
    %v6926 = vand.u32 %v58, 4294901760
    %6927 = vmatpush1.msra.mxu0 %v6926
    %v6928 = vand.u32 %v57, 4294901760
    %6929 = vmatprep.subr.mxu0 %v6928
    %v6930 = vand.u32 %v56, 4294901760
    %6931 = vmatpush1.msra.mxu0 %v6930
    %v6932 = vand.u32 %v55, 4294901760
    %6933 = vmatprep.subr.mxu0 %v6932
    %v6934 = vand.u32 %v54, 4294901760
    %6935 = vmatpush1.msra.mxu0 %v6934
    %v6936 = vand.u32 %v53, 4294901760
    %6937 = vmatprep.subr.mxu0 %v6936
    %v6938 = vand.u32 %v52, 4294901760
    %6939 = vmatpush1.msra.mxu0 %v6938
    %v6940 = vand.u32 %v51, 4294901760
    %6941 = vmatprep.subr.mxu0 %v6940
    %v6942 = vand.u32 %v50, 4294901760
    %6943 = vmatpush1.msra.mxu0 %v6942
    %6944 = vmatprep.subr.mxu0 0.0
    %6945 = vmatpush2.msra.mxu0 0.0
    %6946 = vmatprep.subr.mxu0 0.0
    %6947 = vmatpush2.msra.mxu0 0.0
    %6948 = vmatprep.subr.mxu0 0.0
    %6949 = vmatpush2.msra.mxu0 0.0
    %6950 = vmatprep.subr.mxu0 0.0
    %6951 = vmatpush2.msra.mxu0 0.0
    %6952 = vmatprep.subr.mxu0 0.0
    %6953 = vmatpush2.msra.mxu0 0.0
    %6954 = vmatprep.subr.mxu0 0.0
    %6955 = vmatpush2.msra.mxu0 0.0
    %6956 = vmatprep.subr.mxu0 0.0
    %6957 = vmatpush2.msra.mxu0 0.0
    %6958 = vmatprep.subr.mxu0 0.0
    %6959 = vmatpush2.msra.mxu0 0.0
    %6960 = vmatprep.subr.mxu0 0.0
    %6961 = vmatpush2.msra.mxu0 0.0
    %6962 = vmatprep.subr.mxu0 0.0
    %6963 = vmatpush2.msra.mxu0 0.0
    %6964 = vmatprep.subr.mxu0 0.0
    %6965 = vmatpush2.msra.mxu0 0.0
    %6966 = vmatprep.subr.mxu0 0.0
    %6967 = vmatpush2.msra.mxu0 0.0
    %6968 = vmatprep.subr.mxu0 0.0
    %6969 = vmatpush2.msra.mxu0 0.0
    %6970 = vmatprep.subr.mxu0 0.0
    %6971 = vmatpush2.msra.mxu0 0.0
    %6972 = vmatprep.subr.mxu0 0.0
    %6973 = vmatpush2.msra.mxu0 0.0
    %6974 = vmatprep.subr.mxu0 0.0
    %6975 = vmatpush2.msra.mxu0 0.0
    %6976 = vmatprep.mubr.f32.mxu0 0.0
    %v6977 = vand.u32 %v6335, 4294901760
    %6978 = vmatmul.mubr.f32.gmra.mxu0 %v6977
    %v6979 = vpop.f32.mrf.mxu0
    %v6980 = vadd.f32 %v6892, %v6979
    %v6981 = vpop.f32.mrf.mxu0
    %v6982 = vadd.f32 %v6894, %v6981
    %6983 = vdwg.mxu0
    %v6985 = vsel %vm720, %v6323, 0
    %6987 = vmatprep.subr.mxu0 0.0
    %6988 = vmatpush1.msra.mxu0 0.0
    %6989 = vmatprep.subr.mxu0 0.0
    %6990 = vmatpush1.msra.mxu0 0.0
    %6991 = vmatprep.subr.mxu0 0.0
    %6992 = vmatpush1.msra.mxu0 0.0
    %6993 = vmatprep.subr.mxu0 0.0
    %6994 = vmatpush1.msra.mxu0 0.0
    %6995 = vmatprep.subr.mxu0 0.0
    %6996 = vmatpush1.msra.mxu0 0.0
    %6997 = vmatprep.subr.mxu0 0.0
    %6998 = vmatpush1.msra.mxu0 0.0
    %6999 = vmatprep.subr.mxu0 0.0
    %7000 = vmatpush1.msra.mxu0 0.0
    %7001 = vmatprep.subr.mxu0 0.0
    %7002 = vmatpush1.msra.mxu0 0.0
    %7003 = vmatprep.subr.mxu0 0.0
    %7004 = vmatpush1.msra.mxu0 0.0
    %7005 = vmatprep.subr.mxu0 0.0
    %7006 = vmatpush1.msra.mxu0 0.0
    %7007 = vmatprep.subr.mxu0 0.0
    %7008 = vmatpush1.msra.mxu0 0.0
    %7009 = vmatprep.subr.mxu0 0.0
    %7010 = vmatpush1.msra.mxu0 0.0
    %7011 = vmatprep.subr.mxu0 0.0
    %7012 = vmatpush1.msra.mxu0 0.0
    %7013 = vmatprep.subr.mxu0 0.0
    %7014 = vmatpush1.msra.mxu0 0.0
    %7015 = vmatprep.subr.mxu0 0.0
    %7016 = vmatpush1.msra.mxu0 %v48
    %7017 = vmatprep.subr.mxu0 0.0
    %7018 = vmatpush1.msra.mxu0 %v46
    %7019 = vmatprep.subr.mxu0 0.0
    %7020 = vmatpush2.msra.mxu0 0.0
    %7021 = vmatprep.subr.mxu0 0.0
    %7022 = vmatpush2.msra.mxu0 0.0
    %7023 = vmatprep.subr.mxu0 0.0
    %7024 = vmatpush2.msra.mxu0 0.0
    %7025 = vmatprep.subr.mxu0 0.0
    %7026 = vmatpush2.msra.mxu0 0.0
    %7027 = vmatprep.subr.mxu0 0.0
    %7028 = vmatpush2.msra.mxu0 0.0
    %7029 = vmatprep.subr.mxu0 0.0
    %7030 = vmatpush2.msra.mxu0 0.0
    %7031 = vmatprep.subr.mxu0 0.0
    %7032 = vmatpush2.msra.mxu0 0.0
    %7033 = vmatprep.subr.mxu0 0.0
    %7034 = vmatpush2.msra.mxu0 0.0
    %7035 = vmatprep.subr.mxu0 0.0
    %7036 = vmatpush2.msra.mxu0 0.0
    %7037 = vmatprep.subr.mxu0 0.0
    %7038 = vmatpush2.msra.mxu0 0.0
    %7039 = vmatprep.subr.mxu0 0.0
    %7040 = vmatpush2.msra.mxu0 0.0
    %7041 = vmatprep.subr.mxu0 0.0
    %7042 = vmatpush2.msra.mxu0 0.0
    %7043 = vmatprep.subr.mxu0 0.0
    %7044 = vmatpush2.msra.mxu0 0.0
    %7045 = vmatprep.subr.mxu0 0.0
    %7046 = vmatpush2.msra.mxu0 0.0
    %7047 = vmatprep.subr.mxu0 0.0
    %7048 = vmatpush2.msra.mxu0 0.0
    %7049 = vmatprep.subr.mxu0 0.0
    %7050 = vmatpush2.msra.mxu0 0.0
    %7051 = vmatprep.mubr.f32.mxu0 0.0
    %7052 = vmatmul.mubr.f32.gmra.mxu0 %v6985
    %v7053 = vpop.f32.mrf.mxu0
    %v7054 = vadd.f32 %v6980, %v7053
    %v7055 = vpop.f32.mrf.mxu0
    %7056 = vdwg.mxu0
    %v7058 = vsel %vm720, %v6324, 0
    %7060 = vmatprep.subr.mxu0 0.0
    %7061 = vmatpush1.msra.mxu0 0.0
    %7062 = vmatprep.subr.mxu0 0.0
    %7063 = vmatpush1.msra.mxu0 0.0
    %7064 = vmatprep.subr.mxu0 0.0
    %7065 = vmatpush1.msra.mxu0 0.0
    %7066 = vmatprep.subr.mxu0 0.0
    %7067 = vmatpush1.msra.mxu0 0.0
    %7068 = vmatprep.subr.mxu0 0.0
    %7069 = vmatpush1.msra.mxu0 0.0
    %7070 = vmatprep.subr.mxu0 0.0
    %7071 = vmatpush1.msra.mxu0 0.0
    %7072 = vmatprep.subr.mxu0 0.0
    %7073 = vmatpush1.msra.mxu0 0.0
    %7074 = vmatprep.subr.mxu0 0.0
    %7075 = vmatpush1.msra.mxu0 0.0
    %7076 = vmatprep.subr.mxu0 0.0
    %7077 = vmatpush1.msra.mxu0 0.0
    %7078 = vmatprep.subr.mxu0 0.0
    %7079 = vmatpush1.msra.mxu0 0.0
    %7080 = vmatprep.subr.mxu0 0.0
    %7081 = vmatpush1.msra.mxu0 0.0
    %7082 = vmatprep.subr.mxu0 0.0
    %7083 = vmatpush1.msra.mxu0 0.0
    %7084 = vmatprep.subr.mxu0 0.0
    %7085 = vmatpush1.msra.mxu0 0.0
    %7086 = vmatprep.subr.mxu0 0.0
    %7087 = vmatpush1.msra.mxu0 0.0
    %7088 = vmatprep.subr.mxu0 0.0
    %7089 = vmatpush1.msra.mxu0 %v49
    %7090 = vmatprep.subr.mxu0 0.0
    %7091 = vmatpush1.msra.mxu0 %v47
    %7092 = vmatprep.subr.mxu0 0.0
    %7093 = vmatpush2.msra.mxu0 0.0
    %7094 = vmatprep.subr.mxu0 0.0
    %7095 = vmatpush2.msra.mxu0 0.0
    %7096 = vmatprep.subr.mxu0 0.0
    %7097 = vmatpush2.msra.mxu0 0.0
    %7098 = vmatprep.subr.mxu0 0.0
    %7099 = vmatpush2.msra.mxu0 0.0
    %7100 = vmatprep.subr.mxu0 0.0
    %7101 = vmatpush2.msra.mxu0 0.0
    %7102 = vmatprep.subr.mxu0 0.0
    %7103 = vmatpush2.msra.mxu0 0.0
    %7104 = vmatprep.subr.mxu0 0.0
    %7105 = vmatpush2.msra.mxu0 0.0
    %7106 = vmatprep.subr.mxu0 0.0
    %7107 = vmatpush2.msra.mxu0 0.0
    %7108 = vmatprep.subr.mxu0 0.0
    %7109 = vmatpush2.msra.mxu0 0.0
    %7110 = vmatprep.subr.mxu0 0.0
    %7111 = vmatpush2.msra.mxu0 0.0
    %7112 = vmatprep.subr.mxu0 0.0
    %7113 = vmatpush2.msra.mxu0 0.0
    %7114 = vmatprep.subr.mxu0 0.0
    %7115 = vmatpush2.msra.mxu0 0.0
    %7116 = vmatprep.subr.mxu0 0.0
    %7117 = vmatpush2.msra.mxu0 0.0
    %7118 = vmatprep.subr.mxu0 0.0
    %7119 = vmatpush2.msra.mxu0 0.0
    %7120 = vmatprep.subr.mxu0 0.0
    %7121 = vmatpush2.msra.mxu0 0.0
    %7122 = vmatprep.subr.mxu0 0.0
    %7123 = vmatpush2.msra.mxu0 0.0
    %7124 = vmatprep.mubr.f32.mxu0 0.0
    %7125 = vmatmul.mubr.f32.gmra.mxu0 %v7058
    %v7126 = vpop.f32.mrf.mxu0
    %v7127 = vadd.f32 %v6982, %v7126
    %v7128 = vpop.f32.mrf.mxu0
    %7129 = vdwg.mxu0
    %v7130 = vld [vmem:[%s873] sm:$0x3]
    %7132 = vset.pattern.permute.xlu0 0
    %7133 = vperm.xlu0 %7132, %v7130
    %v7134 = vpop.permute.xlu0 %7133
    %v7136 = vld [vmem:[%s0] sm:$0x3]
    %7138 = vset.pattern.permute.xlu0 0
    %7139 = vperm.xlu0 %7138, %v7136
    %v7140 = vpop.permute.xlu0 %7139
    %v7142 = vxor.u32 %v7054, 2147483648
    %v7143 = vmul.f32 %v7142, 1.442695
    %v7144 = vpow.pop %v7143
    %v7145 = vadd.f32 %v7144, 1.0
    %v7146 = vrcp.pop %v7145
    %v7147 = vmul.f32 1.0, %v7146
    %v7148 = vtanh.pop %v7054
    %v7149 = vmul.f32 %v7147, %v6280
    %7151 = vrot.lane.b32.xlu0 %v7148, 64
    %v7152 = vpop.permute.xlu0 %7151
    %v7154 = vmul.f32 %v7147, %v7152
    %7156 = vrot.lane.b32.xlu0 %v7154, 32
    %v7157 = vpop.permute.xlu0 %7156
    %v7159 = vadd.f32 %v7149, %v7157
    %v7160 = vtanh.pop %v7159
    %7162 = vrot.lane.b32.xlu0 %v7160, 64
    %v7163 = vpop.permute.xlu0 %7162
    %v7165 = vmul.f32 %v7147, %v7163
    %v7166 = vmul.f32 %v7134, %v7165
    %v7167 = vxor.u32 %v7127, 2147483648
    %v7168 = vmul.f32 %v7167, 1.442695
    %v7169 = vpow.pop %v7168
    %v7170 = vadd.f32 %v7169, 1.0
    %v7171 = vrcp.pop %v7170
    %v7172 = vmul.f32 1.0, %v7171
    %v7173 = vtanh.pop %v7127
    %v7174 = vmul.f32 %v7172, %v6310
    %7176 = vrot.lane.b32.xlu0 %v7173, 64
    %v7177 = vpop.permute.xlu0 %7176
    %v7179 = vmul.f32 %v7172, %v7177
    %7181 = vrot.lane.b32.xlu0 %v7179, 32
    %v7182 = vpop.permute.xlu0 %7181
    %v7184 = vadd.f32 %v7174, %v7182
    %v7185 = vtanh.pop %v7184
    %7187 = vrot.lane.b32.xlu0 %v7185, 64
    %v7188 = vpop.permute.xlu0 %7187
    %v7190 = vmul.f32 %v7172, %v7188
    %v7191 = vmul.f32 %v7140, %v7190
    %7193 = vrot.lane.b32.xlu0 %v7166, 32
    %v7194 = vpop.permute.xlu0 %7193
    %s7196 = scalar_lea.vmem [#allocation7], 14
    %7197 = vst.msk [vmem:[%s7196] sm:$0x3] %vm944, %v7194
    %7199 = vrot.lane.b32.xlu0 %v7191, 32
    %v7200 = vpop.permute.xlu0 %7199
    %s7202 = scalar_lea.vmem [#allocation7], 16
    %7203 = vst.msk [vmem:[%s7202] sm:$0x3] %vm944, %v7200
    // Predicated region
    $region26: #{tpu_custom_call.1} parent=1 // pred_check
      _
    $region27: #{tpu_custom_call.1} parent=1 // pred_check_branch
      %7205 = sbr.rel (0) target = $region29
    $region28: #{tpu_custom_call.1} parent=1 // pred_region
      %s7207 = ssub.s32 512, 512
      %7208 = vsyncadd [#allocation4], %s7207
      %s7209 = sshll.u32 [#allocation7], 4
      %s7210 = int_to_ptr.vmem [resolvable:$true] %s7209
      %7215 = dma.vmem_to_hbm [thread:$0]  %s7210, 512, %s4, [#allocation4], 32, 32, 2
    $region29: #{tpu_custom_call.1} parent=1 // pred_fallthru
      _
    // Predicated region
    $region30: #{tpu_custom_call.1} parent=1 // pred_check
      _
    $region31: #{tpu_custom_call.1} parent=1 // pred_check_branch
      %7217 = sbr.rel (0) target = $region33
    $region32: #{tpu_custom_call.1} parent=1 // pred_region
      %7218 = dma.done [#allocation4], 512
    $region33: #{tpu_custom_call.1} parent=1 // pred_fallthru
      _
    %7219 = vsyncpa [#allocation3], 1
    %7220 = vsyncpa [#allocation6], 1
    %7221 = vsyncpa [#allocation4], 1

</llo_original>
